<compile_context>
chip_gen: v6e
topology: v6e:2x2x1
jax: 0.10.0
libtpu: 0.0.40
codegen_flags: <defaults>
</compile_context>

<pallas_src>
import math
import jax
import jax.numpy as jnp
from jax import lax
from jax.experimental import pallas as pl
from jax.experimental.pallas import tpu as pltpu


def _silu(v):
    return v * jax.nn.sigmoid(v)


def _round_up(x, m):
    return ((x + m - 1) // m) * m


# ----------------------------------------------------------------------------
# Pallas kernel: one feature level, whole batch in one grid step.
# ----------------------------------------------------------------------------
def _head_level_kernel(x_ref, sw_ref, sb_ref, w1_ref, b1_ref, w2_ref, b2_ref,
                       wp_ref, bp_ref, out_ref, pad1_ref, pad2_ref):
    N, Hp, Wp, C = pad1_ref.shape
    H, W = Hp - 2, Wp - 2
    C2 = pad2_ref.shape[3]          # 2 * C  (fused cls|reg branches)
    M = N * H * W
    out_ch = out_ref.shape[1]       # 4 + 1 + num_classes (un-padded)
    mxu_dt = sw_ref.dtype

    # Halos must be zero; interiors are fully overwritten below, so one full
    # zero-fill per invocation is enough (no per-conv re-zeroing).
    pad1_ref[...] = jnp.zeros_like(pad1_ref)
    pad2_ref[...] = jnp.zeros_like(pad2_ref)

    # ---- stem: 1x1 conv == channel GEMM over all N*H*W pixels, folded BN bias, SiLU
    s = jnp.dot(x_ref[...].astype(mxu_dt), sw_ref[...],
                preferred_element_type=jnp.float32) + sb_ref[...]
    s = _silu(s)                                                    # (M, C) f32

    def conv3x3(feat, pad_ref, w_ref, b_ref, cf):
        # im2col: 9 shifted views of the zero-padded feature concatenated on the
        # lane (channel) axis -> a single K = 9*cf GEMM on the MXU.
        pad_ref[:, 1:H + 1, 1:W + 1, :] = feat.reshape(N, H, W, cf)
        patches = jnp.concatenate(
            [pad_ref[:, dh:dh + H, dw:dw + W, :].reshape(M, cf)
             for dh in range(3) for dw in range(3)], axis=-1)       # (M, 9*cf)
        y = jnp.dot(patches.astype(mxu_dt), w_ref[...],
                    preferred_element_type=jnp.float32) + b_ref[...]
        return _silu(y)

    # ---- layer 1: cls & reg branches share the stem output -> fused on Cout ([cls|reg])
    f1 = conv3x3(s, pad1_ref, w1_ref, b1_ref, C)                    # (M, 2C)
    # ---- layer 2: block-diagonal weights keep the two branches independent
    f2 = conv3x3(f1, pad2_ref, w2_ref, b2_ref, C2)                  # (M, 2C)

    # ---- single fused prediction GEMM; columns = [reg(4) | obj(1) | cls(nc) | 0-pad]
    pred = jnp.dot(f2.astype(mxu_dt), wp_ref[...],
                   preferred_element_type=jnp.float32) + bp_ref[...]  # (M, 128k)

    # ---- lane-dense NCHW store: out[n, c, h*W + w]
    pred = pred.reshape(N, H * W, pred.shape[-1])
    for n in range(N):
        # (H*W, 128k) -> (128k, H*W), keep only the real output channels
        out_ref[n] = jnp.transpose(pred[n])[0:out_ch, :]


def _full_spec(shape):
    nd = len(shape)
    return pl.BlockSpec(tuple(shape), lambda i, nd=nd: (0,) * nd)


def head_level_forward(x_nchw, kp):
    """One FPN level. x_nchw: (N, Cin, H, W). Returns (N, 5+num_classes, H, W)."""
    N, Cin, H, W = x_nchw.shape
    C2 = kp["w1"].shape[1]
    C = C2 // 2
    out_ch = kp["out_ch"]
    M = N * H * W

    # NCHW -> NHWC -> (M, Cin): the only host-side transpose; output needs none.
    x_flat = jnp.transpose(x_nchw, (0, 2, 3, 1)).reshape(M, Cin)

    args = (x_flat, kp["stem_w"], kp["stem_b"], kp["w1"], kp["b1"],
            kp["w2"], kp["b2"], kp["w_pred"], kp["b_pred"])

    out = pl.pallas_call(
        _head_level_kernel,
        out_shape=jax.ShapeDtypeStruct((N, out_ch, H * W), jnp.float32),
        grid=(1,),
        in_specs=[_full_spec(a.shape) for a in args],
        out_specs=_full_spec((N, out_ch, H * W)),
        scratch_shapes=[pltpu.VMEM((N, H + 2, W + 2, C), jnp.float32),
                        pltpu.VMEM((N, H + 2, W + 2, C2), jnp.float32)],
        compiler_params=pltpu.CompilerParams(
            dimension_semantics=("arbitrary",),
            vmem_limit_bytes=32 * 1024 * 1024),
    )(*args)

    return out.reshape(N, out_ch, H, W)       # free reshape, already channel-first


# ----------------------------------------------------------------------------
# Wrapper-side weight packing (branch fusion / im2col reshape / lane padding).
# ----------------------------------------------------------------------------
def _pack_level_params(p, mxu_dtype=jnp.float32):
    C = p["stem_w"].shape[1]
    nc = p["w_cls"].shape[1]
    out_ch = 5 + nc
    pred_cols = _round_up(out_ch, 128)        # lane-dense prediction GEMM output

    # layer 1: fused cls+reg (shared stem input), output channels [cls | reg]
    w1 = jnp.concatenate([p["cls_w1"], p["reg_w1"]], axis=3).reshape(9 * C, 2 * C)
    b1 = jnp.concatenate([p["cls_b1"], p["reg_b1"]], axis=1)

    # layer 2: block-diagonal over the concatenated [cls | reg] feature
    z = jnp.zeros((3, 3, C, C), jnp.float32)
    w2 = jnp.concatenate(
        [jnp.concatenate([p["cls_w2"], z], axis=3),
         jnp.concatenate([z, p["reg_w2"]], axis=3)],
        axis=2).reshape(9 * 2 * C, 2 * C)
    b2 = jnp.concatenate([p["cls_b2"], p["reg_b2"]], axis=1)

    # prediction: one GEMM, columns = [reg(4) | obj(1) | cls(nc) | zero-pad]
    wp = jnp.zeros((2 * C, pred_cols), jnp.float32)
    wp = wp.at[:C, 5:out_ch].set(p["w_cls"])       # cls_feat -> cls outputs
    wp = wp.at[C:, 0:4].set(p["w_reg"])            # reg_feat -> reg outputs
    wp = wp.at[C:, 4:5].set(p["w_obj"])            # reg_feat -> obj output
    bp = jnp.zeros((1, pred_cols), jnp.float32)
    bp = bp.at[:, 0:4].set(p["b_reg"])
    bp = bp.at[:, 4:5].set(p["b_obj"])
    bp = bp.at[:, 5:out_ch].set(p["b_cls"])

    return dict(
        stem_w=p["stem_w"].astype(mxu_dtype), stem_b=p["stem_b"],
        w1=w1.astype(mxu_dtype), b1=b1,
        w2=w2.astype(mxu_dtype), b2=b2,
        w_pred=wp.astype(mxu_dtype), b_pred=bp,
        out_ch=out_ch)


def anchor_free_decoupled_head(xin_nchw, level_params, mxu_dtype=jnp.float32):
    """Forward over the multi-level FPN inputs (PyTorch NCHW convention).
    Returns list of (N, 4+1+num_classes, H, W) == ModelOutput(pred=outputs)."""
    outputs = []
    for x, p in zip(xin_nchw, level_params):
        kp = _pack_level_params(p, mxu_dtype)
        outputs.append(head_level_forward(x, kp))
    return outputs


# ----------------------------------------------------------------------------
# Deterministic synthetic parameter construction (BN folded into conv).
# ----------------------------------------------------------------------------
def _fold_bn(w_hwio, gamma, beta, mean, var, eps=1e-3):
    scale = gamma / jnp.sqrt(var + eps)
    return w_hwio * scale, (beta - mean * scale)[None, :]


def _make_convlayer(key, cin, cout, k):
    kw, kg, kb, km, kv = jax.random.split(key, 5)
    fan_in = cin * k * k
    w = jax.random.normal(kw, (k, k, cin, cout), jnp.float32) / math.sqrt(fan_in)
    gamma = 1.0 + 0.1 * jax.random.normal(kg, (cout,), jnp.float32)
    beta = 0.1 * jax.random.normal(kb, (cout,), jnp.float32)
    mean = 0.1 * jax.random.normal(km, (cout,), jnp.float32)
    var = jax.random.uniform(kv, (cout,), jnp.float32, minval=0.5, maxval=1.5)
    return _fold_bn(w, gamma, beta, mean, var)


def _make_pred(key, cin, cout, bias_fill=None):
    kw, kb = jax.random.split(key)
    w = jax.random.normal(kw, (cin, cout), jnp.float32) / math.sqrt(cin)
    if bias_fill is None:
        b = 0.1 * jax.random.normal(kb, (cout,), jnp.float32)
    else:
        b = jnp.full((cout,), bias_fill, jnp.float32)
    return w, b[None, :]


def make_level_params(key, cin, hidden, num_classes):
    ks = jax.random.split(key, 8)
    prior_bias = -math.log((1.0 - 0.01) / 0.01)      # initialize_biases(0.01)
    sw, sb = _make_convlayer(ks[0], cin, hidden, 1)
    sw = sw.reshape(cin, hidden)
    cw1, cb1 = _make_convlayer(ks[1], hidden, hidden, 3)
    cw2, cb2 = _make_convlayer(ks[2], hidden, hidden, 3)
    rw1, rb1 = _make_convlayer(ks[3], hidden, hidden, 3)
    rw2, rb2 = _make_convlayer(ks[4], hidden, hidden, 3)
    w_reg, b_reg = _make_pred(ks[5], hidden, 4)
    w_obj, b_obj = _make_pred(ks[6], hidden, 1, bias_fill=prior_bias)
    w_cls, b_cls = _make_pred(ks[7], hidden, num_classes, bias_fill=prior_bias)
    return dict(stem_w=sw, stem_b=sb,
                cls_w1=cw1, cls_b1=cb1, cls_w2=cw2, cls_b2=cb2,
                reg_w1=rw1, reg_b1=rb1, reg_w2=rw2, reg_b2=rb2,
                w_reg=w_reg, b_reg=b_reg, w_obj=w_obj, b_obj=b_obj,
                w_cls=w_cls, b_cls=b_cls)


# ----------------------------------------------------------------------------
# Pure-JAX reference (correctness check of the kernel).
# ----------------------------------------------------------------------------
def _ref_level(x_nchw, p):
    x = jnp.transpose(x_nchw, (0, 2, 3, 1))
    s = _silu(jnp.einsum("nhwc,cd->nhwd", x, p["stem_w"]) + p["stem_b"][0])

    def conv3(f, w, b):
        y = lax.conv_general_dilated(f, w, (1, 1), "SAME",
                                     dimension_numbers=("NHWC", "HWIO", "NHWC"))
        return _silu(y + b[0])

    c = conv3(conv3(s, p["cls_w1"], p["cls_b1"]), p["cls_w2"], p["cls_b2"])
    r = conv3(conv3(s, p["reg_w1"], p["reg_b1"]), p["reg_w2"], p["reg_b2"])
    reg = jnp.einsum("nhwc,cd->nhwd", r, p["w_reg"]) + p["b_reg"][0]
    obj = jnp.einsum("nhwc,cd->nhwd", r, p["w_obj"]) + p["b_obj"][0]
    cls = jnp.einsum("nhwc,cd->nhwd", c, p["w_cls"]) + p["b_cls"][0]
    out = jnp.concatenate([reg, obj, cls], axis=-1)
    return jnp.transpose(out, (0, 3, 1, 2))          # (N, 5+nc, H, W)


if __name__ == "__main__":
    key = jax.random.PRNGKey(0)
    num_classes = 3
    intermediate_features_dim = [32, 48]     # per-level input channels
    spatial = [16, 8]                        # per-level H = W
    hidden = intermediate_features_dim[0]    # hidden_dim = first feature dim
    N = 2

    k_x, k_p = jax.random.split(key)
    xkeys = jax.random.split(k_x, len(intermediate_features_dim))
    pkeys = jax.random.split(k_p, len(intermediate_features_dim))

    xin = [jax.random.normal(
               xkeys[i],
               (N, intermediate_features_dim[i], spatial[i], spatial[i]),
               jnp.float32)
           for i in range(len(intermediate_features_dim))]
    params = [make_level_params(pkeys[i], intermediate_features_dim[i], hidden, num_classes)
              for i in range(len(intermediate_features_dim))]

    outs = anchor_free_decoupled_head(xin, params)
    outs = jax.block_until_ready(outs)

    # sanity check against the pure-JAX reference
    for x, p, o in zip(xin, params, outs):
        assert o.shape == (N, 5 + num_classes, x.shape[2], x.shape[3])
        ref = _ref_level(x, p)
        err = float(jnp.max(jnp.abs(o - ref)))
        assert jnp.allclose(o, ref, atol=1e-3, rtol=1e-3), err

    print("KERNEL_OK")
</pallas_src>

<mosaic_0001>
module attributes {stable_mosaic.version = 11 : i64} {
  func.func @_head_level_kernel(%arg0: i32, %arg1: memref<512x32xf32, #tpu.memory_space<vmem>>, %arg2: memref<32x32xf32, #tpu.memory_space<vmem>>, %arg3: memref<1x32xf32, #tpu.memory_space<vmem>>, %arg4: memref<288x64xf32, #tpu.memory_space<vmem>>, %arg5: memref<1x64xf32, #tpu.memory_space<vmem>>, %arg6: memref<576x64xf32, #tpu.memory_space<vmem>>, %arg7: memref<1x64xf32, #tpu.memory_space<vmem>>, %arg8: memref<64x128xf32, #tpu.memory_space<vmem>>, %arg9: memref<1x128xf32, #tpu.memory_space<vmem>>, %arg10: memref<2x8x256xf32, #tpu.memory_space<vmem>>, %arg11: memref<2x18x18x32xf32, #tpu.memory_space<vmem>>, %arg12: memref<2x18x18x64xf32, #tpu.memory_space<vmem>>) attributes {dimension_semantics = [#tpu.dimension_semantics<arbitrary>], iteration_bounds = array<i64: 1>, scalar_prefetch = 0 : i64, scratch_operands = 2 : i64, tpu.core_type = #tpu.core_type<tc>, window_params = [{pipeline_mode = #tpu.pipeline_mode<synchronous>, transform_indices = @transform_0, window_bounds = array<i64: 512, 32>}, {pipeline_mode = #tpu.pipeline_mode<synchronous>, transform_indices = @transform_1, window_bounds = array<i64: 32, 32>}, {pipeline_mode = #tpu.pipeline_mode<synchronous>, transform_indices = @transform_2, window_bounds = array<i64: 1, 32>}, {pipeline_mode = #tpu.pipeline_mode<synchronous>, transform_indices = @transform_3, window_bounds = array<i64: 288, 64>}, {pipeline_mode = #tpu.pipeline_mode<synchronous>, transform_indices = @transform_4, window_bounds = array<i64: 1, 64>}, {pipeline_mode = #tpu.pipeline_mode<synchronous>, transform_indices = @transform_5, window_bounds = array<i64: 576, 64>}, {pipeline_mode = #tpu.pipeline_mode<synchronous>, transform_indices = @transform_6, window_bounds = array<i64: 1, 64>}, {pipeline_mode = #tpu.pipeline_mode<synchronous>, transform_indices = @transform_7, window_bounds = array<i64: 64, 128>}, {pipeline_mode = #tpu.pipeline_mode<synchronous>, transform_indices = @transform_8, window_bounds = array<i64: 1, 128>}, {pipeline_mode = #tpu.pipeline_mode<synchronous>, transform_indices = @transform_9, window_bounds = array<i64: 2, 8, 256>}]} {
    %cst = arith.constant 0.000000e+00 : f32
    %0 = vector.broadcast %cst : f32 to vector<2x18x18x32xf32>
    %c0 = arith.constant 0 : index
    %c0_0 = arith.constant 0 : index
    %c0_1 = arith.constant 0 : index
    %c0_2 = arith.constant 0 : index
    %1 = vector.load %arg11[%c0, %c0_0, %c0_1, %c0_2] : memref<2x18x18x32xf32, #tpu.memory_space<vmem>>, vector<2x18x18x32xf32>
    tpu.vector_store %arg11[%c0, %c0_0, %c0_1, %c0_2], %0 {strides = array<i32>} : memref<2x18x18x32xf32, #tpu.memory_space<vmem>>, vector<2x18x18x32xf32>,
    %cst_3 = arith.constant 0.000000e+00 : f32
    %2 = vector.broadcast %cst_3 : f32 to vector<2x18x18x64xf32>
    %c0_4 = arith.constant 0 : index
    %c0_5 = arith.constant 0 : index
    %c0_6 = arith.constant 0 : index
    %c0_7 = arith.constant 0 : index
    %3 = vector.load %arg12[%c0_4, %c0_5, %c0_6, %c0_7] : memref<2x18x18x64xf32, #tpu.memory_space<vmem>>, vector<2x18x18x64xf32>
    tpu.vector_store %arg12[%c0_4, %c0_5, %c0_6, %c0_7], %2 {strides = array<i32>} : memref<2x18x18x64xf32, #tpu.memory_space<vmem>>, vector<2x18x18x64xf32>,
    %c0_8 = arith.constant 0 : index
    %c0_9 = arith.constant 0 : index
    %4 = vector.load %arg1[%c0_8, %c0_9] : memref<512x32xf32, #tpu.memory_space<vmem>>, vector<512x32xf32>
    %c0_10 = arith.constant 0 : index
    %c0_11 = arith.constant 0 : index
    %5 = vector.load %arg2[%c0_10, %c0_11] : memref<32x32xf32, #tpu.memory_space<vmem>>, vector<32x32xf32>
    %cst_12 = arith.constant dense<0.000000e+00> : vector<512x32xf32>
    %6 = tpu.matmul %4, %5, %cst_12 {dimension_numbers = #tpu.dot_dimension_numbers<[1], [0], [0], [1], [0, 0, 1, 1], [], []>} : vector<512x32xf32>, vector<32x32xf32>, vector<512x32xf32> -> vector<512x32xf32>
    %c0_13 = arith.constant 0 : index
    %c0_14 = arith.constant 0 : index
    %7 = vector.load %arg3[%c0_13, %c0_14] : memref<1x32xf32, #tpu.memory_space<vmem>>, vector<1x32xf32>
    %8 = vector.broadcast %7 : vector<1x32xf32> to vector<512x32xf32>
    %9 = arith.addf %6, %8 : vector<512x32xf32>
    %10 = arith.negf %9 : vector<512x32xf32>
    %11 = math.exp %10 : vector<512x32xf32>
    %cst_15 = arith.constant 1.000000e+00 : f32
    %12 = vector.broadcast %cst_15 : f32 to vector<512x32xf32>
    %13 = arith.addf %12, %11 : vector<512x32xf32>
    %14 = arith.divf %12, %13 : vector<512x32xf32>
    %15 = arith.mulf %9, %14 : vector<512x32xf32>
    %16 = vector.shape_cast %15 : vector<512x32xf32> to vector<2x16x16x32xf32>
    %c0_16 = arith.constant 0 : index
    %c1 = arith.constant 1 : index
    %c1_17 = arith.constant 1 : index
    %c0_18 = arith.constant 0 : index
    %17 = vector.load %arg11[%c0_16, %c1, %c1_17, %c0_18] : memref<2x18x18x32xf32, #tpu.memory_space<vmem>>, vector<2x16x16x32xf32>
    tpu.vector_store %arg11[%c0_16, %c1, %c1_17, %c0_18], %16 {strides = array<i32>} : memref<2x18x18x32xf32, #tpu.memory_space<vmem>>, vector<2x16x16x32xf32>,
    %c0_19 = arith.constant 0 : index
    %c0_20 = arith.constant 0 : index
    %c0_21 = arith.constant 0 : index
    %c0_22 = arith.constant 0 : index
    %18 = vector.load %arg11[%c0_19, %c0_20, %c0_21, %c0_22] : memref<2x18x18x32xf32, #tpu.memory_space<vmem>>, vector<2x16x16x32xf32>
    %19 = vector.shape_cast %18 : vector<2x16x16x32xf32> to vector<512x32xf32>
    %c0_23 = arith.constant 0 : index
    %c0_24 = arith.constant 0 : index
    %c1_25 = arith.constant 1 : index
    %c0_26 = arith.constant 0 : index
    %20 = vector.load %arg11[%c0_23, %c0_24, %c1_25, %c0_26] : memref<2x18x18x32xf32, #tpu.memory_space<vmem>>, vector<2x16x16x32xf32>
    %21 = vector.shape_cast %20 : vector<2x16x16x32xf32> to vector<512x32xf32>
    %c0_27 = arith.constant 0 : index
    %c0_28 = arith.constant 0 : index
    %c2 = arith.constant 2 : index
    %c0_29 = arith.constant 0 : index
    %22 = vector.load %arg11[%c0_27, %c0_28, %c2, %c0_29] : memref<2x18x18x32xf32, #tpu.memory_space<vmem>>, vector<2x16x16x32xf32>
    %23 = vector.shape_cast %22 : vector<2x16x16x32xf32> to vector<512x32xf32>
    %c0_30 = arith.constant 0 : index
    %c1_31 = arith.constant 1 : index
    %c0_32 = arith.constant 0 : index
    %c0_33 = arith.constant 0 : index
    %24 = vector.load %arg11[%c0_30, %c1_31, %c0_32, %c0_33] : memref<2x18x18x32xf32, #tpu.memory_space<vmem>>, vector<2x16x16x32xf32>
    %25 = vector.shape_cast %24 : vector<2x16x16x32xf32> to vector<512x32xf32>
    %c0_34 = arith.constant 0 : index
    %c1_35 = arith.constant 1 : index
    %c1_36 = arith.constant 1 : index
    %c0_37 = arith.constant 0 : index
    %26 = vector.load %arg11[%c0_34, %c1_35, %c1_36, %c0_37] : memref<2x18x18x32xf32, #tpu.memory_space<vmem>>, vector<2x16x16x32xf32>
    %27 = vector.shape_cast %26 : vector<2x16x16x32xf32> to vector<512x32xf32>
    %c0_38 = arith.constant 0 : index
    %c1_39 = arith.constant 1 : index
    %c2_40 = arith.constant 2 : index
    %c0_41 = arith.constant 0 : index
    %28 = vector.load %arg11[%c0_38, %c1_39, %c2_40, %c0_41] : memref<2x18x18x32xf32, #tpu.memory_space<vmem>>, vector<2x16x16x32xf32>
    %29 = vector.shape_cast %28 : vector<2x16x16x32xf32> to vector<512x32xf32>
    %c0_42 = arith.constant 0 : index
    %c2_43 = arith.constant 2 : index
    %c0_44 = arith.constant 0 : index
    %c0_45 = arith.constant 0 : index
    %30 = vector.load %arg11[%c0_42, %c2_43, %c0_44, %c0_45] : memref<2x18x18x32xf32, #tpu.memory_space<vmem>>, vector<2x16x16x32xf32>
    %31 = vector.shape_cast %30 : vector<2x16x16x32xf32> to vector<512x32xf32>
    %c0_46 = arith.constant 0 : index
    %c2_47 = arith.constant 2 : index
    %c1_48 = arith.constant 1 : index
    %c0_49 = arith.constant 0 : index
    %32 = vector.load %arg11[%c0_46, %c2_47, %c1_48, %c0_49] : memref<2x18x18x32xf32, #tpu.memory_space<vmem>>, vector<2x16x16x32xf32>
    %33 = vector.shape_cast %32 : vector<2x16x16x32xf32> to vector<512x32xf32>
    %c0_50 = arith.constant 0 : index
    %c2_51 = arith.constant 2 : index
    %c2_52 = arith.constant 2 : index
    %c0_53 = arith.constant 0 : index
    %34 = vector.load %arg11[%c0_50, %c2_51, %c2_52, %c0_53] : memref<2x18x18x32xf32, #tpu.memory_space<vmem>>, vector<2x16x16x32xf32>
    %35 = vector.shape_cast %34 : vector<2x16x16x32xf32> to vector<512x32xf32>
    %36 = tpu.concatenate %19, %21, %23, %25, %27, %29, %31, %33, %35 in 1 : vector<512x32xf32>, vector<512x32xf32>, vector<512x32xf32>, vector<512x32xf32>, vector<512x32xf32>, vector<512x32xf32>, vector<512x32xf32>, vector<512x32xf32>, vector<512x32xf32> -> vector<512x288xf32>
    %c0_54 = arith.constant 0 : index
    %c0_55 = arith.constant 0 : index
    %37 = vector.load %arg4[%c0_54, %c0_55] : memref<288x64xf32, #tpu.memory_space<vmem>>, vector<288x64xf32>
    %cst_56 = arith.constant dense<0.000000e+00> : vector<512x64xf32>
    %38 = tpu.matmul %36, %37, %cst_56 {dimension_numbers = #tpu.dot_dimension_numbers<[1], [0], [0], [1], [0, 0, 1, 1], [], []>} : vector<512x288xf32>, vector<288x64xf32>, vector<512x64xf32> -> vector<512x64xf32>
    %c0_57 = arith.constant 0 : index
    %c0_58 = arith.constant 0 : index
    %39 = vector.load %arg5[%c0_57, %c0_58] : memref<1x64xf32, #tpu.memory_space<vmem>>, vector<1x64xf32>
    %40 = vector.broadcast %39 : vector<1x64xf32> to vector<512x64xf32>
    %41 = arith.addf %38, %40 : vector<512x64xf32>
    %42 = arith.negf %41 : vector<512x64xf32>
    %43 = math.exp %42 : vector<512x64xf32>
    %cst_59 = arith.constant 1.000000e+00 : f32
    %44 = vector.broadcast %cst_59 : f32 to vector<512x64xf32>
    %45 = arith.addf %44, %43 : vector<512x64xf32>
    %46 = arith.divf %44, %45 : vector<512x64xf32>
    %47 = arith.mulf %41, %46 : vector<512x64xf32>
    %48 = vector.shape_cast %47 : vector<512x64xf32> to vector<2x16x16x64xf32>
    %c0_60 = arith.constant 0 : index
    %c1_61 = arith.constant 1 : index
    %c1_62 = arith.constant 1 : index
    %c0_63 = arith.constant 0 : index
    %49 = vector.load %arg12[%c0_60, %c1_61, %c1_62, %c0_63] : memref<2x18x18x64xf32, #tpu.memory_space<vmem>>, vector<2x16x16x64xf32>
    tpu.vector_store %arg12[%c0_60, %c1_61, %c1_62, %c0_63], %48 {strides = array<i32>} : memref<2x18x18x64xf32, #tpu.memory_space<vmem>>, vector<2x16x16x64xf32>,
    %c0_64 = arith.constant 0 : index
    %c0_65 = arith.constant 0 : index
    %c0_66 = arith.constant 0 : index
    %c0_67 = arith.constant 0 : index
    %50 = vector.load %arg12[%c0_64, %c0_65, %c0_66, %c0_67] : memref<2x18x18x64xf32, #tpu.memory_space<vmem>>, vector<2x16x16x64xf32>
    %51 = vector.shape_cast %50 : vector<2x16x16x64xf32> to vector<512x64xf32>
    %c0_68 = arith.constant 0 : index
    %c0_69 = arith.constant 0 : index
    %c1_70 = arith.constant 1 : index
    %c0_71 = arith.constant 0 : index
    %52 = vector.load %arg12[%c0_68, %c0_69, %c1_70, %c0_71] : memref<2x18x18x64xf32, #tpu.memory_space<vmem>>, vector<2x16x16x64xf32>
    %53 = vector.shape_cast %52 : vector<2x16x16x64xf32> to vector<512x64xf32>
    %c0_72 = arith.constant 0 : index
    %c0_73 = arith.constant 0 : index
    %c2_74 = arith.constant 2 : index
    %c0_75 = arith.constant 0 : index
    %54 = vector.load %arg12[%c0_72, %c0_73, %c2_74, %c0_75] : memref<2x18x18x64xf32, #tpu.memory_space<vmem>>, vector<2x16x16x64xf32>
    %55 = vector.shape_cast %54 : vector<2x16x16x64xf32> to vector<512x64xf32>
    %c0_76 = arith.constant 0 : index
    %c1_77 = arith.constant 1 : index
    %c0_78 = arith.constant 0 : index
    %c0_79 = arith.constant 0 : index
    %56 = vector.load %arg12[%c0_76, %c1_77, %c0_78, %c0_79] : memref<2x18x18x64xf32, #tpu.memory_space<vmem>>, vector<2x16x16x64xf32>
    %57 = vector.shape_cast %56 : vector<2x16x16x64xf32> to vector<512x64xf32>
    %c0_80 = arith.constant 0 : index
    %c1_81 = arith.constant 1 : index
    %c1_82 = arith.constant 1 : index
    %c0_83 = arith.constant 0 : index
    %58 = vector.load %arg12[%c0_80, %c1_81, %c1_82, %c0_83] : memref<2x18x18x64xf32, #tpu.memory_space<vmem>>, vector<2x16x16x64xf32>
    %59 = vector.shape_cast %58 : vector<2x16x16x64xf32> to vector<512x64xf32>
    %c0_84 = arith.constant 0 : index
    %c1_85 = arith.constant 1 : index
    %c2_86 = arith.constant 2 : index
    %c0_87 = arith.constant 0 : index
    %60 = vector.load %arg12[%c0_84, %c1_85, %c2_86, %c0_87] : memref<2x18x18x64xf32, #tpu.memory_space<vmem>>, vector<2x16x16x64xf32>
    %61 = vector.shape_cast %60 : vector<2x16x16x64xf32> to vector<512x64xf32>
    %c0_88 = arith.constant 0 : index
    %c2_89 = arith.constant 2 : index
    %c0_90 = arith.constant 0 : index
    %c0_91 = arith.constant 0 : index
    %62 = vector.load %arg12[%c0_88, %c2_89, %c0_90, %c0_91] : memref<2x18x18x64xf32, #tpu.memory_space<vmem>>, vector<2x16x16x64xf32>
    %63 = vector.shape_cast %62 : vector<2x16x16x64xf32> to vector<512x64xf32>
    %c0_92 = arith.constant 0 : index
    %c2_93 = arith.constant 2 : index
    %c1_94 = arith.constant 1 : index
    %c0_95 = arith.constant 0 : index
    %64 = vector.load %arg12[%c0_92, %c2_93, %c1_94, %c0_95] : memref<2x18x18x64xf32, #tpu.memory_space<vmem>>, vector<2x16x16x64xf32>
    %65 = vector.shape_cast %64 : vector<2x16x16x64xf32> to vector<512x64xf32>
    %c0_96 = arith.constant 0 : index
    %c2_97 = arith.constant 2 : index
    %c2_98 = arith.constant 2 : index
    %c0_99 = arith.constant 0 : index
    %66 = vector.load %arg12[%c0_96, %c2_97, %c2_98, %c0_99] : memref<2x18x18x64xf32, #tpu.memory_space<vmem>>, vector<2x16x16x64xf32>
    %67 = vector.shape_cast %66 : vector<2x16x16x64xf32> to vector<512x64xf32>
    %68 = tpu.concatenate %51, %53, %55, %57, %59, %61, %63, %65, %67 in 1 : vector<512x64xf32>, vector<512x64xf32>, vector<512x64xf32>, vector<512x64xf32>, vector<512x64xf32>, vector<512x64xf32>, vector<512x64xf32>, vector<512x64xf32>, vector<512x64xf32> -> vector<512x576xf32>
    %c0_100 = arith.constant 0 : index
    %c0_101 = arith.constant 0 : index
    %69 = vector.load %arg6[%c0_100, %c0_101] : memref<576x64xf32, #tpu.memory_space<vmem>>, vector<576x64xf32>
    %cst_102 = arith.constant dense<0.000000e+00> : vector<512x64xf32>
    %70 = tpu.matmul %68, %69, %cst_102 {dimension_numbers = #tpu.dot_dimension_numbers<[1], [0], [0], [1], [0, 0, 1, 1], [], []>} : vector<512x576xf32>, vector<576x64xf32>, vector<512x64xf32> -> vector<512x64xf32>
    %c0_103 = arith.constant 0 : index
    %c0_104 = arith.constant 0 : index
    %71 = vector.load %arg7[%c0_103, %c0_104] : memref<1x64xf32, #tpu.memory_space<vmem>>, vector<1x64xf32>
    %72 = vector.broadcast %71 : vector<1x64xf32> to vector<512x64xf32>
    %73 = arith.addf %70, %72 : vector<512x64xf32>
    %74 = arith.negf %73 : vector<512x64xf32>
    %75 = math.exp %74 : vector<512x64xf32>
    %cst_105 = arith.constant 1.000000e+00 : f32
    %76 = vector.broadcast %cst_105 : f32 to vector<512x64xf32>
    %77 = arith.addf %76, %75 : vector<512x64xf32>
    %78 = arith.divf %76, %77 : vector<512x64xf32>
    %79 = arith.mulf %73, %78 : vector<512x64xf32>
    %c0_106 = arith.constant 0 : index
    %c0_107 = arith.constant 0 : index
    %80 = vector.load %arg8[%c0_106, %c0_107] : memref<64x128xf32, #tpu.memory_space<vmem>>, vector<64x128xf32>
    %cst_108 = arith.constant dense<0.000000e+00> : vector<512x128xf32>
    %81 = tpu.matmul %79, %80, %cst_108 {dimension_numbers = #tpu.dot_dimension_numbers<[1], [0], [0], [1], [0, 0, 1, 1], [], []>} : vector<512x64xf32>, vector<64x128xf32>, vector<512x128xf32> -> vector<512x128xf32>
    %c0_109 = arith.constant 0 : index
    %c0_110 = arith.constant 0 : index
    %82 = vector.load %arg9[%c0_109, %c0_110] : memref<1x128xf32, #tpu.memory_space<vmem>>, vector<1x128xf32>
    %83 = vector.broadcast %82 : vector<1x128xf32> to vector<512x128xf32>
    %84 = arith.addf %81, %83 : vector<512x128xf32>
    %85 = vector.shape_cast %84 : vector<512x128xf32> to vector<2x256x128xf32>
    %86 = vector.extract_strided_slice %85 {offsets = [0, 0, 0], sizes = [1, 256, 128], strides = [1, 1, 1]} : vector<2x256x128xf32> to vector<1x256x128xf32>
    %87 = vector.shape_cast %86 : vector<1x256x128xf32> to vector<256x128xf32>
    %88 = tpu.transpose %87, [1, 0] : vector<256x128xf32> -> vector<128x256xf32>
    %89 = vector.extract_strided_slice %88 {offsets = [0, 0], sizes = [8, 256], strides = [1, 1]} : vector<128x256xf32> to vector<8x256xf32>
    %c0_111 = arith.constant 0 : index
    %c0_112 = arith.constant 0 : index
    %c0_113 = arith.constant 0 : index
    %90 = vector.load %arg10[%c0_111, %c0_112, %c0_113] : memref<2x8x256xf32, #tpu.memory_space<vmem>>, vector<1x8x256xf32>
    %91 = vector.shape_cast %90 : vector<1x8x256xf32> to vector<8x256xf32>
    %92 = vector.shape_cast %89 : vector<8x256xf32> to vector<1x8x256xf32>
    tpu.vector_store %arg10[%c0_111, %c0_112, %c0_113], %92 {strides = array<i32>} : memref<2x8x256xf32, #tpu.memory_space<vmem>>, vector<1x8x256xf32>,
    %93 = vector.extract_strided_slice %85 {offsets = [1, 0, 0], sizes = [1, 256, 128], strides = [1, 1, 1]} : vector<2x256x128xf32> to vector<1x256x128xf32>
    %94 = vector.shape_cast %93 : vector<1x256x128xf32> to vector<256x128xf32>
    %95 = tpu.transpose %94, [1, 0] : vector<256x128xf32> -> vector<128x256xf32>
    %96 = vector.extract_strided_slice %95 {offsets = [0, 0], sizes = [8, 256], strides = [1, 1]} : vector<128x256xf32> to vector<8x256xf32>
    %c1_114 = arith.constant 1 : index
    %c0_115 = arith.constant 0 : index
    %c0_116 = arith.constant 0 : index
    %97 = vector.load %arg10[%c1_114, %c0_115, %c0_116] : memref<2x8x256xf32, #tpu.memory_space<vmem>>, vector<1x8x256xf32>
    %98 = vector.shape_cast %97 : vector<1x8x256xf32> to vector<8x256xf32>
    %99 = vector.shape_cast %96 : vector<8x256xf32> to vector<1x8x256xf32>
    tpu.vector_store %arg10[%c1_114, %c0_115, %c0_116], %99 {strides = array<i32>} : memref<2x8x256xf32, #tpu.memory_space<vmem>>, vector<1x8x256xf32>,
    return
  }
  func.func @transform_0(%arg0: i32) -> (i32, i32) {
    %c0_i32 = arith.constant 0 : i32
    %c0_i32_0 = arith.constant 0 : i32
    %c0_i32_1 = arith.constant 0 : i32
    return %c0_i32, %c0_i32_0 : i32, i32
  }
  func.func @transform_1(%arg0: i32) -> (i32, i32) {
    %c0_i32 = arith.constant 0 : i32
    %c0_i32_0 = arith.constant 0 : i32
    %c0_i32_1 = arith.constant 0 : i32
    return %c0_i32, %c0_i32_0 : i32, i32
  }
  func.func @transform_2(%arg0: i32) -> (i32, i32) {
    %c0_i32 = arith.constant 0 : i32
    %c0_i32_0 = arith.constant 0 : i32
    %c0_i32_1 = arith.constant 0 : i32
    return %c0_i32, %c0_i32_0 : i32, i32
  }
  func.func @transform_3(%arg0: i32) -> (i32, i32) {
    %c0_i32 = arith.constant 0 : i32
    %c0_i32_0 = arith.constant 0 : i32
    %c0_i32_1 = arith.constant 0 : i32
    return %c0_i32, %c0_i32_0 : i32, i32
  }
  func.func @transform_4(%arg0: i32) -> (i32, i32) {
    %c0_i32 = arith.constant 0 : i32
    %c0_i32_0 = arith.constant 0 : i32
    %c0_i32_1 = arith.constant 0 : i32
    return %c0_i32, %c0_i32_0 : i32, i32
  }
  func.func @transform_5(%arg0: i32) -> (i32, i32) {
    %c0_i32 = arith.constant 0 : i32
    %c0_i32_0 = arith.constant 0 : i32
    %c0_i32_1 = arith.constant 0 : i32
    return %c0_i32, %c0_i32_0 : i32, i32
  }
  func.func @transform_6(%arg0: i32) -> (i32, i32) {
    %c0_i32 = arith.constant 0 : i32
    %c0_i32_0 = arith.constant 0 : i32
    %c0_i32_1 = arith.constant 0 : i32
    return %c0_i32, %c0_i32_0 : i32, i32
  }
  func.func @transform_7(%arg0: i32) -> (i32, i32) {
    %c0_i32 = arith.constant 0 : i32
    %c0_i32_0 = arith.constant 0 : i32
    %c0_i32_1 = arith.constant 0 : i32
    return %c0_i32, %c0_i32_0 : i32, i32
  }
  func.func @transform_8(%arg0: i32) -> (i32, i32) {
    %c0_i32 = arith.constant 0 : i32
    %c0_i32_0 = arith.constant 0 : i32
    %c0_i32_1 = arith.constant 0 : i32
    return %c0_i32, %c0_i32_0 : i32, i32
  }
  func.func @transform_9(%arg0: i32) -> (i32, i32, i32) {
    %c0_i32 = arith.constant 0 : i32
    %c0_i32_0 = arith.constant 0 : i32
    %c0_i32_1 = arith.constant 0 : i32
    %c0_i32_2 = arith.constant 0 : i32
    return %c0_i32, %c0_i32_0, %c0_i32_1 : i32, i32, i32
  }
}

</mosaic_0001>

<llo_original>
// kernel: tpu_custom_call.1
$region0: #{tpu_custom_call.1}
  #allocation0 [shape = 'u32[]', space=smem, size = 0x4, offset = 0x4, fixed_abs, tag = 'smem constant byte address 0x4 - core index']
  #allocation1 [shape = 'u32[144,128]{1,0:T(1,128)}', space=vmem, size = 0x12000, scoped, tag = 'internal scratch']
  #allocation2 [shape = 'f32[2,18,18,32]{3,2,1,0:T(8,128)}', space=vmem, size = 0x6c000, scoped, tag = 'scratch operand']
  #allocation3 [shape = 'f32[2,18,18,64]{3,2,1,0:T(8,128)}', space=vmem, size = 0x6c000, scoped, tag = 'scratch operand']
  %s0 = inlined_call_operand.vmem [shape: f32[512,32], index: 0, kind: input, shape index: {}]
  %s1 = inlined_call_operand.vmem [shape: f32[32,32], index: 1, kind: input, shape index: {}]
  %s2 = inlined_call_operand.vmem [shape: f32[1,32], index: 2, kind: input, shape index: {}]
  %s3 = inlined_call_operand.vmem [shape: f32[288,64], index: 3, kind: input, shape index: {}]
  %s4 = inlined_call_operand.vmem [shape: f32[1,64], index: 4, kind: input, shape index: {}]
  %s5 = inlined_call_operand.vmem [shape: f32[576,64], index: 5, kind: input, shape index: {}]
  %s6 = inlined_call_operand.vmem [shape: f32[1,64], index: 6, kind: input, shape index: {}]
  %s7 = inlined_call_operand.vmem [shape: f32[64,128], index: 7, kind: input, shape index: {}]
  %s8 = inlined_call_operand.vmem [shape: f32[1,128], index: 8, kind: input, shape index: {}]
  %s9 = inlined_call_operand.hbm [shape: f32[2,8,256], index: 9, kind: output, shape index: {}]
  %s10 = sld [smem:[#allocation0]]
  $region46: #{tpu_custom_call.1} parent=0
    _
  %s12 = ssub.s32 1, %s10
  %s13 = scalar_select 0, %s12, %s10
  $region1: #{tpu_custom_call.1} parent=0
    #allocation4 [shape = 'u8[16384]{0}', space=vmem, size = 0x4000, scoped, tag = 'output window, operand 0, single buffered']
    #allocation5 [shape = 's32[1]{0}', space=sflag, size = 0x4, scoped, tag = 'scoped memory for tpu_custom_call.1']
    %14 = vsyncpa [#allocation5], 0
    // Predicated region
    $region2: #{tpu_custom_call.1} parent=1 // pred_check
      _
    $region3: #{tpu_custom_call.1} parent=1 // pred_check_branch
      %16 = sbr.rel (0) target = $region5
    $region4: #{tpu_custom_call.1} parent=1 // pred_region
      _
    $region5: #{tpu_custom_call.1} parent=1 // pred_fallthru
      _
    // Predicated region
    $region6: #{tpu_custom_call.1} parent=1 // pred_check
      _
    $region7: #{tpu_custom_call.1} parent=1 // pred_check_branch
      %18 = sbr.rel (0) target = $region9
    $region8: #{tpu_custom_call.1} parent=1 // pred_region
      _
    $region9: #{tpu_custom_call.1} parent=1 // pred_fallthru
      _
    // Predicated region
    $region10: #{tpu_custom_call.1} parent=1 // pred_check
      _
    $region11: #{tpu_custom_call.1} parent=1 // pred_check_branch
      %20 = sbr.rel (0) target = $region13
    $region12: #{tpu_custom_call.1} parent=1 // pred_region
      _
    $region13: #{tpu_custom_call.1} parent=1 // pred_fallthru
      _
    // Predicated region
    $region14: #{tpu_custom_call.1} parent=1 // pred_check
      _
    $region15: #{tpu_custom_call.1} parent=1 // pred_check_branch
      %22 = sbr.rel (0) target = $region17
    $region16: #{tpu_custom_call.1} parent=1 // pred_region
      _
    $region17: #{tpu_custom_call.1} parent=1 // pred_fallthru
      _
    // Predicated region
    $region18: #{tpu_custom_call.1} parent=1 // pred_check
      _
    $region19: #{tpu_custom_call.1} parent=1 // pred_check_branch
      %24 = sbr.rel (0) target = $region21
    $region20: #{tpu_custom_call.1} parent=1 // pred_region
      _
    $region21: #{tpu_custom_call.1} parent=1 // pred_fallthru
      _
    // Predicated region
    $region22: #{tpu_custom_call.1} parent=1 // pred_check
      _
    $region23: #{tpu_custom_call.1} parent=1 // pred_check_branch
      %26 = sbr.rel (0) target = $region25
    $region24: #{tpu_custom_call.1} parent=1 // pred_region
      _
    $region25: #{tpu_custom_call.1} parent=1 // pred_fallthru
      _
    // Predicated region
    $region26: #{tpu_custom_call.1} parent=1 // pred_check
      _
    $region27: #{tpu_custom_call.1} parent=1 // pred_check_branch
      %28 = sbr.rel (0) target = $region29
    $region28: #{tpu_custom_call.1} parent=1 // pred_region
      _
    $region29: #{tpu_custom_call.1} parent=1 // pred_fallthru
      _
    // Predicated region
    $region30: #{tpu_custom_call.1} parent=1 // pred_check
      _
    $region31: #{tpu_custom_call.1} parent=1 // pred_check_branch
      %30 = sbr.rel (0) target = $region33
    $region32: #{tpu_custom_call.1} parent=1 // pred_region
      _
    $region33: #{tpu_custom_call.1} parent=1 // pred_fallthru
      _
    // Predicated region
    $region34: #{tpu_custom_call.1} parent=1 // pred_check
      _
    $region35: #{tpu_custom_call.1} parent=1 // pred_check_branch
      %32 = sbr.rel (0) target = $region37
    $region36: #{tpu_custom_call.1} parent=1 // pred_region
      _
    $region37: #{tpu_custom_call.1} parent=1 // pred_fallthru
      _
    %vm33 = vcmask 261120
    %34 = vst.msk [vmem:[#allocation2] sm:$0xff] %vm33, 0.0
    %35 = vst.msk [vmem:[#allocation2 + $0x8] sm:$0xff] %vm33, 0.0
    %vm36 = vcmask 254976
    %37 = vst.msk [vmem:[#allocation2 + $0x10] sm:$0x3] %vm36, 0.0
    %38 = vst.msk [vmem:[#allocation2 + $0x18] sm:$0xff] %vm33, 0.0
    %39 = vst.msk [vmem:[#allocation2 + $0x20] sm:$0xff] %vm33, 0.0
    %40 = vst.msk [vmem:[#allocation2 + $0x28] sm:$0x3] %vm36, 0.0
    %41 = vst.msk [vmem:[#allocation2 + $0x30] sm:$0xff] %vm33, 0.0
    %42 = vst.msk [vmem:[#allocation2 + $0x38] sm:$0xff] %vm33, 0.0
    %43 = vst.msk [vmem:[#allocation2 + $0x40] sm:$0x3] %vm36, 0.0
    %44 = vst.msk [vmem:[#allocation2 + $0x48] sm:$0xff] %vm33, 0.0
    %45 = vst.msk [vmem:[#allocation2 + $0x50] sm:$0xff] %vm33, 0.0
    %46 = vst.msk [vmem:[#allocation2 + $0x58] sm:$0x3] %vm36, 0.0
    %47 = vst.msk [vmem:[#allocation2 + $0x60] sm:$0xff] %vm33, 0.0
    %48 = vst.msk [vmem:[#allocation2 + $0x68] sm:$0xff] %vm33, 0.0
    %49 = vst.msk [vmem:[#allocation2 + $0x70] sm:$0x3] %vm36, 0.0
    %50 = vst.msk [vmem:[#allocation2 + $0x78] sm:$0xff] %vm33, 0.0
    %51 = vst.msk [vmem:[#allocation2 + $0x80] sm:$0xff] %vm33, 0.0
    %52 = vst.msk [vmem:[#allocation2 + $0x88] sm:$0x3] %vm36, 0.0
    %53 = vst.msk [vmem:[#allocation2 + $0x90] sm:$0xff] %vm33, 0.0
    %54 = vst.msk [vmem:[#allocation2 + $0x98] sm:$0xff] %vm33, 0.0
    %55 = vst.msk [vmem:[#allocation2 + $0xa0] sm:$0x3] %vm36, 0.0
    %56 = vst.msk [vmem:[#allocation2 + $0xa8] sm:$0xff] %vm33, 0.0
    %57 = vst.msk [vmem:[#allocation2 + $0xb0] sm:$0xff] %vm33, 0.0
    %58 = vst.msk [vmem:[#allocation2 + $0xb8] sm:$0x3] %vm36, 0.0
    %59 = vst.msk [vmem:[#allocation2 + $0xc0] sm:$0xff] %vm33, 0.0
    %60 = vst.msk [vmem:[#allocation2 + $0xc8] sm:$0xff] %vm33, 0.0
    %61 = vst.msk [vmem:[#allocation2 + $0xd0] sm:$0x3] %vm36, 0.0
    %62 = vst.msk [vmem:[#allocation2 + $0xd8] sm:$0xff] %vm33, 0.0
    %63 = vst.msk [vmem:[#allocation2 + $0xe0] sm:$0xff] %vm33, 0.0
    %64 = vst.msk [vmem:[#allocation2 + $0xe8] sm:$0x3] %vm36, 0.0
    %65 = vst.msk [vmem:[#allocation2 + $0xf0] sm:$0xff] %vm33, 0.0
    %66 = vst.msk [vmem:[#allocation2 + $0xf8] sm:$0xff] %vm33, 0.0
    %67 = vst.msk [vmem:[#allocation2 + $0x100] sm:$0x3] %vm36, 0.0
    %68 = vst.msk [vmem:[#allocation2 + $0x108] sm:$0xff] %vm33, 0.0
    %69 = vst.msk [vmem:[#allocation2 + $0x110] sm:$0xff] %vm33, 0.0
    %70 = vst.msk [vmem:[#allocation2 + $0x118] sm:$0x3] %vm36, 0.0
    %71 = vst.msk [vmem:[#allocation2 + $0x120] sm:$0xff] %vm33, 0.0
    %72 = vst.msk [vmem:[#allocation2 + $0x128] sm:$0xff] %vm33, 0.0
    %73 = vst.msk [vmem:[#allocation2 + $0x130] sm:$0x3] %vm36, 0.0
    %74 = vst.msk [vmem:[#allocation2 + $0x138] sm:$0xff] %vm33, 0.0
    %75 = vst.msk [vmem:[#allocation2 + $0x140] sm:$0xff] %vm33, 0.0
    %76 = vst.msk [vmem:[#allocation2 + $0x148] sm:$0x3] %vm36, 0.0
    %77 = vst.msk [vmem:[#allocation2 + $0x150] sm:$0xff] %vm33, 0.0
    %78 = vst.msk [vmem:[#allocation2 + $0x158] sm:$0xff] %vm33, 0.0
    %79 = vst.msk [vmem:[#allocation2 + $0x160] sm:$0x3] %vm36, 0.0
    %80 = vst.msk [vmem:[#allocation2 + $0x168] sm:$0xff] %vm33, 0.0
    %81 = vst.msk [vmem:[#allocation2 + $0x170] sm:$0xff] %vm33, 0.0
    %82 = vst.msk [vmem:[#allocation2 + $0x178] sm:$0x3] %vm36, 0.0
    %83 = vst.msk [vmem:[#allocation2 + $0x180] sm:$0xff] %vm33, 0.0
    %84 = vst.msk [vmem:[#allocation2 + $0x188] sm:$0xff] %vm33, 0.0
    %85 = vst.msk [vmem:[#allocation2 + $0x190] sm:$0x3] %vm36, 0.0
    %86 = vst.msk [vmem:[#allocation2 + $0x198] sm:$0xff] %vm33, 0.0
    %87 = vst.msk [vmem:[#allocation2 + $0x1a0] sm:$0xff] %vm33, 0.0
    %88 = vst.msk [vmem:[#allocation2 + $0x1a8] sm:$0x3] %vm36, 0.0
    %89 = vst.msk [vmem:[#allocation2 + $0x1b0] sm:$0xff] %vm33, 0.0
    %90 = vst.msk [vmem:[#allocation2 + $0x1b8] sm:$0xff] %vm33, 0.0
    %91 = vst.msk [vmem:[#allocation2 + $0x1c0] sm:$0x3] %vm36, 0.0
    %92 = vst.msk [vmem:[#allocation2 + $0x1c8] sm:$0xff] %vm33, 0.0
    %93 = vst.msk [vmem:[#allocation2 + $0x1d0] sm:$0xff] %vm33, 0.0
    %94 = vst.msk [vmem:[#allocation2 + $0x1d8] sm:$0x3] %vm36, 0.0
    %95 = vst.msk [vmem:[#allocation2 + $0x1e0] sm:$0xff] %vm33, 0.0
    %96 = vst.msk [vmem:[#allocation2 + $0x1e8] sm:$0xff] %vm33, 0.0
    %97 = vst.msk [vmem:[#allocation2 + $0x1f0] sm:$0x3] %vm36, 0.0
    %98 = vst.msk [vmem:[#allocation2 + $0x1f8] sm:$0xff] %vm33, 0.0
    %99 = vst.msk [vmem:[#allocation2 + $0x200] sm:$0xff] %vm33, 0.0
    %100 = vst.msk [vmem:[#allocation2 + $0x208] sm:$0x3] %vm36, 0.0
    %101 = vst.msk [vmem:[#allocation2 + $0x210] sm:$0xff] %vm33, 0.0
    %102 = vst.msk [vmem:[#allocation2 + $0x218] sm:$0xff] %vm33, 0.0
    %103 = vst.msk [vmem:[#allocation2 + $0x220] sm:$0x3] %vm36, 0.0
    %104 = vst.msk [vmem:[#allocation2 + $0x228] sm:$0xff] %vm33, 0.0
    %105 = vst.msk [vmem:[#allocation2 + $0x230] sm:$0xff] %vm33, 0.0
    %106 = vst.msk [vmem:[#allocation2 + $0x238] sm:$0x3] %vm36, 0.0
    %107 = vst.msk [vmem:[#allocation2 + $0x240] sm:$0xff] %vm33, 0.0
    %108 = vst.msk [vmem:[#allocation2 + $0x248] sm:$0xff] %vm33, 0.0
    %109 = vst.msk [vmem:[#allocation2 + $0x250] sm:$0x3] %vm36, 0.0
    %110 = vst.msk [vmem:[#allocation2 + $0x258] sm:$0xff] %vm33, 0.0
    %111 = vst.msk [vmem:[#allocation2 + $0x260] sm:$0xff] %vm33, 0.0
    %112 = vst.msk [vmem:[#allocation2 + $0x268] sm:$0x3] %vm36, 0.0
    %113 = vst.msk [vmem:[#allocation2 + $0x270] sm:$0xff] %vm33, 0.0
    %114 = vst.msk [vmem:[#allocation2 + $0x278] sm:$0xff] %vm33, 0.0
    %115 = vst.msk [vmem:[#allocation2 + $0x280] sm:$0x3] %vm36, 0.0
    %116 = vst.msk [vmem:[#allocation2 + $0x288] sm:$0xff] %vm33, 0.0
    %117 = vst.msk [vmem:[#allocation2 + $0x290] sm:$0xff] %vm33, 0.0
    %118 = vst.msk [vmem:[#allocation2 + $0x298] sm:$0x3] %vm36, 0.0
    %119 = vst.msk [vmem:[#allocation2 + $0x2a0] sm:$0xff] %vm33, 0.0
    %120 = vst.msk [vmem:[#allocation2 + $0x2a8] sm:$0xff] %vm33, 0.0
    %121 = vst.msk [vmem:[#allocation2 + $0x2b0] sm:$0x3] %vm36, 0.0
    %122 = vst.msk [vmem:[#allocation2 + $0x2b8] sm:$0xff] %vm33, 0.0
    %123 = vst.msk [vmem:[#allocation2 + $0x2c0] sm:$0xff] %vm33, 0.0
    %124 = vst.msk [vmem:[#allocation2 + $0x2c8] sm:$0x3] %vm36, 0.0
    %125 = vst.msk [vmem:[#allocation2 + $0x2d0] sm:$0xff] %vm33, 0.0
    %126 = vst.msk [vmem:[#allocation2 + $0x2d8] sm:$0xff] %vm33, 0.0
    %127 = vst.msk [vmem:[#allocation2 + $0x2e0] sm:$0x3] %vm36, 0.0
    %128 = vst.msk [vmem:[#allocation2 + $0x2e8] sm:$0xff] %vm33, 0.0
    %129 = vst.msk [vmem:[#allocation2 + $0x2f0] sm:$0xff] %vm33, 0.0
    %130 = vst.msk [vmem:[#allocation2 + $0x2f8] sm:$0x3] %vm36, 0.0
    %131 = vst.msk [vmem:[#allocation2 + $0x300] sm:$0xff] %vm33, 0.0
    %132 = vst.msk [vmem:[#allocation2 + $0x308] sm:$0xff] %vm33, 0.0
    %133 = vst.msk [vmem:[#allocation2 + $0x310] sm:$0x3] %vm36, 0.0
    %134 = vst.msk [vmem:[#allocation2 + $0x318] sm:$0xff] %vm33, 0.0
    %135 = vst.msk [vmem:[#allocation2 + $0x320] sm:$0xff] %vm33, 0.0
    %136 = vst.msk [vmem:[#allocation2 + $0x328] sm:$0x3] %vm36, 0.0
    %137 = vst.msk [vmem:[#allocation2 + $0x330] sm:$0xff] %vm33, 0.0
    %138 = vst.msk [vmem:[#allocation2 + $0x338] sm:$0xff] %vm33, 0.0
    %139 = vst.msk [vmem:[#allocation2 + $0x340] sm:$0x3] %vm36, 0.0
    %140 = vst.msk [vmem:[#allocation2 + $0x348] sm:$0xff] %vm33, 0.0
    %141 = vst.msk [vmem:[#allocation2 + $0x350] sm:$0xff] %vm33, 0.0
    %142 = vst.msk [vmem:[#allocation2 + $0x358] sm:$0x3] %vm36, 0.0
    %vm143 = vcmask 523264
    %144 = vst.msk [vmem:[#allocation3] sm:$0xff] %vm143, 0.0
    %145 = vst.msk [vmem:[#allocation3 + $0x8] sm:$0xff] %vm143, 0.0
    %vm146 = vcmask 517120
    %147 = vst.msk [vmem:[#allocation3 + $0x10] sm:$0x3] %vm146, 0.0
    %148 = vst.msk [vmem:[#allocation3 + $0x18] sm:$0xff] %vm143, 0.0
    %149 = vst.msk [vmem:[#allocation3 + $0x20] sm:$0xff] %vm143, 0.0
    %150 = vst.msk [vmem:[#allocation3 + $0x28] sm:$0x3] %vm146, 0.0
    %151 = vst.msk [vmem:[#allocation3 + $0x30] sm:$0xff] %vm143, 0.0
    %152 = vst.msk [vmem:[#allocation3 + $0x38] sm:$0xff] %vm143, 0.0
    %153 = vst.msk [vmem:[#allocation3 + $0x40] sm:$0x3] %vm146, 0.0
    %154 = vst.msk [vmem:[#allocation3 + $0x48] sm:$0xff] %vm143, 0.0
    %155 = vst.msk [vmem:[#allocation3 + $0x50] sm:$0xff] %vm143, 0.0
    %156 = vst.msk [vmem:[#allocation3 + $0x58] sm:$0x3] %vm146, 0.0
    %157 = vst.msk [vmem:[#allocation3 + $0x60] sm:$0xff] %vm143, 0.0
    %158 = vst.msk [vmem:[#allocation3 + $0x68] sm:$0xff] %vm143, 0.0
    %159 = vst.msk [vmem:[#allocation3 + $0x70] sm:$0x3] %vm146, 0.0
    %160 = vst.msk [vmem:[#allocation3 + $0x78] sm:$0xff] %vm143, 0.0
    %161 = vst.msk [vmem:[#allocation3 + $0x80] sm:$0xff] %vm143, 0.0
    %162 = vst.msk [vmem:[#allocation3 + $0x88] sm:$0x3] %vm146, 0.0
    %163 = vst.msk [vmem:[#allocation3 + $0x90] sm:$0xff] %vm143, 0.0
    %164 = vst.msk [vmem:[#allocation3 + $0x98] sm:$0xff] %vm143, 0.0
    %165 = vst.msk [vmem:[#allocation3 + $0xa0] sm:$0x3] %vm146, 0.0
    %166 = vst.msk [vmem:[#allocation3 + $0xa8] sm:$0xff] %vm143, 0.0
    %167 = vst.msk [vmem:[#allocation3 + $0xb0] sm:$0xff] %vm143, 0.0
    %168 = vst.msk [vmem:[#allocation3 + $0xb8] sm:$0x3] %vm146, 0.0
    %169 = vst.msk [vmem:[#allocation3 + $0xc0] sm:$0xff] %vm143, 0.0
    %170 = vst.msk [vmem:[#allocation3 + $0xc8] sm:$0xff] %vm143, 0.0
    %171 = vst.msk [vmem:[#allocation3 + $0xd0] sm:$0x3] %vm146, 0.0
    %172 = vst.msk [vmem:[#allocation3 + $0xd8] sm:$0xff] %vm143, 0.0
    %173 = vst.msk [vmem:[#allocation3 + $0xe0] sm:$0xff] %vm143, 0.0
    %174 = vst.msk [vmem:[#allocation3 + $0xe8] sm:$0x3] %vm146, 0.0
    %175 = vst.msk [vmem:[#allocation3 + $0xf0] sm:$0xff] %vm143, 0.0
    %176 = vst.msk [vmem:[#allocation3 + $0xf8] sm:$0xff] %vm143, 0.0
    %177 = vst.msk [vmem:[#allocation3 + $0x100] sm:$0x3] %vm146, 0.0
    %178 = vst.msk [vmem:[#allocation3 + $0x108] sm:$0xff] %vm143, 0.0
    %179 = vst.msk [vmem:[#allocation3 + $0x110] sm:$0xff] %vm143, 0.0
    %180 = vst.msk [vmem:[#allocation3 + $0x118] sm:$0x3] %vm146, 0.0
    %181 = vst.msk [vmem:[#allocation3 + $0x120] sm:$0xff] %vm143, 0.0
    %182 = vst.msk [vmem:[#allocation3 + $0x128] sm:$0xff] %vm143, 0.0
    %183 = vst.msk [vmem:[#allocation3 + $0x130] sm:$0x3] %vm146, 0.0
    %184 = vst.msk [vmem:[#allocation3 + $0x138] sm:$0xff] %vm143, 0.0
    %185 = vst.msk [vmem:[#allocation3 + $0x140] sm:$0xff] %vm143, 0.0
    %186 = vst.msk [vmem:[#allocation3 + $0x148] sm:$0x3] %vm146, 0.0
    %187 = vst.msk [vmem:[#allocation3 + $0x150] sm:$0xff] %vm143, 0.0
    %188 = vst.msk [vmem:[#allocation3 + $0x158] sm:$0xff] %vm143, 0.0
    %189 = vst.msk [vmem:[#allocation3 + $0x160] sm:$0x3] %vm146, 0.0
    %190 = vst.msk [vmem:[#allocation3 + $0x168] sm:$0xff] %vm143, 0.0
    %191 = vst.msk [vmem:[#allocation3 + $0x170] sm:$0xff] %vm143, 0.0
    %192 = vst.msk [vmem:[#allocation3 + $0x178] sm:$0x3] %vm146, 0.0
    %193 = vst.msk [vmem:[#allocation3 + $0x180] sm:$0xff] %vm143, 0.0
    %194 = vst.msk [vmem:[#allocation3 + $0x188] sm:$0xff] %vm143, 0.0
    %195 = vst.msk [vmem:[#allocation3 + $0x190] sm:$0x3] %vm146, 0.0
    %196 = vst.msk [vmem:[#allocation3 + $0x198] sm:$0xff] %vm143, 0.0
    %197 = vst.msk [vmem:[#allocation3 + $0x1a0] sm:$0xff] %vm143, 0.0
    %198 = vst.msk [vmem:[#allocation3 + $0x1a8] sm:$0x3] %vm146, 0.0
    %199 = vst.msk [vmem:[#allocation3 + $0x1b0] sm:$0xff] %vm143, 0.0
    %200 = vst.msk [vmem:[#allocation3 + $0x1b8] sm:$0xff] %vm143, 0.0
    %201 = vst.msk [vmem:[#allocation3 + $0x1c0] sm:$0x3] %vm146, 0.0
    %202 = vst.msk [vmem:[#allocation3 + $0x1c8] sm:$0xff] %vm143, 0.0
    %203 = vst.msk [vmem:[#allocation3 + $0x1d0] sm:$0xff] %vm143, 0.0
    %204 = vst.msk [vmem:[#allocation3 + $0x1d8] sm:$0x3] %vm146, 0.0
    %205 = vst.msk [vmem:[#allocation3 + $0x1e0] sm:$0xff] %vm143, 0.0
    %206 = vst.msk [vmem:[#allocation3 + $0x1e8] sm:$0xff] %vm143, 0.0
    %207 = vst.msk [vmem:[#allocation3 + $0x1f0] sm:$0x3] %vm146, 0.0
    %208 = vst.msk [vmem:[#allocation3 + $0x1f8] sm:$0xff] %vm143, 0.0
    %209 = vst.msk [vmem:[#allocation3 + $0x200] sm:$0xff] %vm143, 0.0
    %210 = vst.msk [vmem:[#allocation3 + $0x208] sm:$0x3] %vm146, 0.0
    %211 = vst.msk [vmem:[#allocation3 + $0x210] sm:$0xff] %vm143, 0.0
    %212 = vst.msk [vmem:[#allocation3 + $0x218] sm:$0xff] %vm143, 0.0
    %213 = vst.msk [vmem:[#allocation3 + $0x220] sm:$0x3] %vm146, 0.0
    %214 = vst.msk [vmem:[#allocation3 + $0x228] sm:$0xff] %vm143, 0.0
    %215 = vst.msk [vmem:[#allocation3 + $0x230] sm:$0xff] %vm143, 0.0
    %216 = vst.msk [vmem:[#allocation3 + $0x238] sm:$0x3] %vm146, 0.0
    %217 = vst.msk [vmem:[#allocation3 + $0x240] sm:$0xff] %vm143, 0.0
    %218 = vst.msk [vmem:[#allocation3 + $0x248] sm:$0xff] %vm143, 0.0
    %219 = vst.msk [vmem:[#allocation3 + $0x250] sm:$0x3] %vm146, 0.0
    %220 = vst.msk [vmem:[#allocation3 + $0x258] sm:$0xff] %vm143, 0.0
    %221 = vst.msk [vmem:[#allocation3 + $0x260] sm:$0xff] %vm143, 0.0
    %222 = vst.msk [vmem:[#allocation3 + $0x268] sm:$0x3] %vm146, 0.0
    %223 = vst.msk [vmem:[#allocation3 + $0x270] sm:$0xff] %vm143, 0.0
    %224 = vst.msk [vmem:[#allocation3 + $0x278] sm:$0xff] %vm143, 0.0
    %225 = vst.msk [vmem:[#allocation3 + $0x280] sm:$0x3] %vm146, 0.0
    %226 = vst.msk [vmem:[#allocation3 + $0x288] sm:$0xff] %vm143, 0.0
    %227 = vst.msk [vmem:[#allocation3 + $0x290] sm:$0xff] %vm143, 0.0
    %228 = vst.msk [vmem:[#allocation3 + $0x298] sm:$0x3] %vm146, 0.0
    %229 = vst.msk [vmem:[#allocation3 + $0x2a0] sm:$0xff] %vm143, 0.0
    %230 = vst.msk [vmem:[#allocation3 + $0x2a8] sm:$0xff] %vm143, 0.0
    %231 = vst.msk [vmem:[#allocation3 + $0x2b0] sm:$0x3] %vm146, 0.0
    %232 = vst.msk [vmem:[#allocation3 + $0x2b8] sm:$0xff] %vm143, 0.0
    %233 = vst.msk [vmem:[#allocation3 + $0x2c0] sm:$0xff] %vm143, 0.0
    %234 = vst.msk [vmem:[#allocation3 + $0x2c8] sm:$0x3] %vm146, 0.0
    %235 = vst.msk [vmem:[#allocation3 + $0x2d0] sm:$0xff] %vm143, 0.0
    %236 = vst.msk [vmem:[#allocation3 + $0x2d8] sm:$0xff] %vm143, 0.0
    %237 = vst.msk [vmem:[#allocation3 + $0x2e0] sm:$0x3] %vm146, 0.0
    %238 = vst.msk [vmem:[#allocation3 + $0x2e8] sm:$0xff] %vm143, 0.0
    %239 = vst.msk [vmem:[#allocation3 + $0x2f0] sm:$0xff] %vm143, 0.0
    %240 = vst.msk [vmem:[#allocation3 + $0x2f8] sm:$0x3] %vm146, 0.0
    %241 = vst.msk [vmem:[#allocation3 + $0x300] sm:$0xff] %vm143, 0.0
    %242 = vst.msk [vmem:[#allocation3 + $0x308] sm:$0xff] %vm143, 0.0
    %243 = vst.msk [vmem:[#allocation3 + $0x310] sm:$0x3] %vm146, 0.0
    %244 = vst.msk [vmem:[#allocation3 + $0x318] sm:$0xff] %vm143, 0.0
    %245 = vst.msk [vmem:[#allocation3 + $0x320] sm:$0xff] %vm143, 0.0
    %246 = vst.msk [vmem:[#allocation3 + $0x328] sm:$0x3] %vm146, 0.0
    %247 = vst.msk [vmem:[#allocation3 + $0x330] sm:$0xff] %vm143, 0.0
    %248 = vst.msk [vmem:[#allocation3 + $0x338] sm:$0xff] %vm143, 0.0
    %249 = vst.msk [vmem:[#allocation3 + $0x340] sm:$0x3] %vm146, 0.0
    %250 = vst.msk [vmem:[#allocation3 + $0x348] sm:$0xff] %vm143, 0.0
    %251 = vst.msk [vmem:[#allocation3 + $0x350] sm:$0xff] %vm143, 0.0
    %252 = vst.msk [vmem:[#allocation3 + $0x358] sm:$0x3] %vm146, 0.0
    %v253 = vld [vmem:[%s0] sm:$0xff]
    %v254 = vld [vmem:[%s0 + $0x8] sm:$0xff]
    %v255 = vld [vmem:[%s0 + $0x10] sm:$0xff]
    %v256 = vld [vmem:[%s0 + $0x18] sm:$0xff]
    %v257 = vld [vmem:[%s0 + $0x20] sm:$0xff]
    %v258 = vld [vmem:[%s0 + $0x28] sm:$0xff]
    %v259 = vld [vmem:[%s0 + $0x30] sm:$0xff]
    %v260 = vld [vmem:[%s0 + $0x38] sm:$0xff]
    %v261 = vld [vmem:[%s0 + $0x40] sm:$0xff]
    %v262 = vld [vmem:[%s0 + $0x48] sm:$0xff]
    %v263 = vld [vmem:[%s0 + $0x50] sm:$0xff]
    %v264 = vld [vmem:[%s0 + $0x58] sm:$0xff]
    %v265 = vld [vmem:[%s0 + $0x60] sm:$0xff]
    %v266 = vld [vmem:[%s0 + $0x68] sm:$0xff]
    %v267 = vld [vmem:[%s0 + $0x70] sm:$0xff]
    %v268 = vld [vmem:[%s0 + $0x78] sm:$0xff]
    %v269 = vld [vmem:[%s0 + $0x80] sm:$0xff]
    %v270 = vld [vmem:[%s0 + $0x88] sm:$0xff]
    %v271 = vld [vmem:[%s0 + $0x90] sm:$0xff]
    %v272 = vld [vmem:[%s0 + $0x98] sm:$0xff]
    %v273 = vld [vmem:[%s0 + $0xa0] sm:$0xff]
    %v274 = vld [vmem:[%s0 + $0xa8] sm:$0xff]
    %v275 = vld [vmem:[%s0 + $0xb0] sm:$0xff]
    %v276 = vld [vmem:[%s0 + $0xb8] sm:$0xff]
    %v277 = vld [vmem:[%s0 + $0xc0] sm:$0xff]
    %v278 = vld [vmem:[%s0 + $0xc8] sm:$0xff]
    %v279 = vld [vmem:[%s0 + $0xd0] sm:$0xff]
    %v280 = vld [vmem:[%s0 + $0xd8] sm:$0xff]
    %v281 = vld [vmem:[%s0 + $0xe0] sm:$0xff]
    %v282 = vld [vmem:[%s0 + $0xe8] sm:$0xff]
    %v283 = vld [vmem:[%s0 + $0xf0] sm:$0xff]
    %v284 = vld [vmem:[%s0 + $0xf8] sm:$0xff]
    %v285 = vld [vmem:[%s0 + $0x100] sm:$0xff]
    %v286 = vld [vmem:[%s0 + $0x108] sm:$0xff]
    %v287 = vld [vmem:[%s0 + $0x110] sm:$0xff]
    %v288 = vld [vmem:[%s0 + $0x118] sm:$0xff]
    %v289 = vld [vmem:[%s0 + $0x120] sm:$0xff]
    %v290 = vld [vmem:[%s0 + $0x128] sm:$0xff]
    %v291 = vld [vmem:[%s0 + $0x130] sm:$0xff]
    %v292 = vld [vmem:[%s0 + $0x138] sm:$0xff]
    %v293 = vld [vmem:[%s0 + $0x140] sm:$0xff]
    %v294 = vld [vmem:[%s0 + $0x148] sm:$0xff]
    %v295 = vld [vmem:[%s0 + $0x150] sm:$0xff]
    %v296 = vld [vmem:[%s0 + $0x158] sm:$0xff]
    %v297 = vld [vmem:[%s0 + $0x160] sm:$0xff]
    %v298 = vld [vmem:[%s0 + $0x168] sm:$0xff]
    %v299 = vld [vmem:[%s0 + $0x170] sm:$0xff]
    %v300 = vld [vmem:[%s0 + $0x178] sm:$0xff]
    %v301 = vld [vmem:[%s0 + $0x180] sm:$0xff]
    %v302 = vld [vmem:[%s0 + $0x188] sm:$0xff]
    %v303 = vld [vmem:[%s0 + $0x190] sm:$0xff]
    %v304 = vld [vmem:[%s0 + $0x198] sm:$0xff]
    %v305 = vld [vmem:[%s0 + $0x1a0] sm:$0xff]
    %v306 = vld [vmem:[%s0 + $0x1a8] sm:$0xff]
    %v307 = vld [vmem:[%s0 + $0x1b0] sm:$0xff]
    %v308 = vld [vmem:[%s0 + $0x1b8] sm:$0xff]
    %v309 = vld [vmem:[%s0 + $0x1c0] sm:$0xff]
    %v310 = vld [vmem:[%s0 + $0x1c8] sm:$0xff]
    %v311 = vld [vmem:[%s0 + $0x1d0] sm:$0xff]
    %v312 = vld [vmem:[%s0 + $0x1d8] sm:$0xff]
    %v313 = vld [vmem:[%s0 + $0x1e0] sm:$0xff]
    %v314 = vld [vmem:[%s0 + $0x1e8] sm:$0xff]
    %v315 = vld [vmem:[%s0 + $0x1f0] sm:$0xff]
    %v316 = vld [vmem:[%s0 + $0x1f8] sm:$0xff]
    %v317 = vld [vmem:[%s1] sm:$0xff]
    %v318 = vld [vmem:[%s1 + $0x8] sm:$0xff]
    %v319 = vld [vmem:[%s1 + $0x10] sm:$0xff]
    %v320 = vld [vmem:[%s1 + $0x18] sm:$0xff]
    %v321 = vld [vmem:[%s2] sm:$0x1]
    %v323 = vlaneseq
    %v324 = vshrl.u32 %v323, 7
    %v325 = vsub.s32 0, %v324
    %v326 = vrot.slane %v321, %v325
    %v329 = vsel %vm33, %v253, 0
    %v332 = vsel %vm33, %v254, 0
    %v335 = vsel %vm33, %v255, 0
    %v338 = vsel %vm33, %v256, 0
    %v341 = vsel %vm33, %v257, 0
    %v344 = vsel %vm33, %v258, 0
    %v347 = vsel %vm33, %v259, 0
    %v350 = vsel %vm33, %v260, 0
    %v353 = vsel %vm33, %v261, 0
    %v356 = vsel %vm33, %v262, 0
    %v359 = vsel %vm33, %v263, 0
    %v362 = vsel %vm33, %v264, 0
    %v365 = vsel %vm33, %v265, 0
    %v368 = vsel %vm33, %v266, 0
    %v371 = vsel %vm33, %v267, 0
    %v374 = vsel %vm33, %v268, 0
    %v377 = vsel %vm33, %v269, 0
    %v380 = vsel %vm33, %v270, 0
    %v383 = vsel %vm33, %v271, 0
    %v386 = vsel %vm33, %v272, 0
    %v389 = vsel %vm33, %v273, 0
    %v392 = vsel %vm33, %v274, 0
    %v395 = vsel %vm33, %v275, 0
    %v398 = vsel %vm33, %v276, 0
    %v401 = vsel %vm33, %v277, 0
    %v404 = vsel %vm33, %v278, 0
    %v407 = vsel %vm33, %v279, 0
    %v410 = vsel %vm33, %v280, 0
    %v413 = vsel %vm33, %v281, 0
    %v416 = vsel %vm33, %v282, 0
    %v419 = vsel %vm33, %v283, 0
    %v422 = vsel %vm33, %v284, 0
    %v425 = vsel %vm33, %v285, 0
    %v428 = vsel %vm33, %v286, 0
    %v431 = vsel %vm33, %v287, 0
    %v434 = vsel %vm33, %v288, 0
    %v437 = vsel %vm33, %v289, 0
    %v440 = vsel %vm33, %v290, 0
    %v443 = vsel %vm33, %v291, 0
    %v446 = vsel %vm33, %v292, 0
    %v449 = vsel %vm33, %v293, 0
    %v452 = vsel %vm33, %v294, 0
    %v455 = vsel %vm33, %v295, 0
    %v458 = vsel %vm33, %v296, 0
    %v461 = vsel %vm33, %v297, 0
    %v464 = vsel %vm33, %v298, 0
    %v467 = vsel %vm33, %v299, 0
    %v470 = vsel %vm33, %v300, 0
    %v473 = vsel %vm33, %v301, 0
    %v476 = vsel %vm33, %v302, 0
    %v479 = vsel %vm33, %v303, 0
    %v482 = vsel %vm33, %v304, 0
    %v485 = vsel %vm33, %v305, 0
    %v488 = vsel %vm33, %v306, 0
    %v491 = vsel %vm33, %v307, 0
    %v494 = vsel %vm33, %v308, 0
    %v497 = vsel %vm33, %v309, 0
    %v500 = vsel %vm33, %v310, 0
    %v503 = vsel %vm33, %v311, 0
    %v506 = vsel %vm33, %v312, 0
    %v509 = vsel %vm33, %v313, 0
    %v512 = vsel %vm33, %v314, 0
    %v515 = vsel %vm33, %v315, 0
    %v518 = vsel %vm33, %v316, 0
    %520 = vmatprep.subr.mxu0 0.0
    %521 = vmatpush1.msra.mxu0 0.0
    %522 = vmatprep.subr.mxu0 0.0
    %523 = vmatpush1.msra.mxu0 0.0
    %524 = vmatprep.subr.mxu0 0.0
    %525 = vmatpush1.msra.mxu0 0.0
    %526 = vmatprep.subr.mxu0 0.0
    %527 = vmatpush1.msra.mxu0 0.0
    %528 = vmatprep.subr.mxu0 0.0
    %529 = vmatpush1.msra.mxu0 0.0
    %530 = vmatprep.subr.mxu0 0.0
    %531 = vmatpush1.msra.mxu0 0.0
    %532 = vmatprep.subr.mxu0 0.0
    %533 = vmatpush1.msra.mxu0 0.0
    %534 = vmatprep.subr.mxu0 0.0
    %535 = vmatpush1.msra.mxu0 0.0
    %536 = vmatprep.subr.mxu0 0.0
    %537 = vmatpush1.msra.mxu0 0.0
    %538 = vmatprep.subr.mxu0 0.0
    %539 = vmatpush1.msra.mxu0 0.0
    %540 = vmatprep.subr.mxu0 0.0
    %541 = vmatpush1.msra.mxu0 0.0
    %542 = vmatprep.subr.mxu0 0.0
    %543 = vmatpush1.msra.mxu0 0.0
    %544 = vmatprep.subr.mxu0 0.0
    %545 = vmatpush1.msra.mxu0 %v320
    %546 = vmatprep.subr.mxu0 0.0
    %547 = vmatpush1.msra.mxu0 %v319
    %548 = vmatprep.subr.mxu0 0.0
    %549 = vmatpush1.msra.mxu0 %v318
    %550 = vmatprep.subr.mxu0 0.0
    %551 = vmatpush1.msra.mxu0 %v317
    %552 = vmatprep.subr.mxu0 0.0
    %553 = vmatpush2.msra.mxu0 0.0
    %554 = vmatprep.subr.mxu0 0.0
    %555 = vmatpush2.msra.mxu0 0.0
    %556 = vmatprep.subr.mxu0 0.0
    %557 = vmatpush2.msra.mxu0 0.0
    %558 = vmatprep.subr.mxu0 0.0
    %559 = vmatpush2.msra.mxu0 0.0
    %560 = vmatprep.subr.mxu0 0.0
    %561 = vmatpush2.msra.mxu0 0.0
    %562 = vmatprep.subr.mxu0 0.0
    %563 = vmatpush2.msra.mxu0 0.0
    %564 = vmatprep.subr.mxu0 0.0
    %565 = vmatpush2.msra.mxu0 0.0
    %566 = vmatprep.subr.mxu0 0.0
    %567 = vmatpush2.msra.mxu0 0.0
    %568 = vmatprep.subr.mxu0 0.0
    %569 = vmatpush2.msra.mxu0 0.0
    %570 = vmatprep.subr.mxu0 0.0
    %571 = vmatpush2.msra.mxu0 0.0
    %572 = vmatprep.subr.mxu0 0.0
    %573 = vmatpush2.msra.mxu0 0.0
    %574 = vmatprep.subr.mxu0 0.0
    %575 = vmatpush2.msra.mxu0 0.0
    %576 = vmatprep.subr.mxu0 0.0
    %577 = vmatpush2.msra.mxu0 0.0
    %578 = vmatprep.subr.mxu0 0.0
    %579 = vmatpush2.msra.mxu0 0.0
    %580 = vmatprep.subr.mxu0 0.0
    %581 = vmatpush2.msra.mxu0 0.0
    %582 = vmatprep.subr.mxu0 0.0
    %583 = vmatpush2.msra.mxu0 0.0
    %584 = vmatprep.mubr.f32.mxu0 0.0
    %585 = vmatmul.mubr.f32.gmra.mxu0 %v329
    %v586 = vpop.f32.mrf.mxu0
    %v587 = vadd.f32 %v326, %v586
    %v588 = vpop.f32.mrf.mxu0
    %589 = vmatprep.mubr.f32.mxu0 0.0
    %590 = vmatmul.mubr.f32.gmra.mxu0 %v332
    %v591 = vpop.f32.mrf.mxu0
    %v592 = vadd.f32 %v326, %v591
    %v593 = vpop.f32.mrf.mxu0
    %594 = vmatprep.mubr.f32.mxu0 0.0
    %595 = vmatmul.mubr.f32.gmra.mxu0 %v335
    %v596 = vpop.f32.mrf.mxu0
    %v597 = vadd.f32 %v326, %v596
    %v598 = vpop.f32.mrf.mxu0
    %599 = vmatprep.mubr.f32.mxu0 0.0
    %600 = vmatmul.mubr.f32.gmra.mxu0 %v338
    %v601 = vpop.f32.mrf.mxu0
    %v602 = vadd.f32 %v326, %v601
    %v603 = vpop.f32.mrf.mxu0
    %604 = vmatprep.mubr.f32.mxu0 0.0
    %605 = vmatmul.mubr.f32.gmra.mxu0 %v341
    %v606 = vpop.f32.mrf.mxu0
    %v607 = vadd.f32 %v326, %v606
    %v608 = vpop.f32.mrf.mxu0
    %609 = vmatprep.mubr.f32.mxu0 0.0
    %610 = vmatmul.mubr.f32.gmra.mxu0 %v344
    %v611 = vpop.f32.mrf.mxu0
    %v612 = vadd.f32 %v326, %v611
    %v613 = vpop.f32.mrf.mxu0
    %614 = vmatprep.mubr.f32.mxu0 0.0
    %615 = vmatmul.mubr.f32.gmra.mxu0 %v347
    %v616 = vpop.f32.mrf.mxu0
    %v617 = vadd.f32 %v326, %v616
    %v618 = vpop.f32.mrf.mxu0
    %619 = vmatprep.mubr.f32.mxu0 0.0
    %620 = vmatmul.mubr.f32.gmra.mxu0 %v350
    %v621 = vpop.f32.mrf.mxu0
    %v622 = vadd.f32 %v326, %v621
    %v623 = vpop.f32.mrf.mxu0
    %624 = vmatprep.mubr.f32.mxu0 0.0
    %625 = vmatmul.mubr.f32.gmra.mxu0 %v353
    %v626 = vpop.f32.mrf.mxu0
    %v627 = vadd.f32 %v326, %v626
    %v628 = vpop.f32.mrf.mxu0
    %629 = vmatprep.mubr.f32.mxu0 0.0
    %630 = vmatmul.mubr.f32.gmra.mxu0 %v356
    %v631 = vpop.f32.mrf.mxu0
    %v632 = vadd.f32 %v326, %v631
    %v633 = vpop.f32.mrf.mxu0
    %634 = vmatprep.mubr.f32.mxu0 0.0
    %635 = vmatmul.mubr.f32.gmra.mxu0 %v359
    %v636 = vpop.f32.mrf.mxu0
    %v637 = vadd.f32 %v326, %v636
    %v638 = vpop.f32.mrf.mxu0
    %639 = vmatprep.mubr.f32.mxu0 0.0
    %640 = vmatmul.mubr.f32.gmra.mxu0 %v362
    %v641 = vpop.f32.mrf.mxu0
    %v642 = vadd.f32 %v326, %v641
    %v643 = vpop.f32.mrf.mxu0
    %644 = vmatprep.mubr.f32.mxu0 0.0
    %645 = vmatmul.mubr.f32.gmra.mxu0 %v365
    %v646 = vpop.f32.mrf.mxu0
    %v647 = vadd.f32 %v326, %v646
    %v648 = vpop.f32.mrf.mxu0
    %649 = vmatprep.mubr.f32.mxu0 0.0
    %650 = vmatmul.mubr.f32.gmra.mxu0 %v368
    %v651 = vpop.f32.mrf.mxu0
    %v652 = vadd.f32 %v326, %v651
    %v653 = vpop.f32.mrf.mxu0
    %654 = vmatprep.mubr.f32.mxu0 0.0
    %655 = vmatmul.mubr.f32.gmra.mxu0 %v371
    %v656 = vpop.f32.mrf.mxu0
    %v657 = vadd.f32 %v326, %v656
    %v658 = vpop.f32.mrf.mxu0
    %659 = vmatprep.mubr.f32.mxu0 0.0
    %660 = vmatmul.mubr.f32.gmra.mxu0 %v374
    %v661 = vpop.f32.mrf.mxu0
    %v662 = vadd.f32 %v326, %v661
    %v663 = vpop.f32.mrf.mxu0
    %664 = vmatprep.mubr.f32.mxu0 0.0
    %665 = vmatmul.mubr.f32.gmra.mxu0 %v377
    %v666 = vpop.f32.mrf.mxu0
    %v667 = vadd.f32 %v326, %v666
    %v668 = vpop.f32.mrf.mxu0
    %669 = vmatprep.mubr.f32.mxu0 0.0
    %670 = vmatmul.mubr.f32.gmra.mxu0 %v380
    %v671 = vpop.f32.mrf.mxu0
    %v672 = vadd.f32 %v326, %v671
    %v673 = vpop.f32.mrf.mxu0
    %674 = vmatprep.mubr.f32.mxu0 0.0
    %675 = vmatmul.mubr.f32.gmra.mxu0 %v383
    %v676 = vpop.f32.mrf.mxu0
    %v677 = vadd.f32 %v326, %v676
    %v678 = vpop.f32.mrf.mxu0
    %679 = vmatprep.mubr.f32.mxu0 0.0
    %680 = vmatmul.mubr.f32.gmra.mxu0 %v386
    %v681 = vpop.f32.mrf.mxu0
    %v682 = vadd.f32 %v326, %v681
    %v683 = vpop.f32.mrf.mxu0
    %684 = vmatprep.mubr.f32.mxu0 0.0
    %685 = vmatmul.mubr.f32.gmra.mxu0 %v389
    %v686 = vpop.f32.mrf.mxu0
    %v687 = vadd.f32 %v326, %v686
    %v688 = vpop.f32.mrf.mxu0
    %689 = vmatprep.mubr.f32.mxu0 0.0
    %690 = vmatmul.mubr.f32.gmra.mxu0 %v392
    %v691 = vpop.f32.mrf.mxu0
    %v692 = vadd.f32 %v326, %v691
    %v693 = vpop.f32.mrf.mxu0
    %694 = vmatprep.mubr.f32.mxu0 0.0
    %695 = vmatmul.mubr.f32.gmra.mxu0 %v395
    %v696 = vpop.f32.mrf.mxu0
    %v697 = vadd.f32 %v326, %v696
    %v698 = vpop.f32.mrf.mxu0
    %699 = vmatprep.mubr.f32.mxu0 0.0
    %700 = vmatmul.mubr.f32.gmra.mxu0 %v398
    %v701 = vpop.f32.mrf.mxu0
    %v702 = vadd.f32 %v326, %v701
    %v703 = vpop.f32.mrf.mxu0
    %704 = vmatprep.mubr.f32.mxu0 0.0
    %705 = vmatmul.mubr.f32.gmra.mxu0 %v401
    %v706 = vpop.f32.mrf.mxu0
    %v707 = vadd.f32 %v326, %v706
    %v708 = vpop.f32.mrf.mxu0
    %709 = vmatprep.mubr.f32.mxu0 0.0
    %710 = vmatmul.mubr.f32.gmra.mxu0 %v404
    %v711 = vpop.f32.mrf.mxu0
    %v712 = vadd.f32 %v326, %v711
    %v713 = vpop.f32.mrf.mxu0
    %714 = vmatprep.mubr.f32.mxu0 0.0
    %715 = vmatmul.mubr.f32.gmra.mxu0 %v407
    %v716 = vpop.f32.mrf.mxu0
    %v717 = vadd.f32 %v326, %v716
    %v718 = vpop.f32.mrf.mxu0
    %719 = vmatprep.mubr.f32.mxu0 0.0
    %720 = vmatmul.mubr.f32.gmra.mxu0 %v410
    %v721 = vpop.f32.mrf.mxu0
    %v722 = vadd.f32 %v326, %v721
    %v723 = vpop.f32.mrf.mxu0
    %724 = vmatprep.mubr.f32.mxu0 0.0
    %725 = vmatmul.mubr.f32.gmra.mxu0 %v413
    %v726 = vpop.f32.mrf.mxu0
    %v727 = vadd.f32 %v326, %v726
    %v728 = vpop.f32.mrf.mxu0
    %729 = vmatprep.mubr.f32.mxu0 0.0
    %730 = vmatmul.mubr.f32.gmra.mxu0 %v416
    %v731 = vpop.f32.mrf.mxu0
    %v732 = vadd.f32 %v326, %v731
    %v733 = vpop.f32.mrf.mxu0
    %734 = vmatprep.mubr.f32.mxu0 0.0
    %735 = vmatmul.mubr.f32.gmra.mxu0 %v419
    %v736 = vpop.f32.mrf.mxu0
    %v737 = vadd.f32 %v326, %v736
    %v738 = vpop.f32.mrf.mxu0
    %739 = vmatprep.mubr.f32.mxu0 0.0
    %740 = vmatmul.mubr.f32.gmra.mxu0 %v422
    %v741 = vpop.f32.mrf.mxu0
    %v742 = vadd.f32 %v326, %v741
    %v743 = vpop.f32.mrf.mxu0
    %744 = vmatprep.mubr.f32.mxu0 0.0
    %745 = vmatmul.mubr.f32.gmra.mxu0 %v425
    %v746 = vpop.f32.mrf.mxu0
    %v747 = vadd.f32 %v326, %v746
    %v748 = vpop.f32.mrf.mxu0
    %749 = vmatprep.mubr.f32.mxu0 0.0
    %750 = vmatmul.mubr.f32.gmra.mxu0 %v428
    %v751 = vpop.f32.mrf.mxu0
    %v752 = vadd.f32 %v326, %v751
    %v753 = vpop.f32.mrf.mxu0
    %754 = vmatprep.mubr.f32.mxu0 0.0
    %755 = vmatmul.mubr.f32.gmra.mxu0 %v431
    %v756 = vpop.f32.mrf.mxu0
    %v757 = vadd.f32 %v326, %v756
    %v758 = vpop.f32.mrf.mxu0
    %759 = vmatprep.mubr.f32.mxu0 0.0
    %760 = vmatmul.mubr.f32.gmra.mxu0 %v434
    %v761 = vpop.f32.mrf.mxu0
    %v762 = vadd.f32 %v326, %v761
    %v763 = vpop.f32.mrf.mxu0
    %764 = vmatprep.mubr.f32.mxu0 0.0
    %765 = vmatmul.mubr.f32.gmra.mxu0 %v437
    %v766 = vpop.f32.mrf.mxu0
    %v767 = vadd.f32 %v326, %v766
    %v768 = vpop.f32.mrf.mxu0
    %769 = vmatprep.mubr.f32.mxu0 0.0
    %770 = vmatmul.mubr.f32.gmra.mxu0 %v440
    %v771 = vpop.f32.mrf.mxu0
    %v772 = vadd.f32 %v326, %v771
    %v773 = vpop.f32.mrf.mxu0
    %774 = vmatprep.mubr.f32.mxu0 0.0
    %775 = vmatmul.mubr.f32.gmra.mxu0 %v443
    %v776 = vpop.f32.mrf.mxu0
    %v777 = vadd.f32 %v326, %v776
    %v778 = vpop.f32.mrf.mxu0
    %779 = vmatprep.mubr.f32.mxu0 0.0
    %780 = vmatmul.mubr.f32.gmra.mxu0 %v446
    %v781 = vpop.f32.mrf.mxu0
    %v782 = vadd.f32 %v326, %v781
    %v783 = vpop.f32.mrf.mxu0
    %784 = vmatprep.mubr.f32.mxu0 0.0
    %785 = vmatmul.mubr.f32.gmra.mxu0 %v449
    %v786 = vpop.f32.mrf.mxu0
    %v787 = vadd.f32 %v326, %v786
    %v788 = vpop.f32.mrf.mxu0
    %789 = vmatprep.mubr.f32.mxu0 0.0
    %790 = vmatmul.mubr.f32.gmra.mxu0 %v452
    %v791 = vpop.f32.mrf.mxu0
    %v792 = vadd.f32 %v326, %v791
    %v793 = vpop.f32.mrf.mxu0
    %794 = vmatprep.mubr.f32.mxu0 0.0
    %795 = vmatmul.mubr.f32.gmra.mxu0 %v455
    %v796 = vpop.f32.mrf.mxu0
    %v797 = vadd.f32 %v326, %v796
    %v798 = vpop.f32.mrf.mxu0
    %799 = vmatprep.mubr.f32.mxu0 0.0
    %800 = vmatmul.mubr.f32.gmra.mxu0 %v458
    %v801 = vpop.f32.mrf.mxu0
    %v802 = vadd.f32 %v326, %v801
    %v803 = vpop.f32.mrf.mxu0
    %804 = vmatprep.mubr.f32.mxu0 0.0
    %805 = vmatmul.mubr.f32.gmra.mxu0 %v461
    %v806 = vpop.f32.mrf.mxu0
    %v807 = vadd.f32 %v326, %v806
    %v808 = vpop.f32.mrf.mxu0
    %809 = vmatprep.mubr.f32.mxu0 0.0
    %810 = vmatmul.mubr.f32.gmra.mxu0 %v464
    %v811 = vpop.f32.mrf.mxu0
    %v812 = vadd.f32 %v326, %v811
    %v813 = vpop.f32.mrf.mxu0
    %814 = vmatprep.mubr.f32.mxu0 0.0
    %815 = vmatmul.mubr.f32.gmra.mxu0 %v467
    %v816 = vpop.f32.mrf.mxu0
    %v817 = vadd.f32 %v326, %v816
    %v818 = vpop.f32.mrf.mxu0
    %819 = vmatprep.mubr.f32.mxu0 0.0
    %820 = vmatmul.mubr.f32.gmra.mxu0 %v470
    %v821 = vpop.f32.mrf.mxu0
    %v822 = vadd.f32 %v326, %v821
    %v823 = vpop.f32.mrf.mxu0
    %824 = vmatprep.mubr.f32.mxu0 0.0
    %825 = vmatmul.mubr.f32.gmra.mxu0 %v473
    %v826 = vpop.f32.mrf.mxu0
    %v827 = vadd.f32 %v326, %v826
    %v828 = vpop.f32.mrf.mxu0
    %829 = vmatprep.mubr.f32.mxu0 0.0
    %830 = vmatmul.mubr.f32.gmra.mxu0 %v476
    %v831 = vpop.f32.mrf.mxu0
    %v832 = vadd.f32 %v326, %v831
    %v833 = vpop.f32.mrf.mxu0
    %834 = vmatprep.mubr.f32.mxu0 0.0
    %835 = vmatmul.mubr.f32.gmra.mxu0 %v479
    %v836 = vpop.f32.mrf.mxu0
    %v837 = vadd.f32 %v326, %v836
    %v838 = vpop.f32.mrf.mxu0
    %839 = vmatprep.mubr.f32.mxu0 0.0
    %840 = vmatmul.mubr.f32.gmra.mxu0 %v482
    %v841 = vpop.f32.mrf.mxu0
    %v842 = vadd.f32 %v326, %v841
    %v843 = vpop.f32.mrf.mxu0
    %844 = vmatprep.mubr.f32.mxu0 0.0
    %845 = vmatmul.mubr.f32.gmra.mxu0 %v485
    %v846 = vpop.f32.mrf.mxu0
    %v847 = vadd.f32 %v326, %v846
    %v848 = vpop.f32.mrf.mxu0
    %849 = vmatprep.mubr.f32.mxu0 0.0
    %850 = vmatmul.mubr.f32.gmra.mxu0 %v488
    %v851 = vpop.f32.mrf.mxu0
    %v852 = vadd.f32 %v326, %v851
    %v853 = vpop.f32.mrf.mxu0
    %854 = vmatprep.mubr.f32.mxu0 0.0
    %855 = vmatmul.mubr.f32.gmra.mxu0 %v491
    %v856 = vpop.f32.mrf.mxu0
    %v857 = vadd.f32 %v326, %v856
    %v858 = vpop.f32.mrf.mxu0
    %859 = vmatprep.mubr.f32.mxu0 0.0
    %860 = vmatmul.mubr.f32.gmra.mxu0 %v494
    %v861 = vpop.f32.mrf.mxu0
    %v862 = vadd.f32 %v326, %v861
    %v863 = vpop.f32.mrf.mxu0
    %864 = vmatprep.mubr.f32.mxu0 0.0
    %865 = vmatmul.mubr.f32.gmra.mxu0 %v497
    %v866 = vpop.f32.mrf.mxu0
    %v867 = vadd.f32 %v326, %v866
    %v868 = vpop.f32.mrf.mxu0
    %869 = vmatprep.mubr.f32.mxu0 0.0
    %870 = vmatmul.mubr.f32.gmra.mxu0 %v500
    %v871 = vpop.f32.mrf.mxu0
    %v872 = vadd.f32 %v326, %v871
    %v873 = vpop.f32.mrf.mxu0
    %874 = vmatprep.mubr.f32.mxu0 0.0
    %875 = vmatmul.mubr.f32.gmra.mxu0 %v503
    %v876 = vpop.f32.mrf.mxu0
    %v877 = vadd.f32 %v326, %v876
    %v878 = vpop.f32.mrf.mxu0
    %879 = vmatprep.mubr.f32.mxu0 0.0
    %880 = vmatmul.mubr.f32.gmra.mxu0 %v506
    %v881 = vpop.f32.mrf.mxu0
    %v882 = vadd.f32 %v326, %v881
    %v883 = vpop.f32.mrf.mxu0
    %884 = vmatprep.mubr.f32.mxu0 0.0
    %885 = vmatmul.mubr.f32.gmra.mxu0 %v509
    %v886 = vpop.f32.mrf.mxu0
    %v887 = vadd.f32 %v326, %v886
    %v888 = vpop.f32.mrf.mxu0
    %889 = vmatprep.mubr.f32.mxu0 0.0
    %890 = vmatmul.mubr.f32.gmra.mxu0 %v512
    %v891 = vpop.f32.mrf.mxu0
    %v892 = vadd.f32 %v326, %v891
    %v893 = vpop.f32.mrf.mxu0
    %894 = vmatprep.mubr.f32.mxu0 0.0
    %895 = vmatmul.mubr.f32.gmra.mxu0 %v515
    %v896 = vpop.f32.mrf.mxu0
    %v897 = vadd.f32 %v326, %v896
    %v898 = vpop.f32.mrf.mxu0
    %899 = vmatprep.mubr.f32.mxu0 0.0
    %900 = vmatmul.mubr.f32.gmra.mxu0 %v518
    %v901 = vpop.f32.mrf.mxu0
    %v902 = vadd.f32 %v326, %v901
    %v903 = vpop.f32.mrf.mxu0
    %904 = vdwg.mxu0
    %v905 = vxor.u32 %v587, 2147483648
    %v906 = vxor.u32 %v592, 2147483648
    %v907 = vxor.u32 %v597, 2147483648
    %v908 = vxor.u32 %v602, 2147483648
    %v909 = vxor.u32 %v607, 2147483648
    %v910 = vxor.u32 %v612, 2147483648
    %v911 = vxor.u32 %v617, 2147483648
    %v912 = vxor.u32 %v622, 2147483648
    %v913 = vxor.u32 %v627, 2147483648
    %v914 = vxor.u32 %v632, 2147483648
    %v915 = vxor.u32 %v637, 2147483648
    %v916 = vxor.u32 %v642, 2147483648
    %v917 = vxor.u32 %v647, 2147483648
    %v918 = vxor.u32 %v652, 2147483648
    %v919 = vxor.u32 %v657, 2147483648
    %v920 = vxor.u32 %v662, 2147483648
    %v921 = vxor.u32 %v667, 2147483648
    %v922 = vxor.u32 %v672, 2147483648
    %v923 = vxor.u32 %v677, 2147483648
    %v924 = vxor.u32 %v682, 2147483648
    %v925 = vxor.u32 %v687, 2147483648
    %v926 = vxor.u32 %v692, 2147483648
    %v927 = vxor.u32 %v697, 2147483648
    %v928 = vxor.u32 %v702, 2147483648
    %v929 = vxor.u32 %v707, 2147483648
    %v930 = vxor.u32 %v712, 2147483648
    %v931 = vxor.u32 %v717, 2147483648
    %v932 = vxor.u32 %v722, 2147483648
    %v933 = vxor.u32 %v727, 2147483648
    %v934 = vxor.u32 %v732, 2147483648
    %v935 = vxor.u32 %v737, 2147483648
    %v936 = vxor.u32 %v742, 2147483648
    %v937 = vxor.u32 %v747, 2147483648
    %v938 = vxor.u32 %v752, 2147483648
    %v939 = vxor.u32 %v757, 2147483648
    %v940 = vxor.u32 %v762, 2147483648
    %v941 = vxor.u32 %v767, 2147483648
    %v942 = vxor.u32 %v772, 2147483648
    %v943 = vxor.u32 %v777, 2147483648
    %v944 = vxor.u32 %v782, 2147483648
    %v945 = vxor.u32 %v787, 2147483648
    %v946 = vxor.u32 %v792, 2147483648
    %v947 = vxor.u32 %v797, 2147483648
    %v948 = vxor.u32 %v802, 2147483648
    %v949 = vxor.u32 %v807, 2147483648
    %v950 = vxor.u32 %v812, 2147483648
    %v951 = vxor.u32 %v817, 2147483648
    %v952 = vxor.u32 %v822, 2147483648
    %v953 = vxor.u32 %v827, 2147483648
    %v954 = vxor.u32 %v832, 2147483648
    %v955 = vxor.u32 %v837, 2147483648
    %v956 = vxor.u32 %v842, 2147483648
    %v957 = vxor.u32 %v847, 2147483648
    %v958 = vxor.u32 %v852, 2147483648
    %v959 = vxor.u32 %v857, 2147483648
    %v960 = vxor.u32 %v862, 2147483648
    %v961 = vxor.u32 %v867, 2147483648
    %v962 = vxor.u32 %v872, 2147483648
    %v963 = vxor.u32 %v877, 2147483648
    %v964 = vxor.u32 %v882, 2147483648
    %v965 = vxor.u32 %v887, 2147483648
    %v966 = vxor.u32 %v892, 2147483648
    %v967 = vxor.u32 %v897, 2147483648
    %v968 = vxor.u32 %v902, 2147483648
    %v969 = vmul.f32 %v905, 1.442695
    %v970 = vpow.pop %v969
    %v971 = vmul.f32 %v906, 1.442695
    %v972 = vpow.pop %v971
    %v973 = vmul.f32 %v907, 1.442695
    %v974 = vpow.pop %v973
    %v975 = vmul.f32 %v908, 1.442695
    %v976 = vpow.pop %v975
    %v977 = vmul.f32 %v909, 1.442695
    %v978 = vpow.pop %v977
    %v979 = vmul.f32 %v910, 1.442695
    %v980 = vpow.pop %v979
    %v981 = vmul.f32 %v911, 1.442695
    %v982 = vpow.pop %v981
    %v983 = vmul.f32 %v912, 1.442695
    %v984 = vpow.pop %v983
    %v985 = vmul.f32 %v913, 1.442695
    %v986 = vpow.pop %v985
    %v987 = vmul.f32 %v914, 1.442695
    %v988 = vpow.pop %v987
    %v989 = vmul.f32 %v915, 1.442695
    %v990 = vpow.pop %v989
    %v991 = vmul.f32 %v916, 1.442695
    %v992 = vpow.pop %v991
    %v993 = vmul.f32 %v917, 1.442695
    %v994 = vpow.pop %v993
    %v995 = vmul.f32 %v918, 1.442695
    %v996 = vpow.pop %v995
    %v997 = vmul.f32 %v919, 1.442695
    %v998 = vpow.pop %v997
    %v999 = vmul.f32 %v920, 1.442695
    %v1000 = vpow.pop %v999
    %v1001 = vmul.f32 %v921, 1.442695
    %v1002 = vpow.pop %v1001
    %v1003 = vmul.f32 %v922, 1.442695
    %v1004 = vpow.pop %v1003
    %v1005 = vmul.f32 %v923, 1.442695
    %v1006 = vpow.pop %v1005
    %v1007 = vmul.f32 %v924, 1.442695
    %v1008 = vpow.pop %v1007
    %v1009 = vmul.f32 %v925, 1.442695
    %v1010 = vpow.pop %v1009
    %v1011 = vmul.f32 %v926, 1.442695
    %v1012 = vpow.pop %v1011
    %v1013 = vmul.f32 %v927, 1.442695
    %v1014 = vpow.pop %v1013
    %v1015 = vmul.f32 %v928, 1.442695
    %v1016 = vpow.pop %v1015
    %v1017 = vmul.f32 %v929, 1.442695
    %v1018 = vpow.pop %v1017
    %v1019 = vmul.f32 %v930, 1.442695
    %v1020 = vpow.pop %v1019
    %v1021 = vmul.f32 %v931, 1.442695
    %v1022 = vpow.pop %v1021
    %v1023 = vmul.f32 %v932, 1.442695
    %v1024 = vpow.pop %v1023
    %v1025 = vmul.f32 %v933, 1.442695
    %v1026 = vpow.pop %v1025
    %v1027 = vmul.f32 %v934, 1.442695
    %v1028 = vpow.pop %v1027
    %v1029 = vmul.f32 %v935, 1.442695
    %v1030 = vpow.pop %v1029
    %v1031 = vmul.f32 %v936, 1.442695
    %v1032 = vpow.pop %v1031
    %v1033 = vmul.f32 %v937, 1.442695
    %v1034 = vpow.pop %v1033
    %v1035 = vmul.f32 %v938, 1.442695
    %v1036 = vpow.pop %v1035
    %v1037 = vmul.f32 %v939, 1.442695
    %v1038 = vpow.pop %v1037
    %v1039 = vmul.f32 %v940, 1.442695
    %v1040 = vpow.pop %v1039
    %v1041 = vmul.f32 %v941, 1.442695
    %v1042 = vpow.pop %v1041
    %v1043 = vmul.f32 %v942, 1.442695
    %v1044 = vpow.pop %v1043
    %v1045 = vmul.f32 %v943, 1.442695
    %v1046 = vpow.pop %v1045
    %v1047 = vmul.f32 %v944, 1.442695
    %v1048 = vpow.pop %v1047
    %v1049 = vmul.f32 %v945, 1.442695
    %v1050 = vpow.pop %v1049
    %v1051 = vmul.f32 %v946, 1.442695
    %v1052 = vpow.pop %v1051
    %v1053 = vmul.f32 %v947, 1.442695
    %v1054 = vpow.pop %v1053
    %v1055 = vmul.f32 %v948, 1.442695
    %v1056 = vpow.pop %v1055
    %v1057 = vmul.f32 %v949, 1.442695
    %v1058 = vpow.pop %v1057
    %v1059 = vmul.f32 %v950, 1.442695
    %v1060 = vpow.pop %v1059
    %v1061 = vmul.f32 %v951, 1.442695
    %v1062 = vpow.pop %v1061
    %v1063 = vmul.f32 %v952, 1.442695
    %v1064 = vpow.pop %v1063
    %v1065 = vmul.f32 %v953, 1.442695
    %v1066 = vpow.pop %v1065
    %v1067 = vmul.f32 %v954, 1.442695
    %v1068 = vpow.pop %v1067
    %v1069 = vmul.f32 %v955, 1.442695
    %v1070 = vpow.pop %v1069
    %v1071 = vmul.f32 %v956, 1.442695
    %v1072 = vpow.pop %v1071
    %v1073 = vmul.f32 %v957, 1.442695
    %v1074 = vpow.pop %v1073
    %v1075 = vmul.f32 %v958, 1.442695
    %v1076 = vpow.pop %v1075
    %v1077 = vmul.f32 %v959, 1.442695
    %v1078 = vpow.pop %v1077
    %v1079 = vmul.f32 %v960, 1.442695
    %v1080 = vpow.pop %v1079
    %v1081 = vmul.f32 %v961, 1.442695
    %v1082 = vpow.pop %v1081
    %v1083 = vmul.f32 %v962, 1.442695
    %v1084 = vpow.pop %v1083
    %v1085 = vmul.f32 %v963, 1.442695
    %v1086 = vpow.pop %v1085
    %v1087 = vmul.f32 %v964, 1.442695
    %v1088 = vpow.pop %v1087
    %v1089 = vmul.f32 %v965, 1.442695
    %v1090 = vpow.pop %v1089
    %v1091 = vmul.f32 %v966, 1.442695
    %v1092 = vpow.pop %v1091
    %v1093 = vmul.f32 %v967, 1.442695
    %v1094 = vpow.pop %v1093
    %v1095 = vmul.f32 %v968, 1.442695
    %v1096 = vpow.pop %v1095
    %v1097 = vadd.f32 %v970, 1.0
    %v1098 = vadd.f32 %v972, 1.0
    %v1099 = vadd.f32 %v974, 1.0
    %v1100 = vadd.f32 %v976, 1.0
    %v1101 = vadd.f32 %v978, 1.0
    %v1102 = vadd.f32 %v980, 1.0
    %v1103 = vadd.f32 %v982, 1.0
    %v1104 = vadd.f32 %v984, 1.0
    %v1105 = vadd.f32 %v986, 1.0
    %v1106 = vadd.f32 %v988, 1.0
    %v1107 = vadd.f32 %v990, 1.0
    %v1108 = vadd.f32 %v992, 1.0
    %v1109 = vadd.f32 %v994, 1.0
    %v1110 = vadd.f32 %v996, 1.0
    %v1111 = vadd.f32 %v998, 1.0
    %v1112 = vadd.f32 %v1000, 1.0
    %v1113 = vadd.f32 %v1002, 1.0
    %v1114 = vadd.f32 %v1004, 1.0
    %v1115 = vadd.f32 %v1006, 1.0
    %v1116 = vadd.f32 %v1008, 1.0
    %v1117 = vadd.f32 %v1010, 1.0
    %v1118 = vadd.f32 %v1012, 1.0
    %v1119 = vadd.f32 %v1014, 1.0
    %v1120 = vadd.f32 %v1016, 1.0
    %v1121 = vadd.f32 %v1018, 1.0
    %v1122 = vadd.f32 %v1020, 1.0
    %v1123 = vadd.f32 %v1022, 1.0
    %v1124 = vadd.f32 %v1024, 1.0
    %v1125 = vadd.f32 %v1026, 1.0
    %v1126 = vadd.f32 %v1028, 1.0
    %v1127 = vadd.f32 %v1030, 1.0
    %v1128 = vadd.f32 %v1032, 1.0
    %v1129 = vadd.f32 %v1034, 1.0
    %v1130 = vadd.f32 %v1036, 1.0
    %v1131 = vadd.f32 %v1038, 1.0
    %v1132 = vadd.f32 %v1040, 1.0
    %v1133 = vadd.f32 %v1042, 1.0
    %v1134 = vadd.f32 %v1044, 1.0
    %v1135 = vadd.f32 %v1046, 1.0
    %v1136 = vadd.f32 %v1048, 1.0
    %v1137 = vadd.f32 %v1050, 1.0
    %v1138 = vadd.f32 %v1052, 1.0
    %v1139 = vadd.f32 %v1054, 1.0
    %v1140 = vadd.f32 %v1056, 1.0
    %v1141 = vadd.f32 %v1058, 1.0
    %v1142 = vadd.f32 %v1060, 1.0
    %v1143 = vadd.f32 %v1062, 1.0
    %v1144 = vadd.f32 %v1064, 1.0
    %v1145 = vadd.f32 %v1066, 1.0
    %v1146 = vadd.f32 %v1068, 1.0
    %v1147 = vadd.f32 %v1070, 1.0
    %v1148 = vadd.f32 %v1072, 1.0
    %v1149 = vadd.f32 %v1074, 1.0
    %v1150 = vadd.f32 %v1076, 1.0
    %v1151 = vadd.f32 %v1078, 1.0
    %v1152 = vadd.f32 %v1080, 1.0
    %v1153 = vadd.f32 %v1082, 1.0
    %v1154 = vadd.f32 %v1084, 1.0
    %v1155 = vadd.f32 %v1086, 1.0
    %v1156 = vadd.f32 %v1088, 1.0
    %v1157 = vadd.f32 %v1090, 1.0
    %v1158 = vadd.f32 %v1092, 1.0
    %v1159 = vadd.f32 %v1094, 1.0
    %v1160 = vadd.f32 %v1096, 1.0
    %v1161 = vrcp.pop %v1097
    %v1162 = vmul.f32 1.0, %v1161
    %v1163 = vrcp.pop %v1098
    %v1164 = vmul.f32 1.0, %v1163
    %v1165 = vrcp.pop %v1099
    %v1166 = vmul.f32 1.0, %v1165
    %v1167 = vrcp.pop %v1100
    %v1168 = vmul.f32 1.0, %v1167
    %v1169 = vrcp.pop %v1101
    %v1170 = vmul.f32 1.0, %v1169
    %v1171 = vrcp.pop %v1102
    %v1172 = vmul.f32 1.0, %v1171
    %v1173 = vrcp.pop %v1103
    %v1174 = vmul.f32 1.0, %v1173
    %v1175 = vrcp.pop %v1104
    %v1176 = vmul.f32 1.0, %v1175
    %v1177 = vrcp.pop %v1105
    %v1178 = vmul.f32 1.0, %v1177
    %v1179 = vrcp.pop %v1106
    %v1180 = vmul.f32 1.0, %v1179
    %v1181 = vrcp.pop %v1107
    %v1182 = vmul.f32 1.0, %v1181
    %v1183 = vrcp.pop %v1108
    %v1184 = vmul.f32 1.0, %v1183
    %v1185 = vrcp.pop %v1109
    %v1186 = vmul.f32 1.0, %v1185
    %v1187 = vrcp.pop %v1110
    %v1188 = vmul.f32 1.0, %v1187
    %v1189 = vrcp.pop %v1111
    %v1190 = vmul.f32 1.0, %v1189
    %v1191 = vrcp.pop %v1112
    %v1192 = vmul.f32 1.0, %v1191
    %v1193 = vrcp.pop %v1113
    %v1194 = vmul.f32 1.0, %v1193
    %v1195 = vrcp.pop %v1114
    %v1196 = vmul.f32 1.0, %v1195
    %v1197 = vrcp.pop %v1115
    %v1198 = vmul.f32 1.0, %v1197
    %v1199 = vrcp.pop %v1116
    %v1200 = vmul.f32 1.0, %v1199
    %v1201 = vrcp.pop %v1117
    %v1202 = vmul.f32 1.0, %v1201
    %v1203 = vrcp.pop %v1118
    %v1204 = vmul.f32 1.0, %v1203
    %v1205 = vrcp.pop %v1119
    %v1206 = vmul.f32 1.0, %v1205
    %v1207 = vrcp.pop %v1120
    %v1208 = vmul.f32 1.0, %v1207
    %v1209 = vrcp.pop %v1121
    %v1210 = vmul.f32 1.0, %v1209
    %v1211 = vrcp.pop %v1122
    %v1212 = vmul.f32 1.0, %v1211
    %v1213 = vrcp.pop %v1123
    %v1214 = vmul.f32 1.0, %v1213
    %v1215 = vrcp.pop %v1124
    %v1216 = vmul.f32 1.0, %v1215
    %v1217 = vrcp.pop %v1125
    %v1218 = vmul.f32 1.0, %v1217
    %v1219 = vrcp.pop %v1126
    %v1220 = vmul.f32 1.0, %v1219
    %v1221 = vrcp.pop %v1127
    %v1222 = vmul.f32 1.0, %v1221
    %v1223 = vrcp.pop %v1128
    %v1224 = vmul.f32 1.0, %v1223
    %v1225 = vrcp.pop %v1129
    %v1226 = vmul.f32 1.0, %v1225
    %v1227 = vrcp.pop %v1130
    %v1228 = vmul.f32 1.0, %v1227
    %v1229 = vrcp.pop %v1131
    %v1230 = vmul.f32 1.0, %v1229
    %v1231 = vrcp.pop %v1132
    %v1232 = vmul.f32 1.0, %v1231
    %v1233 = vrcp.pop %v1133
    %v1234 = vmul.f32 1.0, %v1233
    %v1235 = vrcp.pop %v1134
    %v1236 = vmul.f32 1.0, %v1235
    %v1237 = vrcp.pop %v1135
    %v1238 = vmul.f32 1.0, %v1237
    %v1239 = vrcp.pop %v1136
    %v1240 = vmul.f32 1.0, %v1239
    %v1241 = vrcp.pop %v1137
    %v1242 = vmul.f32 1.0, %v1241
    %v1243 = vrcp.pop %v1138
    %v1244 = vmul.f32 1.0, %v1243
    %v1245 = vrcp.pop %v1139
    %v1246 = vmul.f32 1.0, %v1245
    %v1247 = vrcp.pop %v1140
    %v1248 = vmul.f32 1.0, %v1247
    %v1249 = vrcp.pop %v1141
    %v1250 = vmul.f32 1.0, %v1249
    %v1251 = vrcp.pop %v1142
    %v1252 = vmul.f32 1.0, %v1251
    %v1253 = vrcp.pop %v1143
    %v1254 = vmul.f32 1.0, %v1253
    %v1255 = vrcp.pop %v1144
    %v1256 = vmul.f32 1.0, %v1255
    %v1257 = vrcp.pop %v1145
    %v1258 = vmul.f32 1.0, %v1257
    %v1259 = vrcp.pop %v1146
    %v1260 = vmul.f32 1.0, %v1259
    %v1261 = vrcp.pop %v1147
    %v1262 = vmul.f32 1.0, %v1261
    %v1263 = vrcp.pop %v1148
    %v1264 = vmul.f32 1.0, %v1263
    %v1265 = vrcp.pop %v1149
    %v1266 = vmul.f32 1.0, %v1265
    %v1267 = vrcp.pop %v1150
    %v1268 = vmul.f32 1.0, %v1267
    %v1269 = vrcp.pop %v1151
    %v1270 = vmul.f32 1.0, %v1269
    %v1271 = vrcp.pop %v1152
    %v1272 = vmul.f32 1.0, %v1271
    %v1273 = vrcp.pop %v1153
    %v1274 = vmul.f32 1.0, %v1273
    %v1275 = vrcp.pop %v1154
    %v1276 = vmul.f32 1.0, %v1275
    %v1277 = vrcp.pop %v1155
    %v1278 = vmul.f32 1.0, %v1277
    %v1279 = vrcp.pop %v1156
    %v1280 = vmul.f32 1.0, %v1279
    %v1281 = vrcp.pop %v1157
    %v1282 = vmul.f32 1.0, %v1281
    %v1283 = vrcp.pop %v1158
    %v1284 = vmul.f32 1.0, %v1283
    %v1285 = vrcp.pop %v1159
    %v1286 = vmul.f32 1.0, %v1285
    %v1287 = vrcp.pop %v1160
    %v1288 = vmul.f32 1.0, %v1287
    %v1289 = vmul.f32 %v587, %v1162
    %v1290 = vmul.f32 %v592, %v1164
    %v1291 = vmul.f32 %v597, %v1166
    %v1292 = vmul.f32 %v602, %v1168
    %v1293 = vmul.f32 %v607, %v1170
    %v1294 = vmul.f32 %v612, %v1172
    %v1295 = vmul.f32 %v617, %v1174
    %v1296 = vmul.f32 %v622, %v1176
    %v1297 = vmul.f32 %v627, %v1178
    %v1298 = vmul.f32 %v632, %v1180
    %v1299 = vmul.f32 %v637, %v1182
    %v1300 = vmul.f32 %v642, %v1184
    %v1301 = vmul.f32 %v647, %v1186
    %v1302 = vmul.f32 %v652, %v1188
    %v1303 = vmul.f32 %v657, %v1190
    %v1304 = vmul.f32 %v662, %v1192
    %v1305 = vmul.f32 %v667, %v1194
    %v1306 = vmul.f32 %v672, %v1196
    %v1307 = vmul.f32 %v677, %v1198
    %v1308 = vmul.f32 %v682, %v1200
    %v1309 = vmul.f32 %v687, %v1202
    %v1310 = vmul.f32 %v692, %v1204
    %v1311 = vmul.f32 %v697, %v1206
    %v1312 = vmul.f32 %v702, %v1208
    %v1313 = vmul.f32 %v707, %v1210
    %v1314 = vmul.f32 %v712, %v1212
    %v1315 = vmul.f32 %v717, %v1214
    %v1316 = vmul.f32 %v722, %v1216
    %v1317 = vmul.f32 %v727, %v1218
    %v1318 = vmul.f32 %v732, %v1220
    %v1319 = vmul.f32 %v737, %v1222
    %v1320 = vmul.f32 %v742, %v1224
    %v1321 = vmul.f32 %v747, %v1226
    %v1322 = vmul.f32 %v752, %v1228
    %v1323 = vmul.f32 %v757, %v1230
    %v1324 = vmul.f32 %v762, %v1232
    %v1325 = vmul.f32 %v767, %v1234
    %v1326 = vmul.f32 %v772, %v1236
    %v1327 = vmul.f32 %v777, %v1238
    %v1328 = vmul.f32 %v782, %v1240
    %v1329 = vmul.f32 %v787, %v1242
    %v1330 = vmul.f32 %v792, %v1244
    %v1331 = vmul.f32 %v797, %v1246
    %v1332 = vmul.f32 %v802, %v1248
    %v1333 = vmul.f32 %v807, %v1250
    %v1334 = vmul.f32 %v812, %v1252
    %v1335 = vmul.f32 %v817, %v1254
    %v1336 = vmul.f32 %v822, %v1256
    %v1337 = vmul.f32 %v827, %v1258
    %v1338 = vmul.f32 %v832, %v1260
    %v1339 = vmul.f32 %v837, %v1262
    %v1340 = vmul.f32 %v842, %v1264
    %v1341 = vmul.f32 %v847, %v1266
    %v1342 = vmul.f32 %v852, %v1268
    %v1343 = vmul.f32 %v857, %v1270
    %v1344 = vmul.f32 %v862, %v1272
    %v1345 = vmul.f32 %v867, %v1274
    %v1346 = vmul.f32 %v872, %v1276
    %v1347 = vmul.f32 %v877, %v1278
    %v1348 = vmul.f32 %v882, %v1280
    %v1349 = vmul.f32 %v887, %v1282
    %v1350 = vmul.f32 %v892, %v1284
    %v1351 = vmul.f32 %v897, %v1286
    %v1352 = vmul.f32 %v902, %v1288
    %s1353 = scalar_lea.vmem [#allocation2], 24
    %1354 = vst.msk [vmem:[%s1353 + $0x1] sm:$0xff] %vm33, %v1289
    %1355 = vst.msk [vmem:[%s1353 + $0x9] sm:$0xff] %vm33, %v1290
    %1356 = vst.msk [vmem:[%s1353 + $0x19] sm:$0xff] %vm33, %v1291
    %1357 = vst.msk [vmem:[%s1353 + $0x21] sm:$0xff] %vm33, %v1292
    %1358 = vst.msk [vmem:[%s1353 + $0x31] sm:$0xff] %vm33, %v1293
    %1359 = vst.msk [vmem:[%s1353 + $0x39] sm:$0xff] %vm33, %v1294
    %1360 = vst.msk [vmem:[%s1353 + $0x49] sm:$0xff] %vm33, %v1295
    %1361 = vst.msk [vmem:[%s1353 + $0x51] sm:$0xff] %vm33, %v1296
    %1362 = vst.msk [vmem:[%s1353 + $0x61] sm:$0xff] %vm33, %v1297
    %1363 = vst.msk [vmem:[%s1353 + $0x69] sm:$0xff] %vm33, %v1298
    %1364 = vst.msk [vmem:[%s1353 + $0x79] sm:$0xff] %vm33, %v1299
    %1365 = vst.msk [vmem:[%s1353 + $0x81] sm:$0xff] %vm33, %v1300
    %1366 = vst.msk [vmem:[%s1353 + $0x91] sm:$0xff] %vm33, %v1301
    %1367 = vst.msk [vmem:[%s1353 + $0x99] sm:$0xff] %vm33, %v1302
    %1368 = vst.msk [vmem:[%s1353 + $0xa9] sm:$0xff] %vm33, %v1303
    %1369 = vst.msk [vmem:[%s1353 + $0xb1] sm:$0xff] %vm33, %v1304
    %1370 = vst.msk [vmem:[%s1353 + $0xc1] sm:$0xff] %vm33, %v1305
    %1371 = vst.msk [vmem:[%s1353 + $0xc9] sm:$0xff] %vm33, %v1306
    %1372 = vst.msk [vmem:[%s1353 + $0xd9] sm:$0xff] %vm33, %v1307
    %1373 = vst.msk [vmem:[%s1353 + $0xe1] sm:$0xff] %vm33, %v1308
    %1374 = vst.msk [vmem:[%s1353 + $0xf1] sm:$0xff] %vm33, %v1309
    %1375 = vst.msk [vmem:[%s1353 + $0xf9] sm:$0xff] %vm33, %v1310
    %1376 = vst.msk [vmem:[%s1353 + $0x109] sm:$0xff] %vm33, %v1311
    %1377 = vst.msk [vmem:[%s1353 + $0x111] sm:$0xff] %vm33, %v1312
    %1378 = vst.msk [vmem:[%s1353 + $0x121] sm:$0xff] %vm33, %v1313
    %1379 = vst.msk [vmem:[%s1353 + $0x129] sm:$0xff] %vm33, %v1314
    %1380 = vst.msk [vmem:[%s1353 + $0x139] sm:$0xff] %vm33, %v1315
    %1381 = vst.msk [vmem:[%s1353 + $0x141] sm:$0xff] %vm33, %v1316
    %1382 = vst.msk [vmem:[%s1353 + $0x151] sm:$0xff] %vm33, %v1317
    %1383 = vst.msk [vmem:[%s1353 + $0x159] sm:$0xff] %vm33, %v1318
    %1384 = vst.msk [vmem:[%s1353 + $0x169] sm:$0xff] %vm33, %v1319
    %1385 = vst.msk [vmem:[%s1353 + $0x171] sm:$0xff] %vm33, %v1320
    %1386 = vst.msk [vmem:[%s1353 + $0x1b1] sm:$0xff] %vm33, %v1321
    %1387 = vst.msk [vmem:[%s1353 + $0x1b9] sm:$0xff] %vm33, %v1322
    %1388 = vst.msk [vmem:[%s1353 + $0x1c9] sm:$0xff] %vm33, %v1323
    %1389 = vst.msk [vmem:[%s1353 + $0x1d1] sm:$0xff] %vm33, %v1324
    %1390 = vst.msk [vmem:[%s1353 + $0x1e1] sm:$0xff] %vm33, %v1325
    %1391 = vst.msk [vmem:[%s1353 + $0x1e9] sm:$0xff] %vm33, %v1326
    %1392 = vst.msk [vmem:[%s1353 + $0x1f9] sm:$0xff] %vm33, %v1327
    %1393 = vst.msk [vmem:[%s1353 + $0x201] sm:$0xff] %vm33, %v1328
    %1394 = vst.msk [vmem:[%s1353 + $0x211] sm:$0xff] %vm33, %v1329
    %1395 = vst.msk [vmem:[%s1353 + $0x219] sm:$0xff] %vm33, %v1330
    %1396 = vst.msk [vmem:[%s1353 + $0x229] sm:$0xff] %vm33, %v1331
    %1397 = vst.msk [vmem:[%s1353 + $0x231] sm:$0xff] %vm33, %v1332
    %1398 = vst.msk [vmem:[%s1353 + $0x241] sm:$0xff] %vm33, %v1333
    %1399 = vst.msk [vmem:[%s1353 + $0x249] sm:$0xff] %vm33, %v1334
    %1400 = vst.msk [vmem:[%s1353 + $0x259] sm:$0xff] %vm33, %v1335
    %1401 = vst.msk [vmem:[%s1353 + $0x261] sm:$0xff] %vm33, %v1336
    %1402 = vst.msk [vmem:[%s1353 + $0x271] sm:$0xff] %vm33, %v1337
    %1403 = vst.msk [vmem:[%s1353 + $0x279] sm:$0xff] %vm33, %v1338
    %1404 = vst.msk [vmem:[%s1353 + $0x289] sm:$0xff] %vm33, %v1339
    %1405 = vst.msk [vmem:[%s1353 + $0x291] sm:$0xff] %vm33, %v1340
    %1406 = vst.msk [vmem:[%s1353 + $0x2a1] sm:$0xff] %vm33, %v1341
    %1407 = vst.msk [vmem:[%s1353 + $0x2a9] sm:$0xff] %vm33, %v1342
    %1408 = vst.msk [vmem:[%s1353 + $0x2b9] sm:$0xff] %vm33, %v1343
    %1409 = vst.msk [vmem:[%s1353 + $0x2c1] sm:$0xff] %vm33, %v1344
    %1410 = vst.msk [vmem:[%s1353 + $0x2d1] sm:$0xff] %vm33, %v1345
    %1411 = vst.msk [vmem:[%s1353 + $0x2d9] sm:$0xff] %vm33, %v1346
    %1412 = vst.msk [vmem:[%s1353 + $0x2e9] sm:$0xff] %vm33, %v1347
    %1413 = vst.msk [vmem:[%s1353 + $0x2f1] sm:$0xff] %vm33, %v1348
    %1414 = vst.msk [vmem:[%s1353 + $0x301] sm:$0xff] %vm33, %v1349
    %1415 = vst.msk [vmem:[%s1353 + $0x309] sm:$0xff] %vm33, %v1350
    %1416 = vst.msk [vmem:[%s1353 + $0x319] sm:$0xff] %vm33, %v1351
    %1417 = vst.msk [vmem:[%s1353 + $0x321] sm:$0xff] %vm33, %v1352
    %v1418 = vld [vmem:[#allocation2] sm:$0xff]
    %v1419 = vld [vmem:[#allocation2 + $0x8] sm:$0xff]
    %v1420 = vld [vmem:[#allocation2 + $0x18] sm:$0xff]
    %v1421 = vld [vmem:[#allocation2 + $0x20] sm:$0xff]
    %v1422 = vld [vmem:[#allocation2 + $0x30] sm:$0xff]
    %v1423 = vld [vmem:[#allocation2 + $0x38] sm:$0xff]
    %v1424 = vld [vmem:[#allocation2 + $0x48] sm:$0xff]
    %v1425 = vld [vmem:[#allocation2 + $0x50] sm:$0xff]
    %v1426 = vld [vmem:[#allocation2 + $0x60] sm:$0xff]
    %v1427 = vld [vmem:[#allocation2 + $0x68] sm:$0xff]
    %v1428 = vld [vmem:[#allocation2 + $0x78] sm:$0xff]
    %v1429 = vld [vmem:[#allocation2 + $0x80] sm:$0xff]
    %v1430 = vld [vmem:[#allocation2 + $0x90] sm:$0xff]
    %v1431 = vld [vmem:[#allocation2 + $0x98] sm:$0xff]
    %v1432 = vld [vmem:[#allocation2 + $0xa8] sm:$0xff]
    %v1433 = vld [vmem:[#allocation2 + $0xb0] sm:$0xff]
    %v1434 = vld [vmem:[#allocation2 + $0xc0] sm:$0xff]
    %v1435 = vld [vmem:[#allocation2 + $0xc8] sm:$0xff]
    %v1436 = vld [vmem:[#allocation2 + $0xd8] sm:$0xff]
    %v1437 = vld [vmem:[#allocation2 + $0xe0] sm:$0xff]
    %v1438 = vld [vmem:[#allocation2 + $0xf0] sm:$0xff]
    %v1439 = vld [vmem:[#allocation2 + $0xf8] sm:$0xff]
    %v1440 = vld [vmem:[#allocation2 + $0x108] sm:$0xff]
    %v1441 = vld [vmem:[#allocation2 + $0x110] sm:$0xff]
    %v1442 = vld [vmem:[#allocation2 + $0x120] sm:$0xff]
    %v1443 = vld [vmem:[#allocation2 + $0x128] sm:$0xff]
    %v1444 = vld [vmem:[#allocation2 + $0x138] sm:$0xff]
    %v1445 = vld [vmem:[#allocation2 + $0x140] sm:$0xff]
    %v1446 = vld [vmem:[#allocation2 + $0x150] sm:$0xff]
    %v1447 = vld [vmem:[#allocation2 + $0x158] sm:$0xff]
    %v1448 = vld [vmem:[#allocation2 + $0x168] sm:$0xff]
    %v1449 = vld [vmem:[#allocation2 + $0x170] sm:$0xff]
    %v1450 = vld [vmem:[#allocation2 + $0x1b0] sm:$0xff]
    %v1451 = vld [vmem:[#allocation2 + $0x1b8] sm:$0xff]
    %v1452 = vld [vmem:[#allocation2 + $0x1c8] sm:$0xff]
    %v1453 = vld [vmem:[#allocation2 + $0x1d0] sm:$0xff]
    %v1454 = vld [vmem:[#allocation2 + $0x1e0] sm:$0xff]
    %v1455 = vld [vmem:[#allocation2 + $0x1e8] sm:$0xff]
    %v1456 = vld [vmem:[#allocation2 + $0x1f8] sm:$0xff]
    %v1457 = vld [vmem:[#allocation2 + $0x200] sm:$0xff]
    %v1458 = vld [vmem:[#allocation2 + $0x210] sm:$0xff]
    %v1459 = vld [vmem:[#allocation2 + $0x218] sm:$0xff]
    %v1460 = vld [vmem:[#allocation2 + $0x228] sm:$0xff]
    %v1461 = vld [vmem:[#allocation2 + $0x230] sm:$0xff]
    %v1462 = vld [vmem:[#allocation2 + $0x240] sm:$0xff]
    %v1463 = vld [vmem:[#allocation2 + $0x248] sm:$0xff]
    %v1464 = vld [vmem:[#allocation2 + $0x258] sm:$0xff]
    %v1465 = vld [vmem:[#allocation2 + $0x260] sm:$0xff]
    %v1466 = vld [vmem:[#allocation2 + $0x270] sm:$0xff]
    %v1467 = vld [vmem:[#allocation2 + $0x278] sm:$0xff]
    %v1468 = vld [vmem:[#allocation2 + $0x288] sm:$0xff]
    %v1469 = vld [vmem:[#allocation2 + $0x290] sm:$0xff]
    %v1470 = vld [vmem:[#allocation2 + $0x2a0] sm:$0xff]
    %v1471 = vld [vmem:[#allocation2 + $0x2a8] sm:$0xff]
    %v1472 = vld [vmem:[#allocation2 + $0x2b8] sm:$0xff]
    %v1473 = vld [vmem:[#allocation2 + $0x2c0] sm:$0xff]
    %v1474 = vld [vmem:[#allocation2 + $0x2d0] sm:$0xff]
    %v1475 = vld [vmem:[#allocation2 + $0x2d8] sm:$0xff]
    %v1476 = vld [vmem:[#allocation2 + $0x2e8] sm:$0xff]
    %v1477 = vld [vmem:[#allocation2 + $0x2f0] sm:$0xff]
    %v1478 = vld [vmem:[#allocation2 + $0x300] sm:$0xff]
    %v1479 = vld [vmem:[#allocation2 + $0x308] sm:$0xff]
    %v1480 = vld [vmem:[#allocation2 + $0x318] sm:$0xff]
    %v1481 = vld [vmem:[#allocation2 + $0x320] sm:$0xff]
    %v1482 = vld [vmem:[#allocation2 + $0x1] sm:$0xff]
    %v1483 = vld [vmem:[#allocation2 + $0x9] sm:$0xff]
    %v1484 = vld [vmem:[#allocation2 + $0x19] sm:$0xff]
    %v1485 = vld [vmem:[#allocation2 + $0x21] sm:$0xff]
    %v1486 = vld [vmem:[#allocation2 + $0x31] sm:$0xff]
    %v1487 = vld [vmem:[#allocation2 + $0x39] sm:$0xff]
    %v1488 = vld [vmem:[#allocation2 + $0x49] sm:$0xff]
    %v1489 = vld [vmem:[#allocation2 + $0x51] sm:$0xff]
    %v1490 = vld [vmem:[#allocation2 + $0x61] sm:$0xff]
    %v1491 = vld [vmem:[#allocation2 + $0x69] sm:$0xff]
    %v1492 = vld [vmem:[#allocation2 + $0x79] sm:$0xff]
    %v1493 = vld [vmem:[#allocation2 + $0x81] sm:$0xff]
    %v1494 = vld [vmem:[#allocation2 + $0x91] sm:$0xff]
    %v1495 = vld [vmem:[#allocation2 + $0x99] sm:$0xff]
    %v1496 = vld [vmem:[#allocation2 + $0xa9] sm:$0xff]
    %v1497 = vld [vmem:[#allocation2 + $0xb1] sm:$0xff]
    %v1498 = vld [vmem:[#allocation2 + $0xc1] sm:$0xff]
    %v1499 = vld [vmem:[#allocation2 + $0xc9] sm:$0xff]
    %v1500 = vld [vmem:[#allocation2 + $0xd9] sm:$0xff]
    %v1501 = vld [vmem:[#allocation2 + $0xe1] sm:$0xff]
    %v1502 = vld [vmem:[#allocation2 + $0xf1] sm:$0xff]
    %v1503 = vld [vmem:[#allocation2 + $0xf9] sm:$0xff]
    %v1504 = vld [vmem:[#allocation2 + $0x109] sm:$0xff]
    %v1505 = vld [vmem:[#allocation2 + $0x111] sm:$0xff]
    %v1506 = vld [vmem:[#allocation2 + $0x121] sm:$0xff]
    %v1507 = vld [vmem:[#allocation2 + $0x129] sm:$0xff]
    %v1508 = vld [vmem:[#allocation2 + $0x139] sm:$0xff]
    %v1509 = vld [vmem:[#allocation2 + $0x141] sm:$0xff]
    %v1510 = vld [vmem:[#allocation2 + $0x151] sm:$0xff]
    %v1511 = vld [vmem:[#allocation2 + $0x159] sm:$0xff]
    %v1512 = vld [vmem:[#allocation2 + $0x169] sm:$0xff]
    %v1513 = vld [vmem:[#allocation2 + $0x171] sm:$0xff]
    %v1514 = vld [vmem:[#allocation2 + $0x1b1] sm:$0xff]
    %v1515 = vld [vmem:[#allocation2 + $0x1b9] sm:$0xff]
    %v1516 = vld [vmem:[#allocation2 + $0x1c9] sm:$0xff]
    %v1517 = vld [vmem:[#allocation2 + $0x1d1] sm:$0xff]
    %v1518 = vld [vmem:[#allocation2 + $0x1e1] sm:$0xff]
    %v1519 = vld [vmem:[#allocation2 + $0x1e9] sm:$0xff]
    %v1520 = vld [vmem:[#allocation2 + $0x1f9] sm:$0xff]
    %v1521 = vld [vmem:[#allocation2 + $0x201] sm:$0xff]
    %v1522 = vld [vmem:[#allocation2 + $0x211] sm:$0xff]
    %v1523 = vld [vmem:[#allocation2 + $0x219] sm:$0xff]
    %v1524 = vld [vmem:[#allocation2 + $0x229] sm:$0xff]
    %v1525 = vld [vmem:[#allocation2 + $0x231] sm:$0xff]
    %v1526 = vld [vmem:[#allocation2 + $0x241] sm:$0xff]
    %v1527 = vld [vmem:[#allocation2 + $0x249] sm:$0xff]
    %v1528 = vld [vmem:[#allocation2 + $0x259] sm:$0xff]
    %v1529 = vld [vmem:[#allocation2 + $0x261] sm:$0xff]
    %v1530 = vld [vmem:[#allocation2 + $0x271] sm:$0xff]
    %v1531 = vld [vmem:[#allocation2 + $0x279] sm:$0xff]
    %v1532 = vld [vmem:[#allocation2 + $0x289] sm:$0xff]
    %v1533 = vld [vmem:[#allocation2 + $0x291] sm:$0xff]
    %v1534 = vld [vmem:[#allocation2 + $0x2a1] sm:$0xff]
    %v1535 = vld [vmem:[#allocation2 + $0x2a9] sm:$0xff]
    %v1536 = vld [vmem:[#allocation2 + $0x2b9] sm:$0xff]
    %v1537 = vld [vmem:[#allocation2 + $0x2c1] sm:$0xff]
    %v1538 = vld [vmem:[#allocation2 + $0x2d1] sm:$0xff]
    %v1539 = vld [vmem:[#allocation2 + $0x2d9] sm:$0xff]
    %v1540 = vld [vmem:[#allocation2 + $0x2e9] sm:$0xff]
    %v1541 = vld [vmem:[#allocation2 + $0x2f1] sm:$0xff]
    %v1542 = vld [vmem:[#allocation2 + $0x301] sm:$0xff]
    %v1543 = vld [vmem:[#allocation2 + $0x309] sm:$0xff]
    %v1544 = vld [vmem:[#allocation2 + $0x319] sm:$0xff]
    %v1545 = vld [vmem:[#allocation2 + $0x321] sm:$0xff]
    %v1546 = vld [vmem:[#allocation2 + $0x2] sm:$0xff]
    %v1547 = vld [vmem:[#allocation2 + $0xa] sm:$0xff]
    %v1548 = vld [vmem:[#allocation2 + $0x1a] sm:$0xff]
    %v1549 = vld [vmem:[#allocation2 + $0x22] sm:$0xff]
    %v1550 = vld [vmem:[#allocation2 + $0x32] sm:$0xff]
    %v1551 = vld [vmem:[#allocation2 + $0x3a] sm:$0xff]
    %v1552 = vld [vmem:[#allocation2 + $0x4a] sm:$0xff]
    %v1553 = vld [vmem:[#allocation2 + $0x52] sm:$0xff]
    %v1554 = vld [vmem:[#allocation2 + $0x62] sm:$0xff]
    %v1555 = vld [vmem:[#allocation2 + $0x6a] sm:$0xff]
    %v1556 = vld [vmem:[#allocation2 + $0x7a] sm:$0xff]
    %v1557 = vld [vmem:[#allocation2 + $0x82] sm:$0xff]
    %v1558 = vld [vmem:[#allocation2 + $0x92] sm:$0xff]
    %v1559 = vld [vmem:[#allocation2 + $0x9a] sm:$0xff]
    %v1560 = vld [vmem:[#allocation2 + $0xaa] sm:$0xff]
    %v1561 = vld [vmem:[#allocation2 + $0xb2] sm:$0xff]
    %v1562 = vld [vmem:[#allocation2 + $0xc2] sm:$0xff]
    %v1563 = vld [vmem:[#allocation2 + $0xca] sm:$0xff]
    %v1564 = vld [vmem:[#allocation2 + $0xda] sm:$0xff]
    %v1565 = vld [vmem:[#allocation2 + $0xe2] sm:$0xff]
    %v1566 = vld [vmem:[#allocation2 + $0xf2] sm:$0xff]
    %v1567 = vld [vmem:[#allocation2 + $0xfa] sm:$0xff]
    %v1568 = vld [vmem:[#allocation2 + $0x10a] sm:$0xff]
    %v1569 = vld [vmem:[#allocation2 + $0x112] sm:$0xff]
    %v1570 = vld [vmem:[#allocation2 + $0x122] sm:$0xff]
    %v1571 = vld [vmem:[#allocation2 + $0x12a] sm:$0xff]
    %v1572 = vld [vmem:[#allocation2 + $0x13a] sm:$0xff]
    %v1573 = vld [vmem:[#allocation2 + $0x142] sm:$0xff]
    %v1574 = vld [vmem:[#allocation2 + $0x152] sm:$0xff]
    %v1575 = vld [vmem:[#allocation2 + $0x15a] sm:$0xff]
    %v1576 = vld [vmem:[#allocation2 + $0x16a] sm:$0xff]
    %v1577 = vld [vmem:[#allocation2 + $0x172] sm:$0xff]
    %v1578 = vld [vmem:[#allocation2 + $0x1b2] sm:$0xff]
    %v1579 = vld [vmem:[#allocation2 + $0x1ba] sm:$0xff]
    %v1580 = vld [vmem:[#allocation2 + $0x1ca] sm:$0xff]
    %v1581 = vld [vmem:[#allocation2 + $0x1d2] sm:$0xff]
    %v1582 = vld [vmem:[#allocation2 + $0x1e2] sm:$0xff]
    %v1583 = vld [vmem:[#allocation2 + $0x1ea] sm:$0xff]
    %v1584 = vld [vmem:[#allocation2 + $0x1fa] sm:$0xff]
    %v1585 = vld [vmem:[#allocation2 + $0x202] sm:$0xff]
    %v1586 = vld [vmem:[#allocation2 + $0x212] sm:$0xff]
    %v1587 = vld [vmem:[#allocation2 + $0x21a] sm:$0xff]
    %v1588 = vld [vmem:[#allocation2 + $0x22a] sm:$0xff]
    %v1589 = vld [vmem:[#allocation2 + $0x232] sm:$0xff]
    %v1590 = vld [vmem:[#allocation2 + $0x242] sm:$0xff]
    %v1591 = vld [vmem:[#allocation2 + $0x24a] sm:$0xff]
    %v1592 = vld [vmem:[#allocation2 + $0x25a] sm:$0xff]
    %v1593 = vld [vmem:[#allocation2 + $0x262] sm:$0xff]
    %v1594 = vld [vmem:[#allocation2 + $0x272] sm:$0xff]
    %v1595 = vld [vmem:[#allocation2 + $0x27a] sm:$0xff]
    %v1596 = vld [vmem:[#allocation2 + $0x28a] sm:$0xff]
    %v1597 = vld [vmem:[#allocation2 + $0x292] sm:$0xff]
    %v1598 = vld [vmem:[#allocation2 + $0x2a2] sm:$0xff]
    %v1599 = vld [vmem:[#allocation2 + $0x2aa] sm:$0xff]
    %v1600 = vld [vmem:[#allocation2 + $0x2ba] sm:$0xff]
    %v1601 = vld [vmem:[#allocation2 + $0x2c2] sm:$0xff]
    %v1602 = vld [vmem:[#allocation2 + $0x2d2] sm:$0xff]
    %v1603 = vld [vmem:[#allocation2 + $0x2da] sm:$0xff]
    %v1604 = vld [vmem:[#allocation2 + $0x2ea] sm:$0xff]
    %v1605 = vld [vmem:[#allocation2 + $0x2f2] sm:$0xff]
    %v1606 = vld [vmem:[#allocation2 + $0x302] sm:$0xff]
    %v1607 = vld [vmem:[#allocation2 + $0x30a] sm:$0xff]
    %v1608 = vld [vmem:[#allocation2 + $0x31a] sm:$0xff]
    %v1609 = vld [vmem:[#allocation2 + $0x322] sm:$0xff]
    %v1610 = vld [vmem:[%s1353] sm:$0xff]
    %v1611 = vld [vmem:[%s1353 + $0x8] sm:$0xff]
    %v1612 = vld [vmem:[%s1353 + $0x18] sm:$0xff]
    %v1613 = vld [vmem:[%s1353 + $0x20] sm:$0xff]
    %v1614 = vld [vmem:[%s1353 + $0x30] sm:$0xff]
    %v1615 = vld [vmem:[%s1353 + $0x38] sm:$0xff]
    %v1616 = vld [vmem:[%s1353 + $0x48] sm:$0xff]
    %v1617 = vld [vmem:[%s1353 + $0x50] sm:$0xff]
    %v1618 = vld [vmem:[%s1353 + $0x60] sm:$0xff]
    %v1619 = vld [vmem:[%s1353 + $0x68] sm:$0xff]
    %v1620 = vld [vmem:[%s1353 + $0x78] sm:$0xff]
    %v1621 = vld [vmem:[%s1353 + $0x80] sm:$0xff]
    %v1622 = vld [vmem:[%s1353 + $0x90] sm:$0xff]
    %v1623 = vld [vmem:[%s1353 + $0x98] sm:$0xff]
    %v1624 = vld [vmem:[%s1353 + $0xa8] sm:$0xff]
    %v1625 = vld [vmem:[%s1353 + $0xb0] sm:$0xff]
    %v1626 = vld [vmem:[%s1353 + $0xc0] sm:$0xff]
    %v1627 = vld [vmem:[%s1353 + $0xc8] sm:$0xff]
    %v1628 = vld [vmem:[%s1353 + $0xd8] sm:$0xff]
    %v1629 = vld [vmem:[%s1353 + $0xe0] sm:$0xff]
    %v1630 = vld [vmem:[%s1353 + $0xf0] sm:$0xff]
    %v1631 = vld [vmem:[%s1353 + $0xf8] sm:$0xff]
    %v1632 = vld [vmem:[%s1353 + $0x108] sm:$0xff]
    %v1633 = vld [vmem:[%s1353 + $0x110] sm:$0xff]
    %v1634 = vld [vmem:[%s1353 + $0x120] sm:$0xff]
    %v1635 = vld [vmem:[%s1353 + $0x128] sm:$0xff]
    %v1636 = vld [vmem:[%s1353 + $0x138] sm:$0xff]
    %v1637 = vld [vmem:[%s1353 + $0x140] sm:$0xff]
    %v1638 = vld [vmem:[%s1353 + $0x150] sm:$0xff]
    %v1639 = vld [vmem:[%s1353 + $0x158] sm:$0xff]
    %v1640 = vld [vmem:[%s1353 + $0x168] sm:$0xff]
    %v1641 = vld [vmem:[%s1353 + $0x170] sm:$0xff]
    %v1642 = vld [vmem:[%s1353 + $0x1b0] sm:$0xff]
    %v1643 = vld [vmem:[%s1353 + $0x1b8] sm:$0xff]
    %v1644 = vld [vmem:[%s1353 + $0x1c8] sm:$0xff]
    %v1645 = vld [vmem:[%s1353 + $0x1d0] sm:$0xff]
    %v1646 = vld [vmem:[%s1353 + $0x1e0] sm:$0xff]
    %v1647 = vld [vmem:[%s1353 + $0x1e8] sm:$0xff]
    %v1648 = vld [vmem:[%s1353 + $0x1f8] sm:$0xff]
    %v1649 = vld [vmem:[%s1353 + $0x200] sm:$0xff]
    %v1650 = vld [vmem:[%s1353 + $0x210] sm:$0xff]
    %v1651 = vld [vmem:[%s1353 + $0x218] sm:$0xff]
    %v1652 = vld [vmem:[%s1353 + $0x228] sm:$0xff]
    %v1653 = vld [vmem:[%s1353 + $0x230] sm:$0xff]
    %v1654 = vld [vmem:[%s1353 + $0x240] sm:$0xff]
    %v1655 = vld [vmem:[%s1353 + $0x248] sm:$0xff]
    %v1656 = vld [vmem:[%s1353 + $0x258] sm:$0xff]
    %v1657 = vld [vmem:[%s1353 + $0x260] sm:$0xff]
    %v1658 = vld [vmem:[%s1353 + $0x270] sm:$0xff]
    %v1659 = vld [vmem:[%s1353 + $0x278] sm:$0xff]
    %v1660 = vld [vmem:[%s1353 + $0x288] sm:$0xff]
    %v1661 = vld [vmem:[%s1353 + $0x290] sm:$0xff]
    %v1662 = vld [vmem:[%s1353 + $0x2a0] sm:$0xff]
    %v1663 = vld [vmem:[%s1353 + $0x2a8] sm:$0xff]
    %v1664 = vld [vmem:[%s1353 + $0x2b8] sm:$0xff]
    %v1665 = vld [vmem:[%s1353 + $0x2c0] sm:$0xff]
    %v1666 = vld [vmem:[%s1353 + $0x2d0] sm:$0xff]
    %v1667 = vld [vmem:[%s1353 + $0x2d8] sm:$0xff]
    %v1668 = vld [vmem:[%s1353 + $0x2e8] sm:$0xff]
    %v1669 = vld [vmem:[%s1353 + $0x2f0] sm:$0xff]
    %v1670 = vld [vmem:[%s1353 + $0x300] sm:$0xff]
    %v1671 = vld [vmem:[%s1353 + $0x308] sm:$0xff]
    %v1672 = vld [vmem:[%s1353 + $0x318] sm:$0xff]
    %v1673 = vld [vmem:[%s1353 + $0x320] sm:$0xff]
    %v1674 = vld [vmem:[%s1353 + $0x1] sm:$0xff]
    %v1675 = vld [vmem:[%s1353 + $0x9] sm:$0xff]
    %v1676 = vld [vmem:[%s1353 + $0x19] sm:$0xff]
    %v1677 = vld [vmem:[%s1353 + $0x21] sm:$0xff]
    %v1678 = vld [vmem:[%s1353 + $0x31] sm:$0xff]
    %v1679 = vld [vmem:[%s1353 + $0x39] sm:$0xff]
    %v1680 = vld [vmem:[%s1353 + $0x49] sm:$0xff]
    %v1681 = vld [vmem:[%s1353 + $0x51] sm:$0xff]
    %v1682 = vld [vmem:[%s1353 + $0x61] sm:$0xff]
    %v1683 = vld [vmem:[%s1353 + $0x69] sm:$0xff]
    %v1684 = vld [vmem:[%s1353 + $0x79] sm:$0xff]
    %v1685 = vld [vmem:[%s1353 + $0x81] sm:$0xff]
    %v1686 = vld [vmem:[%s1353 + $0x91] sm:$0xff]
    %v1687 = vld [vmem:[%s1353 + $0x99] sm:$0xff]
    %v1688 = vld [vmem:[%s1353 + $0xa9] sm:$0xff]
    %v1689 = vld [vmem:[%s1353 + $0xb1] sm:$0xff]
    %v1690 = vld [vmem:[%s1353 + $0xc1] sm:$0xff]
    %v1691 = vld [vmem:[%s1353 + $0xc9] sm:$0xff]
    %v1692 = vld [vmem:[%s1353 + $0xd9] sm:$0xff]
    %v1693 = vld [vmem:[%s1353 + $0xe1] sm:$0xff]
    %v1694 = vld [vmem:[%s1353 + $0xf1] sm:$0xff]
    %v1695 = vld [vmem:[%s1353 + $0xf9] sm:$0xff]
    %v1696 = vld [vmem:[%s1353 + $0x109] sm:$0xff]
    %v1697 = vld [vmem:[%s1353 + $0x111] sm:$0xff]
    %v1698 = vld [vmem:[%s1353 + $0x121] sm:$0xff]
    %v1699 = vld [vmem:[%s1353 + $0x129] sm:$0xff]
    %v1700 = vld [vmem:[%s1353 + $0x139] sm:$0xff]
    %v1701 = vld [vmem:[%s1353 + $0x141] sm:$0xff]
    %v1702 = vld [vmem:[%s1353 + $0x151] sm:$0xff]
    %v1703 = vld [vmem:[%s1353 + $0x159] sm:$0xff]
    %v1704 = vld [vmem:[%s1353 + $0x169] sm:$0xff]
    %v1705 = vld [vmem:[%s1353 + $0x171] sm:$0xff]
    %v1706 = vld [vmem:[%s1353 + $0x1b1] sm:$0xff]
    %v1707 = vld [vmem:[%s1353 + $0x1b9] sm:$0xff]
    %v1708 = vld [vmem:[%s1353 + $0x1c9] sm:$0xff]
    %v1709 = vld [vmem:[%s1353 + $0x1d1] sm:$0xff]
    %v1710 = vld [vmem:[%s1353 + $0x1e1] sm:$0xff]
    %v1711 = vld [vmem:[%s1353 + $0x1e9] sm:$0xff]
    %v1712 = vld [vmem:[%s1353 + $0x1f9] sm:$0xff]
    %v1713 = vld [vmem:[%s1353 + $0x201] sm:$0xff]
    %v1714 = vld [vmem:[%s1353 + $0x211] sm:$0xff]
    %v1715 = vld [vmem:[%s1353 + $0x219] sm:$0xff]
    %v1716 = vld [vmem:[%s1353 + $0x229] sm:$0xff]
    %v1717 = vld [vmem:[%s1353 + $0x231] sm:$0xff]
    %v1718 = vld [vmem:[%s1353 + $0x241] sm:$0xff]
    %v1719 = vld [vmem:[%s1353 + $0x249] sm:$0xff]
    %v1720 = vld [vmem:[%s1353 + $0x259] sm:$0xff]
    %v1721 = vld [vmem:[%s1353 + $0x261] sm:$0xff]
    %v1722 = vld [vmem:[%s1353 + $0x271] sm:$0xff]
    %v1723 = vld [vmem:[%s1353 + $0x279] sm:$0xff]
    %v1724 = vld [vmem:[%s1353 + $0x289] sm:$0xff]
    %v1725 = vld [vmem:[%s1353 + $0x291] sm:$0xff]
    %v1726 = vld [vmem:[%s1353 + $0x2a1] sm:$0xff]
    %v1727 = vld [vmem:[%s1353 + $0x2a9] sm:$0xff]
    %v1728 = vld [vmem:[%s1353 + $0x2b9] sm:$0xff]
    %v1729 = vld [vmem:[%s1353 + $0x2c1] sm:$0xff]
    %v1730 = vld [vmem:[%s1353 + $0x2d1] sm:$0xff]
    %v1731 = vld [vmem:[%s1353 + $0x2d9] sm:$0xff]
    %v1732 = vld [vmem:[%s1353 + $0x2e9] sm:$0xff]
    %v1733 = vld [vmem:[%s1353 + $0x2f1] sm:$0xff]
    %v1734 = vld [vmem:[%s1353 + $0x301] sm:$0xff]
    %v1735 = vld [vmem:[%s1353 + $0x309] sm:$0xff]
    %v1736 = vld [vmem:[%s1353 + $0x319] sm:$0xff]
    %v1737 = vld [vmem:[%s1353 + $0x321] sm:$0xff]
    %v1738 = vld [vmem:[%s1353 + $0x2] sm:$0xff]
    %v1739 = vld [vmem:[%s1353 + $0xa] sm:$0xff]
    %v1740 = vld [vmem:[%s1353 + $0x1a] sm:$0xff]
    %v1741 = vld [vmem:[%s1353 + $0x22] sm:$0xff]
    %v1742 = vld [vmem:[%s1353 + $0x32] sm:$0xff]
    %v1743 = vld [vmem:[%s1353 + $0x3a] sm:$0xff]
    %v1744 = vld [vmem:[%s1353 + $0x4a] sm:$0xff]
    %v1745 = vld [vmem:[%s1353 + $0x52] sm:$0xff]
    %v1746 = vld [vmem:[%s1353 + $0x62] sm:$0xff]
    %v1747 = vld [vmem:[%s1353 + $0x6a] sm:$0xff]
    %v1748 = vld [vmem:[%s1353 + $0x7a] sm:$0xff]
    %v1749 = vld [vmem:[%s1353 + $0x82] sm:$0xff]
    %v1750 = vld [vmem:[%s1353 + $0x92] sm:$0xff]
    %v1751 = vld [vmem:[%s1353 + $0x9a] sm:$0xff]
    %v1752 = vld [vmem:[%s1353 + $0xaa] sm:$0xff]
    %v1753 = vld [vmem:[%s1353 + $0xb2] sm:$0xff]
    %v1754 = vld [vmem:[%s1353 + $0xc2] sm:$0xff]
    %v1755 = vld [vmem:[%s1353 + $0xca] sm:$0xff]
    %v1756 = vld [vmem:[%s1353 + $0xda] sm:$0xff]
    %v1757 = vld [vmem:[%s1353 + $0xe2] sm:$0xff]
    %v1758 = vld [vmem:[%s1353 + $0xf2] sm:$0xff]
    %v1759 = vld [vmem:[%s1353 + $0xfa] sm:$0xff]
    %v1760 = vld [vmem:[%s1353 + $0x10a] sm:$0xff]
    %v1761 = vld [vmem:[%s1353 + $0x112] sm:$0xff]
    %v1762 = vld [vmem:[%s1353 + $0x122] sm:$0xff]
    %v1763 = vld [vmem:[%s1353 + $0x12a] sm:$0xff]
    %v1764 = vld [vmem:[%s1353 + $0x13a] sm:$0xff]
    %v1765 = vld [vmem:[%s1353 + $0x142] sm:$0xff]
    %v1766 = vld [vmem:[%s1353 + $0x152] sm:$0xff]
    %v1767 = vld [vmem:[%s1353 + $0x15a] sm:$0xff]
    %v1768 = vld [vmem:[%s1353 + $0x16a] sm:$0xff]
    %v1769 = vld [vmem:[%s1353 + $0x172] sm:$0xff]
    %v1770 = vld [vmem:[%s1353 + $0x1b2] sm:$0xff]
    %v1771 = vld [vmem:[%s1353 + $0x1ba] sm:$0xff]
    %v1772 = vld [vmem:[%s1353 + $0x1ca] sm:$0xff]
    %v1773 = vld [vmem:[%s1353 + $0x1d2] sm:$0xff]
    %v1774 = vld [vmem:[%s1353 + $0x1e2] sm:$0xff]
    %v1775 = vld [vmem:[%s1353 + $0x1ea] sm:$0xff]
    %v1776 = vld [vmem:[%s1353 + $0x1fa] sm:$0xff]
    %v1777 = vld [vmem:[%s1353 + $0x202] sm:$0xff]
    %v1778 = vld [vmem:[%s1353 + $0x212] sm:$0xff]
    %v1779 = vld [vmem:[%s1353 + $0x21a] sm:$0xff]
    %v1780 = vld [vmem:[%s1353 + $0x22a] sm:$0xff]
    %v1781 = vld [vmem:[%s1353 + $0x232] sm:$0xff]
    %v1782 = vld [vmem:[%s1353 + $0x242] sm:$0xff]
    %v1783 = vld [vmem:[%s1353 + $0x24a] sm:$0xff]
    %v1784 = vld [vmem:[%s1353 + $0x25a] sm:$0xff]
    %v1785 = vld [vmem:[%s1353 + $0x262] sm:$0xff]
    %v1786 = vld [vmem:[%s1353 + $0x272] sm:$0xff]
    %v1787 = vld [vmem:[%s1353 + $0x27a] sm:$0xff]
    %v1788 = vld [vmem:[%s1353 + $0x28a] sm:$0xff]
    %v1789 = vld [vmem:[%s1353 + $0x292] sm:$0xff]
    %v1790 = vld [vmem:[%s1353 + $0x2a2] sm:$0xff]
    %v1791 = vld [vmem:[%s1353 + $0x2aa] sm:$0xff]
    %v1792 = vld [vmem:[%s1353 + $0x2ba] sm:$0xff]
    %v1793 = vld [vmem:[%s1353 + $0x2c2] sm:$0xff]
    %v1794 = vld [vmem:[%s1353 + $0x2d2] sm:$0xff]
    %v1795 = vld [vmem:[%s1353 + $0x2da] sm:$0xff]
    %v1796 = vld [vmem:[%s1353 + $0x2ea] sm:$0xff]
    %v1797 = vld [vmem:[%s1353 + $0x2f2] sm:$0xff]
    %v1798 = vld [vmem:[%s1353 + $0x302] sm:$0xff]
    %v1799 = vld [vmem:[%s1353 + $0x30a] sm:$0xff]
    %v1800 = vld [vmem:[%s1353 + $0x31a] sm:$0xff]
    %v1801 = vld [vmem:[%s1353 + $0x322] sm:$0xff]
    %s1802 = scalar_lea.vmem [#allocation2], 48
    %v1803 = vld [vmem:[%s1802] sm:$0xff]
    %v1804 = vld [vmem:[%s1802 + $0x8] sm:$0xff]
    %v1805 = vld [vmem:[%s1802 + $0x18] sm:$0xff]
    %v1806 = vld [vmem:[%s1802 + $0x20] sm:$0xff]
    %v1807 = vld [vmem:[%s1802 + $0x30] sm:$0xff]
    %v1808 = vld [vmem:[%s1802 + $0x38] sm:$0xff]
    %v1809 = vld [vmem:[%s1802 + $0x48] sm:$0xff]
    %v1810 = vld [vmem:[%s1802 + $0x50] sm:$0xff]
    %v1811 = vld [vmem:[%s1802 + $0x60] sm:$0xff]
    %v1812 = vld [vmem:[%s1802 + $0x68] sm:$0xff]
    %v1813 = vld [vmem:[%s1802 + $0x78] sm:$0xff]
    %v1814 = vld [vmem:[%s1802 + $0x80] sm:$0xff]
    %v1815 = vld [vmem:[%s1802 + $0x90] sm:$0xff]
    %v1816 = vld [vmem:[%s1802 + $0x98] sm:$0xff]
    %v1817 = vld [vmem:[%s1802 + $0xa8] sm:$0xff]
    %v1818 = vld [vmem:[%s1802 + $0xb0] sm:$0xff]
    %v1819 = vld [vmem:[%s1802 + $0xc0] sm:$0xff]
    %v1820 = vld [vmem:[%s1802 + $0xc8] sm:$0xff]
    %v1821 = vld [vmem:[%s1802 + $0xd8] sm:$0xff]
    %v1822 = vld [vmem:[%s1802 + $0xe0] sm:$0xff]
    %v1823 = vld [vmem:[%s1802 + $0xf0] sm:$0xff]
    %v1824 = vld [vmem:[%s1802 + $0xf8] sm:$0xff]
    %v1825 = vld [vmem:[%s1802 + $0x108] sm:$0xff]
    %v1826 = vld [vmem:[%s1802 + $0x110] sm:$0xff]
    %v1827 = vld [vmem:[%s1802 + $0x120] sm:$0xff]
    %v1828 = vld [vmem:[%s1802 + $0x128] sm:$0xff]
    %v1829 = vld [vmem:[%s1802 + $0x138] sm:$0xff]
    %v1830 = vld [vmem:[%s1802 + $0x140] sm:$0xff]
    %v1831 = vld [vmem:[%s1802 + $0x150] sm:$0xff]
    %v1832 = vld [vmem:[%s1802 + $0x158] sm:$0xff]
    %v1833 = vld [vmem:[%s1802 + $0x168] sm:$0xff]
    %v1834 = vld [vmem:[%s1802 + $0x170] sm:$0xff]
    %v1835 = vld [vmem:[%s1802 + $0x1b0] sm:$0xff]
    %v1836 = vld [vmem:[%s1802 + $0x1b8] sm:$0xff]
    %v1837 = vld [vmem:[%s1802 + $0x1c8] sm:$0xff]
    %v1838 = vld [vmem:[%s1802 + $0x1d0] sm:$0xff]
    %v1839 = vld [vmem:[%s1802 + $0x1e0] sm:$0xff]
    %v1840 = vld [vmem:[%s1802 + $0x1e8] sm:$0xff]
    %v1841 = vld [vmem:[%s1802 + $0x1f8] sm:$0xff]
    %v1842 = vld [vmem:[%s1802 + $0x200] sm:$0xff]
    %v1843 = vld [vmem:[%s1802 + $0x210] sm:$0xff]
    %v1844 = vld [vmem:[%s1802 + $0x218] sm:$0xff]
    %v1845 = vld [vmem:[%s1802 + $0x228] sm:$0xff]
    %v1846 = vld [vmem:[%s1802 + $0x230] sm:$0xff]
    %v1847 = vld [vmem:[%s1802 + $0x240] sm:$0xff]
    %v1848 = vld [vmem:[%s1802 + $0x248] sm:$0xff]
    %v1849 = vld [vmem:[%s1802 + $0x258] sm:$0xff]
    %v1850 = vld [vmem:[%s1802 + $0x260] sm:$0xff]
    %v1851 = vld [vmem:[%s1802 + $0x270] sm:$0xff]
    %v1852 = vld [vmem:[%s1802 + $0x278] sm:$0xff]
    %v1853 = vld [vmem:[%s1802 + $0x288] sm:$0xff]
    %v1854 = vld [vmem:[%s1802 + $0x290] sm:$0xff]
    %v1855 = vld [vmem:[%s1802 + $0x2a0] sm:$0xff]
    %v1856 = vld [vmem:[%s1802 + $0x2a8] sm:$0xff]
    %v1857 = vld [vmem:[%s1802 + $0x2b8] sm:$0xff]
    %v1858 = vld [vmem:[%s1802 + $0x2c0] sm:$0xff]
    %v1859 = vld [vmem:[%s1802 + $0x2d0] sm:$0xff]
    %v1860 = vld [vmem:[%s1802 + $0x2d8] sm:$0xff]
    %v1861 = vld [vmem:[%s1802 + $0x2e8] sm:$0xff]
    %v1862 = vld [vmem:[%s1802 + $0x2f0] sm:$0xff]
    %v1863 = vld [vmem:[%s1802 + $0x300] sm:$0xff]
    %v1864 = vld [vmem:[%s1802 + $0x308] sm:$0xff]
    %v1865 = vld [vmem:[%s1802 + $0x318] sm:$0xff]
    %v1866 = vld [vmem:[%s1802 + $0x320] sm:$0xff]
    %v1867 = vld [vmem:[%s1802 + $0x1] sm:$0xff]
    %v1868 = vld [vmem:[%s1802 + $0x9] sm:$0xff]
    %v1869 = vld [vmem:[%s1802 + $0x19] sm:$0xff]
    %v1870 = vld [vmem:[%s1802 + $0x21] sm:$0xff]
    %v1871 = vld [vmem:[%s1802 + $0x31] sm:$0xff]
    %v1872 = vld [vmem:[%s1802 + $0x39] sm:$0xff]
    %v1873 = vld [vmem:[%s1802 + $0x49] sm:$0xff]
    %v1874 = vld [vmem:[%s1802 + $0x51] sm:$0xff]
    %v1875 = vld [vmem:[%s1802 + $0x61] sm:$0xff]
    %v1876 = vld [vmem:[%s1802 + $0x69] sm:$0xff]
    %v1877 = vld [vmem:[%s1802 + $0x79] sm:$0xff]
    %v1878 = vld [vmem:[%s1802 + $0x81] sm:$0xff]
    %v1879 = vld [vmem:[%s1802 + $0x91] sm:$0xff]
    %v1880 = vld [vmem:[%s1802 + $0x99] sm:$0xff]
    %v1881 = vld [vmem:[%s1802 + $0xa9] sm:$0xff]
    %v1882 = vld [vmem:[%s1802 + $0xb1] sm:$0xff]
    %v1883 = vld [vmem:[%s1802 + $0xc1] sm:$0xff]
    %v1884 = vld [vmem:[%s1802 + $0xc9] sm:$0xff]
    %v1885 = vld [vmem:[%s1802 + $0xd9] sm:$0xff]
    %v1886 = vld [vmem:[%s1802 + $0xe1] sm:$0xff]
    %v1887 = vld [vmem:[%s1802 + $0xf1] sm:$0xff]
    %v1888 = vld [vmem:[%s1802 + $0xf9] sm:$0xff]
    %v1889 = vld [vmem:[%s1802 + $0x109] sm:$0xff]
    %v1890 = vld [vmem:[%s1802 + $0x111] sm:$0xff]
    %v1891 = vld [vmem:[%s1802 + $0x121] sm:$0xff]
    %v1892 = vld [vmem:[%s1802 + $0x129] sm:$0xff]
    %v1893 = vld [vmem:[%s1802 + $0x139] sm:$0xff]
    %v1894 = vld [vmem:[%s1802 + $0x141] sm:$0xff]
    %v1895 = vld [vmem:[%s1802 + $0x151] sm:$0xff]
    %v1896 = vld [vmem:[%s1802 + $0x159] sm:$0xff]
    %v1897 = vld [vmem:[%s1802 + $0x169] sm:$0xff]
    %v1898 = vld [vmem:[%s1802 + $0x171] sm:$0xff]
    %v1899 = vld [vmem:[%s1802 + $0x1b1] sm:$0xff]
    %v1900 = vld [vmem:[%s1802 + $0x1b9] sm:$0xff]
    %v1901 = vld [vmem:[%s1802 + $0x1c9] sm:$0xff]
    %v1902 = vld [vmem:[%s1802 + $0x1d1] sm:$0xff]
    %v1903 = vld [vmem:[%s1802 + $0x1e1] sm:$0xff]
    %v1904 = vld [vmem:[%s1802 + $0x1e9] sm:$0xff]
    %v1905 = vld [vmem:[%s1802 + $0x1f9] sm:$0xff]
    %v1906 = vld [vmem:[%s1802 + $0x201] sm:$0xff]
    %v1907 = vld [vmem:[%s1802 + $0x211] sm:$0xff]
    %v1908 = vld [vmem:[%s1802 + $0x219] sm:$0xff]
    %v1909 = vld [vmem:[%s1802 + $0x229] sm:$0xff]
    %v1910 = vld [vmem:[%s1802 + $0x231] sm:$0xff]
    %v1911 = vld [vmem:[%s1802 + $0x241] sm:$0xff]
    %v1912 = vld [vmem:[%s1802 + $0x249] sm:$0xff]
    %v1913 = vld [vmem:[%s1802 + $0x259] sm:$0xff]
    %v1914 = vld [vmem:[%s1802 + $0x261] sm:$0xff]
    %v1915 = vld [vmem:[%s1802 + $0x271] sm:$0xff]
    %v1916 = vld [vmem:[%s1802 + $0x279] sm:$0xff]
    %v1917 = vld [vmem:[%s1802 + $0x289] sm:$0xff]
    %v1918 = vld [vmem:[%s1802 + $0x291] sm:$0xff]
    %v1919 = vld [vmem:[%s1802 + $0x2a1] sm:$0xff]
    %v1920 = vld [vmem:[%s1802 + $0x2a9] sm:$0xff]
    %v1921 = vld [vmem:[%s1802 + $0x2b9] sm:$0xff]
    %v1922 = vld [vmem:[%s1802 + $0x2c1] sm:$0xff]
    %v1923 = vld [vmem:[%s1802 + $0x2d1] sm:$0xff]
    %v1924 = vld [vmem:[%s1802 + $0x2d9] sm:$0xff]
    %v1925 = vld [vmem:[%s1802 + $0x2e9] sm:$0xff]
    %v1926 = vld [vmem:[%s1802 + $0x2f1] sm:$0xff]
    %v1927 = vld [vmem:[%s1802 + $0x301] sm:$0xff]
    %v1928 = vld [vmem:[%s1802 + $0x309] sm:$0xff]
    %v1929 = vld [vmem:[%s1802 + $0x319] sm:$0xff]
    %v1930 = vld [vmem:[%s1802 + $0x321] sm:$0xff]
    %v1931 = vld [vmem:[%s1802 + $0x2] sm:$0xff]
    %v1932 = vld [vmem:[%s1802 + $0xa] sm:$0xff]
    %v1933 = vld [vmem:[%s1802 + $0x1a] sm:$0xff]
    %v1934 = vld [vmem:[%s1802 + $0x22] sm:$0xff]
    %v1935 = vld [vmem:[%s1802 + $0x32] sm:$0xff]
    %v1936 = vld [vmem:[%s1802 + $0x3a] sm:$0xff]
    %v1937 = vld [vmem:[%s1802 + $0x4a] sm:$0xff]
    %v1938 = vld [vmem:[%s1802 + $0x52] sm:$0xff]
    %v1939 = vld [vmem:[%s1802 + $0x62] sm:$0xff]
    %v1940 = vld [vmem:[%s1802 + $0x6a] sm:$0xff]
    %v1941 = vld [vmem:[%s1802 + $0x7a] sm:$0xff]
    %v1942 = vld [vmem:[%s1802 + $0x82] sm:$0xff]
    %v1943 = vld [vmem:[%s1802 + $0x92] sm:$0xff]
    %v1944 = vld [vmem:[%s1802 + $0x9a] sm:$0xff]
    %v1945 = vld [vmem:[%s1802 + $0xaa] sm:$0xff]
    %v1946 = vld [vmem:[%s1802 + $0xb2] sm:$0xff]
    %v1947 = vld [vmem:[%s1802 + $0xc2] sm:$0xff]
    %v1948 = vld [vmem:[%s1802 + $0xca] sm:$0xff]
    %v1949 = vld [vmem:[%s1802 + $0xda] sm:$0xff]
    %v1950 = vld [vmem:[%s1802 + $0xe2] sm:$0xff]
    %v1951 = vld [vmem:[%s1802 + $0xf2] sm:$0xff]
    %v1952 = vld [vmem:[%s1802 + $0xfa] sm:$0xff]
    %v1953 = vld [vmem:[%s1802 + $0x10a] sm:$0xff]
    %v1954 = vld [vmem:[%s1802 + $0x112] sm:$0xff]
    %v1955 = vld [vmem:[%s1802 + $0x122] sm:$0xff]
    %v1956 = vld [vmem:[%s1802 + $0x12a] sm:$0xff]
    %v1957 = vld [vmem:[%s1802 + $0x13a] sm:$0xff]
    %v1958 = vld [vmem:[%s1802 + $0x142] sm:$0xff]
    %v1959 = vld [vmem:[%s1802 + $0x152] sm:$0xff]
    %v1960 = vld [vmem:[%s1802 + $0x15a] sm:$0xff]
    %v1961 = vld [vmem:[%s1802 + $0x16a] sm:$0xff]
    %v1962 = vld [vmem:[%s1802 + $0x172] sm:$0xff]
    %v1963 = vld [vmem:[%s1802 + $0x1b2] sm:$0xff]
    %v1964 = vld [vmem:[%s1802 + $0x1ba] sm:$0xff]
    %v1965 = vld [vmem:[%s1802 + $0x1ca] sm:$0xff]
    %v1966 = vld [vmem:[%s1802 + $0x1d2] sm:$0xff]
    %v1967 = vld [vmem:[%s1802 + $0x1e2] sm:$0xff]
    %v1968 = vld [vmem:[%s1802 + $0x1ea] sm:$0xff]
    %v1969 = vld [vmem:[%s1802 + $0x1fa] sm:$0xff]
    %v1970 = vld [vmem:[%s1802 + $0x202] sm:$0xff]
    %v1971 = vld [vmem:[%s1802 + $0x212] sm:$0xff]
    %v1972 = vld [vmem:[%s1802 + $0x21a] sm:$0xff]
    %v1973 = vld [vmem:[%s1802 + $0x22a] sm:$0xff]
    %v1974 = vld [vmem:[%s1802 + $0x232] sm:$0xff]
    %v1975 = vld [vmem:[%s1802 + $0x242] sm:$0xff]
    %v1976 = vld [vmem:[%s1802 + $0x24a] sm:$0xff]
    %v1977 = vld [vmem:[%s1802 + $0x25a] sm:$0xff]
    %v1978 = vld [vmem:[%s1802 + $0x262] sm:$0xff]
    %v1979 = vld [vmem:[%s1802 + $0x272] sm:$0xff]
    %v1980 = vld [vmem:[%s1802 + $0x27a] sm:$0xff]
    %v1981 = vld [vmem:[%s1802 + $0x28a] sm:$0xff]
    %v1982 = vld [vmem:[%s1802 + $0x292] sm:$0xff]
    %v1983 = vld [vmem:[%s1802 + $0x2a2] sm:$0xff]
    %v1984 = vld [vmem:[%s1802 + $0x2aa] sm:$0xff]
    %v1985 = vld [vmem:[%s1802 + $0x2ba] sm:$0xff]
    %v1986 = vld [vmem:[%s1802 + $0x2c2] sm:$0xff]
    %v1987 = vld [vmem:[%s1802 + $0x2d2] sm:$0xff]
    %v1988 = vld [vmem:[%s1802 + $0x2da] sm:$0xff]
    %v1989 = vld [vmem:[%s1802 + $0x2ea] sm:$0xff]
    %v1990 = vld [vmem:[%s1802 + $0x2f2] sm:$0xff]
    %v1991 = vld [vmem:[%s1802 + $0x302] sm:$0xff]
    %v1992 = vld [vmem:[%s1802 + $0x30a] sm:$0xff]
    %v1993 = vld [vmem:[%s1802 + $0x31a] sm:$0xff]
    %v1994 = vld [vmem:[%s1802 + $0x322] sm:$0xff]
    %2059 = vrot.lane.b32.xlu0 %v1482, 32
    %v2060 = vpop.permute.xlu0 %2059
    %2061 = vrot.lane.b32.xlu0 %v1483, 32
    %v2062 = vpop.permute.xlu0 %2061
    %2063 = vrot.lane.b32.xlu0 %v1484, 32
    %v2064 = vpop.permute.xlu0 %2063
    %2065 = vrot.lane.b32.xlu0 %v1485, 32
    %v2066 = vpop.permute.xlu0 %2065
    %2067 = vrot.lane.b32.xlu0 %v1486, 32
    %v2068 = vpop.permute.xlu0 %2067
    %2069 = vrot.lane.b32.xlu0 %v1487, 32
    %v2070 = vpop.permute.xlu0 %2069
    %2071 = vrot.lane.b32.xlu0 %v1488, 32
    %v2072 = vpop.permute.xlu0 %2071
    %2073 = vrot.lane.b32.xlu0 %v1489, 32
    %v2074 = vpop.permute.xlu0 %2073
    %2075 = vrot.lane.b32.xlu0 %v1490, 32
    %v2076 = vpop.permute.xlu0 %2075
    %2077 = vrot.lane.b32.xlu0 %v1491, 32
    %v2078 = vpop.permute.xlu0 %2077
    %2079 = vrot.lane.b32.xlu0 %v1492, 32
    %v2080 = vpop.permute.xlu0 %2079
    %2081 = vrot.lane.b32.xlu0 %v1493, 32
    %v2082 = vpop.permute.xlu0 %2081
    %2083 = vrot.lane.b32.xlu0 %v1494, 32
    %v2084 = vpop.permute.xlu0 %2083
    %2085 = vrot.lane.b32.xlu0 %v1495, 32
    %v2086 = vpop.permute.xlu0 %2085
    %2087 = vrot.lane.b32.xlu0 %v1496, 32
    %v2088 = vpop.permute.xlu0 %2087
    %2089 = vrot.lane.b32.xlu0 %v1497, 32
    %v2090 = vpop.permute.xlu0 %2089
    %2091 = vrot.lane.b32.xlu0 %v1498, 32
    %v2092 = vpop.permute.xlu0 %2091
    %2093 = vrot.lane.b32.xlu0 %v1499, 32
    %v2094 = vpop.permute.xlu0 %2093
    %2095 = vrot.lane.b32.xlu0 %v1500, 32
    %v2096 = vpop.permute.xlu0 %2095
    %2097 = vrot.lane.b32.xlu0 %v1501, 32
    %v2098 = vpop.permute.xlu0 %2097
    %2099 = vrot.lane.b32.xlu0 %v1502, 32
    %v2100 = vpop.permute.xlu0 %2099
    %2101 = vrot.lane.b32.xlu0 %v1503, 32
    %v2102 = vpop.permute.xlu0 %2101
    %2103 = vrot.lane.b32.xlu0 %v1504, 32
    %v2104 = vpop.permute.xlu0 %2103
    %2105 = vrot.lane.b32.xlu0 %v1505, 32
    %v2106 = vpop.permute.xlu0 %2105
    %2107 = vrot.lane.b32.xlu0 %v1506, 32
    %v2108 = vpop.permute.xlu0 %2107
    %2109 = vrot.lane.b32.xlu0 %v1507, 32
    %v2110 = vpop.permute.xlu0 %2109
    %2111 = vrot.lane.b32.xlu0 %v1508, 32
    %v2112 = vpop.permute.xlu0 %2111
    %2113 = vrot.lane.b32.xlu0 %v1509, 32
    %v2114 = vpop.permute.xlu0 %2113
    %2115 = vrot.lane.b32.xlu0 %v1510, 32
    %v2116 = vpop.permute.xlu0 %2115
    %2117 = vrot.lane.b32.xlu0 %v1511, 32
    %v2118 = vpop.permute.xlu0 %2117
    %2119 = vrot.lane.b32.xlu0 %v1512, 32
    %v2120 = vpop.permute.xlu0 %2119
    %2121 = vrot.lane.b32.xlu0 %v1513, 32
    %v2122 = vpop.permute.xlu0 %2121
    %2123 = vrot.lane.b32.xlu0 %v1514, 32
    %v2124 = vpop.permute.xlu0 %2123
    %2125 = vrot.lane.b32.xlu0 %v1515, 32
    %v2126 = vpop.permute.xlu0 %2125
    %2127 = vrot.lane.b32.xlu0 %v1516, 32
    %v2128 = vpop.permute.xlu0 %2127
    %2129 = vrot.lane.b32.xlu0 %v1517, 32
    %v2130 = vpop.permute.xlu0 %2129
    %2131 = vrot.lane.b32.xlu0 %v1518, 32
    %v2132 = vpop.permute.xlu0 %2131
    %2133 = vrot.lane.b32.xlu0 %v1519, 32
    %v2134 = vpop.permute.xlu0 %2133
    %2135 = vrot.lane.b32.xlu0 %v1520, 32
    %v2136 = vpop.permute.xlu0 %2135
    %2137 = vrot.lane.b32.xlu0 %v1521, 32
    %v2138 = vpop.permute.xlu0 %2137
    %2139 = vrot.lane.b32.xlu0 %v1522, 32
    %v2140 = vpop.permute.xlu0 %2139
    %2141 = vrot.lane.b32.xlu0 %v1523, 32
    %v2142 = vpop.permute.xlu0 %2141
    %2143 = vrot.lane.b32.xlu0 %v1524, 32
    %v2144 = vpop.permute.xlu0 %2143
    %2145 = vrot.lane.b32.xlu0 %v1525, 32
    %v2146 = vpop.permute.xlu0 %2145
    %2147 = vrot.lane.b32.xlu0 %v1526, 32
    %v2148 = vpop.permute.xlu0 %2147
    %2149 = vrot.lane.b32.xlu0 %v1527, 32
    %v2150 = vpop.permute.xlu0 %2149
    %2151 = vrot.lane.b32.xlu0 %v1528, 32
    %v2152 = vpop.permute.xlu0 %2151
    %2153 = vrot.lane.b32.xlu0 %v1529, 32
    %v2154 = vpop.permute.xlu0 %2153
    %2155 = vrot.lane.b32.xlu0 %v1530, 32
    %v2156 = vpop.permute.xlu0 %2155
    %2157 = vrot.lane.b32.xlu0 %v1531, 32
    %v2158 = vpop.permute.xlu0 %2157
    %2159 = vrot.lane.b32.xlu0 %v1532, 32
    %v2160 = vpop.permute.xlu0 %2159
    %2161 = vrot.lane.b32.xlu0 %v1533, 32
    %v2162 = vpop.permute.xlu0 %2161
    %2163 = vrot.lane.b32.xlu0 %v1534, 32
    %v2164 = vpop.permute.xlu0 %2163
    %2165 = vrot.lane.b32.xlu0 %v1535, 32
    %v2166 = vpop.permute.xlu0 %2165
    %2167 = vrot.lane.b32.xlu0 %v1536, 32
    %v2168 = vpop.permute.xlu0 %2167
    %2169 = vrot.lane.b32.xlu0 %v1537, 32
    %v2170 = vpop.permute.xlu0 %2169
    %2171 = vrot.lane.b32.xlu0 %v1538, 32
    %v2172 = vpop.permute.xlu0 %2171
    %2173 = vrot.lane.b32.xlu0 %v1539, 32
    %v2174 = vpop.permute.xlu0 %2173
    %2175 = vrot.lane.b32.xlu0 %v1540, 32
    %v2176 = vpop.permute.xlu0 %2175
    %2177 = vrot.lane.b32.xlu0 %v1541, 32
    %v2178 = vpop.permute.xlu0 %2177
    %2179 = vrot.lane.b32.xlu0 %v1542, 32
    %v2180 = vpop.permute.xlu0 %2179
    %2181 = vrot.lane.b32.xlu0 %v1543, 32
    %v2182 = vpop.permute.xlu0 %2181
    %2183 = vrot.lane.b32.xlu0 %v1544, 32
    %v2184 = vpop.permute.xlu0 %2183
    %2185 = vrot.lane.b32.xlu0 %v1545, 32
    %v2186 = vpop.permute.xlu0 %2185
    %2315 = vrot.lane.b32.xlu0 %v1546, 64
    %v2316 = vpop.permute.xlu0 %2315
    %2317 = vrot.lane.b32.xlu0 %v1547, 64
    %v2318 = vpop.permute.xlu0 %2317
    %2319 = vrot.lane.b32.xlu0 %v1548, 64
    %v2320 = vpop.permute.xlu0 %2319
    %2321 = vrot.lane.b32.xlu0 %v1549, 64
    %v2322 = vpop.permute.xlu0 %2321
    %2323 = vrot.lane.b32.xlu0 %v1550, 64
    %v2324 = vpop.permute.xlu0 %2323
    %2325 = vrot.lane.b32.xlu0 %v1551, 64
    %v2326 = vpop.permute.xlu0 %2325
    %2327 = vrot.lane.b32.xlu0 %v1552, 64
    %v2328 = vpop.permute.xlu0 %2327
    %2329 = vrot.lane.b32.xlu0 %v1553, 64
    %v2330 = vpop.permute.xlu0 %2329
    %2331 = vrot.lane.b32.xlu0 %v1554, 64
    %v2332 = vpop.permute.xlu0 %2331
    %2333 = vrot.lane.b32.xlu0 %v1555, 64
    %v2334 = vpop.permute.xlu0 %2333
    %2335 = vrot.lane.b32.xlu0 %v1556, 64
    %v2336 = vpop.permute.xlu0 %2335
    %2337 = vrot.lane.b32.xlu0 %v1557, 64
    %v2338 = vpop.permute.xlu0 %2337
    %2339 = vrot.lane.b32.xlu0 %v1558, 64
    %v2340 = vpop.permute.xlu0 %2339
    %2341 = vrot.lane.b32.xlu0 %v1559, 64
    %v2342 = vpop.permute.xlu0 %2341
    %2343 = vrot.lane.b32.xlu0 %v1560, 64
    %v2344 = vpop.permute.xlu0 %2343
    %2345 = vrot.lane.b32.xlu0 %v1561, 64
    %v2346 = vpop.permute.xlu0 %2345
    %2347 = vrot.lane.b32.xlu0 %v1562, 64
    %v2348 = vpop.permute.xlu0 %2347
    %2349 = vrot.lane.b32.xlu0 %v1563, 64
    %v2350 = vpop.permute.xlu0 %2349
    %2351 = vrot.lane.b32.xlu0 %v1564, 64
    %v2352 = vpop.permute.xlu0 %2351
    %2353 = vrot.lane.b32.xlu0 %v1565, 64
    %v2354 = vpop.permute.xlu0 %2353
    %2355 = vrot.lane.b32.xlu0 %v1566, 64
    %v2356 = vpop.permute.xlu0 %2355
    %2357 = vrot.lane.b32.xlu0 %v1567, 64
    %v2358 = vpop.permute.xlu0 %2357
    %2359 = vrot.lane.b32.xlu0 %v1568, 64
    %v2360 = vpop.permute.xlu0 %2359
    %2361 = vrot.lane.b32.xlu0 %v1569, 64
    %v2362 = vpop.permute.xlu0 %2361
    %2363 = vrot.lane.b32.xlu0 %v1570, 64
    %v2364 = vpop.permute.xlu0 %2363
    %2365 = vrot.lane.b32.xlu0 %v1571, 64
    %v2366 = vpop.permute.xlu0 %2365
    %2367 = vrot.lane.b32.xlu0 %v1572, 64
    %v2368 = vpop.permute.xlu0 %2367
    %2369 = vrot.lane.b32.xlu0 %v1573, 64
    %v2370 = vpop.permute.xlu0 %2369
    %2371 = vrot.lane.b32.xlu0 %v1574, 64
    %v2372 = vpop.permute.xlu0 %2371
    %2373 = vrot.lane.b32.xlu0 %v1575, 64
    %v2374 = vpop.permute.xlu0 %2373
    %2375 = vrot.lane.b32.xlu0 %v1576, 64
    %v2376 = vpop.permute.xlu0 %2375
    %2377 = vrot.lane.b32.xlu0 %v1577, 64
    %v2378 = vpop.permute.xlu0 %2377
    %2379 = vrot.lane.b32.xlu0 %v1578, 64
    %v2380 = vpop.permute.xlu0 %2379
    %2381 = vrot.lane.b32.xlu0 %v1579, 64
    %v2382 = vpop.permute.xlu0 %2381
    %2383 = vrot.lane.b32.xlu0 %v1580, 64
    %v2384 = vpop.permute.xlu0 %2383
    %2385 = vrot.lane.b32.xlu0 %v1581, 64
    %v2386 = vpop.permute.xlu0 %2385
    %2387 = vrot.lane.b32.xlu0 %v1582, 64
    %v2388 = vpop.permute.xlu0 %2387
    %2389 = vrot.lane.b32.xlu0 %v1583, 64
    %v2390 = vpop.permute.xlu0 %2389
    %2391 = vrot.lane.b32.xlu0 %v1584, 64
    %v2392 = vpop.permute.xlu0 %2391
    %2393 = vrot.lane.b32.xlu0 %v1585, 64
    %v2394 = vpop.permute.xlu0 %2393
    %2395 = vrot.lane.b32.xlu0 %v1586, 64
    %v2396 = vpop.permute.xlu0 %2395
    %2397 = vrot.lane.b32.xlu0 %v1587, 64
    %v2398 = vpop.permute.xlu0 %2397
    %2399 = vrot.lane.b32.xlu0 %v1588, 64
    %v2400 = vpop.permute.xlu0 %2399
    %2401 = vrot.lane.b32.xlu0 %v1589, 64
    %v2402 = vpop.permute.xlu0 %2401
    %2403 = vrot.lane.b32.xlu0 %v1590, 64
    %v2404 = vpop.permute.xlu0 %2403
    %2405 = vrot.lane.b32.xlu0 %v1591, 64
    %v2406 = vpop.permute.xlu0 %2405
    %2407 = vrot.lane.b32.xlu0 %v1592, 64
    %v2408 = vpop.permute.xlu0 %2407
    %2409 = vrot.lane.b32.xlu0 %v1593, 64
    %v2410 = vpop.permute.xlu0 %2409
    %2411 = vrot.lane.b32.xlu0 %v1594, 64
    %v2412 = vpop.permute.xlu0 %2411
    %2413 = vrot.lane.b32.xlu0 %v1595, 64
    %v2414 = vpop.permute.xlu0 %2413
    %2415 = vrot.lane.b32.xlu0 %v1596, 64
    %v2416 = vpop.permute.xlu0 %2415
    %2417 = vrot.lane.b32.xlu0 %v1597, 64
    %v2418 = vpop.permute.xlu0 %2417
    %2419 = vrot.lane.b32.xlu0 %v1598, 64
    %v2420 = vpop.permute.xlu0 %2419
    %2421 = vrot.lane.b32.xlu0 %v1599, 64
    %v2422 = vpop.permute.xlu0 %2421
    %2423 = vrot.lane.b32.xlu0 %v1600, 64
    %v2424 = vpop.permute.xlu0 %2423
    %2425 = vrot.lane.b32.xlu0 %v1601, 64
    %v2426 = vpop.permute.xlu0 %2425
    %2427 = vrot.lane.b32.xlu0 %v1602, 64
    %v2428 = vpop.permute.xlu0 %2427
    %2429 = vrot.lane.b32.xlu0 %v1603, 64
    %v2430 = vpop.permute.xlu0 %2429
    %2431 = vrot.lane.b32.xlu0 %v1604, 64
    %v2432 = vpop.permute.xlu0 %2431
    %2433 = vrot.lane.b32.xlu0 %v1605, 64
    %v2434 = vpop.permute.xlu0 %2433
    %2435 = vrot.lane.b32.xlu0 %v1606, 64
    %v2436 = vpop.permute.xlu0 %2435
    %2437 = vrot.lane.b32.xlu0 %v1607, 64
    %v2438 = vpop.permute.xlu0 %2437
    %2439 = vrot.lane.b32.xlu0 %v1608, 64
    %v2440 = vpop.permute.xlu0 %2439
    %2441 = vrot.lane.b32.xlu0 %v1609, 64
    %v2442 = vpop.permute.xlu0 %2441
    %2571 = vrot.lane.b32.xlu0 %v1610, 96
    %v2572 = vpop.permute.xlu0 %2571
    %2573 = vrot.lane.b32.xlu0 %v1611, 96
    %v2574 = vpop.permute.xlu0 %2573
    %2575 = vrot.lane.b32.xlu0 %v1612, 96
    %v2576 = vpop.permute.xlu0 %2575
    %2577 = vrot.lane.b32.xlu0 %v1613, 96
    %v2578 = vpop.permute.xlu0 %2577
    %2579 = vrot.lane.b32.xlu0 %v1614, 96
    %v2580 = vpop.permute.xlu0 %2579
    %2581 = vrot.lane.b32.xlu0 %v1615, 96
    %v2582 = vpop.permute.xlu0 %2581
    %2583 = vrot.lane.b32.xlu0 %v1616, 96
    %v2584 = vpop.permute.xlu0 %2583
    %2585 = vrot.lane.b32.xlu0 %v1617, 96
    %v2586 = vpop.permute.xlu0 %2585
    %2587 = vrot.lane.b32.xlu0 %v1618, 96
    %v2588 = vpop.permute.xlu0 %2587
    %2589 = vrot.lane.b32.xlu0 %v1619, 96
    %v2590 = vpop.permute.xlu0 %2589
    %2591 = vrot.lane.b32.xlu0 %v1620, 96
    %v2592 = vpop.permute.xlu0 %2591
    %2593 = vrot.lane.b32.xlu0 %v1621, 96
    %v2594 = vpop.permute.xlu0 %2593
    %2595 = vrot.lane.b32.xlu0 %v1622, 96
    %v2596 = vpop.permute.xlu0 %2595
    %2597 = vrot.lane.b32.xlu0 %v1623, 96
    %v2598 = vpop.permute.xlu0 %2597
    %2599 = vrot.lane.b32.xlu0 %v1624, 96
    %v2600 = vpop.permute.xlu0 %2599
    %2601 = vrot.lane.b32.xlu0 %v1625, 96
    %v2602 = vpop.permute.xlu0 %2601
    %2603 = vrot.lane.b32.xlu0 %v1626, 96
    %v2604 = vpop.permute.xlu0 %2603
    %2605 = vrot.lane.b32.xlu0 %v1627, 96
    %v2606 = vpop.permute.xlu0 %2605
    %2607 = vrot.lane.b32.xlu0 %v1628, 96
    %v2608 = vpop.permute.xlu0 %2607
    %2609 = vrot.lane.b32.xlu0 %v1629, 96
    %v2610 = vpop.permute.xlu0 %2609
    %2611 = vrot.lane.b32.xlu0 %v1630, 96
    %v2612 = vpop.permute.xlu0 %2611
    %2613 = vrot.lane.b32.xlu0 %v1631, 96
    %v2614 = vpop.permute.xlu0 %2613
    %2615 = vrot.lane.b32.xlu0 %v1632, 96
    %v2616 = vpop.permute.xlu0 %2615
    %2617 = vrot.lane.b32.xlu0 %v1633, 96
    %v2618 = vpop.permute.xlu0 %2617
    %2619 = vrot.lane.b32.xlu0 %v1634, 96
    %v2620 = vpop.permute.xlu0 %2619
    %2621 = vrot.lane.b32.xlu0 %v1635, 96
    %v2622 = vpop.permute.xlu0 %2621
    %2623 = vrot.lane.b32.xlu0 %v1636, 96
    %v2624 = vpop.permute.xlu0 %2623
    %2625 = vrot.lane.b32.xlu0 %v1637, 96
    %v2626 = vpop.permute.xlu0 %2625
    %2627 = vrot.lane.b32.xlu0 %v1638, 96
    %v2628 = vpop.permute.xlu0 %2627
    %2629 = vrot.lane.b32.xlu0 %v1639, 96
    %v2630 = vpop.permute.xlu0 %2629
    %2631 = vrot.lane.b32.xlu0 %v1640, 96
    %v2632 = vpop.permute.xlu0 %2631
    %2633 = vrot.lane.b32.xlu0 %v1641, 96
    %v2634 = vpop.permute.xlu0 %2633
    %2635 = vrot.lane.b32.xlu0 %v1642, 96
    %v2636 = vpop.permute.xlu0 %2635
    %2637 = vrot.lane.b32.xlu0 %v1643, 96
    %v2638 = vpop.permute.xlu0 %2637
    %2639 = vrot.lane.b32.xlu0 %v1644, 96
    %v2640 = vpop.permute.xlu0 %2639
    %2641 = vrot.lane.b32.xlu0 %v1645, 96
    %v2642 = vpop.permute.xlu0 %2641
    %2643 = vrot.lane.b32.xlu0 %v1646, 96
    %v2644 = vpop.permute.xlu0 %2643
    %2645 = vrot.lane.b32.xlu0 %v1647, 96
    %v2646 = vpop.permute.xlu0 %2645
    %2647 = vrot.lane.b32.xlu0 %v1648, 96
    %v2648 = vpop.permute.xlu0 %2647
    %2649 = vrot.lane.b32.xlu0 %v1649, 96
    %v2650 = vpop.permute.xlu0 %2649
    %2651 = vrot.lane.b32.xlu0 %v1650, 96
    %v2652 = vpop.permute.xlu0 %2651
    %2653 = vrot.lane.b32.xlu0 %v1651, 96
    %v2654 = vpop.permute.xlu0 %2653
    %2655 = vrot.lane.b32.xlu0 %v1652, 96
    %v2656 = vpop.permute.xlu0 %2655
    %2657 = vrot.lane.b32.xlu0 %v1653, 96
    %v2658 = vpop.permute.xlu0 %2657
    %2659 = vrot.lane.b32.xlu0 %v1654, 96
    %v2660 = vpop.permute.xlu0 %2659
    %2661 = vrot.lane.b32.xlu0 %v1655, 96
    %v2662 = vpop.permute.xlu0 %2661
    %2663 = vrot.lane.b32.xlu0 %v1656, 96
    %v2664 = vpop.permute.xlu0 %2663
    %2665 = vrot.lane.b32.xlu0 %v1657, 96
    %v2666 = vpop.permute.xlu0 %2665
    %2667 = vrot.lane.b32.xlu0 %v1658, 96
    %v2668 = vpop.permute.xlu0 %2667
    %2669 = vrot.lane.b32.xlu0 %v1659, 96
    %v2670 = vpop.permute.xlu0 %2669
    %2671 = vrot.lane.b32.xlu0 %v1660, 96
    %v2672 = vpop.permute.xlu0 %2671
    %2673 = vrot.lane.b32.xlu0 %v1661, 96
    %v2674 = vpop.permute.xlu0 %2673
    %2675 = vrot.lane.b32.xlu0 %v1662, 96
    %v2676 = vpop.permute.xlu0 %2675
    %2677 = vrot.lane.b32.xlu0 %v1663, 96
    %v2678 = vpop.permute.xlu0 %2677
    %2679 = vrot.lane.b32.xlu0 %v1664, 96
    %v2680 = vpop.permute.xlu0 %2679
    %2681 = vrot.lane.b32.xlu0 %v1665, 96
    %v2682 = vpop.permute.xlu0 %2681
    %2683 = vrot.lane.b32.xlu0 %v1666, 96
    %v2684 = vpop.permute.xlu0 %2683
    %2685 = vrot.lane.b32.xlu0 %v1667, 96
    %v2686 = vpop.permute.xlu0 %2685
    %2687 = vrot.lane.b32.xlu0 %v1668, 96
    %v2688 = vpop.permute.xlu0 %2687
    %2689 = vrot.lane.b32.xlu0 %v1669, 96
    %v2690 = vpop.permute.xlu0 %2689
    %2691 = vrot.lane.b32.xlu0 %v1670, 96
    %v2692 = vpop.permute.xlu0 %2691
    %2693 = vrot.lane.b32.xlu0 %v1671, 96
    %v2694 = vpop.permute.xlu0 %2693
    %2695 = vrot.lane.b32.xlu0 %v1672, 96
    %v2696 = vpop.permute.xlu0 %2695
    %2697 = vrot.lane.b32.xlu0 %v1673, 96
    %v2698 = vpop.permute.xlu0 %2697
    %2827 = vrot.lane.b32.xlu0 %v1738, 32
    %v2828 = vpop.permute.xlu0 %2827
    %2829 = vrot.lane.b32.xlu0 %v1739, 32
    %v2830 = vpop.permute.xlu0 %2829
    %2831 = vrot.lane.b32.xlu0 %v1740, 32
    %v2832 = vpop.permute.xlu0 %2831
    %2833 = vrot.lane.b32.xlu0 %v1741, 32
    %v2834 = vpop.permute.xlu0 %2833
    %2835 = vrot.lane.b32.xlu0 %v1742, 32
    %v2836 = vpop.permute.xlu0 %2835
    %2837 = vrot.lane.b32.xlu0 %v1743, 32
    %v2838 = vpop.permute.xlu0 %2837
    %2839 = vrot.lane.b32.xlu0 %v1744, 32
    %v2840 = vpop.permute.xlu0 %2839
    %2841 = vrot.lane.b32.xlu0 %v1745, 32
    %v2842 = vpop.permute.xlu0 %2841
    %2843 = vrot.lane.b32.xlu0 %v1746, 32
    %v2844 = vpop.permute.xlu0 %2843
    %2845 = vrot.lane.b32.xlu0 %v1747, 32
    %v2846 = vpop.permute.xlu0 %2845
    %2847 = vrot.lane.b32.xlu0 %v1748, 32
    %v2848 = vpop.permute.xlu0 %2847
    %2849 = vrot.lane.b32.xlu0 %v1749, 32
    %v2850 = vpop.permute.xlu0 %2849
    %2851 = vrot.lane.b32.xlu0 %v1750, 32
    %v2852 = vpop.permute.xlu0 %2851
    %2853 = vrot.lane.b32.xlu0 %v1751, 32
    %v2854 = vpop.permute.xlu0 %2853
    %2855 = vrot.lane.b32.xlu0 %v1752, 32
    %v2856 = vpop.permute.xlu0 %2855
    %2857 = vrot.lane.b32.xlu0 %v1753, 32
    %v2858 = vpop.permute.xlu0 %2857
    %2859 = vrot.lane.b32.xlu0 %v1754, 32
    %v2860 = vpop.permute.xlu0 %2859
    %2861 = vrot.lane.b32.xlu0 %v1755, 32
    %v2862 = vpop.permute.xlu0 %2861
    %2863 = vrot.lane.b32.xlu0 %v1756, 32
    %v2864 = vpop.permute.xlu0 %2863
    %2865 = vrot.lane.b32.xlu0 %v1757, 32
    %v2866 = vpop.permute.xlu0 %2865
    %2867 = vrot.lane.b32.xlu0 %v1758, 32
    %v2868 = vpop.permute.xlu0 %2867
    %2869 = vrot.lane.b32.xlu0 %v1759, 32
    %v2870 = vpop.permute.xlu0 %2869
    %2871 = vrot.lane.b32.xlu0 %v1760, 32
    %v2872 = vpop.permute.xlu0 %2871
    %2873 = vrot.lane.b32.xlu0 %v1761, 32
    %v2874 = vpop.permute.xlu0 %2873
    %2875 = vrot.lane.b32.xlu0 %v1762, 32
    %v2876 = vpop.permute.xlu0 %2875
    %2877 = vrot.lane.b32.xlu0 %v1763, 32
    %v2878 = vpop.permute.xlu0 %2877
    %2879 = vrot.lane.b32.xlu0 %v1764, 32
    %v2880 = vpop.permute.xlu0 %2879
    %2881 = vrot.lane.b32.xlu0 %v1765, 32
    %v2882 = vpop.permute.xlu0 %2881
    %2883 = vrot.lane.b32.xlu0 %v1766, 32
    %v2884 = vpop.permute.xlu0 %2883
    %2885 = vrot.lane.b32.xlu0 %v1767, 32
    %v2886 = vpop.permute.xlu0 %2885
    %2887 = vrot.lane.b32.xlu0 %v1768, 32
    %v2888 = vpop.permute.xlu0 %2887
    %2889 = vrot.lane.b32.xlu0 %v1769, 32
    %v2890 = vpop.permute.xlu0 %2889
    %2891 = vrot.lane.b32.xlu0 %v1770, 32
    %v2892 = vpop.permute.xlu0 %2891
    %2893 = vrot.lane.b32.xlu0 %v1771, 32
    %v2894 = vpop.permute.xlu0 %2893
    %2895 = vrot.lane.b32.xlu0 %v1772, 32
    %v2896 = vpop.permute.xlu0 %2895
    %2897 = vrot.lane.b32.xlu0 %v1773, 32
    %v2898 = vpop.permute.xlu0 %2897
    %2899 = vrot.lane.b32.xlu0 %v1774, 32
    %v2900 = vpop.permute.xlu0 %2899
    %2901 = vrot.lane.b32.xlu0 %v1775, 32
    %v2902 = vpop.permute.xlu0 %2901
    %2903 = vrot.lane.b32.xlu0 %v1776, 32
    %v2904 = vpop.permute.xlu0 %2903
    %2905 = vrot.lane.b32.xlu0 %v1777, 32
    %v2906 = vpop.permute.xlu0 %2905
    %2907 = vrot.lane.b32.xlu0 %v1778, 32
    %v2908 = vpop.permute.xlu0 %2907
    %2909 = vrot.lane.b32.xlu0 %v1779, 32
    %v2910 = vpop.permute.xlu0 %2909
    %2911 = vrot.lane.b32.xlu0 %v1780, 32
    %v2912 = vpop.permute.xlu0 %2911
    %2913 = vrot.lane.b32.xlu0 %v1781, 32
    %v2914 = vpop.permute.xlu0 %2913
    %2915 = vrot.lane.b32.xlu0 %v1782, 32
    %v2916 = vpop.permute.xlu0 %2915
    %2917 = vrot.lane.b32.xlu0 %v1783, 32
    %v2918 = vpop.permute.xlu0 %2917
    %2919 = vrot.lane.b32.xlu0 %v1784, 32
    %v2920 = vpop.permute.xlu0 %2919
    %2921 = vrot.lane.b32.xlu0 %v1785, 32
    %v2922 = vpop.permute.xlu0 %2921
    %2923 = vrot.lane.b32.xlu0 %v1786, 32
    %v2924 = vpop.permute.xlu0 %2923
    %2925 = vrot.lane.b32.xlu0 %v1787, 32
    %v2926 = vpop.permute.xlu0 %2925
    %2927 = vrot.lane.b32.xlu0 %v1788, 32
    %v2928 = vpop.permute.xlu0 %2927
    %2929 = vrot.lane.b32.xlu0 %v1789, 32
    %v2930 = vpop.permute.xlu0 %2929
    %2931 = vrot.lane.b32.xlu0 %v1790, 32
    %v2932 = vpop.permute.xlu0 %2931
    %2933 = vrot.lane.b32.xlu0 %v1791, 32
    %v2934 = vpop.permute.xlu0 %2933
    %2935 = vrot.lane.b32.xlu0 %v1792, 32
    %v2936 = vpop.permute.xlu0 %2935
    %2937 = vrot.lane.b32.xlu0 %v1793, 32
    %v2938 = vpop.permute.xlu0 %2937
    %2939 = vrot.lane.b32.xlu0 %v1794, 32
    %v2940 = vpop.permute.xlu0 %2939
    %2941 = vrot.lane.b32.xlu0 %v1795, 32
    %v2942 = vpop.permute.xlu0 %2941
    %2943 = vrot.lane.b32.xlu0 %v1796, 32
    %v2944 = vpop.permute.xlu0 %2943
    %2945 = vrot.lane.b32.xlu0 %v1797, 32
    %v2946 = vpop.permute.xlu0 %2945
    %2947 = vrot.lane.b32.xlu0 %v1798, 32
    %v2948 = vpop.permute.xlu0 %2947
    %2949 = vrot.lane.b32.xlu0 %v1799, 32
    %v2950 = vpop.permute.xlu0 %2949
    %2951 = vrot.lane.b32.xlu0 %v1800, 32
    %v2952 = vpop.permute.xlu0 %2951
    %2953 = vrot.lane.b32.xlu0 %v1801, 32
    %v2954 = vpop.permute.xlu0 %2953
    %3083 = vrot.lane.b32.xlu0 %v1803, 64
    %v3084 = vpop.permute.xlu0 %3083
    %3085 = vrot.lane.b32.xlu0 %v1804, 64
    %v3086 = vpop.permute.xlu0 %3085
    %3087 = vrot.lane.b32.xlu0 %v1805, 64
    %v3088 = vpop.permute.xlu0 %3087
    %3089 = vrot.lane.b32.xlu0 %v1806, 64
    %v3090 = vpop.permute.xlu0 %3089
    %3091 = vrot.lane.b32.xlu0 %v1807, 64
    %v3092 = vpop.permute.xlu0 %3091
    %3093 = vrot.lane.b32.xlu0 %v1808, 64
    %v3094 = vpop.permute.xlu0 %3093
    %3095 = vrot.lane.b32.xlu0 %v1809, 64
    %v3096 = vpop.permute.xlu0 %3095
    %3097 = vrot.lane.b32.xlu0 %v1810, 64
    %v3098 = vpop.permute.xlu0 %3097
    %3099 = vrot.lane.b32.xlu0 %v1811, 64
    %v3100 = vpop.permute.xlu0 %3099
    %3101 = vrot.lane.b32.xlu0 %v1812, 64
    %v3102 = vpop.permute.xlu0 %3101
    %3103 = vrot.lane.b32.xlu0 %v1813, 64
    %v3104 = vpop.permute.xlu0 %3103
    %3105 = vrot.lane.b32.xlu0 %v1814, 64
    %v3106 = vpop.permute.xlu0 %3105
    %3107 = vrot.lane.b32.xlu0 %v1815, 64
    %v3108 = vpop.permute.xlu0 %3107
    %3109 = vrot.lane.b32.xlu0 %v1816, 64
    %v3110 = vpop.permute.xlu0 %3109
    %3111 = vrot.lane.b32.xlu0 %v1817, 64
    %v3112 = vpop.permute.xlu0 %3111
    %3113 = vrot.lane.b32.xlu0 %v1818, 64
    %v3114 = vpop.permute.xlu0 %3113
    %3115 = vrot.lane.b32.xlu0 %v1819, 64
    %v3116 = vpop.permute.xlu0 %3115
    %3117 = vrot.lane.b32.xlu0 %v1820, 64
    %v3118 = vpop.permute.xlu0 %3117
    %3119 = vrot.lane.b32.xlu0 %v1821, 64
    %v3120 = vpop.permute.xlu0 %3119
    %3121 = vrot.lane.b32.xlu0 %v1822, 64
    %v3122 = vpop.permute.xlu0 %3121
    %3123 = vrot.lane.b32.xlu0 %v1823, 64
    %v3124 = vpop.permute.xlu0 %3123
    %3125 = vrot.lane.b32.xlu0 %v1824, 64
    %v3126 = vpop.permute.xlu0 %3125
    %3127 = vrot.lane.b32.xlu0 %v1825, 64
    %v3128 = vpop.permute.xlu0 %3127
    %3129 = vrot.lane.b32.xlu0 %v1826, 64
    %v3130 = vpop.permute.xlu0 %3129
    %3131 = vrot.lane.b32.xlu0 %v1827, 64
    %v3132 = vpop.permute.xlu0 %3131
    %3133 = vrot.lane.b32.xlu0 %v1828, 64
    %v3134 = vpop.permute.xlu0 %3133
    %3135 = vrot.lane.b32.xlu0 %v1829, 64
    %v3136 = vpop.permute.xlu0 %3135
    %3137 = vrot.lane.b32.xlu0 %v1830, 64
    %v3138 = vpop.permute.xlu0 %3137
    %3139 = vrot.lane.b32.xlu0 %v1831, 64
    %v3140 = vpop.permute.xlu0 %3139
    %3141 = vrot.lane.b32.xlu0 %v1832, 64
    %v3142 = vpop.permute.xlu0 %3141
    %3143 = vrot.lane.b32.xlu0 %v1833, 64
    %v3144 = vpop.permute.xlu0 %3143
    %3145 = vrot.lane.b32.xlu0 %v1834, 64
    %v3146 = vpop.permute.xlu0 %3145
    %3147 = vrot.lane.b32.xlu0 %v1835, 64
    %v3148 = vpop.permute.xlu0 %3147
    %3149 = vrot.lane.b32.xlu0 %v1836, 64
    %v3150 = vpop.permute.xlu0 %3149
    %3151 = vrot.lane.b32.xlu0 %v1837, 64
    %v3152 = vpop.permute.xlu0 %3151
    %3153 = vrot.lane.b32.xlu0 %v1838, 64
    %v3154 = vpop.permute.xlu0 %3153
    %3155 = vrot.lane.b32.xlu0 %v1839, 64
    %v3156 = vpop.permute.xlu0 %3155
    %3157 = vrot.lane.b32.xlu0 %v1840, 64
    %v3158 = vpop.permute.xlu0 %3157
    %3159 = vrot.lane.b32.xlu0 %v1841, 64
    %v3160 = vpop.permute.xlu0 %3159
    %3161 = vrot.lane.b32.xlu0 %v1842, 64
    %v3162 = vpop.permute.xlu0 %3161
    %3163 = vrot.lane.b32.xlu0 %v1843, 64
    %v3164 = vpop.permute.xlu0 %3163
    %3165 = vrot.lane.b32.xlu0 %v1844, 64
    %v3166 = vpop.permute.xlu0 %3165
    %3167 = vrot.lane.b32.xlu0 %v1845, 64
    %v3168 = vpop.permute.xlu0 %3167
    %3169 = vrot.lane.b32.xlu0 %v1846, 64
    %v3170 = vpop.permute.xlu0 %3169
    %3171 = vrot.lane.b32.xlu0 %v1847, 64
    %v3172 = vpop.permute.xlu0 %3171
    %3173 = vrot.lane.b32.xlu0 %v1848, 64
    %v3174 = vpop.permute.xlu0 %3173
    %3175 = vrot.lane.b32.xlu0 %v1849, 64
    %v3176 = vpop.permute.xlu0 %3175
    %3177 = vrot.lane.b32.xlu0 %v1850, 64
    %v3178 = vpop.permute.xlu0 %3177
    %3179 = vrot.lane.b32.xlu0 %v1851, 64
    %v3180 = vpop.permute.xlu0 %3179
    %3181 = vrot.lane.b32.xlu0 %v1852, 64
    %v3182 = vpop.permute.xlu0 %3181
    %3183 = vrot.lane.b32.xlu0 %v1853, 64
    %v3184 = vpop.permute.xlu0 %3183
    %3185 = vrot.lane.b32.xlu0 %v1854, 64
    %v3186 = vpop.permute.xlu0 %3185
    %3187 = vrot.lane.b32.xlu0 %v1855, 64
    %v3188 = vpop.permute.xlu0 %3187
    %3189 = vrot.lane.b32.xlu0 %v1856, 64
    %v3190 = vpop.permute.xlu0 %3189
    %3191 = vrot.lane.b32.xlu0 %v1857, 64
    %v3192 = vpop.permute.xlu0 %3191
    %3193 = vrot.lane.b32.xlu0 %v1858, 64
    %v3194 = vpop.permute.xlu0 %3193
    %3195 = vrot.lane.b32.xlu0 %v1859, 64
    %v3196 = vpop.permute.xlu0 %3195
    %3197 = vrot.lane.b32.xlu0 %v1860, 64
    %v3198 = vpop.permute.xlu0 %3197
    %3199 = vrot.lane.b32.xlu0 %v1861, 64
    %v3200 = vpop.permute.xlu0 %3199
    %3201 = vrot.lane.b32.xlu0 %v1862, 64
    %v3202 = vpop.permute.xlu0 %3201
    %3203 = vrot.lane.b32.xlu0 %v1863, 64
    %v3204 = vpop.permute.xlu0 %3203
    %3205 = vrot.lane.b32.xlu0 %v1864, 64
    %v3206 = vpop.permute.xlu0 %3205
    %3207 = vrot.lane.b32.xlu0 %v1865, 64
    %v3208 = vpop.permute.xlu0 %3207
    %3209 = vrot.lane.b32.xlu0 %v1866, 64
    %v3210 = vpop.permute.xlu0 %3209
    %3339 = vrot.lane.b32.xlu0 %v1867, 96
    %v3340 = vpop.permute.xlu0 %3339
    %3341 = vrot.lane.b32.xlu0 %v1868, 96
    %v3342 = vpop.permute.xlu0 %3341
    %3343 = vrot.lane.b32.xlu0 %v1869, 96
    %v3344 = vpop.permute.xlu0 %3343
    %3345 = vrot.lane.b32.xlu0 %v1870, 96
    %v3346 = vpop.permute.xlu0 %3345
    %3347 = vrot.lane.b32.xlu0 %v1871, 96
    %v3348 = vpop.permute.xlu0 %3347
    %3349 = vrot.lane.b32.xlu0 %v1872, 96
    %v3350 = vpop.permute.xlu0 %3349
    %3351 = vrot.lane.b32.xlu0 %v1873, 96
    %v3352 = vpop.permute.xlu0 %3351
    %3353 = vrot.lane.b32.xlu0 %v1874, 96
    %v3354 = vpop.permute.xlu0 %3353
    %3355 = vrot.lane.b32.xlu0 %v1875, 96
    %v3356 = vpop.permute.xlu0 %3355
    %3357 = vrot.lane.b32.xlu0 %v1876, 96
    %v3358 = vpop.permute.xlu0 %3357
    %3359 = vrot.lane.b32.xlu0 %v1877, 96
    %v3360 = vpop.permute.xlu0 %3359
    %3361 = vrot.lane.b32.xlu0 %v1878, 96
    %v3362 = vpop.permute.xlu0 %3361
    %3363 = vrot.lane.b32.xlu0 %v1879, 96
    %v3364 = vpop.permute.xlu0 %3363
    %3365 = vrot.lane.b32.xlu0 %v1880, 96
    %v3366 = vpop.permute.xlu0 %3365
    %3367 = vrot.lane.b32.xlu0 %v1881, 96
    %v3368 = vpop.permute.xlu0 %3367
    %3369 = vrot.lane.b32.xlu0 %v1882, 96
    %v3370 = vpop.permute.xlu0 %3369
    %3371 = vrot.lane.b32.xlu0 %v1883, 96
    %v3372 = vpop.permute.xlu0 %3371
    %3373 = vrot.lane.b32.xlu0 %v1884, 96
    %v3374 = vpop.permute.xlu0 %3373
    %3375 = vrot.lane.b32.xlu0 %v1885, 96
    %v3376 = vpop.permute.xlu0 %3375
    %3377 = vrot.lane.b32.xlu0 %v1886, 96
    %v3378 = vpop.permute.xlu0 %3377
    %3379 = vrot.lane.b32.xlu0 %v1887, 96
    %v3380 = vpop.permute.xlu0 %3379
    %3381 = vrot.lane.b32.xlu0 %v1888, 96
    %v3382 = vpop.permute.xlu0 %3381
    %3383 = vrot.lane.b32.xlu0 %v1889, 96
    %v3384 = vpop.permute.xlu0 %3383
    %3385 = vrot.lane.b32.xlu0 %v1890, 96
    %v3386 = vpop.permute.xlu0 %3385
    %3387 = vrot.lane.b32.xlu0 %v1891, 96
    %v3388 = vpop.permute.xlu0 %3387
    %3389 = vrot.lane.b32.xlu0 %v1892, 96
    %v3390 = vpop.permute.xlu0 %3389
    %3391 = vrot.lane.b32.xlu0 %v1893, 96
    %v3392 = vpop.permute.xlu0 %3391
    %3393 = vrot.lane.b32.xlu0 %v1894, 96
    %v3394 = vpop.permute.xlu0 %3393
    %3395 = vrot.lane.b32.xlu0 %v1895, 96
    %v3396 = vpop.permute.xlu0 %3395
    %3397 = vrot.lane.b32.xlu0 %v1896, 96
    %v3398 = vpop.permute.xlu0 %3397
    %3399 = vrot.lane.b32.xlu0 %v1897, 96
    %v3400 = vpop.permute.xlu0 %3399
    %3401 = vrot.lane.b32.xlu0 %v1898, 96
    %v3402 = vpop.permute.xlu0 %3401
    %3403 = vrot.lane.b32.xlu0 %v1899, 96
    %v3404 = vpop.permute.xlu0 %3403
    %3405 = vrot.lane.b32.xlu0 %v1900, 96
    %v3406 = vpop.permute.xlu0 %3405
    %3407 = vrot.lane.b32.xlu0 %v1901, 96
    %v3408 = vpop.permute.xlu0 %3407
    %3409 = vrot.lane.b32.xlu0 %v1902, 96
    %v3410 = vpop.permute.xlu0 %3409
    %3411 = vrot.lane.b32.xlu0 %v1903, 96
    %v3412 = vpop.permute.xlu0 %3411
    %3413 = vrot.lane.b32.xlu0 %v1904, 96
    %v3414 = vpop.permute.xlu0 %3413
    %3415 = vrot.lane.b32.xlu0 %v1905, 96
    %v3416 = vpop.permute.xlu0 %3415
    %3417 = vrot.lane.b32.xlu0 %v1906, 96
    %v3418 = vpop.permute.xlu0 %3417
    %3419 = vrot.lane.b32.xlu0 %v1907, 96
    %v3420 = vpop.permute.xlu0 %3419
    %3421 = vrot.lane.b32.xlu0 %v1908, 96
    %v3422 = vpop.permute.xlu0 %3421
    %3423 = vrot.lane.b32.xlu0 %v1909, 96
    %v3424 = vpop.permute.xlu0 %3423
    %3425 = vrot.lane.b32.xlu0 %v1910, 96
    %v3426 = vpop.permute.xlu0 %3425
    %3427 = vrot.lane.b32.xlu0 %v1911, 96
    %v3428 = vpop.permute.xlu0 %3427
    %3429 = vrot.lane.b32.xlu0 %v1912, 96
    %v3430 = vpop.permute.xlu0 %3429
    %3431 = vrot.lane.b32.xlu0 %v1913, 96
    %v3432 = vpop.permute.xlu0 %3431
    %3433 = vrot.lane.b32.xlu0 %v1914, 96
    %v3434 = vpop.permute.xlu0 %3433
    %3435 = vrot.lane.b32.xlu0 %v1915, 96
    %v3436 = vpop.permute.xlu0 %3435
    %3437 = vrot.lane.b32.xlu0 %v1916, 96
    %v3438 = vpop.permute.xlu0 %3437
    %3439 = vrot.lane.b32.xlu0 %v1917, 96
    %v3440 = vpop.permute.xlu0 %3439
    %3441 = vrot.lane.b32.xlu0 %v1918, 96
    %v3442 = vpop.permute.xlu0 %3441
    %3443 = vrot.lane.b32.xlu0 %v1919, 96
    %v3444 = vpop.permute.xlu0 %3443
    %3445 = vrot.lane.b32.xlu0 %v1920, 96
    %v3446 = vpop.permute.xlu0 %3445
    %3447 = vrot.lane.b32.xlu0 %v1921, 96
    %v3448 = vpop.permute.xlu0 %3447
    %3449 = vrot.lane.b32.xlu0 %v1922, 96
    %v3450 = vpop.permute.xlu0 %3449
    %3451 = vrot.lane.b32.xlu0 %v1923, 96
    %v3452 = vpop.permute.xlu0 %3451
    %3453 = vrot.lane.b32.xlu0 %v1924, 96
    %v3454 = vpop.permute.xlu0 %3453
    %3455 = vrot.lane.b32.xlu0 %v1925, 96
    %v3456 = vpop.permute.xlu0 %3455
    %3457 = vrot.lane.b32.xlu0 %v1926, 96
    %v3458 = vpop.permute.xlu0 %3457
    %3459 = vrot.lane.b32.xlu0 %v1927, 96
    %v3460 = vpop.permute.xlu0 %3459
    %3461 = vrot.lane.b32.xlu0 %v1928, 96
    %v3462 = vpop.permute.xlu0 %3461
    %3463 = vrot.lane.b32.xlu0 %v1929, 96
    %v3464 = vpop.permute.xlu0 %3463
    %3465 = vrot.lane.b32.xlu0 %v1930, 96
    %v3466 = vpop.permute.xlu0 %3465
    %v3531 = vsel %vm33, %v1418, %v2060
    %v3532 = vsel %vm33, %v1419, %v2062
    %v3533 = vsel %vm33, %v1420, %v2064
    %v3534 = vsel %vm33, %v1421, %v2066
    %v3535 = vsel %vm33, %v1422, %v2068
    %v3536 = vsel %vm33, %v1423, %v2070
    %v3537 = vsel %vm33, %v1424, %v2072
    %v3538 = vsel %vm33, %v1425, %v2074
    %v3539 = vsel %vm33, %v1426, %v2076
    %v3540 = vsel %vm33, %v1427, %v2078
    %v3541 = vsel %vm33, %v1428, %v2080
    %v3542 = vsel %vm33, %v1429, %v2082
    %v3543 = vsel %vm33, %v1430, %v2084
    %v3544 = vsel %vm33, %v1431, %v2086
    %v3545 = vsel %vm33, %v1432, %v2088
    %v3546 = vsel %vm33, %v1433, %v2090
    %v3547 = vsel %vm33, %v1434, %v2092
    %v3548 = vsel %vm33, %v1435, %v2094
    %v3549 = vsel %vm33, %v1436, %v2096
    %v3550 = vsel %vm33, %v1437, %v2098
    %v3551 = vsel %vm33, %v1438, %v2100
    %v3552 = vsel %vm33, %v1439, %v2102
    %v3553 = vsel %vm33, %v1440, %v2104
    %v3554 = vsel %vm33, %v1441, %v2106
    %v3555 = vsel %vm33, %v1442, %v2108
    %v3556 = vsel %vm33, %v1443, %v2110
    %v3557 = vsel %vm33, %v1444, %v2112
    %v3558 = vsel %vm33, %v1445, %v2114
    %v3559 = vsel %vm33, %v1446, %v2116
    %v3560 = vsel %vm33, %v1447, %v2118
    %v3561 = vsel %vm33, %v1448, %v2120
    %v3562 = vsel %vm33, %v1449, %v2122
    %v3563 = vsel %vm33, %v1450, %v2124
    %v3564 = vsel %vm33, %v1451, %v2126
    %v3565 = vsel %vm33, %v1452, %v2128
    %v3566 = vsel %vm33, %v1453, %v2130
    %v3567 = vsel %vm33, %v1454, %v2132
    %v3568 = vsel %vm33, %v1455, %v2134
    %v3569 = vsel %vm33, %v1456, %v2136
    %v3570 = vsel %vm33, %v1457, %v2138
    %v3571 = vsel %vm33, %v1458, %v2140
    %v3572 = vsel %vm33, %v1459, %v2142
    %v3573 = vsel %vm33, %v1460, %v2144
    %v3574 = vsel %vm33, %v1461, %v2146
    %v3575 = vsel %vm33, %v1462, %v2148
    %v3576 = vsel %vm33, %v1463, %v2150
    %v3577 = vsel %vm33, %v1464, %v2152
    %v3578 = vsel %vm33, %v1465, %v2154
    %v3579 = vsel %vm33, %v1466, %v2156
    %v3580 = vsel %vm33, %v1467, %v2158
    %v3581 = vsel %vm33, %v1468, %v2160
    %v3582 = vsel %vm33, %v1469, %v2162
    %v3583 = vsel %vm33, %v1470, %v2164
    %v3584 = vsel %vm33, %v1471, %v2166
    %v3585 = vsel %vm33, %v1472, %v2168
    %v3586 = vsel %vm33, %v1473, %v2170
    %v3587 = vsel %vm33, %v1474, %v2172
    %v3588 = vsel %vm33, %v1475, %v2174
    %v3589 = vsel %vm33, %v1476, %v2176
    %v3590 = vsel %vm33, %v1477, %v2178
    %v3591 = vsel %vm33, %v1478, %v2180
    %v3592 = vsel %vm33, %v1479, %v2182
    %v3593 = vsel %vm33, %v1480, %v2184
    %v3594 = vsel %vm33, %v1481, %v2186
    %v3595 = vsel %vm143, %v3531, %v2316
    %v3596 = vsel %vm143, %v3532, %v2318
    %v3597 = vsel %vm143, %v3533, %v2320
    %v3598 = vsel %vm143, %v3534, %v2322
    %v3599 = vsel %vm143, %v3535, %v2324
    %v3600 = vsel %vm143, %v3536, %v2326
    %v3601 = vsel %vm143, %v3537, %v2328
    %v3602 = vsel %vm143, %v3538, %v2330
    %v3603 = vsel %vm143, %v3539, %v2332
    %v3604 = vsel %vm143, %v3540, %v2334
    %v3605 = vsel %vm143, %v3541, %v2336
    %v3606 = vsel %vm143, %v3542, %v2338
    %v3607 = vsel %vm143, %v3543, %v2340
    %v3608 = vsel %vm143, %v3544, %v2342
    %v3609 = vsel %vm143, %v3545, %v2344
    %v3610 = vsel %vm143, %v3546, %v2346
    %v3611 = vsel %vm143, %v3547, %v2348
    %v3612 = vsel %vm143, %v3548, %v2350
    %v3613 = vsel %vm143, %v3549, %v2352
    %v3614 = vsel %vm143, %v3550, %v2354
    %v3615 = vsel %vm143, %v3551, %v2356
    %v3616 = vsel %vm143, %v3552, %v2358
    %v3617 = vsel %vm143, %v3553, %v2360
    %v3618 = vsel %vm143, %v3554, %v2362
    %v3619 = vsel %vm143, %v3555, %v2364
    %v3620 = vsel %vm143, %v3556, %v2366
    %v3621 = vsel %vm143, %v3557, %v2368
    %v3622 = vsel %vm143, %v3558, %v2370
    %v3623 = vsel %vm143, %v3559, %v2372
    %v3624 = vsel %vm143, %v3560, %v2374
    %v3625 = vsel %vm143, %v3561, %v2376
    %v3626 = vsel %vm143, %v3562, %v2378
    %v3627 = vsel %vm143, %v3563, %v2380
    %v3628 = vsel %vm143, %v3564, %v2382
    %v3629 = vsel %vm143, %v3565, %v2384
    %v3630 = vsel %vm143, %v3566, %v2386
    %v3631 = vsel %vm143, %v3567, %v2388
    %v3632 = vsel %vm143, %v3568, %v2390
    %v3633 = vsel %vm143, %v3569, %v2392
    %v3634 = vsel %vm143, %v3570, %v2394
    %v3635 = vsel %vm143, %v3571, %v2396
    %v3636 = vsel %vm143, %v3572, %v2398
    %v3637 = vsel %vm143, %v3573, %v2400
    %v3638 = vsel %vm143, %v3574, %v2402
    %v3639 = vsel %vm143, %v3575, %v2404
    %v3640 = vsel %vm143, %v3576, %v2406
    %v3641 = vsel %vm143, %v3577, %v2408
    %v3642 = vsel %vm143, %v3578, %v2410
    %v3643 = vsel %vm143, %v3579, %v2412
    %v3644 = vsel %vm143, %v3580, %v2414
    %v3645 = vsel %vm143, %v3581, %v2416
    %v3646 = vsel %vm143, %v3582, %v2418
    %v3647 = vsel %vm143, %v3583, %v2420
    %v3648 = vsel %vm143, %v3584, %v2422
    %v3649 = vsel %vm143, %v3585, %v2424
    %v3650 = vsel %vm143, %v3586, %v2426
    %v3651 = vsel %vm143, %v3587, %v2428
    %v3652 = vsel %vm143, %v3588, %v2430
    %v3653 = vsel %vm143, %v3589, %v2432
    %v3654 = vsel %vm143, %v3590, %v2434
    %v3655 = vsel %vm143, %v3591, %v2436
    %v3656 = vsel %vm143, %v3592, %v2438
    %v3657 = vsel %vm143, %v3593, %v2440
    %v3658 = vsel %vm143, %v3594, %v2442
    %vm3659 = vcmask 785408
    %v3660 = vsel %vm3659, %v3595, %v2572
    %v3661 = vsel %vm3659, %v3596, %v2574
    %v3662 = vsel %vm3659, %v3597, %v2576
    %v3663 = vsel %vm3659, %v3598, %v2578
    %v3664 = vsel %vm3659, %v3599, %v2580
    %v3665 = vsel %vm3659, %v3600, %v2582
    %v3666 = vsel %vm3659, %v3601, %v2584
    %v3667 = vsel %vm3659, %v3602, %v2586
    %v3668 = vsel %vm3659, %v3603, %v2588
    %v3669 = vsel %vm3659, %v3604, %v2590
    %v3670 = vsel %vm3659, %v3605, %v2592
    %v3671 = vsel %vm3659, %v3606, %v2594
    %v3672 = vsel %vm3659, %v3607, %v2596
    %v3673 = vsel %vm3659, %v3608, %v2598
    %v3674 = vsel %vm3659, %v3609, %v2600
    %v3675 = vsel %vm3659, %v3610, %v2602
    %v3676 = vsel %vm3659, %v3611, %v2604
    %v3677 = vsel %vm3659, %v3612, %v2606
    %v3678 = vsel %vm3659, %v3613, %v2608
    %v3679 = vsel %vm3659, %v3614, %v2610
    %v3680 = vsel %vm3659, %v3615, %v2612
    %v3681 = vsel %vm3659, %v3616, %v2614
    %v3682 = vsel %vm3659, %v3617, %v2616
    %v3683 = vsel %vm3659, %v3618, %v2618
    %v3684 = vsel %vm3659, %v3619, %v2620
    %v3685 = vsel %vm3659, %v3620, %v2622
    %v3686 = vsel %vm3659, %v3621, %v2624
    %v3687 = vsel %vm3659, %v3622, %v2626
    %v3688 = vsel %vm3659, %v3623, %v2628
    %v3689 = vsel %vm3659, %v3624, %v2630
    %v3690 = vsel %vm3659, %v3625, %v2632
    %v3691 = vsel %vm3659, %v3626, %v2634
    %v3692 = vsel %vm3659, %v3627, %v2636
    %v3693 = vsel %vm3659, %v3628, %v2638
    %v3694 = vsel %vm3659, %v3629, %v2640
    %v3695 = vsel %vm3659, %v3630, %v2642
    %v3696 = vsel %vm3659, %v3631, %v2644
    %v3697 = vsel %vm3659, %v3632, %v2646
    %v3698 = vsel %vm3659, %v3633, %v2648
    %v3699 = vsel %vm3659, %v3634, %v2650
    %v3700 = vsel %vm3659, %v3635, %v2652
    %v3701 = vsel %vm3659, %v3636, %v2654
    %v3702 = vsel %vm3659, %v3637, %v2656
    %v3703 = vsel %vm3659, %v3638, %v2658
    %v3704 = vsel %vm3659, %v3639, %v2660
    %v3705 = vsel %vm3659, %v3640, %v2662
    %v3706 = vsel %vm3659, %v3641, %v2664
    %v3707 = vsel %vm3659, %v3642, %v2666
    %v3708 = vsel %vm3659, %v3643, %v2668
    %v3709 = vsel %vm3659, %v3644, %v2670
    %v3710 = vsel %vm3659, %v3645, %v2672
    %v3711 = vsel %vm3659, %v3646, %v2674
    %v3712 = vsel %vm3659, %v3647, %v2676
    %v3713 = vsel %vm3659, %v3648, %v2678
    %v3714 = vsel %vm3659, %v3649, %v2680
    %v3715 = vsel %vm3659, %v3650, %v2682
    %v3716 = vsel %vm3659, %v3651, %v2684
    %v3717 = vsel %vm3659, %v3652, %v2686
    %v3718 = vsel %vm3659, %v3653, %v2688
    %v3719 = vsel %vm3659, %v3654, %v2690
    %v3720 = vsel %vm3659, %v3655, %v2692
    %v3721 = vsel %vm3659, %v3656, %v2694
    %v3722 = vsel %vm3659, %v3657, %v2696
    %v3723 = vsel %vm3659, %v3658, %v2698
    %v3724 = vsel %vm33, %v1674, %v2828
    %v3725 = vsel %vm33, %v1675, %v2830
    %v3726 = vsel %vm33, %v1676, %v2832
    %v3727 = vsel %vm33, %v1677, %v2834
    %v3728 = vsel %vm33, %v1678, %v2836
    %v3729 = vsel %vm33, %v1679, %v2838
    %v3730 = vsel %vm33, %v1680, %v2840
    %v3731 = vsel %vm33, %v1681, %v2842
    %v3732 = vsel %vm33, %v1682, %v2844
    %v3733 = vsel %vm33, %v1683, %v2846
    %v3734 = vsel %vm33, %v1684, %v2848
    %v3735 = vsel %vm33, %v1685, %v2850
    %v3736 = vsel %vm33, %v1686, %v2852
    %v3737 = vsel %vm33, %v1687, %v2854
    %v3738 = vsel %vm33, %v1688, %v2856
    %v3739 = vsel %vm33, %v1689, %v2858
    %v3740 = vsel %vm33, %v1690, %v2860
    %v3741 = vsel %vm33, %v1691, %v2862
    %v3742 = vsel %vm33, %v1692, %v2864
    %v3743 = vsel %vm33, %v1693, %v2866
    %v3744 = vsel %vm33, %v1694, %v2868
    %v3745 = vsel %vm33, %v1695, %v2870
    %v3746 = vsel %vm33, %v1696, %v2872
    %v3747 = vsel %vm33, %v1697, %v2874
    %v3748 = vsel %vm33, %v1698, %v2876
    %v3749 = vsel %vm33, %v1699, %v2878
    %v3750 = vsel %vm33, %v1700, %v2880
    %v3751 = vsel %vm33, %v1701, %v2882
    %v3752 = vsel %vm33, %v1702, %v2884
    %v3753 = vsel %vm33, %v1703, %v2886
    %v3754 = vsel %vm33, %v1704, %v2888
    %v3755 = vsel %vm33, %v1705, %v2890
    %v3756 = vsel %vm33, %v1706, %v2892
    %v3757 = vsel %vm33, %v1707, %v2894
    %v3758 = vsel %vm33, %v1708, %v2896
    %v3759 = vsel %vm33, %v1709, %v2898
    %v3760 = vsel %vm33, %v1710, %v2900
    %v3761 = vsel %vm33, %v1711, %v2902
    %v3762 = vsel %vm33, %v1712, %v2904
    %v3763 = vsel %vm33, %v1713, %v2906
    %v3764 = vsel %vm33, %v1714, %v2908
    %v3765 = vsel %vm33, %v1715, %v2910
    %v3766 = vsel %vm33, %v1716, %v2912
    %v3767 = vsel %vm33, %v1717, %v2914
    %v3768 = vsel %vm33, %v1718, %v2916
    %v3769 = vsel %vm33, %v1719, %v2918
    %v3770 = vsel %vm33, %v1720, %v2920
    %v3771 = vsel %vm33, %v1721, %v2922
    %v3772 = vsel %vm33, %v1722, %v2924
    %v3773 = vsel %vm33, %v1723, %v2926
    %v3774 = vsel %vm33, %v1724, %v2928
    %v3775 = vsel %vm33, %v1725, %v2930
    %v3776 = vsel %vm33, %v1726, %v2932
    %v3777 = vsel %vm33, %v1727, %v2934
    %v3778 = vsel %vm33, %v1728, %v2936
    %v3779 = vsel %vm33, %v1729, %v2938
    %v3780 = vsel %vm33, %v1730, %v2940
    %v3781 = vsel %vm33, %v1731, %v2942
    %v3782 = vsel %vm33, %v1732, %v2944
    %v3783 = vsel %vm33, %v1733, %v2946
    %v3784 = vsel %vm33, %v1734, %v2948
    %v3785 = vsel %vm33, %v1735, %v2950
    %v3786 = vsel %vm33, %v1736, %v2952
    %v3787 = vsel %vm33, %v1737, %v2954
    %v3788 = vsel %vm143, %v3724, %v3084
    %v3789 = vsel %vm143, %v3725, %v3086
    %v3790 = vsel %vm143, %v3726, %v3088
    %v3791 = vsel %vm143, %v3727, %v3090
    %v3792 = vsel %vm143, %v3728, %v3092
    %v3793 = vsel %vm143, %v3729, %v3094
    %v3794 = vsel %vm143, %v3730, %v3096
    %v3795 = vsel %vm143, %v3731, %v3098
    %v3796 = vsel %vm143, %v3732, %v3100
    %v3797 = vsel %vm143, %v3733, %v3102
    %v3798 = vsel %vm143, %v3734, %v3104
    %v3799 = vsel %vm143, %v3735, %v3106
    %v3800 = vsel %vm143, %v3736, %v3108
    %v3801 = vsel %vm143, %v3737, %v3110
    %v3802 = vsel %vm143, %v3738, %v3112
    %v3803 = vsel %vm143, %v3739, %v3114
    %v3804 = vsel %vm143, %v3740, %v3116
    %v3805 = vsel %vm143, %v3741, %v3118
    %v3806 = vsel %vm143, %v3742, %v3120
    %v3807 = vsel %vm143, %v3743, %v3122
    %v3808 = vsel %vm143, %v3744, %v3124
    %v3809 = vsel %vm143, %v3745, %v3126
    %v3810 = vsel %vm143, %v3746, %v3128
    %v3811 = vsel %vm143, %v3747, %v3130
    %v3812 = vsel %vm143, %v3748, %v3132
    %v3813 = vsel %vm143, %v3749, %v3134
    %v3814 = vsel %vm143, %v3750, %v3136
    %v3815 = vsel %vm143, %v3751, %v3138
    %v3816 = vsel %vm143, %v3752, %v3140
    %v3817 = vsel %vm143, %v3753, %v3142
    %v3818 = vsel %vm143, %v3754, %v3144
    %v3819 = vsel %vm143, %v3755, %v3146
    %v3820 = vsel %vm143, %v3756, %v3148
    %v3821 = vsel %vm143, %v3757, %v3150
    %v3822 = vsel %vm143, %v3758, %v3152
    %v3823 = vsel %vm143, %v3759, %v3154
    %v3824 = vsel %vm143, %v3760, %v3156
    %v3825 = vsel %vm143, %v3761, %v3158
    %v3826 = vsel %vm143, %v3762, %v3160
    %v3827 = vsel %vm143, %v3763, %v3162
    %v3828 = vsel %vm143, %v3764, %v3164
    %v3829 = vsel %vm143, %v3765, %v3166
    %v3830 = vsel %vm143, %v3766, %v3168
    %v3831 = vsel %vm143, %v3767, %v3170
    %v3832 = vsel %vm143, %v3768, %v3172
    %v3833 = vsel %vm143, %v3769, %v3174
    %v3834 = vsel %vm143, %v3770, %v3176
    %v3835 = vsel %vm143, %v3771, %v3178
    %v3836 = vsel %vm143, %v3772, %v3180
    %v3837 = vsel %vm143, %v3773, %v3182
    %v3838 = vsel %vm143, %v3774, %v3184
    %v3839 = vsel %vm143, %v3775, %v3186
    %v3840 = vsel %vm143, %v3776, %v3188
    %v3841 = vsel %vm143, %v3777, %v3190
    %v3842 = vsel %vm143, %v3778, %v3192
    %v3843 = vsel %vm143, %v3779, %v3194
    %v3844 = vsel %vm143, %v3780, %v3196
    %v3845 = vsel %vm143, %v3781, %v3198
    %v3846 = vsel %vm143, %v3782, %v3200
    %v3847 = vsel %vm143, %v3783, %v3202
    %v3848 = vsel %vm143, %v3784, %v3204
    %v3849 = vsel %vm143, %v3785, %v3206
    %v3850 = vsel %vm143, %v3786, %v3208
    %v3851 = vsel %vm143, %v3787, %v3210
    %v3852 = vsel %vm3659, %v3788, %v3340
    %v3853 = vsel %vm3659, %v3789, %v3342
    %v3854 = vsel %vm3659, %v3790, %v3344
    %v3855 = vsel %vm3659, %v3791, %v3346
    %v3856 = vsel %vm3659, %v3792, %v3348
    %v3857 = vsel %vm3659, %v3793, %v3350
    %v3858 = vsel %vm3659, %v3794, %v3352
    %v3859 = vsel %vm3659, %v3795, %v3354
    %v3860 = vsel %vm3659, %v3796, %v3356
    %v3861 = vsel %vm3659, %v3797, %v3358
    %v3862 = vsel %vm3659, %v3798, %v3360
    %v3863 = vsel %vm3659, %v3799, %v3362
    %v3864 = vsel %vm3659, %v3800, %v3364
    %v3865 = vsel %vm3659, %v3801, %v3366
    %v3866 = vsel %vm3659, %v3802, %v3368
    %v3867 = vsel %vm3659, %v3803, %v3370
    %v3868 = vsel %vm3659, %v3804, %v3372
    %v3869 = vsel %vm3659, %v3805, %v3374
    %v3870 = vsel %vm3659, %v3806, %v3376
    %v3871 = vsel %vm3659, %v3807, %v3378
    %v3872 = vsel %vm3659, %v3808, %v3380
    %v3873 = vsel %vm3659, %v3809, %v3382
    %v3874 = vsel %vm3659, %v3810, %v3384
    %v3875 = vsel %vm3659, %v3811, %v3386
    %v3876 = vsel %vm3659, %v3812, %v3388
    %v3877 = vsel %vm3659, %v3813, %v3390
    %v3878 = vsel %vm3659, %v3814, %v3392
    %v3879 = vsel %vm3659, %v3815, %v3394
    %v3880 = vsel %vm3659, %v3816, %v3396
    %v3881 = vsel %vm3659, %v3817, %v3398
    %v3882 = vsel %vm3659, %v3818, %v3400
    %v3883 = vsel %vm3659, %v3819, %v3402
    %v3884 = vsel %vm3659, %v3820, %v3404
    %v3885 = vsel %vm3659, %v3821, %v3406
    %v3886 = vsel %vm3659, %v3822, %v3408
    %v3887 = vsel %vm3659, %v3823, %v3410
    %v3888 = vsel %vm3659, %v3824, %v3412
    %v3889 = vsel %vm3659, %v3825, %v3414
    %v3890 = vsel %vm3659, %v3826, %v3416
    %v3891 = vsel %vm3659, %v3827, %v3418
    %v3892 = vsel %vm3659, %v3828, %v3420
    %v3893 = vsel %vm3659, %v3829, %v3422
    %v3894 = vsel %vm3659, %v3830, %v3424
    %v3895 = vsel %vm3659, %v3831, %v3426
    %v3896 = vsel %vm3659, %v3832, %v3428
    %v3897 = vsel %vm3659, %v3833, %v3430
    %v3898 = vsel %vm3659, %v3834, %v3432
    %v3899 = vsel %vm3659, %v3835, %v3434
    %v3900 = vsel %vm3659, %v3836, %v3436
    %v3901 = vsel %vm3659, %v3837, %v3438
    %v3902 = vsel %vm3659, %v3838, %v3440
    %v3903 = vsel %vm3659, %v3839, %v3442
    %v3904 = vsel %vm3659, %v3840, %v3444
    %v3905 = vsel %vm3659, %v3841, %v3446
    %v3906 = vsel %vm3659, %v3842, %v3448
    %v3907 = vsel %vm3659, %v3843, %v3450
    %v3908 = vsel %vm3659, %v3844, %v3452
    %v3909 = vsel %vm3659, %v3845, %v3454
    %v3910 = vsel %vm3659, %v3846, %v3456
    %v3911 = vsel %vm3659, %v3847, %v3458
    %v3912 = vsel %vm3659, %v3848, %v3460
    %v3913 = vsel %vm3659, %v3849, %v3462
    %v3914 = vsel %vm3659, %v3850, %v3464
    %v3915 = vsel %vm3659, %v3851, %v3466
    %v3916 = vld [vmem:[%s3] sm:$0xff]
    %v3917 = vld [vmem:[%s3 + $0x8] sm:$0xff]
    %v3918 = vld [vmem:[%s3 + $0x10] sm:$0xff]
    %v3919 = vld [vmem:[%s3 + $0x18] sm:$0xff]
    %v3920 = vld [vmem:[%s3 + $0x20] sm:$0xff]
    %v3921 = vld [vmem:[%s3 + $0x28] sm:$0xff]
    %v3922 = vld [vmem:[%s3 + $0x30] sm:$0xff]
    %v3923 = vld [vmem:[%s3 + $0x38] sm:$0xff]
    %v3924 = vld [vmem:[%s3 + $0x40] sm:$0xff]
    %v3925 = vld [vmem:[%s3 + $0x48] sm:$0xff]
    %v3926 = vld [vmem:[%s3 + $0x50] sm:$0xff]
    %v3927 = vld [vmem:[%s3 + $0x58] sm:$0xff]
    %v3928 = vld [vmem:[%s3 + $0x60] sm:$0xff]
    %v3929 = vld [vmem:[%s3 + $0x68] sm:$0xff]
    %v3930 = vld [vmem:[%s3 + $0x70] sm:$0xff]
    %v3931 = vld [vmem:[%s3 + $0x78] sm:$0xff]
    %v3932 = vld [vmem:[%s3 + $0x80] sm:$0xff]
    %v3933 = vld [vmem:[%s3 + $0x88] sm:$0xff]
    %v3934 = vld [vmem:[%s3 + $0x90] sm:$0xff]
    %v3935 = vld [vmem:[%s3 + $0x98] sm:$0xff]
    %v3936 = vld [vmem:[%s3 + $0xa0] sm:$0xff]
    %v3937 = vld [vmem:[%s3 + $0xa8] sm:$0xff]
    %v3938 = vld [vmem:[%s3 + $0xb0] sm:$0xff]
    %v3939 = vld [vmem:[%s3 + $0xb8] sm:$0xff]
    %v3940 = vld [vmem:[%s3 + $0xc0] sm:$0xff]
    %v3941 = vld [vmem:[%s3 + $0xc8] sm:$0xff]
    %v3942 = vld [vmem:[%s3 + $0xd0] sm:$0xff]
    %v3943 = vld [vmem:[%s3 + $0xd8] sm:$0xff]
    %v3944 = vld [vmem:[%s3 + $0xe0] sm:$0xff]
    %v3945 = vld [vmem:[%s3 + $0xe8] sm:$0xff]
    %v3946 = vld [vmem:[%s3 + $0xf0] sm:$0xff]
    %v3947 = vld [vmem:[%s3 + $0xf8] sm:$0xff]
    %v3948 = vld [vmem:[%s3 + $0x100] sm:$0xff]
    %v3949 = vld [vmem:[%s3 + $0x108] sm:$0xff]
    %v3950 = vld [vmem:[%s3 + $0x110] sm:$0xff]
    %v3951 = vld [vmem:[%s3 + $0x118] sm:$0xff]
    %v3952 = vld [vmem:[%s4] sm:$0x1]
    %v3954 = vlaneseq
    %v3955 = vshrl.u32 %v3954, 7
    %v3956 = vsub.s32 0, %v3955
    %v3957 = vrot.slane %v3952, %v3956
    %v3960 = vsel %vm33, %v1931, 0
    %v3963 = vsel %vm33, %v1932, 0
    %v3966 = vsel %vm33, %v1933, 0
    %v3969 = vsel %vm33, %v1934, 0
    %v3972 = vsel %vm33, %v1935, 0
    %v3975 = vsel %vm33, %v1936, 0
    %v3978 = vsel %vm33, %v1937, 0
    %v3981 = vsel %vm33, %v1938, 0
    %v3984 = vsel %vm33, %v1939, 0
    %v3987 = vsel %vm33, %v1940, 0
    %v3990 = vsel %vm33, %v1941, 0
    %v3993 = vsel %vm33, %v1942, 0
    %v3996 = vsel %vm33, %v1943, 0
    %v3999 = vsel %vm33, %v1944, 0
    %v4002 = vsel %vm33, %v1945, 0
    %v4005 = vsel %vm33, %v1946, 0
    %v4008 = vsel %vm33, %v1947, 0
    %v4011 = vsel %vm33, %v1948, 0
    %v4014 = vsel %vm33, %v1949, 0
    %v4017 = vsel %vm33, %v1950, 0
    %v4020 = vsel %vm33, %v1951, 0
    %v4023 = vsel %vm33, %v1952, 0
    %v4026 = vsel %vm33, %v1953, 0
    %v4029 = vsel %vm33, %v1954, 0
    %v4032 = vsel %vm33, %v1955, 0
    %v4035 = vsel %vm33, %v1956, 0
    %v4038 = vsel %vm33, %v1957, 0
    %v4041 = vsel %vm33, %v1958, 0
    %v4044 = vsel %vm33, %v1959, 0
    %v4047 = vsel %vm33, %v1960, 0
    %v4050 = vsel %vm33, %v1961, 0
    %v4053 = vsel %vm33, %v1962, 0
    %v4056 = vsel %vm33, %v1963, 0
    %v4059 = vsel %vm33, %v1964, 0
    %v4062 = vsel %vm33, %v1965, 0
    %v4065 = vsel %vm33, %v1966, 0
    %v4068 = vsel %vm33, %v1967, 0
    %v4071 = vsel %vm33, %v1968, 0
    %v4074 = vsel %vm33, %v1969, 0
    %v4077 = vsel %vm33, %v1970, 0
    %v4080 = vsel %vm33, %v1971, 0
    %v4083 = vsel %vm33, %v1972, 0
    %v4086 = vsel %vm33, %v1973, 0
    %v4089 = vsel %vm33, %v1974, 0
    %v4092 = vsel %vm33, %v1975, 0
    %v4095 = vsel %vm33, %v1976, 0
    %v4098 = vsel %vm33, %v1977, 0
    %v4101 = vsel %vm33, %v1978, 0
    %v4104 = vsel %vm33, %v1979, 0
    %v4107 = vsel %vm33, %v1980, 0
    %v4110 = vsel %vm33, %v1981, 0
    %v4113 = vsel %vm33, %v1982, 0
    %v4116 = vsel %vm33, %v1983, 0
    %v4119 = vsel %vm33, %v1984, 0
    %v4122 = vsel %vm33, %v1985, 0
    %v4125 = vsel %vm33, %v1986, 0
    %v4128 = vsel %vm33, %v1987, 0
    %v4131 = vsel %vm33, %v1988, 0
    %v4134 = vsel %vm33, %v1989, 0
    %v4137 = vsel %vm33, %v1990, 0
    %v4140 = vsel %vm33, %v1991, 0
    %v4143 = vsel %vm33, %v1992, 0
    %v4146 = vsel %vm33, %v1993, 0
    %v4149 = vsel %vm33, %v1994, 0
    %4151 = vmatprep.subr.mxu0 0.0
    %4152 = vmatpush1.msra.mxu0 %v3931
    %4153 = vmatprep.subr.mxu0 0.0
    %4154 = vmatpush1.msra.mxu0 %v3930
    %4155 = vmatprep.subr.mxu0 0.0
    %4156 = vmatpush1.msra.mxu0 %v3929
    %4157 = vmatprep.subr.mxu0 0.0
    %4158 = vmatpush1.msra.mxu0 %v3928
    %4159 = vmatprep.subr.mxu0 0.0
    %4160 = vmatpush1.msra.mxu0 %v3927
    %4161 = vmatprep.subr.mxu0 0.0
    %4162 = vmatpush1.msra.mxu0 %v3926
    %4163 = vmatprep.subr.mxu0 0.0
    %4164 = vmatpush1.msra.mxu0 %v3925
    %4165 = vmatprep.subr.mxu0 0.0
    %4166 = vmatpush1.msra.mxu0 %v3924
    %4167 = vmatprep.subr.mxu0 0.0
    %4168 = vmatpush1.msra.mxu0 %v3923
    %4169 = vmatprep.subr.mxu0 0.0
    %4170 = vmatpush1.msra.mxu0 %v3922
    %4171 = vmatprep.subr.mxu0 0.0
    %4172 = vmatpush1.msra.mxu0 %v3921
    %4173 = vmatprep.subr.mxu0 0.0
    %4174 = vmatpush1.msra.mxu0 %v3920
    %4175 = vmatprep.subr.mxu0 0.0
    %4176 = vmatpush1.msra.mxu0 %v3919
    %4177 = vmatprep.subr.mxu0 0.0
    %4178 = vmatpush1.msra.mxu0 %v3918
    %4179 = vmatprep.subr.mxu0 0.0
    %4180 = vmatpush1.msra.mxu0 %v3917
    %4181 = vmatprep.subr.mxu0 0.0
    %4182 = vmatpush1.msra.mxu0 %v3916
    %4183 = vmatprep.subr.mxu0 0.0
    %4184 = vmatpush2.msra.mxu0 %v3947
    %4185 = vmatprep.subr.mxu0 0.0
    %4186 = vmatpush2.msra.mxu0 %v3946
    %4187 = vmatprep.subr.mxu0 0.0
    %4188 = vmatpush2.msra.mxu0 %v3945
    %4189 = vmatprep.subr.mxu0 0.0
    %4190 = vmatpush2.msra.mxu0 %v3944
    %4191 = vmatprep.subr.mxu0 0.0
    %4192 = vmatpush2.msra.mxu0 %v3943
    %4193 = vmatprep.subr.mxu0 0.0
    %4194 = vmatpush2.msra.mxu0 %v3942
    %4195 = vmatprep.subr.mxu0 0.0
    %4196 = vmatpush2.msra.mxu0 %v3941
    %4197 = vmatprep.subr.mxu0 0.0
    %4198 = vmatpush2.msra.mxu0 %v3940
    %4199 = vmatprep.subr.mxu0 0.0
    %4200 = vmatpush2.msra.mxu0 %v3939
    %4201 = vmatprep.subr.mxu0 0.0
    %4202 = vmatpush2.msra.mxu0 %v3938
    %4203 = vmatprep.subr.mxu0 0.0
    %4204 = vmatpush2.msra.mxu0 %v3937
    %4205 = vmatprep.subr.mxu0 0.0
    %4206 = vmatpush2.msra.mxu0 %v3936
    %4207 = vmatprep.subr.mxu0 0.0
    %4208 = vmatpush2.msra.mxu0 %v3935
    %4209 = vmatprep.subr.mxu0 0.0
    %4210 = vmatpush2.msra.mxu0 %v3934
    %4211 = vmatprep.subr.mxu0 0.0
    %4212 = vmatpush2.msra.mxu0 %v3933
    %4213 = vmatprep.subr.mxu0 0.0
    %4214 = vmatpush2.msra.mxu0 %v3932
    %4215 = vmatprep.mubr.f32.mxu0 %v3852
    %4216 = vmatmul.mubr.f32.gmra.mxu0 %v3660
    %v4217 = vpop.f32.mrf.mxu0
    %v4218 = vadd.f32 %v3957, %v4217
    %v4219 = vpop.f32.mrf.mxu0
    %4220 = vmatprep.mubr.f32.mxu0 %v3853
    %4221 = vmatmul.mubr.f32.gmra.mxu0 %v3661
    %v4222 = vpop.f32.mrf.mxu0
    %v4223 = vadd.f32 %v3957, %v4222
    %v4224 = vpop.f32.mrf.mxu0
    %4225 = vmatprep.mubr.f32.mxu0 %v3854
    %4226 = vmatmul.mubr.f32.gmra.mxu0 %v3662
    %v4227 = vpop.f32.mrf.mxu0
    %v4228 = vadd.f32 %v3957, %v4227
    %v4229 = vpop.f32.mrf.mxu0
    %4230 = vmatprep.mubr.f32.mxu0 %v3855
    %4231 = vmatmul.mubr.f32.gmra.mxu0 %v3663
    %v4232 = vpop.f32.mrf.mxu0
    %v4233 = vadd.f32 %v3957, %v4232
    %v4234 = vpop.f32.mrf.mxu0
    %4235 = vmatprep.mubr.f32.mxu0 %v3856
    %4236 = vmatmul.mubr.f32.gmra.mxu0 %v3664
    %v4237 = vpop.f32.mrf.mxu0
    %v4238 = vadd.f32 %v3957, %v4237
    %v4239 = vpop.f32.mrf.mxu0
    %4240 = vmatprep.mubr.f32.mxu0 %v3857
    %4241 = vmatmul.mubr.f32.gmra.mxu0 %v3665
    %v4242 = vpop.f32.mrf.mxu0
    %v4243 = vadd.f32 %v3957, %v4242
    %v4244 = vpop.f32.mrf.mxu0
    %4245 = vmatprep.mubr.f32.mxu0 %v3858
    %4246 = vmatmul.mubr.f32.gmra.mxu0 %v3666
    %v4247 = vpop.f32.mrf.mxu0
    %v4248 = vadd.f32 %v3957, %v4247
    %v4249 = vpop.f32.mrf.mxu0
    %4250 = vmatprep.mubr.f32.mxu0 %v3859
    %4251 = vmatmul.mubr.f32.gmra.mxu0 %v3667
    %v4252 = vpop.f32.mrf.mxu0
    %v4253 = vadd.f32 %v3957, %v4252
    %v4254 = vpop.f32.mrf.mxu0
    %4255 = vmatprep.mubr.f32.mxu0 %v3860
    %4256 = vmatmul.mubr.f32.gmra.mxu0 %v3668
    %v4257 = vpop.f32.mrf.mxu0
    %v4258 = vadd.f32 %v3957, %v4257
    %v4259 = vpop.f32.mrf.mxu0
    %4260 = vmatprep.mubr.f32.mxu0 %v3861
    %4261 = vmatmul.mubr.f32.gmra.mxu0 %v3669
    %v4262 = vpop.f32.mrf.mxu0
    %v4263 = vadd.f32 %v3957, %v4262
    %v4264 = vpop.f32.mrf.mxu0
    %4265 = vmatprep.mubr.f32.mxu0 %v3862
    %4266 = vmatmul.mubr.f32.gmra.mxu0 %v3670
    %v4267 = vpop.f32.mrf.mxu0
    %v4268 = vadd.f32 %v3957, %v4267
    %v4269 = vpop.f32.mrf.mxu0
    %4270 = vmatprep.mubr.f32.mxu0 %v3863
    %4271 = vmatmul.mubr.f32.gmra.mxu0 %v3671
    %v4272 = vpop.f32.mrf.mxu0
    %v4273 = vadd.f32 %v3957, %v4272
    %v4274 = vpop.f32.mrf.mxu0
    %4275 = vmatprep.mubr.f32.mxu0 %v3864
    %4276 = vmatmul.mubr.f32.gmra.mxu0 %v3672
    %v4277 = vpop.f32.mrf.mxu0
    %v4278 = vadd.f32 %v3957, %v4277
    %v4279 = vpop.f32.mrf.mxu0
    %4280 = vmatprep.mubr.f32.mxu0 %v3865
    %4281 = vmatmul.mubr.f32.gmra.mxu0 %v3673
    %v4282 = vpop.f32.mrf.mxu0
    %v4283 = vadd.f32 %v3957, %v4282
    %v4284 = vpop.f32.mrf.mxu0
    %4285 = vmatprep.mubr.f32.mxu0 %v3866
    %4286 = vmatmul.mubr.f32.gmra.mxu0 %v3674
    %v4287 = vpop.f32.mrf.mxu0
    %v4288 = vadd.f32 %v3957, %v4287
    %v4289 = vpop.f32.mrf.mxu0
    %4290 = vmatprep.mubr.f32.mxu0 %v3867
    %4291 = vmatmul.mubr.f32.gmra.mxu0 %v3675
    %v4292 = vpop.f32.mrf.mxu0
    %v4293 = vadd.f32 %v3957, %v4292
    %v4294 = vpop.f32.mrf.mxu0
    %4295 = vmatprep.mubr.f32.mxu0 %v3868
    %4296 = vmatmul.mubr.f32.gmra.mxu0 %v3676
    %v4297 = vpop.f32.mrf.mxu0
    %v4298 = vadd.f32 %v3957, %v4297
    %v4299 = vpop.f32.mrf.mxu0
    %4300 = vmatprep.mubr.f32.mxu0 %v3869
    %4301 = vmatmul.mubr.f32.gmra.mxu0 %v3677
    %v4302 = vpop.f32.mrf.mxu0
    %v4303 = vadd.f32 %v3957, %v4302
    %v4304 = vpop.f32.mrf.mxu0
    %4305 = vmatprep.mubr.f32.mxu0 %v3870
    %4306 = vmatmul.mubr.f32.gmra.mxu0 %v3678
    %v4307 = vpop.f32.mrf.mxu0
    %v4308 = vadd.f32 %v3957, %v4307
    %v4309 = vpop.f32.mrf.mxu0
    %4310 = vmatprep.mubr.f32.mxu0 %v3871
    %4311 = vmatmul.mubr.f32.gmra.mxu0 %v3679
    %v4312 = vpop.f32.mrf.mxu0
    %v4313 = vadd.f32 %v3957, %v4312
    %v4314 = vpop.f32.mrf.mxu0
    %4315 = vmatprep.mubr.f32.mxu0 %v3872
    %4316 = vmatmul.mubr.f32.gmra.mxu0 %v3680
    %v4317 = vpop.f32.mrf.mxu0
    %v4318 = vadd.f32 %v3957, %v4317
    %v4319 = vpop.f32.mrf.mxu0
    %4320 = vmatprep.mubr.f32.mxu0 %v3873
    %4321 = vmatmul.mubr.f32.gmra.mxu0 %v3681
    %v4322 = vpop.f32.mrf.mxu0
    %v4323 = vadd.f32 %v3957, %v4322
    %v4324 = vpop.f32.mrf.mxu0
    %4325 = vmatprep.mubr.f32.mxu0 %v3874
    %4326 = vmatmul.mubr.f32.gmra.mxu0 %v3682
    %v4327 = vpop.f32.mrf.mxu0
    %v4328 = vadd.f32 %v3957, %v4327
    %v4329 = vpop.f32.mrf.mxu0
    %4330 = vmatprep.mubr.f32.mxu0 %v3875
    %4331 = vmatmul.mubr.f32.gmra.mxu0 %v3683
    %v4332 = vpop.f32.mrf.mxu0
    %v4333 = vadd.f32 %v3957, %v4332
    %v4334 = vpop.f32.mrf.mxu0
    %4335 = vmatprep.mubr.f32.mxu0 %v3876
    %4336 = vmatmul.mubr.f32.gmra.mxu0 %v3684
    %v4337 = vpop.f32.mrf.mxu0
    %v4338 = vadd.f32 %v3957, %v4337
    %v4339 = vpop.f32.mrf.mxu0
    %4340 = vmatprep.mubr.f32.mxu0 %v3877
    %4341 = vmatmul.mubr.f32.gmra.mxu0 %v3685
    %v4342 = vpop.f32.mrf.mxu0
    %v4343 = vadd.f32 %v3957, %v4342
    %v4344 = vpop.f32.mrf.mxu0
    %4345 = vmatprep.mubr.f32.mxu0 %v3878
    %4346 = vmatmul.mubr.f32.gmra.mxu0 %v3686
    %v4347 = vpop.f32.mrf.mxu0
    %v4348 = vadd.f32 %v3957, %v4347
    %v4349 = vpop.f32.mrf.mxu0
    %4350 = vmatprep.mubr.f32.mxu0 %v3879
    %4351 = vmatmul.mubr.f32.gmra.mxu0 %v3687
    %v4352 = vpop.f32.mrf.mxu0
    %v4353 = vadd.f32 %v3957, %v4352
    %v4354 = vpop.f32.mrf.mxu0
    %4355 = vmatprep.mubr.f32.mxu0 %v3880
    %4356 = vmatmul.mubr.f32.gmra.mxu0 %v3688
    %v4357 = vpop.f32.mrf.mxu0
    %v4358 = vadd.f32 %v3957, %v4357
    %v4359 = vpop.f32.mrf.mxu0
    %4360 = vmatprep.mubr.f32.mxu0 %v3881
    %4361 = vmatmul.mubr.f32.gmra.mxu0 %v3689
    %v4362 = vpop.f32.mrf.mxu0
    %v4363 = vadd.f32 %v3957, %v4362
    %v4364 = vpop.f32.mrf.mxu0
    %4365 = vmatprep.mubr.f32.mxu0 %v3882
    %4366 = vmatmul.mubr.f32.gmra.mxu0 %v3690
    %v4367 = vpop.f32.mrf.mxu0
    %v4368 = vadd.f32 %v3957, %v4367
    %v4369 = vpop.f32.mrf.mxu0
    %4370 = vmatprep.mubr.f32.mxu0 %v3883
    %4371 = vmatmul.mubr.f32.gmra.mxu0 %v3691
    %v4372 = vpop.f32.mrf.mxu0
    %v4373 = vadd.f32 %v3957, %v4372
    %v4374 = vpop.f32.mrf.mxu0
    %4375 = vmatprep.mubr.f32.mxu0 %v3884
    %4376 = vmatmul.mubr.f32.gmra.mxu0 %v3692
    %v4377 = vpop.f32.mrf.mxu0
    %v4378 = vadd.f32 %v3957, %v4377
    %v4379 = vpop.f32.mrf.mxu0
    %4380 = vmatprep.mubr.f32.mxu0 %v3885
    %4381 = vmatmul.mubr.f32.gmra.mxu0 %v3693
    %v4382 = vpop.f32.mrf.mxu0
    %v4383 = vadd.f32 %v3957, %v4382
    %v4384 = vpop.f32.mrf.mxu0
    %4385 = vmatprep.mubr.f32.mxu0 %v3886
    %4386 = vmatmul.mubr.f32.gmra.mxu0 %v3694
    %v4387 = vpop.f32.mrf.mxu0
    %v4388 = vadd.f32 %v3957, %v4387
    %v4389 = vpop.f32.mrf.mxu0
    %4390 = vmatprep.mubr.f32.mxu0 %v3887
    %4391 = vmatmul.mubr.f32.gmra.mxu0 %v3695
    %v4392 = vpop.f32.mrf.mxu0
    %v4393 = vadd.f32 %v3957, %v4392
    %v4394 = vpop.f32.mrf.mxu0
    %4395 = vmatprep.mubr.f32.mxu0 %v3888
    %4396 = vmatmul.mubr.f32.gmra.mxu0 %v3696
    %v4397 = vpop.f32.mrf.mxu0
    %v4398 = vadd.f32 %v3957, %v4397
    %v4399 = vpop.f32.mrf.mxu0
    %4400 = vmatprep.mubr.f32.mxu0 %v3889
    %4401 = vmatmul.mubr.f32.gmra.mxu0 %v3697
    %v4402 = vpop.f32.mrf.mxu0
    %v4403 = vadd.f32 %v3957, %v4402
    %v4404 = vpop.f32.mrf.mxu0
    %4405 = vmatprep.mubr.f32.mxu0 %v3890
    %4406 = vmatmul.mubr.f32.gmra.mxu0 %v3698
    %v4407 = vpop.f32.mrf.mxu0
    %v4408 = vadd.f32 %v3957, %v4407
    %v4409 = vpop.f32.mrf.mxu0
    %4410 = vmatprep.mubr.f32.mxu0 %v3891
    %4411 = vmatmul.mubr.f32.gmra.mxu0 %v3699
    %v4412 = vpop.f32.mrf.mxu0
    %v4413 = vadd.f32 %v3957, %v4412
    %v4414 = vpop.f32.mrf.mxu0
    %4415 = vmatprep.mubr.f32.mxu0 %v3892
    %4416 = vmatmul.mubr.f32.gmra.mxu0 %v3700
    %v4417 = vpop.f32.mrf.mxu0
    %v4418 = vadd.f32 %v3957, %v4417
    %v4419 = vpop.f32.mrf.mxu0
    %4420 = vmatprep.mubr.f32.mxu0 %v3893
    %4421 = vmatmul.mubr.f32.gmra.mxu0 %v3701
    %v4422 = vpop.f32.mrf.mxu0
    %v4423 = vadd.f32 %v3957, %v4422
    %v4424 = vpop.f32.mrf.mxu0
    %4425 = vmatprep.mubr.f32.mxu0 %v3894
    %4426 = vmatmul.mubr.f32.gmra.mxu0 %v3702
    %v4427 = vpop.f32.mrf.mxu0
    %v4428 = vadd.f32 %v3957, %v4427
    %v4429 = vpop.f32.mrf.mxu0
    %4430 = vmatprep.mubr.f32.mxu0 %v3895
    %4431 = vmatmul.mubr.f32.gmra.mxu0 %v3703
    %v4432 = vpop.f32.mrf.mxu0
    %v4433 = vadd.f32 %v3957, %v4432
    %v4434 = vpop.f32.mrf.mxu0
    %4435 = vmatprep.mubr.f32.mxu0 %v3896
    %4436 = vmatmul.mubr.f32.gmra.mxu0 %v3704
    %v4437 = vpop.f32.mrf.mxu0
    %v4438 = vadd.f32 %v3957, %v4437
    %v4439 = vpop.f32.mrf.mxu0
    %4440 = vmatprep.mubr.f32.mxu0 %v3897
    %4441 = vmatmul.mubr.f32.gmra.mxu0 %v3705
    %v4442 = vpop.f32.mrf.mxu0
    %v4443 = vadd.f32 %v3957, %v4442
    %v4444 = vpop.f32.mrf.mxu0
    %4445 = vmatprep.mubr.f32.mxu0 %v3898
    %4446 = vmatmul.mubr.f32.gmra.mxu0 %v3706
    %v4447 = vpop.f32.mrf.mxu0
    %v4448 = vadd.f32 %v3957, %v4447
    %v4449 = vpop.f32.mrf.mxu0
    %4450 = vmatprep.mubr.f32.mxu0 %v3899
    %4451 = vmatmul.mubr.f32.gmra.mxu0 %v3707
    %v4452 = vpop.f32.mrf.mxu0
    %v4453 = vadd.f32 %v3957, %v4452
    %v4454 = vpop.f32.mrf.mxu0
    %4455 = vmatprep.mubr.f32.mxu0 %v3900
    %4456 = vmatmul.mubr.f32.gmra.mxu0 %v3708
    %v4457 = vpop.f32.mrf.mxu0
    %v4458 = vadd.f32 %v3957, %v4457
    %v4459 = vpop.f32.mrf.mxu0
    %4460 = vmatprep.mubr.f32.mxu0 %v3901
    %4461 = vmatmul.mubr.f32.gmra.mxu0 %v3709
    %v4462 = vpop.f32.mrf.mxu0
    %v4463 = vadd.f32 %v3957, %v4462
    %v4464 = vpop.f32.mrf.mxu0
    %4465 = vmatprep.mubr.f32.mxu0 %v3902
    %4466 = vmatmul.mubr.f32.gmra.mxu0 %v3710
    %v4467 = vpop.f32.mrf.mxu0
    %v4468 = vadd.f32 %v3957, %v4467
    %v4469 = vpop.f32.mrf.mxu0
    %4470 = vmatprep.mubr.f32.mxu0 %v3903
    %4471 = vmatmul.mubr.f32.gmra.mxu0 %v3711
    %v4472 = vpop.f32.mrf.mxu0
    %v4473 = vadd.f32 %v3957, %v4472
    %v4474 = vpop.f32.mrf.mxu0
    %4475 = vmatprep.mubr.f32.mxu0 %v3904
    %4476 = vmatmul.mubr.f32.gmra.mxu0 %v3712
    %v4477 = vpop.f32.mrf.mxu0
    %v4478 = vadd.f32 %v3957, %v4477
    %v4479 = vpop.f32.mrf.mxu0
    %4480 = vmatprep.mubr.f32.mxu0 %v3905
    %4481 = vmatmul.mubr.f32.gmra.mxu0 %v3713
    %v4482 = vpop.f32.mrf.mxu0
    %v4483 = vadd.f32 %v3957, %v4482
    %v4484 = vpop.f32.mrf.mxu0
    %4485 = vmatprep.mubr.f32.mxu0 %v3906
    %4486 = vmatmul.mubr.f32.gmra.mxu0 %v3714
    %v4487 = vpop.f32.mrf.mxu0
    %v4488 = vadd.f32 %v3957, %v4487
    %v4489 = vpop.f32.mrf.mxu0
    %4490 = vmatprep.mubr.f32.mxu0 %v3907
    %4491 = vmatmul.mubr.f32.gmra.mxu0 %v3715
    %v4492 = vpop.f32.mrf.mxu0
    %v4493 = vadd.f32 %v3957, %v4492
    %v4494 = vpop.f32.mrf.mxu0
    %4495 = vmatprep.mubr.f32.mxu0 %v3908
    %4496 = vmatmul.mubr.f32.gmra.mxu0 %v3716
    %v4497 = vpop.f32.mrf.mxu0
    %v4498 = vadd.f32 %v3957, %v4497
    %v4499 = vpop.f32.mrf.mxu0
    %4500 = vmatprep.mubr.f32.mxu0 %v3909
    %4501 = vmatmul.mubr.f32.gmra.mxu0 %v3717
    %v4502 = vpop.f32.mrf.mxu0
    %v4503 = vadd.f32 %v3957, %v4502
    %v4504 = vpop.f32.mrf.mxu0
    %4505 = vmatprep.mubr.f32.mxu0 %v3910
    %4506 = vmatmul.mubr.f32.gmra.mxu0 %v3718
    %v4507 = vpop.f32.mrf.mxu0
    %v4508 = vadd.f32 %v3957, %v4507
    %v4509 = vpop.f32.mrf.mxu0
    %4510 = vmatprep.mubr.f32.mxu0 %v3911
    %4511 = vmatmul.mubr.f32.gmra.mxu0 %v3719
    %v4512 = vpop.f32.mrf.mxu0
    %v4513 = vadd.f32 %v3957, %v4512
    %v4514 = vpop.f32.mrf.mxu0
    %4515 = vmatprep.mubr.f32.mxu0 %v3912
    %4516 = vmatmul.mubr.f32.gmra.mxu0 %v3720
    %v4517 = vpop.f32.mrf.mxu0
    %v4518 = vadd.f32 %v3957, %v4517
    %v4519 = vpop.f32.mrf.mxu0
    %4520 = vmatprep.mubr.f32.mxu0 %v3913
    %4521 = vmatmul.mubr.f32.gmra.mxu0 %v3721
    %v4522 = vpop.f32.mrf.mxu0
    %v4523 = vadd.f32 %v3957, %v4522
    %v4524 = vpop.f32.mrf.mxu0
    %4525 = vmatprep.mubr.f32.mxu0 %v3914
    %4526 = vmatmul.mubr.f32.gmra.mxu0 %v3722
    %v4527 = vpop.f32.mrf.mxu0
    %v4528 = vadd.f32 %v3957, %v4527
    %v4529 = vpop.f32.mrf.mxu0
    %4530 = vmatprep.mubr.f32.mxu0 %v3915
    %4531 = vmatmul.mubr.f32.gmra.mxu0 %v3723
    %v4532 = vpop.f32.mrf.mxu0
    %v4533 = vadd.f32 %v3957, %v4532
    %v4534 = vpop.f32.mrf.mxu0
    %4535 = vdwg.mxu0
    %4536 = vmatprep.subr.mxu0 0.0
    %4537 = vmatpush1.msra.mxu0 0.0
    %4538 = vmatprep.subr.mxu0 0.0
    %4539 = vmatpush1.msra.mxu0 0.0
    %4540 = vmatprep.subr.mxu0 0.0
    %4541 = vmatpush1.msra.mxu0 0.0
    %4542 = vmatprep.subr.mxu0 0.0
    %4543 = vmatpush1.msra.mxu0 0.0
    %4544 = vmatprep.subr.mxu0 0.0
    %4545 = vmatpush1.msra.mxu0 0.0
    %4546 = vmatprep.subr.mxu0 0.0
    %4547 = vmatpush1.msra.mxu0 0.0
    %4548 = vmatprep.subr.mxu0 0.0
    %4549 = vmatpush1.msra.mxu0 0.0
    %4550 = vmatprep.subr.mxu0 0.0
    %4551 = vmatpush1.msra.mxu0 0.0
    %4552 = vmatprep.subr.mxu0 0.0
    %4553 = vmatpush1.msra.mxu0 0.0
    %4554 = vmatprep.subr.mxu0 0.0
    %4555 = vmatpush1.msra.mxu0 0.0
    %4556 = vmatprep.subr.mxu0 0.0
    %4557 = vmatpush1.msra.mxu0 0.0
    %4558 = vmatprep.subr.mxu0 0.0
    %4559 = vmatpush1.msra.mxu0 0.0
    %4560 = vmatprep.subr.mxu0 0.0
    %4561 = vmatpush1.msra.mxu0 %v3951
    %4562 = vmatprep.subr.mxu0 0.0
    %4563 = vmatpush1.msra.mxu0 %v3950
    %4564 = vmatprep.subr.mxu0 0.0
    %4565 = vmatpush1.msra.mxu0 %v3949
    %4566 = vmatprep.subr.mxu0 0.0
    %4567 = vmatpush1.msra.mxu0 %v3948
    %4568 = vmatprep.subr.mxu0 0.0
    %4569 = vmatpush2.msra.mxu0 0.0
    %4570 = vmatprep.subr.mxu0 0.0
    %4571 = vmatpush2.msra.mxu0 0.0
    %4572 = vmatprep.subr.mxu0 0.0
    %4573 = vmatpush2.msra.mxu0 0.0
    %4574 = vmatprep.subr.mxu0 0.0
    %4575 = vmatpush2.msra.mxu0 0.0
    %4576 = vmatprep.subr.mxu0 0.0
    %4577 = vmatpush2.msra.mxu0 0.0
    %4578 = vmatprep.subr.mxu0 0.0
    %4579 = vmatpush2.msra.mxu0 0.0
    %4580 = vmatprep.subr.mxu0 0.0
    %4581 = vmatpush2.msra.mxu0 0.0
    %4582 = vmatprep.subr.mxu0 0.0
    %4583 = vmatpush2.msra.mxu0 0.0
    %4584 = vmatprep.subr.mxu0 0.0
    %4585 = vmatpush2.msra.mxu0 0.0
    %4586 = vmatprep.subr.mxu0 0.0
    %4587 = vmatpush2.msra.mxu0 0.0
    %4588 = vmatprep.subr.mxu0 0.0
    %4589 = vmatpush2.msra.mxu0 0.0
    %4590 = vmatprep.subr.mxu0 0.0
    %4591 = vmatpush2.msra.mxu0 0.0
    %4592 = vmatprep.subr.mxu0 0.0
    %4593 = vmatpush2.msra.mxu0 0.0
    %4594 = vmatprep.subr.mxu0 0.0
    %4595 = vmatpush2.msra.mxu0 0.0
    %4596 = vmatprep.subr.mxu0 0.0
    %4597 = vmatpush2.msra.mxu0 0.0
    %4598 = vmatprep.subr.mxu0 0.0
    %4599 = vmatpush2.msra.mxu0 0.0
    %4600 = vmatprep.mubr.f32.mxu0 0.0
    %4601 = vmatmul.mubr.f32.gmra.mxu0 %v3960
    %v4602 = vpop.f32.mrf.mxu0
    %v4603 = vadd.f32 %v4218, %v4602
    %v4604 = vpop.f32.mrf.mxu0
    %4605 = vmatprep.mubr.f32.mxu0 0.0
    %4606 = vmatmul.mubr.f32.gmra.mxu0 %v3963
    %v4607 = vpop.f32.mrf.mxu0
    %v4608 = vadd.f32 %v4223, %v4607
    %v4609 = vpop.f32.mrf.mxu0
    %4610 = vmatprep.mubr.f32.mxu0 0.0
    %4611 = vmatmul.mubr.f32.gmra.mxu0 %v3966
    %v4612 = vpop.f32.mrf.mxu0
    %v4613 = vadd.f32 %v4228, %v4612
    %v4614 = vpop.f32.mrf.mxu0
    %4615 = vmatprep.mubr.f32.mxu0 0.0
    %4616 = vmatmul.mubr.f32.gmra.mxu0 %v3969
    %v4617 = vpop.f32.mrf.mxu0
    %v4618 = vadd.f32 %v4233, %v4617
    %v4619 = vpop.f32.mrf.mxu0
    %4620 = vmatprep.mubr.f32.mxu0 0.0
    %4621 = vmatmul.mubr.f32.gmra.mxu0 %v3972
    %v4622 = vpop.f32.mrf.mxu0
    %v4623 = vadd.f32 %v4238, %v4622
    %v4624 = vpop.f32.mrf.mxu0
    %4625 = vmatprep.mubr.f32.mxu0 0.0
    %4626 = vmatmul.mubr.f32.gmra.mxu0 %v3975
    %v4627 = vpop.f32.mrf.mxu0
    %v4628 = vadd.f32 %v4243, %v4627
    %v4629 = vpop.f32.mrf.mxu0
    %4630 = vmatprep.mubr.f32.mxu0 0.0
    %4631 = vmatmul.mubr.f32.gmra.mxu0 %v3978
    %v4632 = vpop.f32.mrf.mxu0
    %v4633 = vadd.f32 %v4248, %v4632
    %v4634 = vpop.f32.mrf.mxu0
    %4635 = vmatprep.mubr.f32.mxu0 0.0
    %4636 = vmatmul.mubr.f32.gmra.mxu0 %v3981
    %v4637 = vpop.f32.mrf.mxu0
    %v4638 = vadd.f32 %v4253, %v4637
    %v4639 = vpop.f32.mrf.mxu0
    %4640 = vmatprep.mubr.f32.mxu0 0.0
    %4641 = vmatmul.mubr.f32.gmra.mxu0 %v3984
    %v4642 = vpop.f32.mrf.mxu0
    %v4643 = vadd.f32 %v4258, %v4642
    %v4644 = vpop.f32.mrf.mxu0
    %4645 = vmatprep.mubr.f32.mxu0 0.0
    %4646 = vmatmul.mubr.f32.gmra.mxu0 %v3987
    %v4647 = vpop.f32.mrf.mxu0
    %v4648 = vadd.f32 %v4263, %v4647
    %v4649 = vpop.f32.mrf.mxu0
    %4650 = vmatprep.mubr.f32.mxu0 0.0
    %4651 = vmatmul.mubr.f32.gmra.mxu0 %v3990
    %v4652 = vpop.f32.mrf.mxu0
    %v4653 = vadd.f32 %v4268, %v4652
    %v4654 = vpop.f32.mrf.mxu0
    %4655 = vmatprep.mubr.f32.mxu0 0.0
    %4656 = vmatmul.mubr.f32.gmra.mxu0 %v3993
    %v4657 = vpop.f32.mrf.mxu0
    %v4658 = vadd.f32 %v4273, %v4657
    %v4659 = vpop.f32.mrf.mxu0
    %4660 = vmatprep.mubr.f32.mxu0 0.0
    %4661 = vmatmul.mubr.f32.gmra.mxu0 %v3996
    %v4662 = vpop.f32.mrf.mxu0
    %v4663 = vadd.f32 %v4278, %v4662
    %v4664 = vpop.f32.mrf.mxu0
    %4665 = vmatprep.mubr.f32.mxu0 0.0
    %4666 = vmatmul.mubr.f32.gmra.mxu0 %v3999
    %v4667 = vpop.f32.mrf.mxu0
    %v4668 = vadd.f32 %v4283, %v4667
    %v4669 = vpop.f32.mrf.mxu0
    %4670 = vmatprep.mubr.f32.mxu0 0.0
    %4671 = vmatmul.mubr.f32.gmra.mxu0 %v4002
    %v4672 = vpop.f32.mrf.mxu0
    %v4673 = vadd.f32 %v4288, %v4672
    %v4674 = vpop.f32.mrf.mxu0
    %4675 = vmatprep.mubr.f32.mxu0 0.0
    %4676 = vmatmul.mubr.f32.gmra.mxu0 %v4005
    %v4677 = vpop.f32.mrf.mxu0
    %v4678 = vadd.f32 %v4293, %v4677
    %v4679 = vpop.f32.mrf.mxu0
    %4680 = vmatprep.mubr.f32.mxu0 0.0
    %4681 = vmatmul.mubr.f32.gmra.mxu0 %v4008
    %v4682 = vpop.f32.mrf.mxu0
    %v4683 = vadd.f32 %v4298, %v4682
    %v4684 = vpop.f32.mrf.mxu0
    %4685 = vmatprep.mubr.f32.mxu0 0.0
    %4686 = vmatmul.mubr.f32.gmra.mxu0 %v4011
    %v4687 = vpop.f32.mrf.mxu0
    %v4688 = vadd.f32 %v4303, %v4687
    %v4689 = vpop.f32.mrf.mxu0
    %4690 = vmatprep.mubr.f32.mxu0 0.0
    %4691 = vmatmul.mubr.f32.gmra.mxu0 %v4014
    %v4692 = vpop.f32.mrf.mxu0
    %v4693 = vadd.f32 %v4308, %v4692
    %v4694 = vpop.f32.mrf.mxu0
    %4695 = vmatprep.mubr.f32.mxu0 0.0
    %4696 = vmatmul.mubr.f32.gmra.mxu0 %v4017
    %v4697 = vpop.f32.mrf.mxu0
    %v4698 = vadd.f32 %v4313, %v4697
    %v4699 = vpop.f32.mrf.mxu0
    %4700 = vmatprep.mubr.f32.mxu0 0.0
    %4701 = vmatmul.mubr.f32.gmra.mxu0 %v4020
    %v4702 = vpop.f32.mrf.mxu0
    %v4703 = vadd.f32 %v4318, %v4702
    %v4704 = vpop.f32.mrf.mxu0
    %4705 = vmatprep.mubr.f32.mxu0 0.0
    %4706 = vmatmul.mubr.f32.gmra.mxu0 %v4023
    %v4707 = vpop.f32.mrf.mxu0
    %v4708 = vadd.f32 %v4323, %v4707
    %v4709 = vpop.f32.mrf.mxu0
    %4710 = vmatprep.mubr.f32.mxu0 0.0
    %4711 = vmatmul.mubr.f32.gmra.mxu0 %v4026
    %v4712 = vpop.f32.mrf.mxu0
    %v4713 = vadd.f32 %v4328, %v4712
    %v4714 = vpop.f32.mrf.mxu0
    %4715 = vmatprep.mubr.f32.mxu0 0.0
    %4716 = vmatmul.mubr.f32.gmra.mxu0 %v4029
    %v4717 = vpop.f32.mrf.mxu0
    %v4718 = vadd.f32 %v4333, %v4717
    %v4719 = vpop.f32.mrf.mxu0
    %4720 = vmatprep.mubr.f32.mxu0 0.0
    %4721 = vmatmul.mubr.f32.gmra.mxu0 %v4032
    %v4722 = vpop.f32.mrf.mxu0
    %v4723 = vadd.f32 %v4338, %v4722
    %v4724 = vpop.f32.mrf.mxu0
    %4725 = vmatprep.mubr.f32.mxu0 0.0
    %4726 = vmatmul.mubr.f32.gmra.mxu0 %v4035
    %v4727 = vpop.f32.mrf.mxu0
    %v4728 = vadd.f32 %v4343, %v4727
    %v4729 = vpop.f32.mrf.mxu0
    %4730 = vmatprep.mubr.f32.mxu0 0.0
    %4731 = vmatmul.mubr.f32.gmra.mxu0 %v4038
    %v4732 = vpop.f32.mrf.mxu0
    %v4733 = vadd.f32 %v4348, %v4732
    %v4734 = vpop.f32.mrf.mxu0
    %4735 = vmatprep.mubr.f32.mxu0 0.0
    %4736 = vmatmul.mubr.f32.gmra.mxu0 %v4041
    %v4737 = vpop.f32.mrf.mxu0
    %v4738 = vadd.f32 %v4353, %v4737
    %v4739 = vpop.f32.mrf.mxu0
    %4740 = vmatprep.mubr.f32.mxu0 0.0
    %4741 = vmatmul.mubr.f32.gmra.mxu0 %v4044
    %v4742 = vpop.f32.mrf.mxu0
    %v4743 = vadd.f32 %v4358, %v4742
    %v4744 = vpop.f32.mrf.mxu0
    %4745 = vmatprep.mubr.f32.mxu0 0.0
    %4746 = vmatmul.mubr.f32.gmra.mxu0 %v4047
    %v4747 = vpop.f32.mrf.mxu0
    %v4748 = vadd.f32 %v4363, %v4747
    %v4749 = vpop.f32.mrf.mxu0
    %4750 = vmatprep.mubr.f32.mxu0 0.0
    %4751 = vmatmul.mubr.f32.gmra.mxu0 %v4050
    %v4752 = vpop.f32.mrf.mxu0
    %v4753 = vadd.f32 %v4368, %v4752
    %v4754 = vpop.f32.mrf.mxu0
    %4755 = vmatprep.mubr.f32.mxu0 0.0
    %4756 = vmatmul.mubr.f32.gmra.mxu0 %v4053
    %v4757 = vpop.f32.mrf.mxu0
    %v4758 = vadd.f32 %v4373, %v4757
    %v4759 = vpop.f32.mrf.mxu0
    %4760 = vmatprep.mubr.f32.mxu0 0.0
    %4761 = vmatmul.mubr.f32.gmra.mxu0 %v4056
    %v4762 = vpop.f32.mrf.mxu0
    %v4763 = vadd.f32 %v4378, %v4762
    %v4764 = vpop.f32.mrf.mxu0
    %4765 = vmatprep.mubr.f32.mxu0 0.0
    %4766 = vmatmul.mubr.f32.gmra.mxu0 %v4059
    %v4767 = vpop.f32.mrf.mxu0
    %v4768 = vadd.f32 %v4383, %v4767
    %v4769 = vpop.f32.mrf.mxu0
    %4770 = vmatprep.mubr.f32.mxu0 0.0
    %4771 = vmatmul.mubr.f32.gmra.mxu0 %v4062
    %v4772 = vpop.f32.mrf.mxu0
    %v4773 = vadd.f32 %v4388, %v4772
    %v4774 = vpop.f32.mrf.mxu0
    %4775 = vmatprep.mubr.f32.mxu0 0.0
    %4776 = vmatmul.mubr.f32.gmra.mxu0 %v4065
    %v4777 = vpop.f32.mrf.mxu0
    %v4778 = vadd.f32 %v4393, %v4777
    %v4779 = vpop.f32.mrf.mxu0
    %4780 = vmatprep.mubr.f32.mxu0 0.0
    %4781 = vmatmul.mubr.f32.gmra.mxu0 %v4068
    %v4782 = vpop.f32.mrf.mxu0
    %v4783 = vadd.f32 %v4398, %v4782
    %v4784 = vpop.f32.mrf.mxu0
    %4785 = vmatprep.mubr.f32.mxu0 0.0
    %4786 = vmatmul.mubr.f32.gmra.mxu0 %v4071
    %v4787 = vpop.f32.mrf.mxu0
    %v4788 = vadd.f32 %v4403, %v4787
    %v4789 = vpop.f32.mrf.mxu0
    %4790 = vmatprep.mubr.f32.mxu0 0.0
    %4791 = vmatmul.mubr.f32.gmra.mxu0 %v4074
    %v4792 = vpop.f32.mrf.mxu0
    %v4793 = vadd.f32 %v4408, %v4792
    %v4794 = vpop.f32.mrf.mxu0
    %4795 = vmatprep.mubr.f32.mxu0 0.0
    %4796 = vmatmul.mubr.f32.gmra.mxu0 %v4077
    %v4797 = vpop.f32.mrf.mxu0
    %v4798 = vadd.f32 %v4413, %v4797
    %v4799 = vpop.f32.mrf.mxu0
    %4800 = vmatprep.mubr.f32.mxu0 0.0
    %4801 = vmatmul.mubr.f32.gmra.mxu0 %v4080
    %v4802 = vpop.f32.mrf.mxu0
    %v4803 = vadd.f32 %v4418, %v4802
    %v4804 = vpop.f32.mrf.mxu0
    %4805 = vmatprep.mubr.f32.mxu0 0.0
    %4806 = vmatmul.mubr.f32.gmra.mxu0 %v4083
    %v4807 = vpop.f32.mrf.mxu0
    %v4808 = vadd.f32 %v4423, %v4807
    %v4809 = vpop.f32.mrf.mxu0
    %4810 = vmatprep.mubr.f32.mxu0 0.0
    %4811 = vmatmul.mubr.f32.gmra.mxu0 %v4086
    %v4812 = vpop.f32.mrf.mxu0
    %v4813 = vadd.f32 %v4428, %v4812
    %v4814 = vpop.f32.mrf.mxu0
    %4815 = vmatprep.mubr.f32.mxu0 0.0
    %4816 = vmatmul.mubr.f32.gmra.mxu0 %v4089
    %v4817 = vpop.f32.mrf.mxu0
    %v4818 = vadd.f32 %v4433, %v4817
    %v4819 = vpop.f32.mrf.mxu0
    %4820 = vmatprep.mubr.f32.mxu0 0.0
    %4821 = vmatmul.mubr.f32.gmra.mxu0 %v4092
    %v4822 = vpop.f32.mrf.mxu0
    %v4823 = vadd.f32 %v4438, %v4822
    %v4824 = vpop.f32.mrf.mxu0
    %4825 = vmatprep.mubr.f32.mxu0 0.0
    %4826 = vmatmul.mubr.f32.gmra.mxu0 %v4095
    %v4827 = vpop.f32.mrf.mxu0
    %v4828 = vadd.f32 %v4443, %v4827
    %v4829 = vpop.f32.mrf.mxu0
    %4830 = vmatprep.mubr.f32.mxu0 0.0
    %4831 = vmatmul.mubr.f32.gmra.mxu0 %v4098
    %v4832 = vpop.f32.mrf.mxu0
    %v4833 = vadd.f32 %v4448, %v4832
    %v4834 = vpop.f32.mrf.mxu0
    %4835 = vmatprep.mubr.f32.mxu0 0.0
    %4836 = vmatmul.mubr.f32.gmra.mxu0 %v4101
    %v4837 = vpop.f32.mrf.mxu0
    %v4838 = vadd.f32 %v4453, %v4837
    %v4839 = vpop.f32.mrf.mxu0
    %4840 = vmatprep.mubr.f32.mxu0 0.0
    %4841 = vmatmul.mubr.f32.gmra.mxu0 %v4104
    %v4842 = vpop.f32.mrf.mxu0
    %v4843 = vadd.f32 %v4458, %v4842
    %v4844 = vpop.f32.mrf.mxu0
    %4845 = vmatprep.mubr.f32.mxu0 0.0
    %4846 = vmatmul.mubr.f32.gmra.mxu0 %v4107
    %v4847 = vpop.f32.mrf.mxu0
    %v4848 = vadd.f32 %v4463, %v4847
    %v4849 = vpop.f32.mrf.mxu0
    %4850 = vmatprep.mubr.f32.mxu0 0.0
    %4851 = vmatmul.mubr.f32.gmra.mxu0 %v4110
    %v4852 = vpop.f32.mrf.mxu0
    %v4853 = vadd.f32 %v4468, %v4852
    %v4854 = vpop.f32.mrf.mxu0
    %4855 = vmatprep.mubr.f32.mxu0 0.0
    %4856 = vmatmul.mubr.f32.gmra.mxu0 %v4113
    %v4857 = vpop.f32.mrf.mxu0
    %v4858 = vadd.f32 %v4473, %v4857
    %v4859 = vpop.f32.mrf.mxu0
    %4860 = vmatprep.mubr.f32.mxu0 0.0
    %4861 = vmatmul.mubr.f32.gmra.mxu0 %v4116
    %v4862 = vpop.f32.mrf.mxu0
    %v4863 = vadd.f32 %v4478, %v4862
    %v4864 = vpop.f32.mrf.mxu0
    %4865 = vmatprep.mubr.f32.mxu0 0.0
    %4866 = vmatmul.mubr.f32.gmra.mxu0 %v4119
    %v4867 = vpop.f32.mrf.mxu0
    %v4868 = vadd.f32 %v4483, %v4867
    %v4869 = vpop.f32.mrf.mxu0
    %4870 = vmatprep.mubr.f32.mxu0 0.0
    %4871 = vmatmul.mubr.f32.gmra.mxu0 %v4122
    %v4872 = vpop.f32.mrf.mxu0
    %v4873 = vadd.f32 %v4488, %v4872
    %v4874 = vpop.f32.mrf.mxu0
    %4875 = vmatprep.mubr.f32.mxu0 0.0
    %4876 = vmatmul.mubr.f32.gmra.mxu0 %v4125
    %v4877 = vpop.f32.mrf.mxu0
    %v4878 = vadd.f32 %v4493, %v4877
    %v4879 = vpop.f32.mrf.mxu0
    %4880 = vmatprep.mubr.f32.mxu0 0.0
    %4881 = vmatmul.mubr.f32.gmra.mxu0 %v4128
    %v4882 = vpop.f32.mrf.mxu0
    %v4883 = vadd.f32 %v4498, %v4882
    %v4884 = vpop.f32.mrf.mxu0
    %4885 = vmatprep.mubr.f32.mxu0 0.0
    %4886 = vmatmul.mubr.f32.gmra.mxu0 %v4131
    %v4887 = vpop.f32.mrf.mxu0
    %v4888 = vadd.f32 %v4503, %v4887
    %v4889 = vpop.f32.mrf.mxu0
    %4890 = vmatprep.mubr.f32.mxu0 0.0
    %4891 = vmatmul.mubr.f32.gmra.mxu0 %v4134
    %v4892 = vpop.f32.mrf.mxu0
    %v4893 = vadd.f32 %v4508, %v4892
    %v4894 = vpop.f32.mrf.mxu0
    %4895 = vmatprep.mubr.f32.mxu0 0.0
    %4896 = vmatmul.mubr.f32.gmra.mxu0 %v4137
    %v4897 = vpop.f32.mrf.mxu0
    %v4898 = vadd.f32 %v4513, %v4897
    %v4899 = vpop.f32.mrf.mxu0
    %4900 = vmatprep.mubr.f32.mxu0 0.0
    %4901 = vmatmul.mubr.f32.gmra.mxu0 %v4140
    %v4902 = vpop.f32.mrf.mxu0
    %v4903 = vadd.f32 %v4518, %v4902
    %v4904 = vpop.f32.mrf.mxu0
    %4905 = vmatprep.mubr.f32.mxu0 0.0
    %4906 = vmatmul.mubr.f32.gmra.mxu0 %v4143
    %v4907 = vpop.f32.mrf.mxu0
    %v4908 = vadd.f32 %v4523, %v4907
    %v4909 = vpop.f32.mrf.mxu0
    %4910 = vmatprep.mubr.f32.mxu0 0.0
    %4911 = vmatmul.mubr.f32.gmra.mxu0 %v4146
    %v4912 = vpop.f32.mrf.mxu0
    %v4913 = vadd.f32 %v4528, %v4912
    %v4914 = vpop.f32.mrf.mxu0
    %4915 = vmatprep.mubr.f32.mxu0 0.0
    %4916 = vmatmul.mubr.f32.gmra.mxu0 %v4149
    %v4917 = vpop.f32.mrf.mxu0
    %v4918 = vadd.f32 %v4533, %v4917
    %v4919 = vpop.f32.mrf.mxu0
    %4920 = vdwg.mxu0
    %v4921 = vxor.u32 %v4603, 2147483648
    %v4922 = vxor.u32 %v4608, 2147483648
    %v4923 = vxor.u32 %v4613, 2147483648
    %v4924 = vxor.u32 %v4618, 2147483648
    %v4925 = vxor.u32 %v4623, 2147483648
    %v4926 = vxor.u32 %v4628, 2147483648
    %v4927 = vxor.u32 %v4633, 2147483648
    %v4928 = vxor.u32 %v4638, 2147483648
    %v4929 = vxor.u32 %v4643, 2147483648
    %v4930 = vxor.u32 %v4648, 2147483648
    %v4931 = vxor.u32 %v4653, 2147483648
    %v4932 = vxor.u32 %v4658, 2147483648
    %v4933 = vxor.u32 %v4663, 2147483648
    %v4934 = vxor.u32 %v4668, 2147483648
    %v4935 = vxor.u32 %v4673, 2147483648
    %v4936 = vxor.u32 %v4678, 2147483648
    %v4937 = vxor.u32 %v4683, 2147483648
    %v4938 = vxor.u32 %v4688, 2147483648
    %v4939 = vxor.u32 %v4693, 2147483648
    %v4940 = vxor.u32 %v4698, 2147483648
    %v4941 = vxor.u32 %v4703, 2147483648
    %v4942 = vxor.u32 %v4708, 2147483648
    %v4943 = vxor.u32 %v4713, 2147483648
    %v4944 = vxor.u32 %v4718, 2147483648
    %v4945 = vxor.u32 %v4723, 2147483648
    %v4946 = vxor.u32 %v4728, 2147483648
    %v4947 = vxor.u32 %v4733, 2147483648
    %v4948 = vxor.u32 %v4738, 2147483648
    %v4949 = vxor.u32 %v4743, 2147483648
    %v4950 = vxor.u32 %v4748, 2147483648
    %v4951 = vxor.u32 %v4753, 2147483648
    %v4952 = vxor.u32 %v4758, 2147483648
    %v4953 = vxor.u32 %v4763, 2147483648
    %v4954 = vxor.u32 %v4768, 2147483648
    %v4955 = vxor.u32 %v4773, 2147483648
    %v4956 = vxor.u32 %v4778, 2147483648
    %v4957 = vxor.u32 %v4783, 2147483648
    %v4958 = vxor.u32 %v4788, 2147483648
    %v4959 = vxor.u32 %v4793, 2147483648
    %v4960 = vxor.u32 %v4798, 2147483648
    %v4961 = vxor.u32 %v4803, 2147483648
    %v4962 = vxor.u32 %v4808, 2147483648
    %v4963 = vxor.u32 %v4813, 2147483648
    %v4964 = vxor.u32 %v4818, 2147483648
    %v4965 = vxor.u32 %v4823, 2147483648
    %v4966 = vxor.u32 %v4828, 2147483648
    %v4967 = vxor.u32 %v4833, 2147483648
    %v4968 = vxor.u32 %v4838, 2147483648
    %v4969 = vxor.u32 %v4843, 2147483648
    %v4970 = vxor.u32 %v4848, 2147483648
    %v4971 = vxor.u32 %v4853, 2147483648
    %v4972 = vxor.u32 %v4858, 2147483648
    %v4973 = vxor.u32 %v4863, 2147483648
    %v4974 = vxor.u32 %v4868, 2147483648
    %v4975 = vxor.u32 %v4873, 2147483648
    %v4976 = vxor.u32 %v4878, 2147483648
    %v4977 = vxor.u32 %v4883, 2147483648
    %v4978 = vxor.u32 %v4888, 2147483648
    %v4979 = vxor.u32 %v4893, 2147483648
    %v4980 = vxor.u32 %v4898, 2147483648
    %v4981 = vxor.u32 %v4903, 2147483648
    %v4982 = vxor.u32 %v4908, 2147483648
    %v4983 = vxor.u32 %v4913, 2147483648
    %v4984 = vxor.u32 %v4918, 2147483648
    %v4985 = vmul.f32 %v4921, 1.442695
    %v4986 = vpow.pop %v4985
    %v4987 = vmul.f32 %v4922, 1.442695
    %v4988 = vpow.pop %v4987
    %v4989 = vmul.f32 %v4923, 1.442695
    %v4990 = vpow.pop %v4989
    %v4991 = vmul.f32 %v4924, 1.442695
    %v4992 = vpow.pop %v4991
    %v4993 = vmul.f32 %v4925, 1.442695
    %v4994 = vpow.pop %v4993
    %v4995 = vmul.f32 %v4926, 1.442695
    %v4996 = vpow.pop %v4995
    %v4997 = vmul.f32 %v4927, 1.442695
    %v4998 = vpow.pop %v4997
    %v4999 = vmul.f32 %v4928, 1.442695
    %v5000 = vpow.pop %v4999
    %v5001 = vmul.f32 %v4929, 1.442695
    %v5002 = vpow.pop %v5001
    %v5003 = vmul.f32 %v4930, 1.442695
    %v5004 = vpow.pop %v5003
    %v5005 = vmul.f32 %v4931, 1.442695
    %v5006 = vpow.pop %v5005
    %v5007 = vmul.f32 %v4932, 1.442695
    %v5008 = vpow.pop %v5007
    %v5009 = vmul.f32 %v4933, 1.442695
    %v5010 = vpow.pop %v5009
    %v5011 = vmul.f32 %v4934, 1.442695
    %v5012 = vpow.pop %v5011
    %v5013 = vmul.f32 %v4935, 1.442695
    %v5014 = vpow.pop %v5013
    %v5015 = vmul.f32 %v4936, 1.442695
    %v5016 = vpow.pop %v5015
    %v5017 = vmul.f32 %v4937, 1.442695
    %v5018 = vpow.pop %v5017
    %v5019 = vmul.f32 %v4938, 1.442695
    %v5020 = vpow.pop %v5019
    %v5021 = vmul.f32 %v4939, 1.442695
    %v5022 = vpow.pop %v5021
    %v5023 = vmul.f32 %v4940, 1.442695
    %v5024 = vpow.pop %v5023
    %v5025 = vmul.f32 %v4941, 1.442695
    %v5026 = vpow.pop %v5025
    %v5027 = vmul.f32 %v4942, 1.442695
    %v5028 = vpow.pop %v5027
    %v5029 = vmul.f32 %v4943, 1.442695
    %v5030 = vpow.pop %v5029
    %v5031 = vmul.f32 %v4944, 1.442695
    %v5032 = vpow.pop %v5031
    %v5033 = vmul.f32 %v4945, 1.442695
    %v5034 = vpow.pop %v5033
    %v5035 = vmul.f32 %v4946, 1.442695
    %v5036 = vpow.pop %v5035
    %v5037 = vmul.f32 %v4947, 1.442695
    %v5038 = vpow.pop %v5037
    %v5039 = vmul.f32 %v4948, 1.442695
    %v5040 = vpow.pop %v5039
    %v5041 = vmul.f32 %v4949, 1.442695
    %v5042 = vpow.pop %v5041
    %v5043 = vmul.f32 %v4950, 1.442695
    %v5044 = vpow.pop %v5043
    %v5045 = vmul.f32 %v4951, 1.442695
    %v5046 = vpow.pop %v5045
    %v5047 = vmul.f32 %v4952, 1.442695
    %v5048 = vpow.pop %v5047
    %v5049 = vmul.f32 %v4953, 1.442695
    %v5050 = vpow.pop %v5049
    %v5051 = vmul.f32 %v4954, 1.442695
    %v5052 = vpow.pop %v5051
    %v5053 = vmul.f32 %v4955, 1.442695
    %v5054 = vpow.pop %v5053
    %v5055 = vmul.f32 %v4956, 1.442695
    %v5056 = vpow.pop %v5055
    %v5057 = vmul.f32 %v4957, 1.442695
    %v5058 = vpow.pop %v5057
    %v5059 = vmul.f32 %v4958, 1.442695
    %v5060 = vpow.pop %v5059
    %v5061 = vmul.f32 %v4959, 1.442695
    %v5062 = vpow.pop %v5061
    %v5063 = vmul.f32 %v4960, 1.442695
    %v5064 = vpow.pop %v5063
    %v5065 = vmul.f32 %v4961, 1.442695
    %v5066 = vpow.pop %v5065
    %v5067 = vmul.f32 %v4962, 1.442695
    %v5068 = vpow.pop %v5067
    %v5069 = vmul.f32 %v4963, 1.442695
    %v5070 = vpow.pop %v5069
    %v5071 = vmul.f32 %v4964, 1.442695
    %v5072 = vpow.pop %v5071
    %v5073 = vmul.f32 %v4965, 1.442695
    %v5074 = vpow.pop %v5073
    %v5075 = vmul.f32 %v4966, 1.442695
    %v5076 = vpow.pop %v5075
    %v5077 = vmul.f32 %v4967, 1.442695
    %v5078 = vpow.pop %v5077
    %v5079 = vmul.f32 %v4968, 1.442695
    %v5080 = vpow.pop %v5079
    %v5081 = vmul.f32 %v4969, 1.442695
    %v5082 = vpow.pop %v5081
    %v5083 = vmul.f32 %v4970, 1.442695
    %v5084 = vpow.pop %v5083
    %v5085 = vmul.f32 %v4971, 1.442695
    %v5086 = vpow.pop %v5085
    %v5087 = vmul.f32 %v4972, 1.442695
    %v5088 = vpow.pop %v5087
    %v5089 = vmul.f32 %v4973, 1.442695
    %v5090 = vpow.pop %v5089
    %v5091 = vmul.f32 %v4974, 1.442695
    %v5092 = vpow.pop %v5091
    %v5093 = vmul.f32 %v4975, 1.442695
    %v5094 = vpow.pop %v5093
    %v5095 = vmul.f32 %v4976, 1.442695
    %v5096 = vpow.pop %v5095
    %v5097 = vmul.f32 %v4977, 1.442695
    %v5098 = vpow.pop %v5097
    %v5099 = vmul.f32 %v4978, 1.442695
    %v5100 = vpow.pop %v5099
    %v5101 = vmul.f32 %v4979, 1.442695
    %v5102 = vpow.pop %v5101
    %v5103 = vmul.f32 %v4980, 1.442695
    %v5104 = vpow.pop %v5103
    %v5105 = vmul.f32 %v4981, 1.442695
    %v5106 = vpow.pop %v5105
    %v5107 = vmul.f32 %v4982, 1.442695
    %v5108 = vpow.pop %v5107
    %v5109 = vmul.f32 %v4983, 1.442695
    %v5110 = vpow.pop %v5109
    %v5111 = vmul.f32 %v4984, 1.442695
    %v5112 = vpow.pop %v5111
    %v5113 = vadd.f32 %v4986, 1.0
    %v5114 = vadd.f32 %v4988, 1.0
    %v5115 = vadd.f32 %v4990, 1.0
    %v5116 = vadd.f32 %v4992, 1.0
    %v5117 = vadd.f32 %v4994, 1.0
    %v5118 = vadd.f32 %v4996, 1.0
    %v5119 = vadd.f32 %v4998, 1.0
    %v5120 = vadd.f32 %v5000, 1.0
    %v5121 = vadd.f32 %v5002, 1.0
    %v5122 = vadd.f32 %v5004, 1.0
    %v5123 = vadd.f32 %v5006, 1.0
    %v5124 = vadd.f32 %v5008, 1.0
    %v5125 = vadd.f32 %v5010, 1.0
    %v5126 = vadd.f32 %v5012, 1.0
    %v5127 = vadd.f32 %v5014, 1.0
    %v5128 = vadd.f32 %v5016, 1.0
    %v5129 = vadd.f32 %v5018, 1.0
    %v5130 = vadd.f32 %v5020, 1.0
    %v5131 = vadd.f32 %v5022, 1.0
    %v5132 = vadd.f32 %v5024, 1.0
    %v5133 = vadd.f32 %v5026, 1.0
    %v5134 = vadd.f32 %v5028, 1.0
    %v5135 = vadd.f32 %v5030, 1.0
    %v5136 = vadd.f32 %v5032, 1.0
    %v5137 = vadd.f32 %v5034, 1.0
    %v5138 = vadd.f32 %v5036, 1.0
    %v5139 = vadd.f32 %v5038, 1.0
    %v5140 = vadd.f32 %v5040, 1.0
    %v5141 = vadd.f32 %v5042, 1.0
    %v5142 = vadd.f32 %v5044, 1.0
    %v5143 = vadd.f32 %v5046, 1.0
    %v5144 = vadd.f32 %v5048, 1.0
    %v5145 = vadd.f32 %v5050, 1.0
    %v5146 = vadd.f32 %v5052, 1.0
    %v5147 = vadd.f32 %v5054, 1.0
    %v5148 = vadd.f32 %v5056, 1.0
    %v5149 = vadd.f32 %v5058, 1.0
    %v5150 = vadd.f32 %v5060, 1.0
    %v5151 = vadd.f32 %v5062, 1.0
    %v5152 = vadd.f32 %v5064, 1.0
    %v5153 = vadd.f32 %v5066, 1.0
    %v5154 = vadd.f32 %v5068, 1.0
    %v5155 = vadd.f32 %v5070, 1.0
    %v5156 = vadd.f32 %v5072, 1.0
    %v5157 = vadd.f32 %v5074, 1.0
    %v5158 = vadd.f32 %v5076, 1.0
    %v5159 = vadd.f32 %v5078, 1.0
    %v5160 = vadd.f32 %v5080, 1.0
    %v5161 = vadd.f32 %v5082, 1.0
    %v5162 = vadd.f32 %v5084, 1.0
    %v5163 = vadd.f32 %v5086, 1.0
    %v5164 = vadd.f32 %v5088, 1.0
    %v5165 = vadd.f32 %v5090, 1.0
    %v5166 = vadd.f32 %v5092, 1.0
    %v5167 = vadd.f32 %v5094, 1.0
    %v5168 = vadd.f32 %v5096, 1.0
    %v5169 = vadd.f32 %v5098, 1.0
    %v5170 = vadd.f32 %v5100, 1.0
    %v5171 = vadd.f32 %v5102, 1.0
    %v5172 = vadd.f32 %v5104, 1.0
    %v5173 = vadd.f32 %v5106, 1.0
    %v5174 = vadd.f32 %v5108, 1.0
    %v5175 = vadd.f32 %v5110, 1.0
    %v5176 = vadd.f32 %v5112, 1.0
    %v5177 = vrcp.pop %v5113
    %v5178 = vmul.f32 1.0, %v5177
    %v5179 = vrcp.pop %v5114
    %v5180 = vmul.f32 1.0, %v5179
    %v5181 = vrcp.pop %v5115
    %v5182 = vmul.f32 1.0, %v5181
    %v5183 = vrcp.pop %v5116
    %v5184 = vmul.f32 1.0, %v5183
    %v5185 = vrcp.pop %v5117
    %v5186 = vmul.f32 1.0, %v5185
    %v5187 = vrcp.pop %v5118
    %v5188 = vmul.f32 1.0, %v5187
    %v5189 = vrcp.pop %v5119
    %v5190 = vmul.f32 1.0, %v5189
    %v5191 = vrcp.pop %v5120
    %v5192 = vmul.f32 1.0, %v5191
    %v5193 = vrcp.pop %v5121
    %v5194 = vmul.f32 1.0, %v5193
    %v5195 = vrcp.pop %v5122
    %v5196 = vmul.f32 1.0, %v5195
    %v5197 = vrcp.pop %v5123
    %v5198 = vmul.f32 1.0, %v5197
    %v5199 = vrcp.pop %v5124
    %v5200 = vmul.f32 1.0, %v5199
    %v5201 = vrcp.pop %v5125
    %v5202 = vmul.f32 1.0, %v5201
    %v5203 = vrcp.pop %v5126
    %v5204 = vmul.f32 1.0, %v5203
    %v5205 = vrcp.pop %v5127
    %v5206 = vmul.f32 1.0, %v5205
    %v5207 = vrcp.pop %v5128
    %v5208 = vmul.f32 1.0, %v5207
    %v5209 = vrcp.pop %v5129
    %v5210 = vmul.f32 1.0, %v5209
    %v5211 = vrcp.pop %v5130
    %v5212 = vmul.f32 1.0, %v5211
    %v5213 = vrcp.pop %v5131
    %v5214 = vmul.f32 1.0, %v5213
    %v5215 = vrcp.pop %v5132
    %v5216 = vmul.f32 1.0, %v5215
    %v5217 = vrcp.pop %v5133
    %v5218 = vmul.f32 1.0, %v5217
    %v5219 = vrcp.pop %v5134
    %v5220 = vmul.f32 1.0, %v5219
    %v5221 = vrcp.pop %v5135
    %v5222 = vmul.f32 1.0, %v5221
    %v5223 = vrcp.pop %v5136
    %v5224 = vmul.f32 1.0, %v5223
    %v5225 = vrcp.pop %v5137
    %v5226 = vmul.f32 1.0, %v5225
    %v5227 = vrcp.pop %v5138
    %v5228 = vmul.f32 1.0, %v5227
    %v5229 = vrcp.pop %v5139
    %v5230 = vmul.f32 1.0, %v5229
    %v5231 = vrcp.pop %v5140
    %v5232 = vmul.f32 1.0, %v5231
    %v5233 = vrcp.pop %v5141
    %v5234 = vmul.f32 1.0, %v5233
    %v5235 = vrcp.pop %v5142
    %v5236 = vmul.f32 1.0, %v5235
    %v5237 = vrcp.pop %v5143
    %v5238 = vmul.f32 1.0, %v5237
    %v5239 = vrcp.pop %v5144
    %v5240 = vmul.f32 1.0, %v5239
    %v5241 = vrcp.pop %v5145
    %v5242 = vmul.f32 1.0, %v5241
    %v5243 = vrcp.pop %v5146
    %v5244 = vmul.f32 1.0, %v5243
    %v5245 = vrcp.pop %v5147
    %v5246 = vmul.f32 1.0, %v5245
    %v5247 = vrcp.pop %v5148
    %v5248 = vmul.f32 1.0, %v5247
    %v5249 = vrcp.pop %v5149
    %v5250 = vmul.f32 1.0, %v5249
    %v5251 = vrcp.pop %v5150
    %v5252 = vmul.f32 1.0, %v5251
    %v5253 = vrcp.pop %v5151
    %v5254 = vmul.f32 1.0, %v5253
    %v5255 = vrcp.pop %v5152
    %v5256 = vmul.f32 1.0, %v5255
    %v5257 = vrcp.pop %v5153
    %v5258 = vmul.f32 1.0, %v5257
    %v5259 = vrcp.pop %v5154
    %v5260 = vmul.f32 1.0, %v5259
    %v5261 = vrcp.pop %v5155
    %v5262 = vmul.f32 1.0, %v5261
    %v5263 = vrcp.pop %v5156
    %v5264 = vmul.f32 1.0, %v5263
    %v5265 = vrcp.pop %v5157
    %v5266 = vmul.f32 1.0, %v5265
    %v5267 = vrcp.pop %v5158
    %v5268 = vmul.f32 1.0, %v5267
    %v5269 = vrcp.pop %v5159
    %v5270 = vmul.f32 1.0, %v5269
    %v5271 = vrcp.pop %v5160
    %v5272 = vmul.f32 1.0, %v5271
    %v5273 = vrcp.pop %v5161
    %v5274 = vmul.f32 1.0, %v5273
    %v5275 = vrcp.pop %v5162
    %v5276 = vmul.f32 1.0, %v5275
    %v5277 = vrcp.pop %v5163
    %v5278 = vmul.f32 1.0, %v5277
    %v5279 = vrcp.pop %v5164
    %v5280 = vmul.f32 1.0, %v5279
    %v5281 = vrcp.pop %v5165
    %v5282 = vmul.f32 1.0, %v5281
    %v5283 = vrcp.pop %v5166
    %v5284 = vmul.f32 1.0, %v5283
    %v5285 = vrcp.pop %v5167
    %v5286 = vmul.f32 1.0, %v5285
    %v5287 = vrcp.pop %v5168
    %v5288 = vmul.f32 1.0, %v5287
    %v5289 = vrcp.pop %v5169
    %v5290 = vmul.f32 1.0, %v5289
    %v5291 = vrcp.pop %v5170
    %v5292 = vmul.f32 1.0, %v5291
    %v5293 = vrcp.pop %v5171
    %v5294 = vmul.f32 1.0, %v5293
    %v5295 = vrcp.pop %v5172
    %v5296 = vmul.f32 1.0, %v5295
    %v5297 = vrcp.pop %v5173
    %v5298 = vmul.f32 1.0, %v5297
    %v5299 = vrcp.pop %v5174
    %v5300 = vmul.f32 1.0, %v5299
    %v5301 = vrcp.pop %v5175
    %v5302 = vmul.f32 1.0, %v5301
    %v5303 = vrcp.pop %v5176
    %v5304 = vmul.f32 1.0, %v5303
    %v5305 = vmul.f32 %v4603, %v5178
    %v5306 = vmul.f32 %v4608, %v5180
    %v5307 = vmul.f32 %v4613, %v5182
    %v5308 = vmul.f32 %v4618, %v5184
    %v5309 = vmul.f32 %v4623, %v5186
    %v5310 = vmul.f32 %v4628, %v5188
    %v5311 = vmul.f32 %v4633, %v5190
    %v5312 = vmul.f32 %v4638, %v5192
    %v5313 = vmul.f32 %v4643, %v5194
    %v5314 = vmul.f32 %v4648, %v5196
    %v5315 = vmul.f32 %v4653, %v5198
    %v5316 = vmul.f32 %v4658, %v5200
    %v5317 = vmul.f32 %v4663, %v5202
    %v5318 = vmul.f32 %v4668, %v5204
    %v5319 = vmul.f32 %v4673, %v5206
    %v5320 = vmul.f32 %v4678, %v5208
    %v5321 = vmul.f32 %v4683, %v5210
    %v5322 = vmul.f32 %v4688, %v5212
    %v5323 = vmul.f32 %v4693, %v5214
    %v5324 = vmul.f32 %v4698, %v5216
    %v5325 = vmul.f32 %v4703, %v5218
    %v5326 = vmul.f32 %v4708, %v5220
    %v5327 = vmul.f32 %v4713, %v5222
    %v5328 = vmul.f32 %v4718, %v5224
    %v5329 = vmul.f32 %v4723, %v5226
    %v5330 = vmul.f32 %v4728, %v5228
    %v5331 = vmul.f32 %v4733, %v5230
    %v5332 = vmul.f32 %v4738, %v5232
    %v5333 = vmul.f32 %v4743, %v5234
    %v5334 = vmul.f32 %v4748, %v5236
    %v5335 = vmul.f32 %v4753, %v5238
    %v5336 = vmul.f32 %v4758, %v5240
    %v5337 = vmul.f32 %v4763, %v5242
    %v5338 = vmul.f32 %v4768, %v5244
    %v5339 = vmul.f32 %v4773, %v5246
    %v5340 = vmul.f32 %v4778, %v5248
    %v5341 = vmul.f32 %v4783, %v5250
    %v5342 = vmul.f32 %v4788, %v5252
    %v5343 = vmul.f32 %v4793, %v5254
    %v5344 = vmul.f32 %v4798, %v5256
    %v5345 = vmul.f32 %v4803, %v5258
    %v5346 = vmul.f32 %v4808, %v5260
    %v5347 = vmul.f32 %v4813, %v5262
    %v5348 = vmul.f32 %v4818, %v5264
    %v5349 = vmul.f32 %v4823, %v5266
    %v5350 = vmul.f32 %v4828, %v5268
    %v5351 = vmul.f32 %v4833, %v5270
    %v5352 = vmul.f32 %v4838, %v5272
    %v5353 = vmul.f32 %v4843, %v5274
    %v5354 = vmul.f32 %v4848, %v5276
    %v5355 = vmul.f32 %v4853, %v5278
    %v5356 = vmul.f32 %v4858, %v5280
    %v5357 = vmul.f32 %v4863, %v5282
    %v5358 = vmul.f32 %v4868, %v5284
    %v5359 = vmul.f32 %v4873, %v5286
    %v5360 = vmul.f32 %v4878, %v5288
    %v5361 = vmul.f32 %v4883, %v5290
    %v5362 = vmul.f32 %v4888, %v5292
    %v5363 = vmul.f32 %v4893, %v5294
    %v5364 = vmul.f32 %v4898, %v5296
    %v5365 = vmul.f32 %v4903, %v5298
    %v5366 = vmul.f32 %v4908, %v5300
    %v5367 = vmul.f32 %v4913, %v5302
    %v5368 = vmul.f32 %v4918, %v5304
    %s5369 = scalar_lea.vmem [#allocation3], 24
    %5370 = vst.msk [vmem:[%s5369 + $0x1] sm:$0xff] %vm143, %v5305
    %5371 = vst.msk [vmem:[%s5369 + $0x9] sm:$0xff] %vm143, %v5306
    %5372 = vst.msk [vmem:[%s5369 + $0x19] sm:$0xff] %vm143, %v5307
    %5373 = vst.msk [vmem:[%s5369 + $0x21] sm:$0xff] %vm143, %v5308
    %5374 = vst.msk [vmem:[%s5369 + $0x31] sm:$0xff] %vm143, %v5309
    %5375 = vst.msk [vmem:[%s5369 + $0x39] sm:$0xff] %vm143, %v5310
    %5376 = vst.msk [vmem:[%s5369 + $0x49] sm:$0xff] %vm143, %v5311
    %5377 = vst.msk [vmem:[%s5369 + $0x51] sm:$0xff] %vm143, %v5312
    %5378 = vst.msk [vmem:[%s5369 + $0x61] sm:$0xff] %vm143, %v5313
    %5379 = vst.msk [vmem:[%s5369 + $0x69] sm:$0xff] %vm143, %v5314
    %5380 = vst.msk [vmem:[%s5369 + $0x79] sm:$0xff] %vm143, %v5315
    %5381 = vst.msk [vmem:[%s5369 + $0x81] sm:$0xff] %vm143, %v5316
    %5382 = vst.msk [vmem:[%s5369 + $0x91] sm:$0xff] %vm143, %v5317
    %5383 = vst.msk [vmem:[%s5369 + $0x99] sm:$0xff] %vm143, %v5318
    %5384 = vst.msk [vmem:[%s5369 + $0xa9] sm:$0xff] %vm143, %v5319
    %5385 = vst.msk [vmem:[%s5369 + $0xb1] sm:$0xff] %vm143, %v5320
    %5386 = vst.msk [vmem:[%s5369 + $0xc1] sm:$0xff] %vm143, %v5321
    %5387 = vst.msk [vmem:[%s5369 + $0xc9] sm:$0xff] %vm143, %v5322
    %5388 = vst.msk [vmem:[%s5369 + $0xd9] sm:$0xff] %vm143, %v5323
    %5389 = vst.msk [vmem:[%s5369 + $0xe1] sm:$0xff] %vm143, %v5324
    %5390 = vst.msk [vmem:[%s5369 + $0xf1] sm:$0xff] %vm143, %v5325
    %5391 = vst.msk [vmem:[%s5369 + $0xf9] sm:$0xff] %vm143, %v5326
    %5392 = vst.msk [vmem:[%s5369 + $0x109] sm:$0xff] %vm143, %v5327
    %5393 = vst.msk [vmem:[%s5369 + $0x111] sm:$0xff] %vm143, %v5328
    %5394 = vst.msk [vmem:[%s5369 + $0x121] sm:$0xff] %vm143, %v5329
    %5395 = vst.msk [vmem:[%s5369 + $0x129] sm:$0xff] %vm143, %v5330
    %5396 = vst.msk [vmem:[%s5369 + $0x139] sm:$0xff] %vm143, %v5331
    %5397 = vst.msk [vmem:[%s5369 + $0x141] sm:$0xff] %vm143, %v5332
    %5398 = vst.msk [vmem:[%s5369 + $0x151] sm:$0xff] %vm143, %v5333
    %5399 = vst.msk [vmem:[%s5369 + $0x159] sm:$0xff] %vm143, %v5334
    %5400 = vst.msk [vmem:[%s5369 + $0x169] sm:$0xff] %vm143, %v5335
    %5401 = vst.msk [vmem:[%s5369 + $0x171] sm:$0xff] %vm143, %v5336
    %5402 = vst.msk [vmem:[%s5369 + $0x1b1] sm:$0xff] %vm143, %v5337
    %5403 = vst.msk [vmem:[%s5369 + $0x1b9] sm:$0xff] %vm143, %v5338
    %5404 = vst.msk [vmem:[%s5369 + $0x1c9] sm:$0xff] %vm143, %v5339
    %5405 = vst.msk [vmem:[%s5369 + $0x1d1] sm:$0xff] %vm143, %v5340
    %5406 = vst.msk [vmem:[%s5369 + $0x1e1] sm:$0xff] %vm143, %v5341
    %5407 = vst.msk [vmem:[%s5369 + $0x1e9] sm:$0xff] %vm143, %v5342
    %5408 = vst.msk [vmem:[%s5369 + $0x1f9] sm:$0xff] %vm143, %v5343
    %5409 = vst.msk [vmem:[%s5369 + $0x201] sm:$0xff] %vm143, %v5344
    %5410 = vst.msk [vmem:[%s5369 + $0x211] sm:$0xff] %vm143, %v5345
    %5411 = vst.msk [vmem:[%s5369 + $0x219] sm:$0xff] %vm143, %v5346
    %5412 = vst.msk [vmem:[%s5369 + $0x229] sm:$0xff] %vm143, %v5347
    %5413 = vst.msk [vmem:[%s5369 + $0x231] sm:$0xff] %vm143, %v5348
    %5414 = vst.msk [vmem:[%s5369 + $0x241] sm:$0xff] %vm143, %v5349
    %5415 = vst.msk [vmem:[%s5369 + $0x249] sm:$0xff] %vm143, %v5350
    %5416 = vst.msk [vmem:[%s5369 + $0x259] sm:$0xff] %vm143, %v5351
    %5417 = vst.msk [vmem:[%s5369 + $0x261] sm:$0xff] %vm143, %v5352
    %5418 = vst.msk [vmem:[%s5369 + $0x271] sm:$0xff] %vm143, %v5353
    %5419 = vst.msk [vmem:[%s5369 + $0x279] sm:$0xff] %vm143, %v5354
    %5420 = vst.msk [vmem:[%s5369 + $0x289] sm:$0xff] %vm143, %v5355
    %5421 = vst.msk [vmem:[%s5369 + $0x291] sm:$0xff] %vm143, %v5356
    %5422 = vst.msk [vmem:[%s5369 + $0x2a1] sm:$0xff] %vm143, %v5357
    %5423 = vst.msk [vmem:[%s5369 + $0x2a9] sm:$0xff] %vm143, %v5358
    %5424 = vst.msk [vmem:[%s5369 + $0x2b9] sm:$0xff] %vm143, %v5359
    %5425 = vst.msk [vmem:[%s5369 + $0x2c1] sm:$0xff] %vm143, %v5360
    %5426 = vst.msk [vmem:[%s5369 + $0x2d1] sm:$0xff] %vm143, %v5361
    %5427 = vst.msk [vmem:[%s5369 + $0x2d9] sm:$0xff] %vm143, %v5362
    %5428 = vst.msk [vmem:[%s5369 + $0x2e9] sm:$0xff] %vm143, %v5363
    %5429 = vst.msk [vmem:[%s5369 + $0x2f1] sm:$0xff] %vm143, %v5364
    %5430 = vst.msk [vmem:[%s5369 + $0x301] sm:$0xff] %vm143, %v5365
    %5431 = vst.msk [vmem:[%s5369 + $0x309] sm:$0xff] %vm143, %v5366
    %5432 = vst.msk [vmem:[%s5369 + $0x319] sm:$0xff] %vm143, %v5367
    %5433 = vst.msk [vmem:[%s5369 + $0x321] sm:$0xff] %vm143, %v5368
    %v5434 = vld [vmem:[#allocation3] sm:$0xff]
    %v5435 = vld [vmem:[#allocation3 + $0x8] sm:$0xff]
    %v5436 = vld [vmem:[#allocation3 + $0x18] sm:$0xff]
    %v5437 = vld [vmem:[#allocation3 + $0x20] sm:$0xff]
    %v5438 = vld [vmem:[#allocation3 + $0x30] sm:$0xff]
    %v5439 = vld [vmem:[#allocation3 + $0x38] sm:$0xff]
    %v5440 = vld [vmem:[#allocation3 + $0x48] sm:$0xff]
    %v5441 = vld [vmem:[#allocation3 + $0x50] sm:$0xff]
    %v5442 = vld [vmem:[#allocation3 + $0x60] sm:$0xff]
    %v5443 = vld [vmem:[#allocation3 + $0x68] sm:$0xff]
    %v5444 = vld [vmem:[#allocation3 + $0x78] sm:$0xff]
    %v5445 = vld [vmem:[#allocation3 + $0x80] sm:$0xff]
    %v5446 = vld [vmem:[#allocation3 + $0x90] sm:$0xff]
    %v5447 = vld [vmem:[#allocation3 + $0x98] sm:$0xff]
    %v5448 = vld [vmem:[#allocation3 + $0xa8] sm:$0xff]
    %v5449 = vld [vmem:[#allocation3 + $0xb0] sm:$0xff]
    %v5450 = vld [vmem:[#allocation3 + $0xc0] sm:$0xff]
    %v5451 = vld [vmem:[#allocation3 + $0xc8] sm:$0xff]
    %v5452 = vld [vmem:[#allocation3 + $0xd8] sm:$0xff]
    %v5453 = vld [vmem:[#allocation3 + $0xe0] sm:$0xff]
    %v5454 = vld [vmem:[#allocation3 + $0xf0] sm:$0xff]
    %v5455 = vld [vmem:[#allocation3 + $0xf8] sm:$0xff]
    %v5456 = vld [vmem:[#allocation3 + $0x108] sm:$0xff]
    %v5457 = vld [vmem:[#allocation3 + $0x110] sm:$0xff]
    %v5458 = vld [vmem:[#allocation3 + $0x120] sm:$0xff]
    %v5459 = vld [vmem:[#allocation3 + $0x128] sm:$0xff]
    %v5460 = vld [vmem:[#allocation3 + $0x138] sm:$0xff]
    %v5461 = vld [vmem:[#allocation3 + $0x140] sm:$0xff]
    %v5462 = vld [vmem:[#allocation3 + $0x150] sm:$0xff]
    %v5463 = vld [vmem:[#allocation3 + $0x158] sm:$0xff]
    %v5464 = vld [vmem:[#allocation3 + $0x168] sm:$0xff]
    %v5465 = vld [vmem:[#allocation3 + $0x170] sm:$0xff]
    %v5466 = vld [vmem:[#allocation3 + $0x1b0] sm:$0xff]
    %v5467 = vld [vmem:[#allocation3 + $0x1b8] sm:$0xff]
    %v5468 = vld [vmem:[#allocation3 + $0x1c8] sm:$0xff]
    %v5469 = vld [vmem:[#allocation3 + $0x1d0] sm:$0xff]
    %v5470 = vld [vmem:[#allocation3 + $0x1e0] sm:$0xff]
    %v5471 = vld [vmem:[#allocation3 + $0x1e8] sm:$0xff]
    %v5472 = vld [vmem:[#allocation3 + $0x1f8] sm:$0xff]
    %v5473 = vld [vmem:[#allocation3 + $0x200] sm:$0xff]
    %v5474 = vld [vmem:[#allocation3 + $0x210] sm:$0xff]
    %v5475 = vld [vmem:[#allocation3 + $0x218] sm:$0xff]
    %v5476 = vld [vmem:[#allocation3 + $0x228] sm:$0xff]
    %v5477 = vld [vmem:[#allocation3 + $0x230] sm:$0xff]
    %v5478 = vld [vmem:[#allocation3 + $0x240] sm:$0xff]
    %v5479 = vld [vmem:[#allocation3 + $0x248] sm:$0xff]
    %v5480 = vld [vmem:[#allocation3 + $0x258] sm:$0xff]
    %v5481 = vld [vmem:[#allocation3 + $0x260] sm:$0xff]
    %v5482 = vld [vmem:[#allocation3 + $0x270] sm:$0xff]
    %v5483 = vld [vmem:[#allocation3 + $0x278] sm:$0xff]
    %v5484 = vld [vmem:[#allocation3 + $0x288] sm:$0xff]
    %v5485 = vld [vmem:[#allocation3 + $0x290] sm:$0xff]
    %v5486 = vld [vmem:[#allocation3 + $0x2a0] sm:$0xff]
    %v5487 = vld [vmem:[#allocation3 + $0x2a8] sm:$0xff]
    %v5488 = vld [vmem:[#allocation3 + $0x2b8] sm:$0xff]
    %v5489 = vld [vmem:[#allocation3 + $0x2c0] sm:$0xff]
    %v5490 = vld [vmem:[#allocation3 + $0x2d0] sm:$0xff]
    %v5491 = vld [vmem:[#allocation3 + $0x2d8] sm:$0xff]
    %v5492 = vld [vmem:[#allocation3 + $0x2e8] sm:$0xff]
    %v5493 = vld [vmem:[#allocation3 + $0x2f0] sm:$0xff]
    %v5494 = vld [vmem:[#allocation3 + $0x300] sm:$0xff]
    %v5495 = vld [vmem:[#allocation3 + $0x308] sm:$0xff]
    %v5496 = vld [vmem:[#allocation3 + $0x318] sm:$0xff]
    %v5497 = vld [vmem:[#allocation3 + $0x320] sm:$0xff]
    %v5498 = vld [vmem:[#allocation3 + $0x1] sm:$0xff]
    %v5499 = vld [vmem:[#allocation3 + $0x9] sm:$0xff]
    %v5500 = vld [vmem:[#allocation3 + $0x19] sm:$0xff]
    %v5501 = vld [vmem:[#allocation3 + $0x21] sm:$0xff]
    %v5502 = vld [vmem:[#allocation3 + $0x31] sm:$0xff]
    %v5503 = vld [vmem:[#allocation3 + $0x39] sm:$0xff]
    %v5504 = vld [vmem:[#allocation3 + $0x49] sm:$0xff]
    %v5505 = vld [vmem:[#allocation3 + $0x51] sm:$0xff]
    %v5506 = vld [vmem:[#allocation3 + $0x61] sm:$0xff]
    %v5507 = vld [vmem:[#allocation3 + $0x69] sm:$0xff]
    %v5508 = vld [vmem:[#allocation3 + $0x79] sm:$0xff]
    %v5509 = vld [vmem:[#allocation3 + $0x81] sm:$0xff]
    %v5510 = vld [vmem:[#allocation3 + $0x91] sm:$0xff]
    %v5511 = vld [vmem:[#allocation3 + $0x99] sm:$0xff]
    %v5512 = vld [vmem:[#allocation3 + $0xa9] sm:$0xff]
    %v5513 = vld [vmem:[#allocation3 + $0xb1] sm:$0xff]
    %v5514 = vld [vmem:[#allocation3 + $0xc1] sm:$0xff]
    %v5515 = vld [vmem:[#allocation3 + $0xc9] sm:$0xff]
    %v5516 = vld [vmem:[#allocation3 + $0xd9] sm:$0xff]
    %v5517 = vld [vmem:[#allocation3 + $0xe1] sm:$0xff]
    %v5518 = vld [vmem:[#allocation3 + $0xf1] sm:$0xff]
    %v5519 = vld [vmem:[#allocation3 + $0xf9] sm:$0xff]
    %v5520 = vld [vmem:[#allocation3 + $0x109] sm:$0xff]
    %v5521 = vld [vmem:[#allocation3 + $0x111] sm:$0xff]
    %v5522 = vld [vmem:[#allocation3 + $0x121] sm:$0xff]
    %v5523 = vld [vmem:[#allocation3 + $0x129] sm:$0xff]
    %v5524 = vld [vmem:[#allocation3 + $0x139] sm:$0xff]
    %v5525 = vld [vmem:[#allocation3 + $0x141] sm:$0xff]
    %v5526 = vld [vmem:[#allocation3 + $0x151] sm:$0xff]
    %v5527 = vld [vmem:[#allocation3 + $0x159] sm:$0xff]
    %v5528 = vld [vmem:[#allocation3 + $0x169] sm:$0xff]
    %v5529 = vld [vmem:[#allocation3 + $0x171] sm:$0xff]
    %v5530 = vld [vmem:[#allocation3 + $0x1b1] sm:$0xff]
    %v5531 = vld [vmem:[#allocation3 + $0x1b9] sm:$0xff]
    %v5532 = vld [vmem:[#allocation3 + $0x1c9] sm:$0xff]
    %v5533 = vld [vmem:[#allocation3 + $0x1d1] sm:$0xff]
    %v5534 = vld [vmem:[#allocation3 + $0x1e1] sm:$0xff]
    %v5535 = vld [vmem:[#allocation3 + $0x1e9] sm:$0xff]
    %v5536 = vld [vmem:[#allocation3 + $0x1f9] sm:$0xff]
    %v5537 = vld [vmem:[#allocation3 + $0x201] sm:$0xff]
    %v5538 = vld [vmem:[#allocation3 + $0x211] sm:$0xff]
    %v5539 = vld [vmem:[#allocation3 + $0x219] sm:$0xff]
    %v5540 = vld [vmem:[#allocation3 + $0x229] sm:$0xff]
    %v5541 = vld [vmem:[#allocation3 + $0x231] sm:$0xff]
    %v5542 = vld [vmem:[#allocation3 + $0x241] sm:$0xff]
    %v5543 = vld [vmem:[#allocation3 + $0x249] sm:$0xff]
    %v5544 = vld [vmem:[#allocation3 + $0x259] sm:$0xff]
    %v5545 = vld [vmem:[#allocation3 + $0x261] sm:$0xff]
    %v5546 = vld [vmem:[#allocation3 + $0x271] sm:$0xff]
    %v5547 = vld [vmem:[#allocation3 + $0x279] sm:$0xff]
    %v5548 = vld [vmem:[#allocation3 + $0x289] sm:$0xff]
    %v5549 = vld [vmem:[#allocation3 + $0x291] sm:$0xff]
    %v5550 = vld [vmem:[#allocation3 + $0x2a1] sm:$0xff]
    %v5551 = vld [vmem:[#allocation3 + $0x2a9] sm:$0xff]
    %v5552 = vld [vmem:[#allocation3 + $0x2b9] sm:$0xff]
    %v5553 = vld [vmem:[#allocation3 + $0x2c1] sm:$0xff]
    %v5554 = vld [vmem:[#allocation3 + $0x2d1] sm:$0xff]
    %v5555 = vld [vmem:[#allocation3 + $0x2d9] sm:$0xff]
    %v5556 = vld [vmem:[#allocation3 + $0x2e9] sm:$0xff]
    %v5557 = vld [vmem:[#allocation3 + $0x2f1] sm:$0xff]
    %v5558 = vld [vmem:[#allocation3 + $0x301] sm:$0xff]
    %v5559 = vld [vmem:[#allocation3 + $0x309] sm:$0xff]
    %v5560 = vld [vmem:[#allocation3 + $0x319] sm:$0xff]
    %v5561 = vld [vmem:[#allocation3 + $0x321] sm:$0xff]
    %v5562 = vld [vmem:[#allocation3 + $0x2] sm:$0xff]
    %v5563 = vld [vmem:[#allocation3 + $0xa] sm:$0xff]
    %v5564 = vld [vmem:[#allocation3 + $0x1a] sm:$0xff]
    %v5565 = vld [vmem:[#allocation3 + $0x22] sm:$0xff]
    %v5566 = vld [vmem:[#allocation3 + $0x32] sm:$0xff]
    %v5567 = vld [vmem:[#allocation3 + $0x3a] sm:$0xff]
    %v5568 = vld [vmem:[#allocation3 + $0x4a] sm:$0xff]
    %v5569 = vld [vmem:[#allocation3 + $0x52] sm:$0xff]
    %v5570 = vld [vmem:[#allocation3 + $0x62] sm:$0xff]
    %v5571 = vld [vmem:[#allocation3 + $0x6a] sm:$0xff]
    %v5572 = vld [vmem:[#allocation3 + $0x7a] sm:$0xff]
    %v5573 = vld [vmem:[#allocation3 + $0x82] sm:$0xff]
    %v5574 = vld [vmem:[#allocation3 + $0x92] sm:$0xff]
    %v5575 = vld [vmem:[#allocation3 + $0x9a] sm:$0xff]
    %v5576 = vld [vmem:[#allocation3 + $0xaa] sm:$0xff]
    %v5577 = vld [vmem:[#allocation3 + $0xb2] sm:$0xff]
    %v5578 = vld [vmem:[#allocation3 + $0xc2] sm:$0xff]
    %v5579 = vld [vmem:[#allocation3 + $0xca] sm:$0xff]
    %v5580 = vld [vmem:[#allocation3 + $0xda] sm:$0xff]
    %v5581 = vld [vmem:[#allocation3 + $0xe2] sm:$0xff]
    %v5582 = vld [vmem:[#allocation3 + $0xf2] sm:$0xff]
    %v5583 = vld [vmem:[#allocation3 + $0xfa] sm:$0xff]
    %v5584 = vld [vmem:[#allocation3 + $0x10a] sm:$0xff]
    %v5585 = vld [vmem:[#allocation3 + $0x112] sm:$0xff]
    %v5586 = vld [vmem:[#allocation3 + $0x122] sm:$0xff]
    %v5587 = vld [vmem:[#allocation3 + $0x12a] sm:$0xff]
    %v5588 = vld [vmem:[#allocation3 + $0x13a] sm:$0xff]
    %v5589 = vld [vmem:[#allocation3 + $0x142] sm:$0xff]
    %v5590 = vld [vmem:[#allocation3 + $0x152] sm:$0xff]
    %v5591 = vld [vmem:[#allocation3 + $0x15a] sm:$0xff]
    %v5592 = vld [vmem:[#allocation3 + $0x16a] sm:$0xff]
    %v5593 = vld [vmem:[#allocation3 + $0x172] sm:$0xff]
    %v5594 = vld [vmem:[#allocation3 + $0x1b2] sm:$0xff]
    %v5595 = vld [vmem:[#allocation3 + $0x1ba] sm:$0xff]
    %v5596 = vld [vmem:[#allocation3 + $0x1ca] sm:$0xff]
    %v5597 = vld [vmem:[#allocation3 + $0x1d2] sm:$0xff]
    %v5598 = vld [vmem:[#allocation3 + $0x1e2] sm:$0xff]
    %v5599 = vld [vmem:[#allocation3 + $0x1ea] sm:$0xff]
    %v5600 = vld [vmem:[#allocation3 + $0x1fa] sm:$0xff]
    %v5601 = vld [vmem:[#allocation3 + $0x202] sm:$0xff]
    %v5602 = vld [vmem:[#allocation3 + $0x212] sm:$0xff]
    %v5603 = vld [vmem:[#allocation3 + $0x21a] sm:$0xff]
    %v5604 = vld [vmem:[#allocation3 + $0x22a] sm:$0xff]
    %v5605 = vld [vmem:[#allocation3 + $0x232] sm:$0xff]
    %v5606 = vld [vmem:[#allocation3 + $0x242] sm:$0xff]
    %v5607 = vld [vmem:[#allocation3 + $0x24a] sm:$0xff]
    %v5608 = vld [vmem:[#allocation3 + $0x25a] sm:$0xff]
    %v5609 = vld [vmem:[#allocation3 + $0x262] sm:$0xff]
    %v5610 = vld [vmem:[#allocation3 + $0x272] sm:$0xff]
    %v5611 = vld [vmem:[#allocation3 + $0x27a] sm:$0xff]
    %v5612 = vld [vmem:[#allocation3 + $0x28a] sm:$0xff]
    %v5613 = vld [vmem:[#allocation3 + $0x292] sm:$0xff]
    %v5614 = vld [vmem:[#allocation3 + $0x2a2] sm:$0xff]
    %v5615 = vld [vmem:[#allocation3 + $0x2aa] sm:$0xff]
    %v5616 = vld [vmem:[#allocation3 + $0x2ba] sm:$0xff]
    %v5617 = vld [vmem:[#allocation3 + $0x2c2] sm:$0xff]
    %v5618 = vld [vmem:[#allocation3 + $0x2d2] sm:$0xff]
    %v5619 = vld [vmem:[#allocation3 + $0x2da] sm:$0xff]
    %v5620 = vld [vmem:[#allocation3 + $0x2ea] sm:$0xff]
    %v5621 = vld [vmem:[#allocation3 + $0x2f2] sm:$0xff]
    %v5622 = vld [vmem:[#allocation3 + $0x302] sm:$0xff]
    %v5623 = vld [vmem:[#allocation3 + $0x30a] sm:$0xff]
    %v5624 = vld [vmem:[#allocation3 + $0x31a] sm:$0xff]
    %v5625 = vld [vmem:[#allocation3 + $0x322] sm:$0xff]
    %v5626 = vld [vmem:[%s5369] sm:$0xff]
    %v5627 = vld [vmem:[%s5369 + $0x8] sm:$0xff]
    %v5628 = vld [vmem:[%s5369 + $0x18] sm:$0xff]
    %v5629 = vld [vmem:[%s5369 + $0x20] sm:$0xff]
    %v5630 = vld [vmem:[%s5369 + $0x30] sm:$0xff]
    %v5631 = vld [vmem:[%s5369 + $0x38] sm:$0xff]
    %v5632 = vld [vmem:[%s5369 + $0x48] sm:$0xff]
    %v5633 = vld [vmem:[%s5369 + $0x50] sm:$0xff]
    %v5634 = vld [vmem:[%s5369 + $0x60] sm:$0xff]
    %v5635 = vld [vmem:[%s5369 + $0x68] sm:$0xff]
    %v5636 = vld [vmem:[%s5369 + $0x78] sm:$0xff]
    %v5637 = vld [vmem:[%s5369 + $0x80] sm:$0xff]
    %v5638 = vld [vmem:[%s5369 + $0x90] sm:$0xff]
    %v5639 = vld [vmem:[%s5369 + $0x98] sm:$0xff]
    %v5640 = vld [vmem:[%s5369 + $0xa8] sm:$0xff]
    %v5641 = vld [vmem:[%s5369 + $0xb0] sm:$0xff]
    %v5642 = vld [vmem:[%s5369 + $0xc0] sm:$0xff]
    %v5643 = vld [vmem:[%s5369 + $0xc8] sm:$0xff]
    %v5644 = vld [vmem:[%s5369 + $0xd8] sm:$0xff]
    %v5645 = vld [vmem:[%s5369 + $0xe0] sm:$0xff]
    %v5646 = vld [vmem:[%s5369 + $0xf0] sm:$0xff]
    %v5647 = vld [vmem:[%s5369 + $0xf8] sm:$0xff]
    %v5648 = vld [vmem:[%s5369 + $0x108] sm:$0xff]
    %v5649 = vld [vmem:[%s5369 + $0x110] sm:$0xff]
    %v5650 = vld [vmem:[%s5369 + $0x120] sm:$0xff]
    %v5651 = vld [vmem:[%s5369 + $0x128] sm:$0xff]
    %v5652 = vld [vmem:[%s5369 + $0x138] sm:$0xff]
    %v5653 = vld [vmem:[%s5369 + $0x140] sm:$0xff]
    %v5654 = vld [vmem:[%s5369 + $0x150] sm:$0xff]
    %v5655 = vld [vmem:[%s5369 + $0x158] sm:$0xff]
    %v5656 = vld [vmem:[%s5369 + $0x168] sm:$0xff]
    %v5657 = vld [vmem:[%s5369 + $0x170] sm:$0xff]
    %v5658 = vld [vmem:[%s5369 + $0x1b0] sm:$0xff]
    %v5659 = vld [vmem:[%s5369 + $0x1b8] sm:$0xff]
    %v5660 = vld [vmem:[%s5369 + $0x1c8] sm:$0xff]
    %v5661 = vld [vmem:[%s5369 + $0x1d0] sm:$0xff]
    %v5662 = vld [vmem:[%s5369 + $0x1e0] sm:$0xff]
    %v5663 = vld [vmem:[%s5369 + $0x1e8] sm:$0xff]
    %v5664 = vld [vmem:[%s5369 + $0x1f8] sm:$0xff]
    %v5665 = vld [vmem:[%s5369 + $0x200] sm:$0xff]
    %v5666 = vld [vmem:[%s5369 + $0x210] sm:$0xff]
    %v5667 = vld [vmem:[%s5369 + $0x218] sm:$0xff]
    %v5668 = vld [vmem:[%s5369 + $0x228] sm:$0xff]
    %v5669 = vld [vmem:[%s5369 + $0x230] sm:$0xff]
    %v5670 = vld [vmem:[%s5369 + $0x240] sm:$0xff]
    %v5671 = vld [vmem:[%s5369 + $0x248] sm:$0xff]
    %v5672 = vld [vmem:[%s5369 + $0x258] sm:$0xff]
    %v5673 = vld [vmem:[%s5369 + $0x260] sm:$0xff]
    %v5674 = vld [vmem:[%s5369 + $0x270] sm:$0xff]
    %v5675 = vld [vmem:[%s5369 + $0x278] sm:$0xff]
    %v5676 = vld [vmem:[%s5369 + $0x288] sm:$0xff]
    %v5677 = vld [vmem:[%s5369 + $0x290] sm:$0xff]
    %v5678 = vld [vmem:[%s5369 + $0x2a0] sm:$0xff]
    %v5679 = vld [vmem:[%s5369 + $0x2a8] sm:$0xff]
    %v5680 = vld [vmem:[%s5369 + $0x2b8] sm:$0xff]
    %v5681 = vld [vmem:[%s5369 + $0x2c0] sm:$0xff]
    %v5682 = vld [vmem:[%s5369 + $0x2d0] sm:$0xff]
    %v5683 = vld [vmem:[%s5369 + $0x2d8] sm:$0xff]
    %v5684 = vld [vmem:[%s5369 + $0x2e8] sm:$0xff]
    %v5685 = vld [vmem:[%s5369 + $0x2f0] sm:$0xff]
    %v5686 = vld [vmem:[%s5369 + $0x300] sm:$0xff]
    %v5687 = vld [vmem:[%s5369 + $0x308] sm:$0xff]
    %v5688 = vld [vmem:[%s5369 + $0x318] sm:$0xff]
    %v5689 = vld [vmem:[%s5369 + $0x320] sm:$0xff]
    %v5690 = vld [vmem:[%s5369 + $0x1] sm:$0xff]
    %v5691 = vld [vmem:[%s5369 + $0x9] sm:$0xff]
    %v5692 = vld [vmem:[%s5369 + $0x19] sm:$0xff]
    %v5693 = vld [vmem:[%s5369 + $0x21] sm:$0xff]
    %v5694 = vld [vmem:[%s5369 + $0x31] sm:$0xff]
    %v5695 = vld [vmem:[%s5369 + $0x39] sm:$0xff]
    %v5696 = vld [vmem:[%s5369 + $0x49] sm:$0xff]
    %v5697 = vld [vmem:[%s5369 + $0x51] sm:$0xff]
    %v5698 = vld [vmem:[%s5369 + $0x61] sm:$0xff]
    %v5699 = vld [vmem:[%s5369 + $0x69] sm:$0xff]
    %v5700 = vld [vmem:[%s5369 + $0x79] sm:$0xff]
    %v5701 = vld [vmem:[%s5369 + $0x81] sm:$0xff]
    %v5702 = vld [vmem:[%s5369 + $0x91] sm:$0xff]
    %v5703 = vld [vmem:[%s5369 + $0x99] sm:$0xff]
    %v5704 = vld [vmem:[%s5369 + $0xa9] sm:$0xff]
    %v5705 = vld [vmem:[%s5369 + $0xb1] sm:$0xff]
    %v5706 = vld [vmem:[%s5369 + $0xc1] sm:$0xff]
    %v5707 = vld [vmem:[%s5369 + $0xc9] sm:$0xff]
    %v5708 = vld [vmem:[%s5369 + $0xd9] sm:$0xff]
    %v5709 = vld [vmem:[%s5369 + $0xe1] sm:$0xff]
    %v5710 = vld [vmem:[%s5369 + $0xf1] sm:$0xff]
    %v5711 = vld [vmem:[%s5369 + $0xf9] sm:$0xff]
    %v5712 = vld [vmem:[%s5369 + $0x109] sm:$0xff]
    %v5713 = vld [vmem:[%s5369 + $0x111] sm:$0xff]
    %v5714 = vld [vmem:[%s5369 + $0x121] sm:$0xff]
    %v5715 = vld [vmem:[%s5369 + $0x129] sm:$0xff]
    %v5716 = vld [vmem:[%s5369 + $0x139] sm:$0xff]
    %v5717 = vld [vmem:[%s5369 + $0x141] sm:$0xff]
    %v5718 = vld [vmem:[%s5369 + $0x151] sm:$0xff]
    %v5719 = vld [vmem:[%s5369 + $0x159] sm:$0xff]
    %v5720 = vld [vmem:[%s5369 + $0x169] sm:$0xff]
    %v5721 = vld [vmem:[%s5369 + $0x171] sm:$0xff]
    %v5722 = vld [vmem:[%s5369 + $0x1b1] sm:$0xff]
    %v5723 = vld [vmem:[%s5369 + $0x1b9] sm:$0xff]
    %v5724 = vld [vmem:[%s5369 + $0x1c9] sm:$0xff]
    %v5725 = vld [vmem:[%s5369 + $0x1d1] sm:$0xff]
    %v5726 = vld [vmem:[%s5369 + $0x1e1] sm:$0xff]
    %v5727 = vld [vmem:[%s5369 + $0x1e9] sm:$0xff]
    %v5728 = vld [vmem:[%s5369 + $0x1f9] sm:$0xff]
    %v5729 = vld [vmem:[%s5369 + $0x201] sm:$0xff]
    %v5730 = vld [vmem:[%s5369 + $0x211] sm:$0xff]
    %v5731 = vld [vmem:[%s5369 + $0x219] sm:$0xff]
    %v5732 = vld [vmem:[%s5369 + $0x229] sm:$0xff]
    %v5733 = vld [vmem:[%s5369 + $0x231] sm:$0xff]
    %v5734 = vld [vmem:[%s5369 + $0x241] sm:$0xff]
    %v5735 = vld [vmem:[%s5369 + $0x249] sm:$0xff]
    %v5736 = vld [vmem:[%s5369 + $0x259] sm:$0xff]
    %v5737 = vld [vmem:[%s5369 + $0x261] sm:$0xff]
    %v5738 = vld [vmem:[%s5369 + $0x271] sm:$0xff]
    %v5739 = vld [vmem:[%s5369 + $0x279] sm:$0xff]
    %v5740 = vld [vmem:[%s5369 + $0x289] sm:$0xff]
    %v5741 = vld [vmem:[%s5369 + $0x291] sm:$0xff]
    %v5742 = vld [vmem:[%s5369 + $0x2a1] sm:$0xff]
    %v5743 = vld [vmem:[%s5369 + $0x2a9] sm:$0xff]
    %v5744 = vld [vmem:[%s5369 + $0x2b9] sm:$0xff]
    %v5745 = vld [vmem:[%s5369 + $0x2c1] sm:$0xff]
    %v5746 = vld [vmem:[%s5369 + $0x2d1] sm:$0xff]
    %v5747 = vld [vmem:[%s5369 + $0x2d9] sm:$0xff]
    %v5748 = vld [vmem:[%s5369 + $0x2e9] sm:$0xff]
    %v5749 = vld [vmem:[%s5369 + $0x2f1] sm:$0xff]
    %v5750 = vld [vmem:[%s5369 + $0x301] sm:$0xff]
    %v5751 = vld [vmem:[%s5369 + $0x309] sm:$0xff]
    %v5752 = vld [vmem:[%s5369 + $0x319] sm:$0xff]
    %v5753 = vld [vmem:[%s5369 + $0x321] sm:$0xff]
    %v5754 = vld [vmem:[%s5369 + $0x2] sm:$0xff]
    %v5755 = vld [vmem:[%s5369 + $0xa] sm:$0xff]
    %v5756 = vld [vmem:[%s5369 + $0x1a] sm:$0xff]
    %v5757 = vld [vmem:[%s5369 + $0x22] sm:$0xff]
    %v5758 = vld [vmem:[%s5369 + $0x32] sm:$0xff]
    %v5759 = vld [vmem:[%s5369 + $0x3a] sm:$0xff]
    %v5760 = vld [vmem:[%s5369 + $0x4a] sm:$0xff]
    %v5761 = vld [vmem:[%s5369 + $0x52] sm:$0xff]
    %v5762 = vld [vmem:[%s5369 + $0x62] sm:$0xff]
    %v5763 = vld [vmem:[%s5369 + $0x6a] sm:$0xff]
    %v5764 = vld [vmem:[%s5369 + $0x7a] sm:$0xff]
    %v5765 = vld [vmem:[%s5369 + $0x82] sm:$0xff]
    %v5766 = vld [vmem:[%s5369 + $0x92] sm:$0xff]
    %v5767 = vld [vmem:[%s5369 + $0x9a] sm:$0xff]
    %v5768 = vld [vmem:[%s5369 + $0xaa] sm:$0xff]
    %v5769 = vld [vmem:[%s5369 + $0xb2] sm:$0xff]
    %v5770 = vld [vmem:[%s5369 + $0xc2] sm:$0xff]
    %v5771 = vld [vmem:[%s5369 + $0xca] sm:$0xff]
    %v5772 = vld [vmem:[%s5369 + $0xda] sm:$0xff]
    %v5773 = vld [vmem:[%s5369 + $0xe2] sm:$0xff]
    %v5774 = vld [vmem:[%s5369 + $0xf2] sm:$0xff]
    %v5775 = vld [vmem:[%s5369 + $0xfa] sm:$0xff]
    %v5776 = vld [vmem:[%s5369 + $0x10a] sm:$0xff]
    %v5777 = vld [vmem:[%s5369 + $0x112] sm:$0xff]
    %v5778 = vld [vmem:[%s5369 + $0x122] sm:$0xff]
    %v5779 = vld [vmem:[%s5369 + $0x12a] sm:$0xff]
    %v5780 = vld [vmem:[%s5369 + $0x13a] sm:$0xff]
    %v5781 = vld [vmem:[%s5369 + $0x142] sm:$0xff]
    %v5782 = vld [vmem:[%s5369 + $0x152] sm:$0xff]
    %v5783 = vld [vmem:[%s5369 + $0x15a] sm:$0xff]
    %v5784 = vld [vmem:[%s5369 + $0x16a] sm:$0xff]
    %v5785 = vld [vmem:[%s5369 + $0x172] sm:$0xff]
    %v5786 = vld [vmem:[%s5369 + $0x1b2] sm:$0xff]
    %v5787 = vld [vmem:[%s5369 + $0x1ba] sm:$0xff]
    %v5788 = vld [vmem:[%s5369 + $0x1ca] sm:$0xff]
    %v5789 = vld [vmem:[%s5369 + $0x1d2] sm:$0xff]
    %v5790 = vld [vmem:[%s5369 + $0x1e2] sm:$0xff]
    %v5791 = vld [vmem:[%s5369 + $0x1ea] sm:$0xff]
    %v5792 = vld [vmem:[%s5369 + $0x1fa] sm:$0xff]
    %v5793 = vld [vmem:[%s5369 + $0x202] sm:$0xff]
    %v5794 = vld [vmem:[%s5369 + $0x212] sm:$0xff]
    %v5795 = vld [vmem:[%s5369 + $0x21a] sm:$0xff]
    %v5796 = vld [vmem:[%s5369 + $0x22a] sm:$0xff]
    %v5797 = vld [vmem:[%s5369 + $0x232] sm:$0xff]
    %v5798 = vld [vmem:[%s5369 + $0x242] sm:$0xff]
    %v5799 = vld [vmem:[%s5369 + $0x24a] sm:$0xff]
    %v5800 = vld [vmem:[%s5369 + $0x25a] sm:$0xff]
    %v5801 = vld [vmem:[%s5369 + $0x262] sm:$0xff]
    %v5802 = vld [vmem:[%s5369 + $0x272] sm:$0xff]
    %v5803 = vld [vmem:[%s5369 + $0x27a] sm:$0xff]
    %v5804 = vld [vmem:[%s5369 + $0x28a] sm:$0xff]
    %v5805 = vld [vmem:[%s5369 + $0x292] sm:$0xff]
    %v5806 = vld [vmem:[%s5369 + $0x2a2] sm:$0xff]
    %v5807 = vld [vmem:[%s5369 + $0x2aa] sm:$0xff]
    %v5808 = vld [vmem:[%s5369 + $0x2ba] sm:$0xff]
    %v5809 = vld [vmem:[%s5369 + $0x2c2] sm:$0xff]
    %v5810 = vld [vmem:[%s5369 + $0x2d2] sm:$0xff]
    %v5811 = vld [vmem:[%s5369 + $0x2da] sm:$0xff]
    %v5812 = vld [vmem:[%s5369 + $0x2ea] sm:$0xff]
    %v5813 = vld [vmem:[%s5369 + $0x2f2] sm:$0xff]
    %v5814 = vld [vmem:[%s5369 + $0x302] sm:$0xff]
    %v5815 = vld [vmem:[%s5369 + $0x30a] sm:$0xff]
    %v5816 = vld [vmem:[%s5369 + $0x31a] sm:$0xff]
    %v5817 = vld [vmem:[%s5369 + $0x322] sm:$0xff]
    %s5818 = scalar_lea.vmem [#allocation3], 48
    %v5819 = vld [vmem:[%s5818] sm:$0xff]
    %v5820 = vld [vmem:[%s5818 + $0x8] sm:$0xff]
    %v5821 = vld [vmem:[%s5818 + $0x18] sm:$0xff]
    %v5822 = vld [vmem:[%s5818 + $0x20] sm:$0xff]
    %v5823 = vld [vmem:[%s5818 + $0x30] sm:$0xff]
    %v5824 = vld [vmem:[%s5818 + $0x38] sm:$0xff]
    %v5825 = vld [vmem:[%s5818 + $0x48] sm:$0xff]
    %v5826 = vld [vmem:[%s5818 + $0x50] sm:$0xff]
    %v5827 = vld [vmem:[%s5818 + $0x60] sm:$0xff]
    %v5828 = vld [vmem:[%s5818 + $0x68] sm:$0xff]
    %v5829 = vld [vmem:[%s5818 + $0x78] sm:$0xff]
    %v5830 = vld [vmem:[%s5818 + $0x80] sm:$0xff]
    %v5831 = vld [vmem:[%s5818 + $0x90] sm:$0xff]
    %v5832 = vld [vmem:[%s5818 + $0x98] sm:$0xff]
    %v5833 = vld [vmem:[%s5818 + $0xa8] sm:$0xff]
    %v5834 = vld [vmem:[%s5818 + $0xb0] sm:$0xff]
    %v5835 = vld [vmem:[%s5818 + $0xc0] sm:$0xff]
    %v5836 = vld [vmem:[%s5818 + $0xc8] sm:$0xff]
    %v5837 = vld [vmem:[%s5818 + $0xd8] sm:$0xff]
    %v5838 = vld [vmem:[%s5818 + $0xe0] sm:$0xff]
    %v5839 = vld [vmem:[%s5818 + $0xf0] sm:$0xff]
    %v5840 = vld [vmem:[%s5818 + $0xf8] sm:$0xff]
    %v5841 = vld [vmem:[%s5818 + $0x108] sm:$0xff]
    %v5842 = vld [vmem:[%s5818 + $0x110] sm:$0xff]
    %v5843 = vld [vmem:[%s5818 + $0x120] sm:$0xff]
    %v5844 = vld [vmem:[%s5818 + $0x128] sm:$0xff]
    %v5845 = vld [vmem:[%s5818 + $0x138] sm:$0xff]
    %v5846 = vld [vmem:[%s5818 + $0x140] sm:$0xff]
    %v5847 = vld [vmem:[%s5818 + $0x150] sm:$0xff]
    %v5848 = vld [vmem:[%s5818 + $0x158] sm:$0xff]
    %v5849 = vld [vmem:[%s5818 + $0x168] sm:$0xff]
    %v5850 = vld [vmem:[%s5818 + $0x170] sm:$0xff]
    %v5851 = vld [vmem:[%s5818 + $0x1b0] sm:$0xff]
    %v5852 = vld [vmem:[%s5818 + $0x1b8] sm:$0xff]
    %v5853 = vld [vmem:[%s5818 + $0x1c8] sm:$0xff]
    %v5854 = vld [vmem:[%s5818 + $0x1d0] sm:$0xff]
    %v5855 = vld [vmem:[%s5818 + $0x1e0] sm:$0xff]
    %v5856 = vld [vmem:[%s5818 + $0x1e8] sm:$0xff]
    %v5857 = vld [vmem:[%s5818 + $0x1f8] sm:$0xff]
    %v5858 = vld [vmem:[%s5818 + $0x200] sm:$0xff]
    %v5859 = vld [vmem:[%s5818 + $0x210] sm:$0xff]
    %v5860 = vld [vmem:[%s5818 + $0x218] sm:$0xff]
    %v5861 = vld [vmem:[%s5818 + $0x228] sm:$0xff]
    %v5862 = vld [vmem:[%s5818 + $0x230] sm:$0xff]
    %v5863 = vld [vmem:[%s5818 + $0x240] sm:$0xff]
    %v5864 = vld [vmem:[%s5818 + $0x248] sm:$0xff]
    %v5865 = vld [vmem:[%s5818 + $0x258] sm:$0xff]
    %v5866 = vld [vmem:[%s5818 + $0x260] sm:$0xff]
    %v5867 = vld [vmem:[%s5818 + $0x270] sm:$0xff]
    %v5868 = vld [vmem:[%s5818 + $0x278] sm:$0xff]
    %v5869 = vld [vmem:[%s5818 + $0x288] sm:$0xff]
    %v5870 = vld [vmem:[%s5818 + $0x290] sm:$0xff]
    %v5871 = vld [vmem:[%s5818 + $0x2a0] sm:$0xff]
    %v5872 = vld [vmem:[%s5818 + $0x2a8] sm:$0xff]
    %v5873 = vld [vmem:[%s5818 + $0x2b8] sm:$0xff]
    %v5874 = vld [vmem:[%s5818 + $0x2c0] sm:$0xff]
    %v5875 = vld [vmem:[%s5818 + $0x2d0] sm:$0xff]
    %v5876 = vld [vmem:[%s5818 + $0x2d8] sm:$0xff]
    %v5877 = vld [vmem:[%s5818 + $0x2e8] sm:$0xff]
    %v5878 = vld [vmem:[%s5818 + $0x2f0] sm:$0xff]
    %v5879 = vld [vmem:[%s5818 + $0x300] sm:$0xff]
    %v5880 = vld [vmem:[%s5818 + $0x308] sm:$0xff]
    %v5881 = vld [vmem:[%s5818 + $0x318] sm:$0xff]
    %v5882 = vld [vmem:[%s5818 + $0x320] sm:$0xff]
    %v5883 = vld [vmem:[%s5818 + $0x1] sm:$0xff]
    %v5884 = vld [vmem:[%s5818 + $0x9] sm:$0xff]
    %v5885 = vld [vmem:[%s5818 + $0x19] sm:$0xff]
    %v5886 = vld [vmem:[%s5818 + $0x21] sm:$0xff]
    %v5887 = vld [vmem:[%s5818 + $0x31] sm:$0xff]
    %v5888 = vld [vmem:[%s5818 + $0x39] sm:$0xff]
    %v5889 = vld [vmem:[%s5818 + $0x49] sm:$0xff]
    %v5890 = vld [vmem:[%s5818 + $0x51] sm:$0xff]
    %v5891 = vld [vmem:[%s5818 + $0x61] sm:$0xff]
    %v5892 = vld [vmem:[%s5818 + $0x69] sm:$0xff]
    %v5893 = vld [vmem:[%s5818 + $0x79] sm:$0xff]
    %v5894 = vld [vmem:[%s5818 + $0x81] sm:$0xff]
    %v5895 = vld [vmem:[%s5818 + $0x91] sm:$0xff]
    %v5896 = vld [vmem:[%s5818 + $0x99] sm:$0xff]
    %v5897 = vld [vmem:[%s5818 + $0xa9] sm:$0xff]
    %v5898 = vld [vmem:[%s5818 + $0xb1] sm:$0xff]
    %v5899 = vld [vmem:[%s5818 + $0xc1] sm:$0xff]
    %v5900 = vld [vmem:[%s5818 + $0xc9] sm:$0xff]
    %v5901 = vld [vmem:[%s5818 + $0xd9] sm:$0xff]
    %v5902 = vld [vmem:[%s5818 + $0xe1] sm:$0xff]
    %v5903 = vld [vmem:[%s5818 + $0xf1] sm:$0xff]
    %v5904 = vld [vmem:[%s5818 + $0xf9] sm:$0xff]
    %v5905 = vld [vmem:[%s5818 + $0x109] sm:$0xff]
    %v5906 = vld [vmem:[%s5818 + $0x111] sm:$0xff]
    %v5907 = vld [vmem:[%s5818 + $0x121] sm:$0xff]
    %v5908 = vld [vmem:[%s5818 + $0x129] sm:$0xff]
    %v5909 = vld [vmem:[%s5818 + $0x139] sm:$0xff]
    %v5910 = vld [vmem:[%s5818 + $0x141] sm:$0xff]
    %v5911 = vld [vmem:[%s5818 + $0x151] sm:$0xff]
    %v5912 = vld [vmem:[%s5818 + $0x159] sm:$0xff]
    %v5913 = vld [vmem:[%s5818 + $0x169] sm:$0xff]
    %v5914 = vld [vmem:[%s5818 + $0x171] sm:$0xff]
    %v5915 = vld [vmem:[%s5818 + $0x1b1] sm:$0xff]
    %v5916 = vld [vmem:[%s5818 + $0x1b9] sm:$0xff]
    %v5917 = vld [vmem:[%s5818 + $0x1c9] sm:$0xff]
    %v5918 = vld [vmem:[%s5818 + $0x1d1] sm:$0xff]
    %v5919 = vld [vmem:[%s5818 + $0x1e1] sm:$0xff]
    %v5920 = vld [vmem:[%s5818 + $0x1e9] sm:$0xff]
    %v5921 = vld [vmem:[%s5818 + $0x1f9] sm:$0xff]
    %v5922 = vld [vmem:[%s5818 + $0x201] sm:$0xff]
    %v5923 = vld [vmem:[%s5818 + $0x211] sm:$0xff]
    %v5924 = vld [vmem:[%s5818 + $0x219] sm:$0xff]
    %v5925 = vld [vmem:[%s5818 + $0x229] sm:$0xff]
    %v5926 = vld [vmem:[%s5818 + $0x231] sm:$0xff]
    %v5927 = vld [vmem:[%s5818 + $0x241] sm:$0xff]
    %v5928 = vld [vmem:[%s5818 + $0x249] sm:$0xff]
    %v5929 = vld [vmem:[%s5818 + $0x259] sm:$0xff]
    %v5930 = vld [vmem:[%s5818 + $0x261] sm:$0xff]
    %v5931 = vld [vmem:[%s5818 + $0x271] sm:$0xff]
    %v5932 = vld [vmem:[%s5818 + $0x279] sm:$0xff]
    %v5933 = vld [vmem:[%s5818 + $0x289] sm:$0xff]
    %v5934 = vld [vmem:[%s5818 + $0x291] sm:$0xff]
    %v5935 = vld [vmem:[%s5818 + $0x2a1] sm:$0xff]
    %v5936 = vld [vmem:[%s5818 + $0x2a9] sm:$0xff]
    %v5937 = vld [vmem:[%s5818 + $0x2b9] sm:$0xff]
    %v5938 = vld [vmem:[%s5818 + $0x2c1] sm:$0xff]
    %v5939 = vld [vmem:[%s5818 + $0x2d1] sm:$0xff]
    %v5940 = vld [vmem:[%s5818 + $0x2d9] sm:$0xff]
    %v5941 = vld [vmem:[%s5818 + $0x2e9] sm:$0xff]
    %v5942 = vld [vmem:[%s5818 + $0x2f1] sm:$0xff]
    %v5943 = vld [vmem:[%s5818 + $0x301] sm:$0xff]
    %v5944 = vld [vmem:[%s5818 + $0x309] sm:$0xff]
    %v5945 = vld [vmem:[%s5818 + $0x319] sm:$0xff]
    %v5946 = vld [vmem:[%s5818 + $0x321] sm:$0xff]
    %v5947 = vld [vmem:[%s5818 + $0x2] sm:$0xff]
    %v5948 = vld [vmem:[%s5818 + $0xa] sm:$0xff]
    %v5949 = vld [vmem:[%s5818 + $0x1a] sm:$0xff]
    %v5950 = vld [vmem:[%s5818 + $0x22] sm:$0xff]
    %v5951 = vld [vmem:[%s5818 + $0x32] sm:$0xff]
    %v5952 = vld [vmem:[%s5818 + $0x3a] sm:$0xff]
    %v5953 = vld [vmem:[%s5818 + $0x4a] sm:$0xff]
    %v5954 = vld [vmem:[%s5818 + $0x52] sm:$0xff]
    %v5955 = vld [vmem:[%s5818 + $0x62] sm:$0xff]
    %v5956 = vld [vmem:[%s5818 + $0x6a] sm:$0xff]
    %v5957 = vld [vmem:[%s5818 + $0x7a] sm:$0xff]
    %v5958 = vld [vmem:[%s5818 + $0x82] sm:$0xff]
    %v5959 = vld [vmem:[%s5818 + $0x92] sm:$0xff]
    %v5960 = vld [vmem:[%s5818 + $0x9a] sm:$0xff]
    %v5961 = vld [vmem:[%s5818 + $0xaa] sm:$0xff]
    %v5962 = vld [vmem:[%s5818 + $0xb2] sm:$0xff]
    %v5963 = vld [vmem:[%s5818 + $0xc2] sm:$0xff]
    %v5964 = vld [vmem:[%s5818 + $0xca] sm:$0xff]
    %v5965 = vld [vmem:[%s5818 + $0xda] sm:$0xff]
    %v5966 = vld [vmem:[%s5818 + $0xe2] sm:$0xff]
    %v5967 = vld [vmem:[%s5818 + $0xf2] sm:$0xff]
    %v5968 = vld [vmem:[%s5818 + $0xfa] sm:$0xff]
    %v5969 = vld [vmem:[%s5818 + $0x10a] sm:$0xff]
    %v5970 = vld [vmem:[%s5818 + $0x112] sm:$0xff]
    %v5971 = vld [vmem:[%s5818 + $0x122] sm:$0xff]
    %v5972 = vld [vmem:[%s5818 + $0x12a] sm:$0xff]
    %v5973 = vld [vmem:[%s5818 + $0x13a] sm:$0xff]
    %v5974 = vld [vmem:[%s5818 + $0x142] sm:$0xff]
    %v5975 = vld [vmem:[%s5818 + $0x152] sm:$0xff]
    %v5976 = vld [vmem:[%s5818 + $0x15a] sm:$0xff]
    %v5977 = vld [vmem:[%s5818 + $0x16a] sm:$0xff]
    %v5978 = vld [vmem:[%s5818 + $0x172] sm:$0xff]
    %v5979 = vld [vmem:[%s5818 + $0x1b2] sm:$0xff]
    %v5980 = vld [vmem:[%s5818 + $0x1ba] sm:$0xff]
    %v5981 = vld [vmem:[%s5818 + $0x1ca] sm:$0xff]
    %v5982 = vld [vmem:[%s5818 + $0x1d2] sm:$0xff]
    %v5983 = vld [vmem:[%s5818 + $0x1e2] sm:$0xff]
    %v5984 = vld [vmem:[%s5818 + $0x1ea] sm:$0xff]
    %v5985 = vld [vmem:[%s5818 + $0x1fa] sm:$0xff]
    %v5986 = vld [vmem:[%s5818 + $0x202] sm:$0xff]
    %v5987 = vld [vmem:[%s5818 + $0x212] sm:$0xff]
    %v5988 = vld [vmem:[%s5818 + $0x21a] sm:$0xff]
    %v5989 = vld [vmem:[%s5818 + $0x22a] sm:$0xff]
    %v5990 = vld [vmem:[%s5818 + $0x232] sm:$0xff]
    %v5991 = vld [vmem:[%s5818 + $0x242] sm:$0xff]
    %v5992 = vld [vmem:[%s5818 + $0x24a] sm:$0xff]
    %v5993 = vld [vmem:[%s5818 + $0x25a] sm:$0xff]
    %v5994 = vld [vmem:[%s5818 + $0x262] sm:$0xff]
    %v5995 = vld [vmem:[%s5818 + $0x272] sm:$0xff]
    %v5996 = vld [vmem:[%s5818 + $0x27a] sm:$0xff]
    %v5997 = vld [vmem:[%s5818 + $0x28a] sm:$0xff]
    %v5998 = vld [vmem:[%s5818 + $0x292] sm:$0xff]
    %v5999 = vld [vmem:[%s5818 + $0x2a2] sm:$0xff]
    %v6000 = vld [vmem:[%s5818 + $0x2aa] sm:$0xff]
    %v6001 = vld [vmem:[%s5818 + $0x2ba] sm:$0xff]
    %v6002 = vld [vmem:[%s5818 + $0x2c2] sm:$0xff]
    %v6003 = vld [vmem:[%s5818 + $0x2d2] sm:$0xff]
    %v6004 = vld [vmem:[%s5818 + $0x2da] sm:$0xff]
    %v6005 = vld [vmem:[%s5818 + $0x2ea] sm:$0xff]
    %v6006 = vld [vmem:[%s5818 + $0x2f2] sm:$0xff]
    %v6007 = vld [vmem:[%s5818 + $0x302] sm:$0xff]
    %v6008 = vld [vmem:[%s5818 + $0x30a] sm:$0xff]
    %v6009 = vld [vmem:[%s5818 + $0x31a] sm:$0xff]
    %v6010 = vld [vmem:[%s5818 + $0x322] sm:$0xff]
    %6075 = vrot.lane.b32.xlu0 %v5498, 64
    %v6076 = vpop.permute.xlu0 %6075
    %6077 = vrot.lane.b32.xlu0 %v5499, 64
    %v6078 = vpop.permute.xlu0 %6077
    %6079 = vrot.lane.b32.xlu0 %v5500, 64
    %v6080 = vpop.permute.xlu0 %6079
    %6081 = vrot.lane.b32.xlu0 %v5501, 64
    %v6082 = vpop.permute.xlu0 %6081
    %6083 = vrot.lane.b32.xlu0 %v5502, 64
    %v6084 = vpop.permute.xlu0 %6083
    %6085 = vrot.lane.b32.xlu0 %v5503, 64
    %v6086 = vpop.permute.xlu0 %6085
    %6087 = vrot.lane.b32.xlu0 %v5504, 64
    %v6088 = vpop.permute.xlu0 %6087
    %6089 = vrot.lane.b32.xlu0 %v5505, 64
    %v6090 = vpop.permute.xlu0 %6089
    %6091 = vrot.lane.b32.xlu0 %v5506, 64
    %v6092 = vpop.permute.xlu0 %6091
    %6093 = vrot.lane.b32.xlu0 %v5507, 64
    %v6094 = vpop.permute.xlu0 %6093
    %6095 = vrot.lane.b32.xlu0 %v5508, 64
    %v6096 = vpop.permute.xlu0 %6095
    %6097 = vrot.lane.b32.xlu0 %v5509, 64
    %v6098 = vpop.permute.xlu0 %6097
    %6099 = vrot.lane.b32.xlu0 %v5510, 64
    %v6100 = vpop.permute.xlu0 %6099
    %6101 = vrot.lane.b32.xlu0 %v5511, 64
    %v6102 = vpop.permute.xlu0 %6101
    %6103 = vrot.lane.b32.xlu0 %v5512, 64
    %v6104 = vpop.permute.xlu0 %6103
    %6105 = vrot.lane.b32.xlu0 %v5513, 64
    %v6106 = vpop.permute.xlu0 %6105
    %6107 = vrot.lane.b32.xlu0 %v5514, 64
    %v6108 = vpop.permute.xlu0 %6107
    %6109 = vrot.lane.b32.xlu0 %v5515, 64
    %v6110 = vpop.permute.xlu0 %6109
    %6111 = vrot.lane.b32.xlu0 %v5516, 64
    %v6112 = vpop.permute.xlu0 %6111
    %6113 = vrot.lane.b32.xlu0 %v5517, 64
    %v6114 = vpop.permute.xlu0 %6113
    %6115 = vrot.lane.b32.xlu0 %v5518, 64
    %v6116 = vpop.permute.xlu0 %6115
    %6117 = vrot.lane.b32.xlu0 %v5519, 64
    %v6118 = vpop.permute.xlu0 %6117
    %6119 = vrot.lane.b32.xlu0 %v5520, 64
    %v6120 = vpop.permute.xlu0 %6119
    %6121 = vrot.lane.b32.xlu0 %v5521, 64
    %v6122 = vpop.permute.xlu0 %6121
    %6123 = vrot.lane.b32.xlu0 %v5522, 64
    %v6124 = vpop.permute.xlu0 %6123
    %6125 = vrot.lane.b32.xlu0 %v5523, 64
    %v6126 = vpop.permute.xlu0 %6125
    %6127 = vrot.lane.b32.xlu0 %v5524, 64
    %v6128 = vpop.permute.xlu0 %6127
    %6129 = vrot.lane.b32.xlu0 %v5525, 64
    %v6130 = vpop.permute.xlu0 %6129
    %6131 = vrot.lane.b32.xlu0 %v5526, 64
    %v6132 = vpop.permute.xlu0 %6131
    %6133 = vrot.lane.b32.xlu0 %v5527, 64
    %v6134 = vpop.permute.xlu0 %6133
    %6135 = vrot.lane.b32.xlu0 %v5528, 64
    %v6136 = vpop.permute.xlu0 %6135
    %6137 = vrot.lane.b32.xlu0 %v5529, 64
    %v6138 = vpop.permute.xlu0 %6137
    %6139 = vrot.lane.b32.xlu0 %v5530, 64
    %v6140 = vpop.permute.xlu0 %6139
    %6141 = vrot.lane.b32.xlu0 %v5531, 64
    %v6142 = vpop.permute.xlu0 %6141
    %6143 = vrot.lane.b32.xlu0 %v5532, 64
    %v6144 = vpop.permute.xlu0 %6143
    %6145 = vrot.lane.b32.xlu0 %v5533, 64
    %v6146 = vpop.permute.xlu0 %6145
    %6147 = vrot.lane.b32.xlu0 %v5534, 64
    %v6148 = vpop.permute.xlu0 %6147
    %6149 = vrot.lane.b32.xlu0 %v5535, 64
    %v6150 = vpop.permute.xlu0 %6149
    %6151 = vrot.lane.b32.xlu0 %v5536, 64
    %v6152 = vpop.permute.xlu0 %6151
    %6153 = vrot.lane.b32.xlu0 %v5537, 64
    %v6154 = vpop.permute.xlu0 %6153
    %6155 = vrot.lane.b32.xlu0 %v5538, 64
    %v6156 = vpop.permute.xlu0 %6155
    %6157 = vrot.lane.b32.xlu0 %v5539, 64
    %v6158 = vpop.permute.xlu0 %6157
    %6159 = vrot.lane.b32.xlu0 %v5540, 64
    %v6160 = vpop.permute.xlu0 %6159
    %6161 = vrot.lane.b32.xlu0 %v5541, 64
    %v6162 = vpop.permute.xlu0 %6161
    %6163 = vrot.lane.b32.xlu0 %v5542, 64
    %v6164 = vpop.permute.xlu0 %6163
    %6165 = vrot.lane.b32.xlu0 %v5543, 64
    %v6166 = vpop.permute.xlu0 %6165
    %6167 = vrot.lane.b32.xlu0 %v5544, 64
    %v6168 = vpop.permute.xlu0 %6167
    %6169 = vrot.lane.b32.xlu0 %v5545, 64
    %v6170 = vpop.permute.xlu0 %6169
    %6171 = vrot.lane.b32.xlu0 %v5546, 64
    %v6172 = vpop.permute.xlu0 %6171
    %6173 = vrot.lane.b32.xlu0 %v5547, 64
    %v6174 = vpop.permute.xlu0 %6173
    %6175 = vrot.lane.b32.xlu0 %v5548, 64
    %v6176 = vpop.permute.xlu0 %6175
    %6177 = vrot.lane.b32.xlu0 %v5549, 64
    %v6178 = vpop.permute.xlu0 %6177
    %6179 = vrot.lane.b32.xlu0 %v5550, 64
    %v6180 = vpop.permute.xlu0 %6179
    %6181 = vrot.lane.b32.xlu0 %v5551, 64
    %v6182 = vpop.permute.xlu0 %6181
    %6183 = vrot.lane.b32.xlu0 %v5552, 64
    %v6184 = vpop.permute.xlu0 %6183
    %6185 = vrot.lane.b32.xlu0 %v5553, 64
    %v6186 = vpop.permute.xlu0 %6185
    %6187 = vrot.lane.b32.xlu0 %v5554, 64
    %v6188 = vpop.permute.xlu0 %6187
    %6189 = vrot.lane.b32.xlu0 %v5555, 64
    %v6190 = vpop.permute.xlu0 %6189
    %6191 = vrot.lane.b32.xlu0 %v5556, 64
    %v6192 = vpop.permute.xlu0 %6191
    %6193 = vrot.lane.b32.xlu0 %v5557, 64
    %v6194 = vpop.permute.xlu0 %6193
    %6195 = vrot.lane.b32.xlu0 %v5558, 64
    %v6196 = vpop.permute.xlu0 %6195
    %6197 = vrot.lane.b32.xlu0 %v5559, 64
    %v6198 = vpop.permute.xlu0 %6197
    %6199 = vrot.lane.b32.xlu0 %v5560, 64
    %v6200 = vpop.permute.xlu0 %6199
    %6201 = vrot.lane.b32.xlu0 %v5561, 64
    %v6202 = vpop.permute.xlu0 %6201
    %6331 = vrot.lane.b32.xlu0 %v5626, 64
    %v6332 = vpop.permute.xlu0 %6331
    %6333 = vrot.lane.b32.xlu0 %v5627, 64
    %v6334 = vpop.permute.xlu0 %6333
    %6335 = vrot.lane.b32.xlu0 %v5628, 64
    %v6336 = vpop.permute.xlu0 %6335
    %6337 = vrot.lane.b32.xlu0 %v5629, 64
    %v6338 = vpop.permute.xlu0 %6337
    %6339 = vrot.lane.b32.xlu0 %v5630, 64
    %v6340 = vpop.permute.xlu0 %6339
    %6341 = vrot.lane.b32.xlu0 %v5631, 64
    %v6342 = vpop.permute.xlu0 %6341
    %6343 = vrot.lane.b32.xlu0 %v5632, 64
    %v6344 = vpop.permute.xlu0 %6343
    %6345 = vrot.lane.b32.xlu0 %v5633, 64
    %v6346 = vpop.permute.xlu0 %6345
    %6347 = vrot.lane.b32.xlu0 %v5634, 64
    %v6348 = vpop.permute.xlu0 %6347
    %6349 = vrot.lane.b32.xlu0 %v5635, 64
    %v6350 = vpop.permute.xlu0 %6349
    %6351 = vrot.lane.b32.xlu0 %v5636, 64
    %v6352 = vpop.permute.xlu0 %6351
    %6353 = vrot.lane.b32.xlu0 %v5637, 64
    %v6354 = vpop.permute.xlu0 %6353
    %6355 = vrot.lane.b32.xlu0 %v5638, 64
    %v6356 = vpop.permute.xlu0 %6355
    %6357 = vrot.lane.b32.xlu0 %v5639, 64
    %v6358 = vpop.permute.xlu0 %6357
    %6359 = vrot.lane.b32.xlu0 %v5640, 64
    %v6360 = vpop.permute.xlu0 %6359
    %6361 = vrot.lane.b32.xlu0 %v5641, 64
    %v6362 = vpop.permute.xlu0 %6361
    %6363 = vrot.lane.b32.xlu0 %v5642, 64
    %v6364 = vpop.permute.xlu0 %6363
    %6365 = vrot.lane.b32.xlu0 %v5643, 64
    %v6366 = vpop.permute.xlu0 %6365
    %6367 = vrot.lane.b32.xlu0 %v5644, 64
    %v6368 = vpop.permute.xlu0 %6367
    %6369 = vrot.lane.b32.xlu0 %v5645, 64
    %v6370 = vpop.permute.xlu0 %6369
    %6371 = vrot.lane.b32.xlu0 %v5646, 64
    %v6372 = vpop.permute.xlu0 %6371
    %6373 = vrot.lane.b32.xlu0 %v5647, 64
    %v6374 = vpop.permute.xlu0 %6373
    %6375 = vrot.lane.b32.xlu0 %v5648, 64
    %v6376 = vpop.permute.xlu0 %6375
    %6377 = vrot.lane.b32.xlu0 %v5649, 64
    %v6378 = vpop.permute.xlu0 %6377
    %6379 = vrot.lane.b32.xlu0 %v5650, 64
    %v6380 = vpop.permute.xlu0 %6379
    %6381 = vrot.lane.b32.xlu0 %v5651, 64
    %v6382 = vpop.permute.xlu0 %6381
    %6383 = vrot.lane.b32.xlu0 %v5652, 64
    %v6384 = vpop.permute.xlu0 %6383
    %6385 = vrot.lane.b32.xlu0 %v5653, 64
    %v6386 = vpop.permute.xlu0 %6385
    %6387 = vrot.lane.b32.xlu0 %v5654, 64
    %v6388 = vpop.permute.xlu0 %6387
    %6389 = vrot.lane.b32.xlu0 %v5655, 64
    %v6390 = vpop.permute.xlu0 %6389
    %6391 = vrot.lane.b32.xlu0 %v5656, 64
    %v6392 = vpop.permute.xlu0 %6391
    %6393 = vrot.lane.b32.xlu0 %v5657, 64
    %v6394 = vpop.permute.xlu0 %6393
    %6395 = vrot.lane.b32.xlu0 %v5658, 64
    %v6396 = vpop.permute.xlu0 %6395
    %6397 = vrot.lane.b32.xlu0 %v5659, 64
    %v6398 = vpop.permute.xlu0 %6397
    %6399 = vrot.lane.b32.xlu0 %v5660, 64
    %v6400 = vpop.permute.xlu0 %6399
    %6401 = vrot.lane.b32.xlu0 %v5661, 64
    %v6402 = vpop.permute.xlu0 %6401
    %6403 = vrot.lane.b32.xlu0 %v5662, 64
    %v6404 = vpop.permute.xlu0 %6403
    %6405 = vrot.lane.b32.xlu0 %v5663, 64
    %v6406 = vpop.permute.xlu0 %6405
    %6407 = vrot.lane.b32.xlu0 %v5664, 64
    %v6408 = vpop.permute.xlu0 %6407
    %6409 = vrot.lane.b32.xlu0 %v5665, 64
    %v6410 = vpop.permute.xlu0 %6409
    %6411 = vrot.lane.b32.xlu0 %v5666, 64
    %v6412 = vpop.permute.xlu0 %6411
    %6413 = vrot.lane.b32.xlu0 %v5667, 64
    %v6414 = vpop.permute.xlu0 %6413
    %6415 = vrot.lane.b32.xlu0 %v5668, 64
    %v6416 = vpop.permute.xlu0 %6415
    %6417 = vrot.lane.b32.xlu0 %v5669, 64
    %v6418 = vpop.permute.xlu0 %6417
    %6419 = vrot.lane.b32.xlu0 %v5670, 64
    %v6420 = vpop.permute.xlu0 %6419
    %6421 = vrot.lane.b32.xlu0 %v5671, 64
    %v6422 = vpop.permute.xlu0 %6421
    %6423 = vrot.lane.b32.xlu0 %v5672, 64
    %v6424 = vpop.permute.xlu0 %6423
    %6425 = vrot.lane.b32.xlu0 %v5673, 64
    %v6426 = vpop.permute.xlu0 %6425
    %6427 = vrot.lane.b32.xlu0 %v5674, 64
    %v6428 = vpop.permute.xlu0 %6427
    %6429 = vrot.lane.b32.xlu0 %v5675, 64
    %v6430 = vpop.permute.xlu0 %6429
    %6431 = vrot.lane.b32.xlu0 %v5676, 64
    %v6432 = vpop.permute.xlu0 %6431
    %6433 = vrot.lane.b32.xlu0 %v5677, 64
    %v6434 = vpop.permute.xlu0 %6433
    %6435 = vrot.lane.b32.xlu0 %v5678, 64
    %v6436 = vpop.permute.xlu0 %6435
    %6437 = vrot.lane.b32.xlu0 %v5679, 64
    %v6438 = vpop.permute.xlu0 %6437
    %6439 = vrot.lane.b32.xlu0 %v5680, 64
    %v6440 = vpop.permute.xlu0 %6439
    %6441 = vrot.lane.b32.xlu0 %v5681, 64
    %v6442 = vpop.permute.xlu0 %6441
    %6443 = vrot.lane.b32.xlu0 %v5682, 64
    %v6444 = vpop.permute.xlu0 %6443
    %6445 = vrot.lane.b32.xlu0 %v5683, 64
    %v6446 = vpop.permute.xlu0 %6445
    %6447 = vrot.lane.b32.xlu0 %v5684, 64
    %v6448 = vpop.permute.xlu0 %6447
    %6449 = vrot.lane.b32.xlu0 %v5685, 64
    %v6450 = vpop.permute.xlu0 %6449
    %6451 = vrot.lane.b32.xlu0 %v5686, 64
    %v6452 = vpop.permute.xlu0 %6451
    %6453 = vrot.lane.b32.xlu0 %v5687, 64
    %v6454 = vpop.permute.xlu0 %6453
    %6455 = vrot.lane.b32.xlu0 %v5688, 64
    %v6456 = vpop.permute.xlu0 %6455
    %6457 = vrot.lane.b32.xlu0 %v5689, 64
    %v6458 = vpop.permute.xlu0 %6457
    %6587 = vrot.lane.b32.xlu0 %v5754, 64
    %v6588 = vpop.permute.xlu0 %6587
    %6589 = vrot.lane.b32.xlu0 %v5755, 64
    %v6590 = vpop.permute.xlu0 %6589
    %6591 = vrot.lane.b32.xlu0 %v5756, 64
    %v6592 = vpop.permute.xlu0 %6591
    %6593 = vrot.lane.b32.xlu0 %v5757, 64
    %v6594 = vpop.permute.xlu0 %6593
    %6595 = vrot.lane.b32.xlu0 %v5758, 64
    %v6596 = vpop.permute.xlu0 %6595
    %6597 = vrot.lane.b32.xlu0 %v5759, 64
    %v6598 = vpop.permute.xlu0 %6597
    %6599 = vrot.lane.b32.xlu0 %v5760, 64
    %v6600 = vpop.permute.xlu0 %6599
    %6601 = vrot.lane.b32.xlu0 %v5761, 64
    %v6602 = vpop.permute.xlu0 %6601
    %6603 = vrot.lane.b32.xlu0 %v5762, 64
    %v6604 = vpop.permute.xlu0 %6603
    %6605 = vrot.lane.b32.xlu0 %v5763, 64
    %v6606 = vpop.permute.xlu0 %6605
    %6607 = vrot.lane.b32.xlu0 %v5764, 64
    %v6608 = vpop.permute.xlu0 %6607
    %6609 = vrot.lane.b32.xlu0 %v5765, 64
    %v6610 = vpop.permute.xlu0 %6609
    %6611 = vrot.lane.b32.xlu0 %v5766, 64
    %v6612 = vpop.permute.xlu0 %6611
    %6613 = vrot.lane.b32.xlu0 %v5767, 64
    %v6614 = vpop.permute.xlu0 %6613
    %6615 = vrot.lane.b32.xlu0 %v5768, 64
    %v6616 = vpop.permute.xlu0 %6615
    %6617 = vrot.lane.b32.xlu0 %v5769, 64
    %v6618 = vpop.permute.xlu0 %6617
    %6619 = vrot.lane.b32.xlu0 %v5770, 64
    %v6620 = vpop.permute.xlu0 %6619
    %6621 = vrot.lane.b32.xlu0 %v5771, 64
    %v6622 = vpop.permute.xlu0 %6621
    %6623 = vrot.lane.b32.xlu0 %v5772, 64
    %v6624 = vpop.permute.xlu0 %6623
    %6625 = vrot.lane.b32.xlu0 %v5773, 64
    %v6626 = vpop.permute.xlu0 %6625
    %6627 = vrot.lane.b32.xlu0 %v5774, 64
    %v6628 = vpop.permute.xlu0 %6627
    %6629 = vrot.lane.b32.xlu0 %v5775, 64
    %v6630 = vpop.permute.xlu0 %6629
    %6631 = vrot.lane.b32.xlu0 %v5776, 64
    %v6632 = vpop.permute.xlu0 %6631
    %6633 = vrot.lane.b32.xlu0 %v5777, 64
    %v6634 = vpop.permute.xlu0 %6633
    %6635 = vrot.lane.b32.xlu0 %v5778, 64
    %v6636 = vpop.permute.xlu0 %6635
    %6637 = vrot.lane.b32.xlu0 %v5779, 64
    %v6638 = vpop.permute.xlu0 %6637
    %6639 = vrot.lane.b32.xlu0 %v5780, 64
    %v6640 = vpop.permute.xlu0 %6639
    %6641 = vrot.lane.b32.xlu0 %v5781, 64
    %v6642 = vpop.permute.xlu0 %6641
    %6643 = vrot.lane.b32.xlu0 %v5782, 64
    %v6644 = vpop.permute.xlu0 %6643
    %6645 = vrot.lane.b32.xlu0 %v5783, 64
    %v6646 = vpop.permute.xlu0 %6645
    %6647 = vrot.lane.b32.xlu0 %v5784, 64
    %v6648 = vpop.permute.xlu0 %6647
    %6649 = vrot.lane.b32.xlu0 %v5785, 64
    %v6650 = vpop.permute.xlu0 %6649
    %6651 = vrot.lane.b32.xlu0 %v5786, 64
    %v6652 = vpop.permute.xlu0 %6651
    %6653 = vrot.lane.b32.xlu0 %v5787, 64
    %v6654 = vpop.permute.xlu0 %6653
    %6655 = vrot.lane.b32.xlu0 %v5788, 64
    %v6656 = vpop.permute.xlu0 %6655
    %6657 = vrot.lane.b32.xlu0 %v5789, 64
    %v6658 = vpop.permute.xlu0 %6657
    %6659 = vrot.lane.b32.xlu0 %v5790, 64
    %v6660 = vpop.permute.xlu0 %6659
    %6661 = vrot.lane.b32.xlu0 %v5791, 64
    %v6662 = vpop.permute.xlu0 %6661
    %6663 = vrot.lane.b32.xlu0 %v5792, 64
    %v6664 = vpop.permute.xlu0 %6663
    %6665 = vrot.lane.b32.xlu0 %v5793, 64
    %v6666 = vpop.permute.xlu0 %6665
    %6667 = vrot.lane.b32.xlu0 %v5794, 64
    %v6668 = vpop.permute.xlu0 %6667
    %6669 = vrot.lane.b32.xlu0 %v5795, 64
    %v6670 = vpop.permute.xlu0 %6669
    %6671 = vrot.lane.b32.xlu0 %v5796, 64
    %v6672 = vpop.permute.xlu0 %6671
    %6673 = vrot.lane.b32.xlu0 %v5797, 64
    %v6674 = vpop.permute.xlu0 %6673
    %6675 = vrot.lane.b32.xlu0 %v5798, 64
    %v6676 = vpop.permute.xlu0 %6675
    %6677 = vrot.lane.b32.xlu0 %v5799, 64
    %v6678 = vpop.permute.xlu0 %6677
    %6679 = vrot.lane.b32.xlu0 %v5800, 64
    %v6680 = vpop.permute.xlu0 %6679
    %6681 = vrot.lane.b32.xlu0 %v5801, 64
    %v6682 = vpop.permute.xlu0 %6681
    %6683 = vrot.lane.b32.xlu0 %v5802, 64
    %v6684 = vpop.permute.xlu0 %6683
    %6685 = vrot.lane.b32.xlu0 %v5803, 64
    %v6686 = vpop.permute.xlu0 %6685
    %6687 = vrot.lane.b32.xlu0 %v5804, 64
    %v6688 = vpop.permute.xlu0 %6687
    %6689 = vrot.lane.b32.xlu0 %v5805, 64
    %v6690 = vpop.permute.xlu0 %6689
    %6691 = vrot.lane.b32.xlu0 %v5806, 64
    %v6692 = vpop.permute.xlu0 %6691
    %6693 = vrot.lane.b32.xlu0 %v5807, 64
    %v6694 = vpop.permute.xlu0 %6693
    %6695 = vrot.lane.b32.xlu0 %v5808, 64
    %v6696 = vpop.permute.xlu0 %6695
    %6697 = vrot.lane.b32.xlu0 %v5809, 64
    %v6698 = vpop.permute.xlu0 %6697
    %6699 = vrot.lane.b32.xlu0 %v5810, 64
    %v6700 = vpop.permute.xlu0 %6699
    %6701 = vrot.lane.b32.xlu0 %v5811, 64
    %v6702 = vpop.permute.xlu0 %6701
    %6703 = vrot.lane.b32.xlu0 %v5812, 64
    %v6704 = vpop.permute.xlu0 %6703
    %6705 = vrot.lane.b32.xlu0 %v5813, 64
    %v6706 = vpop.permute.xlu0 %6705
    %6707 = vrot.lane.b32.xlu0 %v5814, 64
    %v6708 = vpop.permute.xlu0 %6707
    %6709 = vrot.lane.b32.xlu0 %v5815, 64
    %v6710 = vpop.permute.xlu0 %6709
    %6711 = vrot.lane.b32.xlu0 %v5816, 64
    %v6712 = vpop.permute.xlu0 %6711
    %6713 = vrot.lane.b32.xlu0 %v5817, 64
    %v6714 = vpop.permute.xlu0 %6713
    %6843 = vrot.lane.b32.xlu0 %v5883, 64
    %v6844 = vpop.permute.xlu0 %6843
    %6845 = vrot.lane.b32.xlu0 %v5884, 64
    %v6846 = vpop.permute.xlu0 %6845
    %6847 = vrot.lane.b32.xlu0 %v5885, 64
    %v6848 = vpop.permute.xlu0 %6847
    %6849 = vrot.lane.b32.xlu0 %v5886, 64
    %v6850 = vpop.permute.xlu0 %6849
    %6851 = vrot.lane.b32.xlu0 %v5887, 64
    %v6852 = vpop.permute.xlu0 %6851
    %6853 = vrot.lane.b32.xlu0 %v5888, 64
    %v6854 = vpop.permute.xlu0 %6853
    %6855 = vrot.lane.b32.xlu0 %v5889, 64
    %v6856 = vpop.permute.xlu0 %6855
    %6857 = vrot.lane.b32.xlu0 %v5890, 64
    %v6858 = vpop.permute.xlu0 %6857
    %6859 = vrot.lane.b32.xlu0 %v5891, 64
    %v6860 = vpop.permute.xlu0 %6859
    %6861 = vrot.lane.b32.xlu0 %v5892, 64
    %v6862 = vpop.permute.xlu0 %6861
    %6863 = vrot.lane.b32.xlu0 %v5893, 64
    %v6864 = vpop.permute.xlu0 %6863
    %6865 = vrot.lane.b32.xlu0 %v5894, 64
    %v6866 = vpop.permute.xlu0 %6865
    %6867 = vrot.lane.b32.xlu0 %v5895, 64
    %v6868 = vpop.permute.xlu0 %6867
    %6869 = vrot.lane.b32.xlu0 %v5896, 64
    %v6870 = vpop.permute.xlu0 %6869
    %6871 = vrot.lane.b32.xlu0 %v5897, 64
    %v6872 = vpop.permute.xlu0 %6871
    %6873 = vrot.lane.b32.xlu0 %v5898, 64
    %v6874 = vpop.permute.xlu0 %6873
    %6875 = vrot.lane.b32.xlu0 %v5899, 64
    %v6876 = vpop.permute.xlu0 %6875
    %6877 = vrot.lane.b32.xlu0 %v5900, 64
    %v6878 = vpop.permute.xlu0 %6877
    %6879 = vrot.lane.b32.xlu0 %v5901, 64
    %v6880 = vpop.permute.xlu0 %6879
    %6881 = vrot.lane.b32.xlu0 %v5902, 64
    %v6882 = vpop.permute.xlu0 %6881
    %6883 = vrot.lane.b32.xlu0 %v5903, 64
    %v6884 = vpop.permute.xlu0 %6883
    %6885 = vrot.lane.b32.xlu0 %v5904, 64
    %v6886 = vpop.permute.xlu0 %6885
    %6887 = vrot.lane.b32.xlu0 %v5905, 64
    %v6888 = vpop.permute.xlu0 %6887
    %6889 = vrot.lane.b32.xlu0 %v5906, 64
    %v6890 = vpop.permute.xlu0 %6889
    %6891 = vrot.lane.b32.xlu0 %v5907, 64
    %v6892 = vpop.permute.xlu0 %6891
    %6893 = vrot.lane.b32.xlu0 %v5908, 64
    %v6894 = vpop.permute.xlu0 %6893
    %6895 = vrot.lane.b32.xlu0 %v5909, 64
    %v6896 = vpop.permute.xlu0 %6895
    %6897 = vrot.lane.b32.xlu0 %v5910, 64
    %v6898 = vpop.permute.xlu0 %6897
    %6899 = vrot.lane.b32.xlu0 %v5911, 64
    %v6900 = vpop.permute.xlu0 %6899
    %6901 = vrot.lane.b32.xlu0 %v5912, 64
    %v6902 = vpop.permute.xlu0 %6901
    %6903 = vrot.lane.b32.xlu0 %v5913, 64
    %v6904 = vpop.permute.xlu0 %6903
    %6905 = vrot.lane.b32.xlu0 %v5914, 64
    %v6906 = vpop.permute.xlu0 %6905
    %6907 = vrot.lane.b32.xlu0 %v5915, 64
    %v6908 = vpop.permute.xlu0 %6907
    %6909 = vrot.lane.b32.xlu0 %v5916, 64
    %v6910 = vpop.permute.xlu0 %6909
    %6911 = vrot.lane.b32.xlu0 %v5917, 64
    %v6912 = vpop.permute.xlu0 %6911
    %6913 = vrot.lane.b32.xlu0 %v5918, 64
    %v6914 = vpop.permute.xlu0 %6913
    %6915 = vrot.lane.b32.xlu0 %v5919, 64
    %v6916 = vpop.permute.xlu0 %6915
    %6917 = vrot.lane.b32.xlu0 %v5920, 64
    %v6918 = vpop.permute.xlu0 %6917
    %6919 = vrot.lane.b32.xlu0 %v5921, 64
    %v6920 = vpop.permute.xlu0 %6919
    %6921 = vrot.lane.b32.xlu0 %v5922, 64
    %v6922 = vpop.permute.xlu0 %6921
    %6923 = vrot.lane.b32.xlu0 %v5923, 64
    %v6924 = vpop.permute.xlu0 %6923
    %6925 = vrot.lane.b32.xlu0 %v5924, 64
    %v6926 = vpop.permute.xlu0 %6925
    %6927 = vrot.lane.b32.xlu0 %v5925, 64
    %v6928 = vpop.permute.xlu0 %6927
    %6929 = vrot.lane.b32.xlu0 %v5926, 64
    %v6930 = vpop.permute.xlu0 %6929
    %6931 = vrot.lane.b32.xlu0 %v5927, 64
    %v6932 = vpop.permute.xlu0 %6931
    %6933 = vrot.lane.b32.xlu0 %v5928, 64
    %v6934 = vpop.permute.xlu0 %6933
    %6935 = vrot.lane.b32.xlu0 %v5929, 64
    %v6936 = vpop.permute.xlu0 %6935
    %6937 = vrot.lane.b32.xlu0 %v5930, 64
    %v6938 = vpop.permute.xlu0 %6937
    %6939 = vrot.lane.b32.xlu0 %v5931, 64
    %v6940 = vpop.permute.xlu0 %6939
    %6941 = vrot.lane.b32.xlu0 %v5932, 64
    %v6942 = vpop.permute.xlu0 %6941
    %6943 = vrot.lane.b32.xlu0 %v5933, 64
    %v6944 = vpop.permute.xlu0 %6943
    %6945 = vrot.lane.b32.xlu0 %v5934, 64
    %v6946 = vpop.permute.xlu0 %6945
    %6947 = vrot.lane.b32.xlu0 %v5935, 64
    %v6948 = vpop.permute.xlu0 %6947
    %6949 = vrot.lane.b32.xlu0 %v5936, 64
    %v6950 = vpop.permute.xlu0 %6949
    %6951 = vrot.lane.b32.xlu0 %v5937, 64
    %v6952 = vpop.permute.xlu0 %6951
    %6953 = vrot.lane.b32.xlu0 %v5938, 64
    %v6954 = vpop.permute.xlu0 %6953
    %6955 = vrot.lane.b32.xlu0 %v5939, 64
    %v6956 = vpop.permute.xlu0 %6955
    %6957 = vrot.lane.b32.xlu0 %v5940, 64
    %v6958 = vpop.permute.xlu0 %6957
    %6959 = vrot.lane.b32.xlu0 %v5941, 64
    %v6960 = vpop.permute.xlu0 %6959
    %6961 = vrot.lane.b32.xlu0 %v5942, 64
    %v6962 = vpop.permute.xlu0 %6961
    %6963 = vrot.lane.b32.xlu0 %v5943, 64
    %v6964 = vpop.permute.xlu0 %6963
    %6965 = vrot.lane.b32.xlu0 %v5944, 64
    %v6966 = vpop.permute.xlu0 %6965
    %6967 = vrot.lane.b32.xlu0 %v5945, 64
    %v6968 = vpop.permute.xlu0 %6967
    %6969 = vrot.lane.b32.xlu0 %v5946, 64
    %v6970 = vpop.permute.xlu0 %6969
    %v7035 = vsel %vm143, %v5434, %v6076
    %v7036 = vsel %vm143, %v5435, %v6078
    %v7037 = vsel %vm143, %v5436, %v6080
    %v7038 = vsel %vm143, %v5437, %v6082
    %v7039 = vsel %vm143, %v5438, %v6084
    %v7040 = vsel %vm143, %v5439, %v6086
    %v7041 = vsel %vm143, %v5440, %v6088
    %v7042 = vsel %vm143, %v5441, %v6090
    %v7043 = vsel %vm143, %v5442, %v6092
    %v7044 = vsel %vm143, %v5443, %v6094
    %v7045 = vsel %vm143, %v5444, %v6096
    %v7046 = vsel %vm143, %v5445, %v6098
    %v7047 = vsel %vm143, %v5446, %v6100
    %v7048 = vsel %vm143, %v5447, %v6102
    %v7049 = vsel %vm143, %v5448, %v6104
    %v7050 = vsel %vm143, %v5449, %v6106
    %v7051 = vsel %vm143, %v5450, %v6108
    %v7052 = vsel %vm143, %v5451, %v6110
    %v7053 = vsel %vm143, %v5452, %v6112
    %v7054 = vsel %vm143, %v5453, %v6114
    %v7055 = vsel %vm143, %v5454, %v6116
    %v7056 = vsel %vm143, %v5455, %v6118
    %v7057 = vsel %vm143, %v5456, %v6120
    %v7058 = vsel %vm143, %v5457, %v6122
    %v7059 = vsel %vm143, %v5458, %v6124
    %v7060 = vsel %vm143, %v5459, %v6126
    %v7061 = vsel %vm143, %v5460, %v6128
    %v7062 = vsel %vm143, %v5461, %v6130
    %v7063 = vsel %vm143, %v5462, %v6132
    %v7064 = vsel %vm143, %v5463, %v6134
    %v7065 = vsel %vm143, %v5464, %v6136
    %v7066 = vsel %vm143, %v5465, %v6138
    %v7067 = vsel %vm143, %v5466, %v6140
    %v7068 = vsel %vm143, %v5467, %v6142
    %v7069 = vsel %vm143, %v5468, %v6144
    %v7070 = vsel %vm143, %v5469, %v6146
    %v7071 = vsel %vm143, %v5470, %v6148
    %v7072 = vsel %vm143, %v5471, %v6150
    %v7073 = vsel %vm143, %v5472, %v6152
    %v7074 = vsel %vm143, %v5473, %v6154
    %v7075 = vsel %vm143, %v5474, %v6156
    %v7076 = vsel %vm143, %v5475, %v6158
    %v7077 = vsel %vm143, %v5476, %v6160
    %v7078 = vsel %vm143, %v5477, %v6162
    %v7079 = vsel %vm143, %v5478, %v6164
    %v7080 = vsel %vm143, %v5479, %v6166
    %v7081 = vsel %vm143, %v5480, %v6168
    %v7082 = vsel %vm143, %v5481, %v6170
    %v7083 = vsel %vm143, %v5482, %v6172
    %v7084 = vsel %vm143, %v5483, %v6174
    %v7085 = vsel %vm143, %v5484, %v6176
    %v7086 = vsel %vm143, %v5485, %v6178
    %v7087 = vsel %vm143, %v5486, %v6180
    %v7088 = vsel %vm143, %v5487, %v6182
    %v7089 = vsel %vm143, %v5488, %v6184
    %v7090 = vsel %vm143, %v5489, %v6186
    %v7091 = vsel %vm143, %v5490, %v6188
    %v7092 = vsel %vm143, %v5491, %v6190
    %v7093 = vsel %vm143, %v5492, %v6192
    %v7094 = vsel %vm143, %v5493, %v6194
    %v7095 = vsel %vm143, %v5494, %v6196
    %v7096 = vsel %vm143, %v5495, %v6198
    %v7097 = vsel %vm143, %v5496, %v6200
    %v7098 = vsel %vm143, %v5497, %v6202
    %v7099 = vsel %vm143, %v5562, %v6332
    %v7100 = vsel %vm143, %v5563, %v6334
    %v7101 = vsel %vm143, %v5564, %v6336
    %v7102 = vsel %vm143, %v5565, %v6338
    %v7103 = vsel %vm143, %v5566, %v6340
    %v7104 = vsel %vm143, %v5567, %v6342
    %v7105 = vsel %vm143, %v5568, %v6344
    %v7106 = vsel %vm143, %v5569, %v6346
    %v7107 = vsel %vm143, %v5570, %v6348
    %v7108 = vsel %vm143, %v5571, %v6350
    %v7109 = vsel %vm143, %v5572, %v6352
    %v7110 = vsel %vm143, %v5573, %v6354
    %v7111 = vsel %vm143, %v5574, %v6356
    %v7112 = vsel %vm143, %v5575, %v6358
    %v7113 = vsel %vm143, %v5576, %v6360
    %v7114 = vsel %vm143, %v5577, %v6362
    %v7115 = vsel %vm143, %v5578, %v6364
    %v7116 = vsel %vm143, %v5579, %v6366
    %v7117 = vsel %vm143, %v5580, %v6368
    %v7118 = vsel %vm143, %v5581, %v6370
    %v7119 = vsel %vm143, %v5582, %v6372
    %v7120 = vsel %vm143, %v5583, %v6374
    %v7121 = vsel %vm143, %v5584, %v6376
    %v7122 = vsel %vm143, %v5585, %v6378
    %v7123 = vsel %vm143, %v5586, %v6380
    %v7124 = vsel %vm143, %v5587, %v6382
    %v7125 = vsel %vm143, %v5588, %v6384
    %v7126 = vsel %vm143, %v5589, %v6386
    %v7127 = vsel %vm143, %v5590, %v6388
    %v7128 = vsel %vm143, %v5591, %v6390
    %v7129 = vsel %vm143, %v5592, %v6392
    %v7130 = vsel %vm143, %v5593, %v6394
    %v7131 = vsel %vm143, %v5594, %v6396
    %v7132 = vsel %vm143, %v5595, %v6398
    %v7133 = vsel %vm143, %v5596, %v6400
    %v7134 = vsel %vm143, %v5597, %v6402
    %v7135 = vsel %vm143, %v5598, %v6404
    %v7136 = vsel %vm143, %v5599, %v6406
    %v7137 = vsel %vm143, %v5600, %v6408
    %v7138 = vsel %vm143, %v5601, %v6410
    %v7139 = vsel %vm143, %v5602, %v6412
    %v7140 = vsel %vm143, %v5603, %v6414
    %v7141 = vsel %vm143, %v5604, %v6416
    %v7142 = vsel %vm143, %v5605, %v6418
    %v7143 = vsel %vm143, %v5606, %v6420
    %v7144 = vsel %vm143, %v5607, %v6422
    %v7145 = vsel %vm143, %v5608, %v6424
    %v7146 = vsel %vm143, %v5609, %v6426
    %v7147 = vsel %vm143, %v5610, %v6428
    %v7148 = vsel %vm143, %v5611, %v6430
    %v7149 = vsel %vm143, %v5612, %v6432
    %v7150 = vsel %vm143, %v5613, %v6434
    %v7151 = vsel %vm143, %v5614, %v6436
    %v7152 = vsel %vm143, %v5615, %v6438
    %v7153 = vsel %vm143, %v5616, %v6440
    %v7154 = vsel %vm143, %v5617, %v6442
    %v7155 = vsel %vm143, %v5618, %v6444
    %v7156 = vsel %vm143, %v5619, %v6446
    %v7157 = vsel %vm143, %v5620, %v6448
    %v7158 = vsel %vm143, %v5621, %v6450
    %v7159 = vsel %vm143, %v5622, %v6452
    %v7160 = vsel %vm143, %v5623, %v6454
    %v7161 = vsel %vm143, %v5624, %v6456
    %v7162 = vsel %vm143, %v5625, %v6458
    %v7163 = vsel %vm143, %v5690, %v6588
    %v7164 = vsel %vm143, %v5691, %v6590
    %v7165 = vsel %vm143, %v5692, %v6592
    %v7166 = vsel %vm143, %v5693, %v6594
    %v7167 = vsel %vm143, %v5694, %v6596
    %v7168 = vsel %vm143, %v5695, %v6598
    %v7169 = vsel %vm143, %v5696, %v6600
    %v7170 = vsel %vm143, %v5697, %v6602
    %v7171 = vsel %vm143, %v5698, %v6604
    %v7172 = vsel %vm143, %v5699, %v6606
    %v7173 = vsel %vm143, %v5700, %v6608
    %v7174 = vsel %vm143, %v5701, %v6610
    %v7175 = vsel %vm143, %v5702, %v6612
    %v7176 = vsel %vm143, %v5703, %v6614
    %v7177 = vsel %vm143, %v5704, %v6616
    %v7178 = vsel %vm143, %v5705, %v6618
    %v7179 = vsel %vm143, %v5706, %v6620
    %v7180 = vsel %vm143, %v5707, %v6622
    %v7181 = vsel %vm143, %v5708, %v6624
    %v7182 = vsel %vm143, %v5709, %v6626
    %v7183 = vsel %vm143, %v5710, %v6628
    %v7184 = vsel %vm143, %v5711, %v6630
    %v7185 = vsel %vm143, %v5712, %v6632
    %v7186 = vsel %vm143, %v5713, %v6634
    %v7187 = vsel %vm143, %v5714, %v6636
    %v7188 = vsel %vm143, %v5715, %v6638
    %v7189 = vsel %vm143, %v5716, %v6640
    %v7190 = vsel %vm143, %v5717, %v6642
    %v7191 = vsel %vm143, %v5718, %v6644
    %v7192 = vsel %vm143, %v5719, %v6646
    %v7193 = vsel %vm143, %v5720, %v6648
    %v7194 = vsel %vm143, %v5721, %v6650
    %v7195 = vsel %vm143, %v5722, %v6652
    %v7196 = vsel %vm143, %v5723, %v6654
    %v7197 = vsel %vm143, %v5724, %v6656
    %v7198 = vsel %vm143, %v5725, %v6658
    %v7199 = vsel %vm143, %v5726, %v6660
    %v7200 = vsel %vm143, %v5727, %v6662
    %v7201 = vsel %vm143, %v5728, %v6664
    %v7202 = vsel %vm143, %v5729, %v6666
    %v7203 = vsel %vm143, %v5730, %v6668
    %v7204 = vsel %vm143, %v5731, %v6670
    %v7205 = vsel %vm143, %v5732, %v6672
    %v7206 = vsel %vm143, %v5733, %v6674
    %v7207 = vsel %vm143, %v5734, %v6676
    %v7208 = vsel %vm143, %v5735, %v6678
    %v7209 = vsel %vm143, %v5736, %v6680
    %v7210 = vsel %vm143, %v5737, %v6682
    %v7211 = vsel %vm143, %v5738, %v6684
    %v7212 = vsel %vm143, %v5739, %v6686
    %v7213 = vsel %vm143, %v5740, %v6688
    %v7214 = vsel %vm143, %v5741, %v6690
    %v7215 = vsel %vm143, %v5742, %v6692
    %v7216 = vsel %vm143, %v5743, %v6694
    %v7217 = vsel %vm143, %v5744, %v6696
    %v7218 = vsel %vm143, %v5745, %v6698
    %v7219 = vsel %vm143, %v5746, %v6700
    %v7220 = vsel %vm143, %v5747, %v6702
    %v7221 = vsel %vm143, %v5748, %v6704
    %v7222 = vsel %vm143, %v5749, %v6706
    %v7223 = vsel %vm143, %v5750, %v6708
    %v7224 = vsel %vm143, %v5751, %v6710
    %v7225 = vsel %vm143, %v5752, %v6712
    %v7226 = vsel %vm143, %v5753, %v6714
    %v7227 = vsel %vm143, %v5819, %v6844
    %v7228 = vsel %vm143, %v5820, %v6846
    %v7229 = vsel %vm143, %v5821, %v6848
    %v7230 = vsel %vm143, %v5822, %v6850
    %v7231 = vsel %vm143, %v5823, %v6852
    %v7232 = vsel %vm143, %v5824, %v6854
    %v7233 = vsel %vm143, %v5825, %v6856
    %v7234 = vsel %vm143, %v5826, %v6858
    %v7235 = vsel %vm143, %v5827, %v6860
    %v7236 = vsel %vm143, %v5828, %v6862
    %v7237 = vsel %vm143, %v5829, %v6864
    %v7238 = vsel %vm143, %v5830, %v6866
    %v7239 = vsel %vm143, %v5831, %v6868
    %v7240 = vsel %vm143, %v5832, %v6870
    %v7241 = vsel %vm143, %v5833, %v6872
    %v7242 = vsel %vm143, %v5834, %v6874
    %v7243 = vsel %vm143, %v5835, %v6876
    %v7244 = vsel %vm143, %v5836, %v6878
    %v7245 = vsel %vm143, %v5837, %v6880
    %v7246 = vsel %vm143, %v5838, %v6882
    %v7247 = vsel %vm143, %v5839, %v6884
    %v7248 = vsel %vm143, %v5840, %v6886
    %v7249 = vsel %vm143, %v5841, %v6888
    %v7250 = vsel %vm143, %v5842, %v6890
    %v7251 = vsel %vm143, %v5843, %v6892
    %v7252 = vsel %vm143, %v5844, %v6894
    %v7253 = vsel %vm143, %v5845, %v6896
    %v7254 = vsel %vm143, %v5846, %v6898
    %v7255 = vsel %vm143, %v5847, %v6900
    %v7256 = vsel %vm143, %v5848, %v6902
    %v7257 = vsel %vm143, %v5849, %v6904
    %v7258 = vsel %vm143, %v5850, %v6906
    %v7259 = vsel %vm143, %v5851, %v6908
    %v7260 = vsel %vm143, %v5852, %v6910
    %v7261 = vsel %vm143, %v5853, %v6912
    %v7262 = vsel %vm143, %v5854, %v6914
    %v7263 = vsel %vm143, %v5855, %v6916
    %v7264 = vsel %vm143, %v5856, %v6918
    %v7265 = vsel %vm143, %v5857, %v6920
    %v7266 = vsel %vm143, %v5858, %v6922
    %v7267 = vsel %vm143, %v5859, %v6924
    %v7268 = vsel %vm143, %v5860, %v6926
    %v7269 = vsel %vm143, %v5861, %v6928
    %v7270 = vsel %vm143, %v5862, %v6930
    %v7271 = vsel %vm143, %v5863, %v6932
    %v7272 = vsel %vm143, %v5864, %v6934
    %v7273 = vsel %vm143, %v5865, %v6936
    %v7274 = vsel %vm143, %v5866, %v6938
    %v7275 = vsel %vm143, %v5867, %v6940
    %v7276 = vsel %vm143, %v5868, %v6942
    %v7277 = vsel %vm143, %v5869, %v6944
    %v7278 = vsel %vm143, %v5870, %v6946
    %v7279 = vsel %vm143, %v5871, %v6948
    %v7280 = vsel %vm143, %v5872, %v6950
    %v7281 = vsel %vm143, %v5873, %v6952
    %v7282 = vsel %vm143, %v5874, %v6954
    %v7283 = vsel %vm143, %v5875, %v6956
    %v7284 = vsel %vm143, %v5876, %v6958
    %v7285 = vsel %vm143, %v5877, %v6960
    %v7286 = vsel %vm143, %v5878, %v6962
    %v7287 = vsel %vm143, %v5879, %v6964
    %v7288 = vsel %vm143, %v5880, %v6966
    %v7289 = vsel %vm143, %v5881, %v6968
    %v7290 = vsel %vm143, %v5882, %v6970
    %v7291 = vld [vmem:[%s5] sm:$0xff]
    %v7292 = vld [vmem:[%s5 + $0x8] sm:$0xff]
    %v7293 = vld [vmem:[%s5 + $0x10] sm:$0xff]
    %v7294 = vld [vmem:[%s5 + $0x18] sm:$0xff]
    %v7295 = vld [vmem:[%s5 + $0x20] sm:$0xff]
    %v7296 = vld [vmem:[%s5 + $0x28] sm:$0xff]
    %v7297 = vld [vmem:[%s5 + $0x30] sm:$0xff]
    %v7298 = vld [vmem:[%s5 + $0x38] sm:$0xff]
    %v7299 = vld [vmem:[%s5 + $0x40] sm:$0xff]
    %v7300 = vld [vmem:[%s5 + $0x48] sm:$0xff]
    %v7301 = vld [vmem:[%s5 + $0x50] sm:$0xff]
    %v7302 = vld [vmem:[%s5 + $0x58] sm:$0xff]
    %v7303 = vld [vmem:[%s5 + $0x60] sm:$0xff]
    %v7304 = vld [vmem:[%s5 + $0x68] sm:$0xff]
    %v7305 = vld [vmem:[%s5 + $0x70] sm:$0xff]
    %v7306 = vld [vmem:[%s5 + $0x78] sm:$0xff]
    %v7307 = vld [vmem:[%s5 + $0x80] sm:$0xff]
    %v7308 = vld [vmem:[%s5 + $0x88] sm:$0xff]
    %v7309 = vld [vmem:[%s5 + $0x90] sm:$0xff]
    %v7310 = vld [vmem:[%s5 + $0x98] sm:$0xff]
    %v7311 = vld [vmem:[%s5 + $0xa0] sm:$0xff]
    %v7312 = vld [vmem:[%s5 + $0xa8] sm:$0xff]
    %v7313 = vld [vmem:[%s5 + $0xb0] sm:$0xff]
    %v7314 = vld [vmem:[%s5 + $0xb8] sm:$0xff]
    %v7315 = vld [vmem:[%s5 + $0xc0] sm:$0xff]
    %v7316 = vld [vmem:[%s5 + $0xc8] sm:$0xff]
    %v7317 = vld [vmem:[%s5 + $0xd0] sm:$0xff]
    %v7318 = vld [vmem:[%s5 + $0xd8] sm:$0xff]
    %v7319 = vld [vmem:[%s5 + $0xe0] sm:$0xff]
    %v7320 = vld [vmem:[%s5 + $0xe8] sm:$0xff]
    %v7321 = vld [vmem:[%s5 + $0xf0] sm:$0xff]
    %v7322 = vld [vmem:[%s5 + $0xf8] sm:$0xff]
    %v7323 = vld [vmem:[%s5 + $0x100] sm:$0xff]
    %v7324 = vld [vmem:[%s5 + $0x108] sm:$0xff]
    %v7325 = vld [vmem:[%s5 + $0x110] sm:$0xff]
    %v7326 = vld [vmem:[%s5 + $0x118] sm:$0xff]
    %v7327 = vld [vmem:[%s5 + $0x120] sm:$0xff]
    %v7328 = vld [vmem:[%s5 + $0x128] sm:$0xff]
    %v7329 = vld [vmem:[%s5 + $0x130] sm:$0xff]
    %v7330 = vld [vmem:[%s5 + $0x138] sm:$0xff]
    %v7331 = vld [vmem:[%s5 + $0x140] sm:$0xff]
    %v7332 = vld [vmem:[%s5 + $0x148] sm:$0xff]
    %v7333 = vld [vmem:[%s5 + $0x150] sm:$0xff]
    %v7334 = vld [vmem:[%s5 + $0x158] sm:$0xff]
    %v7335 = vld [vmem:[%s5 + $0x160] sm:$0xff]
    %v7336 = vld [vmem:[%s5 + $0x168] sm:$0xff]
    %v7337 = vld [vmem:[%s5 + $0x170] sm:$0xff]
    %v7338 = vld [vmem:[%s5 + $0x178] sm:$0xff]
    %v7339 = vld [vmem:[%s5 + $0x180] sm:$0xff]
    %v7340 = vld [vmem:[%s5 + $0x188] sm:$0xff]
    %v7341 = vld [vmem:[%s5 + $0x190] sm:$0xff]
    %v7342 = vld [vmem:[%s5 + $0x198] sm:$0xff]
    %v7343 = vld [vmem:[%s5 + $0x1a0] sm:$0xff]
    %v7344 = vld [vmem:[%s5 + $0x1a8] sm:$0xff]
    %v7345 = vld [vmem:[%s5 + $0x1b0] sm:$0xff]
    %v7346 = vld [vmem:[%s5 + $0x1b8] sm:$0xff]
    %v7347 = vld [vmem:[%s5 + $0x1c0] sm:$0xff]
    %v7348 = vld [vmem:[%s5 + $0x1c8] sm:$0xff]
    %v7349 = vld [vmem:[%s5 + $0x1d0] sm:$0xff]
    %v7350 = vld [vmem:[%s5 + $0x1d8] sm:$0xff]
    %v7351 = vld [vmem:[%s5 + $0x1e0] sm:$0xff]
    %v7352 = vld [vmem:[%s5 + $0x1e8] sm:$0xff]
    %v7353 = vld [vmem:[%s5 + $0x1f0] sm:$0xff]
    %v7354 = vld [vmem:[%s5 + $0x1f8] sm:$0xff]
    %v7355 = vld [vmem:[%s5 + $0x200] sm:$0xff]
    %v7356 = vld [vmem:[%s5 + $0x208] sm:$0xff]
    %v7357 = vld [vmem:[%s5 + $0x210] sm:$0xff]
    %v7358 = vld [vmem:[%s5 + $0x218] sm:$0xff]
    %v7359 = vld [vmem:[%s5 + $0x220] sm:$0xff]
    %v7360 = vld [vmem:[%s5 + $0x228] sm:$0xff]
    %v7361 = vld [vmem:[%s5 + $0x230] sm:$0xff]
    %v7362 = vld [vmem:[%s5 + $0x238] sm:$0xff]
    %v7363 = vld [vmem:[%s6] sm:$0x1]
    %v7365 = vlaneseq
    %v7366 = vshrl.u32 %v7365, 7
    %v7367 = vsub.s32 0, %v7366
    %v7368 = vrot.slane %v7363, %v7367
    %v7371 = vsel %vm143, %v5947, 0
    %v7374 = vsel %vm143, %v5948, 0
    %v7377 = vsel %vm143, %v5949, 0
    %v7380 = vsel %vm143, %v5950, 0
    %v7383 = vsel %vm143, %v5951, 0
    %v7386 = vsel %vm143, %v5952, 0
    %v7389 = vsel %vm143, %v5953, 0
    %v7392 = vsel %vm143, %v5954, 0
    %v7395 = vsel %vm143, %v5955, 0
    %v7398 = vsel %vm143, %v5956, 0
    %v7401 = vsel %vm143, %v5957, 0
    %v7404 = vsel %vm143, %v5958, 0
    %v7407 = vsel %vm143, %v5959, 0
    %v7410 = vsel %vm143, %v5960, 0
    %v7413 = vsel %vm143, %v5961, 0
    %v7416 = vsel %vm143, %v5962, 0
    %v7419 = vsel %vm143, %v5963, 0
    %v7422 = vsel %vm143, %v5964, 0
    %v7425 = vsel %vm143, %v5965, 0
    %v7428 = vsel %vm143, %v5966, 0
    %v7431 = vsel %vm143, %v5967, 0
    %v7434 = vsel %vm143, %v5968, 0
    %v7437 = vsel %vm143, %v5969, 0
    %v7440 = vsel %vm143, %v5970, 0
    %v7443 = vsel %vm143, %v5971, 0
    %v7446 = vsel %vm143, %v5972, 0
    %v7449 = vsel %vm143, %v5973, 0
    %v7452 = vsel %vm143, %v5974, 0
    %v7455 = vsel %vm143, %v5975, 0
    %v7458 = vsel %vm143, %v5976, 0
    %v7461 = vsel %vm143, %v5977, 0
    %v7464 = vsel %vm143, %v5978, 0
    %v7467 = vsel %vm143, %v5979, 0
    %v7470 = vsel %vm143, %v5980, 0
    %v7473 = vsel %vm143, %v5981, 0
    %v7476 = vsel %vm143, %v5982, 0
    %v7479 = vsel %vm143, %v5983, 0
    %v7482 = vsel %vm143, %v5984, 0
    %v7485 = vsel %vm143, %v5985, 0
    %v7488 = vsel %vm143, %v5986, 0
    %v7491 = vsel %vm143, %v5987, 0
    %v7494 = vsel %vm143, %v5988, 0
    %v7497 = vsel %vm143, %v5989, 0
    %v7500 = vsel %vm143, %v5990, 0
    %v7503 = vsel %vm143, %v5991, 0
    %v7506 = vsel %vm143, %v5992, 0
    %v7509 = vsel %vm143, %v5993, 0
    %v7512 = vsel %vm143, %v5994, 0
    %v7515 = vsel %vm143, %v5995, 0
    %v7518 = vsel %vm143, %v5996, 0
    %v7521 = vsel %vm143, %v5997, 0
    %v7524 = vsel %vm143, %v5998, 0
    %v7527 = vsel %vm143, %v5999, 0
    %v7530 = vsel %vm143, %v6000, 0
    %v7533 = vsel %vm143, %v6001, 0
    %v7536 = vsel %vm143, %v6002, 0
    %v7539 = vsel %vm143, %v6003, 0
    %v7542 = vsel %vm143, %v6004, 0
    %v7545 = vsel %vm143, %v6005, 0
    %v7548 = vsel %vm143, %v6006, 0
    %v7551 = vsel %vm143, %v6007, 0
    %v7554 = vsel %vm143, %v6008, 0
    %v7557 = vsel %vm143, %v6009, 0
    %v7560 = vsel %vm143, %v6010, 0
    %7562 = vmatprep.subr.mxu0 0.0
    %7563 = vmatpush1.msra.mxu0 %v7306
    %7564 = vmatprep.subr.mxu0 0.0
    %7565 = vmatpush1.msra.mxu0 %v7305
    %7566 = vmatprep.subr.mxu0 0.0
    %7567 = vmatpush1.msra.mxu0 %v7304
    %7568 = vmatprep.subr.mxu0 0.0
    %7569 = vmatpush1.msra.mxu0 %v7303
    %7570 = vmatprep.subr.mxu0 0.0
    %7571 = vmatpush1.msra.mxu0 %v7302
    %7572 = vmatprep.subr.mxu0 0.0
    %7573 = vmatpush1.msra.mxu0 %v7301
    %7574 = vmatprep.subr.mxu0 0.0
    %7575 = vmatpush1.msra.mxu0 %v7300
    %7576 = vmatprep.subr.mxu0 0.0
    %7577 = vmatpush1.msra.mxu0 %v7299
    %7578 = vmatprep.subr.mxu0 0.0
    %7579 = vmatpush1.msra.mxu0 %v7298
    %7580 = vmatprep.subr.mxu0 0.0
    %7581 = vmatpush1.msra.mxu0 %v7297
    %7582 = vmatprep.subr.mxu0 0.0
    %7583 = vmatpush1.msra.mxu0 %v7296
    %7584 = vmatprep.subr.mxu0 0.0
    %7585 = vmatpush1.msra.mxu0 %v7295
    %7586 = vmatprep.subr.mxu0 0.0
    %7587 = vmatpush1.msra.mxu0 %v7294
    %7588 = vmatprep.subr.mxu0 0.0
    %7589 = vmatpush1.msra.mxu0 %v7293
    %7590 = vmatprep.subr.mxu0 0.0
    %7591 = vmatpush1.msra.mxu0 %v7292
    %7592 = vmatprep.subr.mxu0 0.0
    %7593 = vmatpush1.msra.mxu0 %v7291
    %7594 = vmatprep.subr.mxu0 0.0
    %7595 = vmatpush2.msra.mxu0 %v7322
    %7596 = vmatprep.subr.mxu0 0.0
    %7597 = vmatpush2.msra.mxu0 %v7321
    %7598 = vmatprep.subr.mxu0 0.0
    %7599 = vmatpush2.msra.mxu0 %v7320
    %7600 = vmatprep.subr.mxu0 0.0
    %7601 = vmatpush2.msra.mxu0 %v7319
    %7602 = vmatprep.subr.mxu0 0.0
    %7603 = vmatpush2.msra.mxu0 %v7318
    %7604 = vmatprep.subr.mxu0 0.0
    %7605 = vmatpush2.msra.mxu0 %v7317
    %7606 = vmatprep.subr.mxu0 0.0
    %7607 = vmatpush2.msra.mxu0 %v7316
    %7608 = vmatprep.subr.mxu0 0.0
    %7609 = vmatpush2.msra.mxu0 %v7315
    %7610 = vmatprep.subr.mxu0 0.0
    %7611 = vmatpush2.msra.mxu0 %v7314
    %7612 = vmatprep.subr.mxu0 0.0
    %7613 = vmatpush2.msra.mxu0 %v7313
    %7614 = vmatprep.subr.mxu0 0.0
    %7615 = vmatpush2.msra.mxu0 %v7312
    %7616 = vmatprep.subr.mxu0 0.0
    %7617 = vmatpush2.msra.mxu0 %v7311
    %7618 = vmatprep.subr.mxu0 0.0
    %7619 = vmatpush2.msra.mxu0 %v7310
    %7620 = vmatprep.subr.mxu0 0.0
    %7621 = vmatpush2.msra.mxu0 %v7309
    %7622 = vmatprep.subr.mxu0 0.0
    %7623 = vmatpush2.msra.mxu0 %v7308
    %7624 = vmatprep.subr.mxu0 0.0
    %7625 = vmatpush2.msra.mxu0 %v7307
    %7626 = vmatprep.mubr.f32.mxu0 %v7099
    %7627 = vmatmul.mubr.f32.gmra.mxu0 %v7035
    %v7628 = vpop.f32.mrf.mxu0
    %v7629 = vadd.f32 %v7368, %v7628
    %v7630 = vpop.f32.mrf.mxu0
    %7631 = vmatprep.mubr.f32.mxu0 %v7100
    %7632 = vmatmul.mubr.f32.gmra.mxu0 %v7036
    %v7633 = vpop.f32.mrf.mxu0
    %v7634 = vadd.f32 %v7368, %v7633
    %v7635 = vpop.f32.mrf.mxu0
    %7636 = vmatprep.mubr.f32.mxu0 %v7101
    %7637 = vmatmul.mubr.f32.gmra.mxu0 %v7037
    %v7638 = vpop.f32.mrf.mxu0
    %v7639 = vadd.f32 %v7368, %v7638
    %v7640 = vpop.f32.mrf.mxu0
    %7641 = vmatprep.mubr.f32.mxu0 %v7102
    %7642 = vmatmul.mubr.f32.gmra.mxu0 %v7038
    %v7643 = vpop.f32.mrf.mxu0
    %v7644 = vadd.f32 %v7368, %v7643
    %v7645 = vpop.f32.mrf.mxu0
    %7646 = vmatprep.mubr.f32.mxu0 %v7103
    %7647 = vmatmul.mubr.f32.gmra.mxu0 %v7039
    %v7648 = vpop.f32.mrf.mxu0
    %v7649 = vadd.f32 %v7368, %v7648
    %v7650 = vpop.f32.mrf.mxu0
    %7651 = vmatprep.mubr.f32.mxu0 %v7104
    %7652 = vmatmul.mubr.f32.gmra.mxu0 %v7040
    %v7653 = vpop.f32.mrf.mxu0
    %v7654 = vadd.f32 %v7368, %v7653
    %v7655 = vpop.f32.mrf.mxu0
    %7656 = vmatprep.mubr.f32.mxu0 %v7105
    %7657 = vmatmul.mubr.f32.gmra.mxu0 %v7041
    %v7658 = vpop.f32.mrf.mxu0
    %v7659 = vadd.f32 %v7368, %v7658
    %v7660 = vpop.f32.mrf.mxu0
    %7661 = vmatprep.mubr.f32.mxu0 %v7106
    %7662 = vmatmul.mubr.f32.gmra.mxu0 %v7042
    %v7663 = vpop.f32.mrf.mxu0
    %v7664 = vadd.f32 %v7368, %v7663
    %v7665 = vpop.f32.mrf.mxu0
    %7666 = vmatprep.mubr.f32.mxu0 %v7107
    %7667 = vmatmul.mubr.f32.gmra.mxu0 %v7043
    %v7668 = vpop.f32.mrf.mxu0
    %v7669 = vadd.f32 %v7368, %v7668
    %v7670 = vpop.f32.mrf.mxu0
    %7671 = vmatprep.mubr.f32.mxu0 %v7108
    %7672 = vmatmul.mubr.f32.gmra.mxu0 %v7044
    %v7673 = vpop.f32.mrf.mxu0
    %v7674 = vadd.f32 %v7368, %v7673
    %v7675 = vpop.f32.mrf.mxu0
    %7676 = vmatprep.mubr.f32.mxu0 %v7109
    %7677 = vmatmul.mubr.f32.gmra.mxu0 %v7045
    %v7678 = vpop.f32.mrf.mxu0
    %v7679 = vadd.f32 %v7368, %v7678
    %v7680 = vpop.f32.mrf.mxu0
    %7681 = vmatprep.mubr.f32.mxu0 %v7110
    %7682 = vmatmul.mubr.f32.gmra.mxu0 %v7046
    %v7683 = vpop.f32.mrf.mxu0
    %v7684 = vadd.f32 %v7368, %v7683
    %v7685 = vpop.f32.mrf.mxu0
    %7686 = vmatprep.mubr.f32.mxu0 %v7111
    %7687 = vmatmul.mubr.f32.gmra.mxu0 %v7047
    %v7688 = vpop.f32.mrf.mxu0
    %v7689 = vadd.f32 %v7368, %v7688
    %v7690 = vpop.f32.mrf.mxu0
    %7691 = vmatprep.mubr.f32.mxu0 %v7112
    %7692 = vmatmul.mubr.f32.gmra.mxu0 %v7048
    %v7693 = vpop.f32.mrf.mxu0
    %v7694 = vadd.f32 %v7368, %v7693
    %v7695 = vpop.f32.mrf.mxu0
    %7696 = vmatprep.mubr.f32.mxu0 %v7113
    %7697 = vmatmul.mubr.f32.gmra.mxu0 %v7049
    %v7698 = vpop.f32.mrf.mxu0
    %v7699 = vadd.f32 %v7368, %v7698
    %v7700 = vpop.f32.mrf.mxu0
    %7701 = vmatprep.mubr.f32.mxu0 %v7114
    %7702 = vmatmul.mubr.f32.gmra.mxu0 %v7050
    %v7703 = vpop.f32.mrf.mxu0
    %v7704 = vadd.f32 %v7368, %v7703
    %v7705 = vpop.f32.mrf.mxu0
    %7706 = vmatprep.mubr.f32.mxu0 %v7115
    %7707 = vmatmul.mubr.f32.gmra.mxu0 %v7051
    %v7708 = vpop.f32.mrf.mxu0
    %v7709 = vadd.f32 %v7368, %v7708
    %v7710 = vpop.f32.mrf.mxu0
    %7711 = vmatprep.mubr.f32.mxu0 %v7116
    %7712 = vmatmul.mubr.f32.gmra.mxu0 %v7052
    %v7713 = vpop.f32.mrf.mxu0
    %v7714 = vadd.f32 %v7368, %v7713
    %v7715 = vpop.f32.mrf.mxu0
    %7716 = vmatprep.mubr.f32.mxu0 %v7117
    %7717 = vmatmul.mubr.f32.gmra.mxu0 %v7053
    %v7718 = vpop.f32.mrf.mxu0
    %v7719 = vadd.f32 %v7368, %v7718
    %v7720 = vpop.f32.mrf.mxu0
    %7721 = vmatprep.mubr.f32.mxu0 %v7118
    %7722 = vmatmul.mubr.f32.gmra.mxu0 %v7054
    %v7723 = vpop.f32.mrf.mxu0
    %v7724 = vadd.f32 %v7368, %v7723
    %v7725 = vpop.f32.mrf.mxu0
    %7726 = vmatprep.mubr.f32.mxu0 %v7119
    %7727 = vmatmul.mubr.f32.gmra.mxu0 %v7055
    %v7728 = vpop.f32.mrf.mxu0
    %v7729 = vadd.f32 %v7368, %v7728
    %v7730 = vpop.f32.mrf.mxu0
    %7731 = vmatprep.mubr.f32.mxu0 %v7120
    %7732 = vmatmul.mubr.f32.gmra.mxu0 %v7056
    %v7733 = vpop.f32.mrf.mxu0
    %v7734 = vadd.f32 %v7368, %v7733
    %v7735 = vpop.f32.mrf.mxu0
    %7736 = vmatprep.mubr.f32.mxu0 %v7121
    %7737 = vmatmul.mubr.f32.gmra.mxu0 %v7057
    %v7738 = vpop.f32.mrf.mxu0
    %v7739 = vadd.f32 %v7368, %v7738
    %v7740 = vpop.f32.mrf.mxu0
    %7741 = vmatprep.mubr.f32.mxu0 %v7122
    %7742 = vmatmul.mubr.f32.gmra.mxu0 %v7058
    %v7743 = vpop.f32.mrf.mxu0
    %v7744 = vadd.f32 %v7368, %v7743
    %v7745 = vpop.f32.mrf.mxu0
    %7746 = vmatprep.mubr.f32.mxu0 %v7123
    %7747 = vmatmul.mubr.f32.gmra.mxu0 %v7059
    %v7748 = vpop.f32.mrf.mxu0
    %v7749 = vadd.f32 %v7368, %v7748
    %v7750 = vpop.f32.mrf.mxu0
    %7751 = vmatprep.mubr.f32.mxu0 %v7124
    %7752 = vmatmul.mubr.f32.gmra.mxu0 %v7060
    %v7753 = vpop.f32.mrf.mxu0
    %v7754 = vadd.f32 %v7368, %v7753
    %v7755 = vpop.f32.mrf.mxu0
    %7756 = vmatprep.mubr.f32.mxu0 %v7125
    %7757 = vmatmul.mubr.f32.gmra.mxu0 %v7061
    %v7758 = vpop.f32.mrf.mxu0
    %v7759 = vadd.f32 %v7368, %v7758
    %v7760 = vpop.f32.mrf.mxu0
    %7761 = vmatprep.mubr.f32.mxu0 %v7126
    %7762 = vmatmul.mubr.f32.gmra.mxu0 %v7062
    %v7763 = vpop.f32.mrf.mxu0
    %v7764 = vadd.f32 %v7368, %v7763
    %v7765 = vpop.f32.mrf.mxu0
    %7766 = vmatprep.mubr.f32.mxu0 %v7127
    %7767 = vmatmul.mubr.f32.gmra.mxu0 %v7063
    %v7768 = vpop.f32.mrf.mxu0
    %v7769 = vadd.f32 %v7368, %v7768
    %v7770 = vpop.f32.mrf.mxu0
    %7771 = vmatprep.mubr.f32.mxu0 %v7128
    %7772 = vmatmul.mubr.f32.gmra.mxu0 %v7064
    %v7773 = vpop.f32.mrf.mxu0
    %v7774 = vadd.f32 %v7368, %v7773
    %v7775 = vpop.f32.mrf.mxu0
    %7776 = vmatprep.mubr.f32.mxu0 %v7129
    %7777 = vmatmul.mubr.f32.gmra.mxu0 %v7065
    %v7778 = vpop.f32.mrf.mxu0
    %v7779 = vadd.f32 %v7368, %v7778
    %v7780 = vpop.f32.mrf.mxu0
    %7781 = vmatprep.mubr.f32.mxu0 %v7130
    %7782 = vmatmul.mubr.f32.gmra.mxu0 %v7066
    %v7783 = vpop.f32.mrf.mxu0
    %v7784 = vadd.f32 %v7368, %v7783
    %v7785 = vpop.f32.mrf.mxu0
    %7786 = vmatprep.mubr.f32.mxu0 %v7131
    %7787 = vmatmul.mubr.f32.gmra.mxu0 %v7067
    %v7788 = vpop.f32.mrf.mxu0
    %v7789 = vadd.f32 %v7368, %v7788
    %v7790 = vpop.f32.mrf.mxu0
    %7791 = vmatprep.mubr.f32.mxu0 %v7132
    %7792 = vmatmul.mubr.f32.gmra.mxu0 %v7068
    %v7793 = vpop.f32.mrf.mxu0
    %v7794 = vadd.f32 %v7368, %v7793
    %v7795 = vpop.f32.mrf.mxu0
    %7796 = vmatprep.mubr.f32.mxu0 %v7133
    %7797 = vmatmul.mubr.f32.gmra.mxu0 %v7069
    %v7798 = vpop.f32.mrf.mxu0
    %v7799 = vadd.f32 %v7368, %v7798
    %v7800 = vpop.f32.mrf.mxu0
    %7801 = vmatprep.mubr.f32.mxu0 %v7134
    %7802 = vmatmul.mubr.f32.gmra.mxu0 %v7070
    %v7803 = vpop.f32.mrf.mxu0
    %v7804 = vadd.f32 %v7368, %v7803
    %v7805 = vpop.f32.mrf.mxu0
    %7806 = vmatprep.mubr.f32.mxu0 %v7135
    %7807 = vmatmul.mubr.f32.gmra.mxu0 %v7071
    %v7808 = vpop.f32.mrf.mxu0
    %v7809 = vadd.f32 %v7368, %v7808
    %v7810 = vpop.f32.mrf.mxu0
    %7811 = vmatprep.mubr.f32.mxu0 %v7136
    %7812 = vmatmul.mubr.f32.gmra.mxu0 %v7072
    %v7813 = vpop.f32.mrf.mxu0
    %v7814 = vadd.f32 %v7368, %v7813
    %v7815 = vpop.f32.mrf.mxu0
    %7816 = vmatprep.mubr.f32.mxu0 %v7137
    %7817 = vmatmul.mubr.f32.gmra.mxu0 %v7073
    %v7818 = vpop.f32.mrf.mxu0
    %v7819 = vadd.f32 %v7368, %v7818
    %v7820 = vpop.f32.mrf.mxu0
    %7821 = vmatprep.mubr.f32.mxu0 %v7138
    %7822 = vmatmul.mubr.f32.gmra.mxu0 %v7074
    %v7823 = vpop.f32.mrf.mxu0
    %v7824 = vadd.f32 %v7368, %v7823
    %v7825 = vpop.f32.mrf.mxu0
    %7826 = vmatprep.mubr.f32.mxu0 %v7139
    %7827 = vmatmul.mubr.f32.gmra.mxu0 %v7075
    %v7828 = vpop.f32.mrf.mxu0
    %v7829 = vadd.f32 %v7368, %v7828
    %v7830 = vpop.f32.mrf.mxu0
    %7831 = vmatprep.mubr.f32.mxu0 %v7140
    %7832 = vmatmul.mubr.f32.gmra.mxu0 %v7076
    %v7833 = vpop.f32.mrf.mxu0
    %v7834 = vadd.f32 %v7368, %v7833
    %v7835 = vpop.f32.mrf.mxu0
    %7836 = vmatprep.mubr.f32.mxu0 %v7141
    %7837 = vmatmul.mubr.f32.gmra.mxu0 %v7077
    %v7838 = vpop.f32.mrf.mxu0
    %v7839 = vadd.f32 %v7368, %v7838
    %v7840 = vpop.f32.mrf.mxu0
    %7841 = vmatprep.mubr.f32.mxu0 %v7142
    %7842 = vmatmul.mubr.f32.gmra.mxu0 %v7078
    %v7843 = vpop.f32.mrf.mxu0
    %v7844 = vadd.f32 %v7368, %v7843
    %v7845 = vpop.f32.mrf.mxu0
    %7846 = vmatprep.mubr.f32.mxu0 %v7143
    %7847 = vmatmul.mubr.f32.gmra.mxu0 %v7079
    %v7848 = vpop.f32.mrf.mxu0
    %v7849 = vadd.f32 %v7368, %v7848
    %v7850 = vpop.f32.mrf.mxu0
    %7851 = vmatprep.mubr.f32.mxu0 %v7144
    %7852 = vmatmul.mubr.f32.gmra.mxu0 %v7080
    %v7853 = vpop.f32.mrf.mxu0
    %v7854 = vadd.f32 %v7368, %v7853
    %v7855 = vpop.f32.mrf.mxu0
    %7856 = vmatprep.mubr.f32.mxu0 %v7145
    %7857 = vmatmul.mubr.f32.gmra.mxu0 %v7081
    %v7858 = vpop.f32.mrf.mxu0
    %v7859 = vadd.f32 %v7368, %v7858
    %v7860 = vpop.f32.mrf.mxu0
    %7861 = vmatprep.mubr.f32.mxu0 %v7146
    %7862 = vmatmul.mubr.f32.gmra.mxu0 %v7082
    %v7863 = vpop.f32.mrf.mxu0
    %v7864 = vadd.f32 %v7368, %v7863
    %v7865 = vpop.f32.mrf.mxu0
    %7866 = vmatprep.mubr.f32.mxu0 %v7147
    %7867 = vmatmul.mubr.f32.gmra.mxu0 %v7083
    %v7868 = vpop.f32.mrf.mxu0
    %v7869 = vadd.f32 %v7368, %v7868
    %v7870 = vpop.f32.mrf.mxu0
    %7871 = vmatprep.mubr.f32.mxu0 %v7148
    %7872 = vmatmul.mubr.f32.gmra.mxu0 %v7084
    %v7873 = vpop.f32.mrf.mxu0
    %v7874 = vadd.f32 %v7368, %v7873
    %v7875 = vpop.f32.mrf.mxu0
    %7876 = vmatprep.mubr.f32.mxu0 %v7149
    %7877 = vmatmul.mubr.f32.gmra.mxu0 %v7085
    %v7878 = vpop.f32.mrf.mxu0
    %v7879 = vadd.f32 %v7368, %v7878
    %v7880 = vpop.f32.mrf.mxu0
    %7881 = vmatprep.mubr.f32.mxu0 %v7150
    %7882 = vmatmul.mubr.f32.gmra.mxu0 %v7086
    %v7883 = vpop.f32.mrf.mxu0
    %v7884 = vadd.f32 %v7368, %v7883
    %v7885 = vpop.f32.mrf.mxu0
    %7886 = vmatprep.mubr.f32.mxu0 %v7151
    %7887 = vmatmul.mubr.f32.gmra.mxu0 %v7087
    %v7888 = vpop.f32.mrf.mxu0
    %v7889 = vadd.f32 %v7368, %v7888
    %v7890 = vpop.f32.mrf.mxu0
    %7891 = vmatprep.mubr.f32.mxu0 %v7152
    %7892 = vmatmul.mubr.f32.gmra.mxu0 %v7088
    %v7893 = vpop.f32.mrf.mxu0
    %v7894 = vadd.f32 %v7368, %v7893
    %v7895 = vpop.f32.mrf.mxu0
    %7896 = vmatprep.mubr.f32.mxu0 %v7153
    %7897 = vmatmul.mubr.f32.gmra.mxu0 %v7089
    %v7898 = vpop.f32.mrf.mxu0
    %v7899 = vadd.f32 %v7368, %v7898
    %v7900 = vpop.f32.mrf.mxu0
    %7901 = vmatprep.mubr.f32.mxu0 %v7154
    %7902 = vmatmul.mubr.f32.gmra.mxu0 %v7090
    %v7903 = vpop.f32.mrf.mxu0
    %v7904 = vadd.f32 %v7368, %v7903
    %v7905 = vpop.f32.mrf.mxu0
    %7906 = vmatprep.mubr.f32.mxu0 %v7155
    %7907 = vmatmul.mubr.f32.gmra.mxu0 %v7091
    %v7908 = vpop.f32.mrf.mxu0
    %v7909 = vadd.f32 %v7368, %v7908
    %v7910 = vpop.f32.mrf.mxu0
    %7911 = vmatprep.mubr.f32.mxu0 %v7156
    %7912 = vmatmul.mubr.f32.gmra.mxu0 %v7092
    %v7913 = vpop.f32.mrf.mxu0
    %v7914 = vadd.f32 %v7368, %v7913
    %v7915 = vpop.f32.mrf.mxu0
    %7916 = vmatprep.mubr.f32.mxu0 %v7157
    %7917 = vmatmul.mubr.f32.gmra.mxu0 %v7093
    %v7918 = vpop.f32.mrf.mxu0
    %v7919 = vadd.f32 %v7368, %v7918
    %v7920 = vpop.f32.mrf.mxu0
    %7921 = vmatprep.mubr.f32.mxu0 %v7158
    %7922 = vmatmul.mubr.f32.gmra.mxu0 %v7094
    %v7923 = vpop.f32.mrf.mxu0
    %v7924 = vadd.f32 %v7368, %v7923
    %v7925 = vpop.f32.mrf.mxu0
    %7926 = vmatprep.mubr.f32.mxu0 %v7159
    %7927 = vmatmul.mubr.f32.gmra.mxu0 %v7095
    %v7928 = vpop.f32.mrf.mxu0
    %v7929 = vadd.f32 %v7368, %v7928
    %v7930 = vpop.f32.mrf.mxu0
    %7931 = vmatprep.mubr.f32.mxu0 %v7160
    %7932 = vmatmul.mubr.f32.gmra.mxu0 %v7096
    %v7933 = vpop.f32.mrf.mxu0
    %v7934 = vadd.f32 %v7368, %v7933
    %v7935 = vpop.f32.mrf.mxu0
    %7936 = vmatprep.mubr.f32.mxu0 %v7161
    %7937 = vmatmul.mubr.f32.gmra.mxu0 %v7097
    %v7938 = vpop.f32.mrf.mxu0
    %v7939 = vadd.f32 %v7368, %v7938
    %v7940 = vpop.f32.mrf.mxu0
    %7941 = vmatprep.mubr.f32.mxu0 %v7162
    %7942 = vmatmul.mubr.f32.gmra.mxu0 %v7098
    %v7943 = vpop.f32.mrf.mxu0
    %v7944 = vadd.f32 %v7368, %v7943
    %v7945 = vpop.f32.mrf.mxu0
    %7946 = vdwg.mxu0
    %7947 = vmatprep.subr.mxu0 0.0
    %7948 = vmatpush1.msra.mxu0 %v7338
    %7949 = vmatprep.subr.mxu0 0.0
    %7950 = vmatpush1.msra.mxu0 %v7337
    %7951 = vmatprep.subr.mxu0 0.0
    %7952 = vmatpush1.msra.mxu0 %v7336
    %7953 = vmatprep.subr.mxu0 0.0
    %7954 = vmatpush1.msra.mxu0 %v7335
    %7955 = vmatprep.subr.mxu0 0.0
    %7956 = vmatpush1.msra.mxu0 %v7334
    %7957 = vmatprep.subr.mxu0 0.0
    %7958 = vmatpush1.msra.mxu0 %v7333
    %7959 = vmatprep.subr.mxu0 0.0
    %7960 = vmatpush1.msra.mxu0 %v7332
    %7961 = vmatprep.subr.mxu0 0.0
    %7962 = vmatpush1.msra.mxu0 %v7331
    %7963 = vmatprep.subr.mxu0 0.0
    %7964 = vmatpush1.msra.mxu0 %v7330
    %7965 = vmatprep.subr.mxu0 0.0
    %7966 = vmatpush1.msra.mxu0 %v7329
    %7967 = vmatprep.subr.mxu0 0.0
    %7968 = vmatpush1.msra.mxu0 %v7328
    %7969 = vmatprep.subr.mxu0 0.0
    %7970 = vmatpush1.msra.mxu0 %v7327
    %7971 = vmatprep.subr.mxu0 0.0
    %7972 = vmatpush1.msra.mxu0 %v7326
    %7973 = vmatprep.subr.mxu0 0.0
    %7974 = vmatpush1.msra.mxu0 %v7325
    %7975 = vmatprep.subr.mxu0 0.0
    %7976 = vmatpush1.msra.mxu0 %v7324
    %7977 = vmatprep.subr.mxu0 0.0
    %7978 = vmatpush1.msra.mxu0 %v7323
    %7979 = vmatprep.subr.mxu0 0.0
    %7980 = vmatpush2.msra.mxu0 %v7354
    %7981 = vmatprep.subr.mxu0 0.0
    %7982 = vmatpush2.msra.mxu0 %v7353
    %7983 = vmatprep.subr.mxu0 0.0
    %7984 = vmatpush2.msra.mxu0 %v7352
    %7985 = vmatprep.subr.mxu0 0.0
    %7986 = vmatpush2.msra.mxu0 %v7351
    %7987 = vmatprep.subr.mxu0 0.0
    %7988 = vmatpush2.msra.mxu0 %v7350
    %7989 = vmatprep.subr.mxu0 0.0
    %7990 = vmatpush2.msra.mxu0 %v7349
    %7991 = vmatprep.subr.mxu0 0.0
    %7992 = vmatpush2.msra.mxu0 %v7348
    %7993 = vmatprep.subr.mxu0 0.0
    %7994 = vmatpush2.msra.mxu0 %v7347
    %7995 = vmatprep.subr.mxu0 0.0
    %7996 = vmatpush2.msra.mxu0 %v7346
    %7997 = vmatprep.subr.mxu0 0.0
    %7998 = vmatpush2.msra.mxu0 %v7345
    %7999 = vmatprep.subr.mxu0 0.0
    %8000 = vmatpush2.msra.mxu0 %v7344
    %8001 = vmatprep.subr.mxu0 0.0
    %8002 = vmatpush2.msra.mxu0 %v7343
    %8003 = vmatprep.subr.mxu0 0.0
    %8004 = vmatpush2.msra.mxu0 %v7342
    %8005 = vmatprep.subr.mxu0 0.0
    %8006 = vmatpush2.msra.mxu0 %v7341
    %8007 = vmatprep.subr.mxu0 0.0
    %8008 = vmatpush2.msra.mxu0 %v7340
    %8009 = vmatprep.subr.mxu0 0.0
    %8010 = vmatpush2.msra.mxu0 %v7339
    %8011 = vmatprep.mubr.f32.mxu0 %v7227
    %8012 = vmatmul.mubr.f32.gmra.mxu0 %v7163
    %v8013 = vpop.f32.mrf.mxu0
    %v8014 = vadd.f32 %v7629, %v8013
    %v8015 = vpop.f32.mrf.mxu0
    %8016 = vmatprep.mubr.f32.mxu0 %v7228
    %8017 = vmatmul.mubr.f32.gmra.mxu0 %v7164
    %v8018 = vpop.f32.mrf.mxu0
    %v8019 = vadd.f32 %v7634, %v8018
    %v8020 = vpop.f32.mrf.mxu0
    %8021 = vmatprep.mubr.f32.mxu0 %v7229
    %8022 = vmatmul.mubr.f32.gmra.mxu0 %v7165
    %v8023 = vpop.f32.mrf.mxu0
    %v8024 = vadd.f32 %v7639, %v8023
    %v8025 = vpop.f32.mrf.mxu0
    %8026 = vmatprep.mubr.f32.mxu0 %v7230
    %8027 = vmatmul.mubr.f32.gmra.mxu0 %v7166
    %v8028 = vpop.f32.mrf.mxu0
    %v8029 = vadd.f32 %v7644, %v8028
    %v8030 = vpop.f32.mrf.mxu0
    %8031 = vmatprep.mubr.f32.mxu0 %v7231
    %8032 = vmatmul.mubr.f32.gmra.mxu0 %v7167
    %v8033 = vpop.f32.mrf.mxu0
    %v8034 = vadd.f32 %v7649, %v8033
    %v8035 = vpop.f32.mrf.mxu0
    %8036 = vmatprep.mubr.f32.mxu0 %v7232
    %8037 = vmatmul.mubr.f32.gmra.mxu0 %v7168
    %v8038 = vpop.f32.mrf.mxu0
    %v8039 = vadd.f32 %v7654, %v8038
    %v8040 = vpop.f32.mrf.mxu0
    %8041 = vmatprep.mubr.f32.mxu0 %v7233
    %8042 = vmatmul.mubr.f32.gmra.mxu0 %v7169
    %v8043 = vpop.f32.mrf.mxu0
    %v8044 = vadd.f32 %v7659, %v8043
    %v8045 = vpop.f32.mrf.mxu0
    %8046 = vmatprep.mubr.f32.mxu0 %v7234
    %8047 = vmatmul.mubr.f32.gmra.mxu0 %v7170
    %v8048 = vpop.f32.mrf.mxu0
    %v8049 = vadd.f32 %v7664, %v8048
    %v8050 = vpop.f32.mrf.mxu0
    %8051 = vmatprep.mubr.f32.mxu0 %v7235
    %8052 = vmatmul.mubr.f32.gmra.mxu0 %v7171
    %v8053 = vpop.f32.mrf.mxu0
    %v8054 = vadd.f32 %v7669, %v8053
    %v8055 = vpop.f32.mrf.mxu0
    %8056 = vmatprep.mubr.f32.mxu0 %v7236
    %8057 = vmatmul.mubr.f32.gmra.mxu0 %v7172
    %v8058 = vpop.f32.mrf.mxu0
    %v8059 = vadd.f32 %v7674, %v8058
    %v8060 = vpop.f32.mrf.mxu0
    %8061 = vmatprep.mubr.f32.mxu0 %v7237
    %8062 = vmatmul.mubr.f32.gmra.mxu0 %v7173
    %v8063 = vpop.f32.mrf.mxu0
    %v8064 = vadd.f32 %v7679, %v8063
    %v8065 = vpop.f32.mrf.mxu0
    %8066 = vmatprep.mubr.f32.mxu0 %v7238
    %8067 = vmatmul.mubr.f32.gmra.mxu0 %v7174
    %v8068 = vpop.f32.mrf.mxu0
    %v8069 = vadd.f32 %v7684, %v8068
    %v8070 = vpop.f32.mrf.mxu0
    %8071 = vmatprep.mubr.f32.mxu0 %v7239
    %8072 = vmatmul.mubr.f32.gmra.mxu0 %v7175
    %v8073 = vpop.f32.mrf.mxu0
    %v8074 = vadd.f32 %v7689, %v8073
    %v8075 = vpop.f32.mrf.mxu0
    %8076 = vmatprep.mubr.f32.mxu0 %v7240
    %8077 = vmatmul.mubr.f32.gmra.mxu0 %v7176
    %v8078 = vpop.f32.mrf.mxu0
    %v8079 = vadd.f32 %v7694, %v8078
    %v8080 = vpop.f32.mrf.mxu0
    %8081 = vmatprep.mubr.f32.mxu0 %v7241
    %8082 = vmatmul.mubr.f32.gmra.mxu0 %v7177
    %v8083 = vpop.f32.mrf.mxu0
    %v8084 = vadd.f32 %v7699, %v8083
    %v8085 = vpop.f32.mrf.mxu0
    %8086 = vmatprep.mubr.f32.mxu0 %v7242
    %8087 = vmatmul.mubr.f32.gmra.mxu0 %v7178
    %v8088 = vpop.f32.mrf.mxu0
    %v8089 = vadd.f32 %v7704, %v8088
    %v8090 = vpop.f32.mrf.mxu0
    %8091 = vmatprep.mubr.f32.mxu0 %v7243
    %8092 = vmatmul.mubr.f32.gmra.mxu0 %v7179
    %v8093 = vpop.f32.mrf.mxu0
    %v8094 = vadd.f32 %v7709, %v8093
    %v8095 = vpop.f32.mrf.mxu0
    %8096 = vmatprep.mubr.f32.mxu0 %v7244
    %8097 = vmatmul.mubr.f32.gmra.mxu0 %v7180
    %v8098 = vpop.f32.mrf.mxu0
    %v8099 = vadd.f32 %v7714, %v8098
    %v8100 = vpop.f32.mrf.mxu0
    %8101 = vmatprep.mubr.f32.mxu0 %v7245
    %8102 = vmatmul.mubr.f32.gmra.mxu0 %v7181
    %v8103 = vpop.f32.mrf.mxu0
    %v8104 = vadd.f32 %v7719, %v8103
    %v8105 = vpop.f32.mrf.mxu0
    %8106 = vmatprep.mubr.f32.mxu0 %v7246
    %8107 = vmatmul.mubr.f32.gmra.mxu0 %v7182
    %v8108 = vpop.f32.mrf.mxu0
    %v8109 = vadd.f32 %v7724, %v8108
    %v8110 = vpop.f32.mrf.mxu0
    %8111 = vmatprep.mubr.f32.mxu0 %v7247
    %8112 = vmatmul.mubr.f32.gmra.mxu0 %v7183
    %v8113 = vpop.f32.mrf.mxu0
    %v8114 = vadd.f32 %v7729, %v8113
    %v8115 = vpop.f32.mrf.mxu0
    %8116 = vmatprep.mubr.f32.mxu0 %v7248
    %8117 = vmatmul.mubr.f32.gmra.mxu0 %v7184
    %v8118 = vpop.f32.mrf.mxu0
    %v8119 = vadd.f32 %v7734, %v8118
    %v8120 = vpop.f32.mrf.mxu0
    %8121 = vmatprep.mubr.f32.mxu0 %v7249
    %8122 = vmatmul.mubr.f32.gmra.mxu0 %v7185
    %v8123 = vpop.f32.mrf.mxu0
    %v8124 = vadd.f32 %v7739, %v8123
    %v8125 = vpop.f32.mrf.mxu0
    %8126 = vmatprep.mubr.f32.mxu0 %v7250
    %8127 = vmatmul.mubr.f32.gmra.mxu0 %v7186
    %v8128 = vpop.f32.mrf.mxu0
    %v8129 = vadd.f32 %v7744, %v8128
    %v8130 = vpop.f32.mrf.mxu0
    %8131 = vmatprep.mubr.f32.mxu0 %v7251
    %8132 = vmatmul.mubr.f32.gmra.mxu0 %v7187
    %v8133 = vpop.f32.mrf.mxu0
    %v8134 = vadd.f32 %v7749, %v8133
    %v8135 = vpop.f32.mrf.mxu0
    %8136 = vmatprep.mubr.f32.mxu0 %v7252
    %8137 = vmatmul.mubr.f32.gmra.mxu0 %v7188
    %v8138 = vpop.f32.mrf.mxu0
    %v8139 = vadd.f32 %v7754, %v8138
    %v8140 = vpop.f32.mrf.mxu0
    %8141 = vmatprep.mubr.f32.mxu0 %v7253
    %8142 = vmatmul.mubr.f32.gmra.mxu0 %v7189
    %v8143 = vpop.f32.mrf.mxu0
    %v8144 = vadd.f32 %v7759, %v8143
    %v8145 = vpop.f32.mrf.mxu0
    %8146 = vmatprep.mubr.f32.mxu0 %v7254
    %8147 = vmatmul.mubr.f32.gmra.mxu0 %v7190
    %v8148 = vpop.f32.mrf.mxu0
    %v8149 = vadd.f32 %v7764, %v8148
    %v8150 = vpop.f32.mrf.mxu0
    %8151 = vmatprep.mubr.f32.mxu0 %v7255
    %8152 = vmatmul.mubr.f32.gmra.mxu0 %v7191
    %v8153 = vpop.f32.mrf.mxu0
    %v8154 = vadd.f32 %v7769, %v8153
    %v8155 = vpop.f32.mrf.mxu0
    %8156 = vmatprep.mubr.f32.mxu0 %v7256
    %8157 = vmatmul.mubr.f32.gmra.mxu0 %v7192
    %v8158 = vpop.f32.mrf.mxu0
    %v8159 = vadd.f32 %v7774, %v8158
    %v8160 = vpop.f32.mrf.mxu0
    %8161 = vmatprep.mubr.f32.mxu0 %v7257
    %8162 = vmatmul.mubr.f32.gmra.mxu0 %v7193
    %v8163 = vpop.f32.mrf.mxu0
    %v8164 = vadd.f32 %v7779, %v8163
    %v8165 = vpop.f32.mrf.mxu0
    %8166 = vmatprep.mubr.f32.mxu0 %v7258
    %8167 = vmatmul.mubr.f32.gmra.mxu0 %v7194
    %v8168 = vpop.f32.mrf.mxu0
    %v8169 = vadd.f32 %v7784, %v8168
    %v8170 = vpop.f32.mrf.mxu0
    %8171 = vmatprep.mubr.f32.mxu0 %v7259
    %8172 = vmatmul.mubr.f32.gmra.mxu0 %v7195
    %v8173 = vpop.f32.mrf.mxu0
    %v8174 = vadd.f32 %v7789, %v8173
    %v8175 = vpop.f32.mrf.mxu0
    %8176 = vmatprep.mubr.f32.mxu0 %v7260
    %8177 = vmatmul.mubr.f32.gmra.mxu0 %v7196
    %v8178 = vpop.f32.mrf.mxu0
    %v8179 = vadd.f32 %v7794, %v8178
    %v8180 = vpop.f32.mrf.mxu0
    %8181 = vmatprep.mubr.f32.mxu0 %v7261
    %8182 = vmatmul.mubr.f32.gmra.mxu0 %v7197
    %v8183 = vpop.f32.mrf.mxu0
    %v8184 = vadd.f32 %v7799, %v8183
    %v8185 = vpop.f32.mrf.mxu0
    %8186 = vmatprep.mubr.f32.mxu0 %v7262
    %8187 = vmatmul.mubr.f32.gmra.mxu0 %v7198
    %v8188 = vpop.f32.mrf.mxu0
    %v8189 = vadd.f32 %v7804, %v8188
    %v8190 = vpop.f32.mrf.mxu0
    %8191 = vmatprep.mubr.f32.mxu0 %v7263
    %8192 = vmatmul.mubr.f32.gmra.mxu0 %v7199
    %v8193 = vpop.f32.mrf.mxu0
    %v8194 = vadd.f32 %v7809, %v8193
    %v8195 = vpop.f32.mrf.mxu0
    %8196 = vmatprep.mubr.f32.mxu0 %v7264
    %8197 = vmatmul.mubr.f32.gmra.mxu0 %v7200
    %v8198 = vpop.f32.mrf.mxu0
    %v8199 = vadd.f32 %v7814, %v8198
    %v8200 = vpop.f32.mrf.mxu0
    %8201 = vmatprep.mubr.f32.mxu0 %v7265
    %8202 = vmatmul.mubr.f32.gmra.mxu0 %v7201
    %v8203 = vpop.f32.mrf.mxu0
    %v8204 = vadd.f32 %v7819, %v8203
    %v8205 = vpop.f32.mrf.mxu0
    %8206 = vmatprep.mubr.f32.mxu0 %v7266
    %8207 = vmatmul.mubr.f32.gmra.mxu0 %v7202
    %v8208 = vpop.f32.mrf.mxu0
    %v8209 = vadd.f32 %v7824, %v8208
    %v8210 = vpop.f32.mrf.mxu0
    %8211 = vmatprep.mubr.f32.mxu0 %v7267
    %8212 = vmatmul.mubr.f32.gmra.mxu0 %v7203
    %v8213 = vpop.f32.mrf.mxu0
    %v8214 = vadd.f32 %v7829, %v8213
    %v8215 = vpop.f32.mrf.mxu0
    %8216 = vmatprep.mubr.f32.mxu0 %v7268
    %8217 = vmatmul.mubr.f32.gmra.mxu0 %v7204
    %v8218 = vpop.f32.mrf.mxu0
    %v8219 = vadd.f32 %v7834, %v8218
    %v8220 = vpop.f32.mrf.mxu0
    %8221 = vmatprep.mubr.f32.mxu0 %v7269
    %8222 = vmatmul.mubr.f32.gmra.mxu0 %v7205
    %v8223 = vpop.f32.mrf.mxu0
    %v8224 = vadd.f32 %v7839, %v8223
    %v8225 = vpop.f32.mrf.mxu0
    %8226 = vmatprep.mubr.f32.mxu0 %v7270
    %8227 = vmatmul.mubr.f32.gmra.mxu0 %v7206
    %v8228 = vpop.f32.mrf.mxu0
    %v8229 = vadd.f32 %v7844, %v8228
    %v8230 = vpop.f32.mrf.mxu0
    %8231 = vmatprep.mubr.f32.mxu0 %v7271
    %8232 = vmatmul.mubr.f32.gmra.mxu0 %v7207
    %v8233 = vpop.f32.mrf.mxu0
    %v8234 = vadd.f32 %v7849, %v8233
    %v8235 = vpop.f32.mrf.mxu0
    %8236 = vmatprep.mubr.f32.mxu0 %v7272
    %8237 = vmatmul.mubr.f32.gmra.mxu0 %v7208
    %v8238 = vpop.f32.mrf.mxu0
    %v8239 = vadd.f32 %v7854, %v8238
    %v8240 = vpop.f32.mrf.mxu0
    %8241 = vmatprep.mubr.f32.mxu0 %v7273
    %8242 = vmatmul.mubr.f32.gmra.mxu0 %v7209
    %v8243 = vpop.f32.mrf.mxu0
    %v8244 = vadd.f32 %v7859, %v8243
    %v8245 = vpop.f32.mrf.mxu0
    %8246 = vmatprep.mubr.f32.mxu0 %v7274
    %8247 = vmatmul.mubr.f32.gmra.mxu0 %v7210
    %v8248 = vpop.f32.mrf.mxu0
    %v8249 = vadd.f32 %v7864, %v8248
    %v8250 = vpop.f32.mrf.mxu0
    %8251 = vmatprep.mubr.f32.mxu0 %v7275
    %8252 = vmatmul.mubr.f32.gmra.mxu0 %v7211
    %v8253 = vpop.f32.mrf.mxu0
    %v8254 = vadd.f32 %v7869, %v8253
    %v8255 = vpop.f32.mrf.mxu0
    %8256 = vmatprep.mubr.f32.mxu0 %v7276
    %8257 = vmatmul.mubr.f32.gmra.mxu0 %v7212
    %v8258 = vpop.f32.mrf.mxu0
    %v8259 = vadd.f32 %v7874, %v8258
    %v8260 = vpop.f32.mrf.mxu0
    %8261 = vmatprep.mubr.f32.mxu0 %v7277
    %8262 = vmatmul.mubr.f32.gmra.mxu0 %v7213
    %v8263 = vpop.f32.mrf.mxu0
    %v8264 = vadd.f32 %v7879, %v8263
    %v8265 = vpop.f32.mrf.mxu0
    %8266 = vmatprep.mubr.f32.mxu0 %v7278
    %8267 = vmatmul.mubr.f32.gmra.mxu0 %v7214
    %v8268 = vpop.f32.mrf.mxu0
    %v8269 = vadd.f32 %v7884, %v8268
    %v8270 = vpop.f32.mrf.mxu0
    %8271 = vmatprep.mubr.f32.mxu0 %v7279
    %8272 = vmatmul.mubr.f32.gmra.mxu0 %v7215
    %v8273 = vpop.f32.mrf.mxu0
    %v8274 = vadd.f32 %v7889, %v8273
    %v8275 = vpop.f32.mrf.mxu0
    %8276 = vmatprep.mubr.f32.mxu0 %v7280
    %8277 = vmatmul.mubr.f32.gmra.mxu0 %v7216
    %v8278 = vpop.f32.mrf.mxu0
    %v8279 = vadd.f32 %v7894, %v8278
    %v8280 = vpop.f32.mrf.mxu0
    %8281 = vmatprep.mubr.f32.mxu0 %v7281
    %8282 = vmatmul.mubr.f32.gmra.mxu0 %v7217
    %v8283 = vpop.f32.mrf.mxu0
    %v8284 = vadd.f32 %v7899, %v8283
    %v8285 = vpop.f32.mrf.mxu0
    %8286 = vmatprep.mubr.f32.mxu0 %v7282
    %8287 = vmatmul.mubr.f32.gmra.mxu0 %v7218
    %v8288 = vpop.f32.mrf.mxu0
    %v8289 = vadd.f32 %v7904, %v8288
    %v8290 = vpop.f32.mrf.mxu0
    %8291 = vmatprep.mubr.f32.mxu0 %v7283
    %8292 = vmatmul.mubr.f32.gmra.mxu0 %v7219
    %v8293 = vpop.f32.mrf.mxu0
    %v8294 = vadd.f32 %v7909, %v8293
    %v8295 = vpop.f32.mrf.mxu0
    %8296 = vmatprep.mubr.f32.mxu0 %v7284
    %8297 = vmatmul.mubr.f32.gmra.mxu0 %v7220
    %v8298 = vpop.f32.mrf.mxu0
    %v8299 = vadd.f32 %v7914, %v8298
    %v8300 = vpop.f32.mrf.mxu0
    %8301 = vmatprep.mubr.f32.mxu0 %v7285
    %8302 = vmatmul.mubr.f32.gmra.mxu0 %v7221
    %v8303 = vpop.f32.mrf.mxu0
    %v8304 = vadd.f32 %v7919, %v8303
    %v8305 = vpop.f32.mrf.mxu0
    %8306 = vmatprep.mubr.f32.mxu0 %v7286
    %8307 = vmatmul.mubr.f32.gmra.mxu0 %v7222
    %v8308 = vpop.f32.mrf.mxu0
    %v8309 = vadd.f32 %v7924, %v8308
    %v8310 = vpop.f32.mrf.mxu0
    %8311 = vmatprep.mubr.f32.mxu0 %v7287
    %8312 = vmatmul.mubr.f32.gmra.mxu0 %v7223
    %v8313 = vpop.f32.mrf.mxu0
    %v8314 = vadd.f32 %v7929, %v8313
    %v8315 = vpop.f32.mrf.mxu0
    %8316 = vmatprep.mubr.f32.mxu0 %v7288
    %8317 = vmatmul.mubr.f32.gmra.mxu0 %v7224
    %v8318 = vpop.f32.mrf.mxu0
    %v8319 = vadd.f32 %v7934, %v8318
    %v8320 = vpop.f32.mrf.mxu0
    %8321 = vmatprep.mubr.f32.mxu0 %v7289
    %8322 = vmatmul.mubr.f32.gmra.mxu0 %v7225
    %v8323 = vpop.f32.mrf.mxu0
    %v8324 = vadd.f32 %v7939, %v8323
    %v8325 = vpop.f32.mrf.mxu0
    %8326 = vmatprep.mubr.f32.mxu0 %v7290
    %8327 = vmatmul.mubr.f32.gmra.mxu0 %v7226
    %v8328 = vpop.f32.mrf.mxu0
    %v8329 = vadd.f32 %v7944, %v8328
    %v8330 = vpop.f32.mrf.mxu0
    %8331 = vdwg.mxu0
    %8332 = vmatprep.subr.mxu0 0.0
    %8333 = vmatpush1.msra.mxu0 0.0
    %8334 = vmatprep.subr.mxu0 0.0
    %8335 = vmatpush1.msra.mxu0 0.0
    %8336 = vmatprep.subr.mxu0 0.0
    %8337 = vmatpush1.msra.mxu0 0.0
    %8338 = vmatprep.subr.mxu0 0.0
    %8339 = vmatpush1.msra.mxu0 0.0
    %8340 = vmatprep.subr.mxu0 0.0
    %8341 = vmatpush1.msra.mxu0 0.0
    %8342 = vmatprep.subr.mxu0 0.0
    %8343 = vmatpush1.msra.mxu0 0.0
    %8344 = vmatprep.subr.mxu0 0.0
    %8345 = vmatpush1.msra.mxu0 0.0
    %8346 = vmatprep.subr.mxu0 0.0
    %8347 = vmatpush1.msra.mxu0 0.0
    %8348 = vmatprep.subr.mxu0 0.0
    %8349 = vmatpush1.msra.mxu0 %v7362
    %8350 = vmatprep.subr.mxu0 0.0
    %8351 = vmatpush1.msra.mxu0 %v7361
    %8352 = vmatprep.subr.mxu0 0.0
    %8353 = vmatpush1.msra.mxu0 %v7360
    %8354 = vmatprep.subr.mxu0 0.0
    %8355 = vmatpush1.msra.mxu0 %v7359
    %8356 = vmatprep.subr.mxu0 0.0
    %8357 = vmatpush1.msra.mxu0 %v7358
    %8358 = vmatprep.subr.mxu0 0.0
    %8359 = vmatpush1.msra.mxu0 %v7357
    %8360 = vmatprep.subr.mxu0 0.0
    %8361 = vmatpush1.msra.mxu0 %v7356
    %8362 = vmatprep.subr.mxu0 0.0
    %8363 = vmatpush1.msra.mxu0 %v7355
    %8364 = vmatprep.subr.mxu0 0.0
    %8365 = vmatpush2.msra.mxu0 0.0
    %8366 = vmatprep.subr.mxu0 0.0
    %8367 = vmatpush2.msra.mxu0 0.0
    %8368 = vmatprep.subr.mxu0 0.0
    %8369 = vmatpush2.msra.mxu0 0.0
    %8370 = vmatprep.subr.mxu0 0.0
    %8371 = vmatpush2.msra.mxu0 0.0
    %8372 = vmatprep.subr.mxu0 0.0
    %8373 = vmatpush2.msra.mxu0 0.0
    %8374 = vmatprep.subr.mxu0 0.0
    %8375 = vmatpush2.msra.mxu0 0.0
    %8376 = vmatprep.subr.mxu0 0.0
    %8377 = vmatpush2.msra.mxu0 0.0
    %8378 = vmatprep.subr.mxu0 0.0
    %8379 = vmatpush2.msra.mxu0 0.0
    %8380 = vmatprep.subr.mxu0 0.0
    %8381 = vmatpush2.msra.mxu0 0.0
    %8382 = vmatprep.subr.mxu0 0.0
    %8383 = vmatpush2.msra.mxu0 0.0
    %8384 = vmatprep.subr.mxu0 0.0
    %8385 = vmatpush2.msra.mxu0 0.0
    %8386 = vmatprep.subr.mxu0 0.0
    %8387 = vmatpush2.msra.mxu0 0.0
    %8388 = vmatprep.subr.mxu0 0.0
    %8389 = vmatpush2.msra.mxu0 0.0
    %8390 = vmatprep.subr.mxu0 0.0
    %8391 = vmatpush2.msra.mxu0 0.0
    %8392 = vmatprep.subr.mxu0 0.0
    %8393 = vmatpush2.msra.mxu0 0.0
    %8394 = vmatprep.subr.mxu0 0.0
    %8395 = vmatpush2.msra.mxu0 0.0
    %8396 = vmatprep.mubr.f32.mxu0 0.0
    %8397 = vmatmul.mubr.f32.gmra.mxu0 %v7371
    %v8398 = vpop.f32.mrf.mxu0
    %v8399 = vadd.f32 %v8014, %v8398
    %v8400 = vpop.f32.mrf.mxu0
    %8401 = vmatprep.mubr.f32.mxu0 0.0
    %8402 = vmatmul.mubr.f32.gmra.mxu0 %v7374
    %v8403 = vpop.f32.mrf.mxu0
    %v8404 = vadd.f32 %v8019, %v8403
    %v8405 = vpop.f32.mrf.mxu0
    %8406 = vmatprep.mubr.f32.mxu0 0.0
    %8407 = vmatmul.mubr.f32.gmra.mxu0 %v7377
    %v8408 = vpop.f32.mrf.mxu0
    %v8409 = vadd.f32 %v8024, %v8408
    %v8410 = vpop.f32.mrf.mxu0
    %8411 = vmatprep.mubr.f32.mxu0 0.0
    %8412 = vmatmul.mubr.f32.gmra.mxu0 %v7380
    %v8413 = vpop.f32.mrf.mxu0
    %v8414 = vadd.f32 %v8029, %v8413
    %v8415 = vpop.f32.mrf.mxu0
    %8416 = vmatprep.mubr.f32.mxu0 0.0
    %8417 = vmatmul.mubr.f32.gmra.mxu0 %v7383
    %v8418 = vpop.f32.mrf.mxu0
    %v8419 = vadd.f32 %v8034, %v8418
    %v8420 = vpop.f32.mrf.mxu0
    %8421 = vmatprep.mubr.f32.mxu0 0.0
    %8422 = vmatmul.mubr.f32.gmra.mxu0 %v7386
    %v8423 = vpop.f32.mrf.mxu0
    %v8424 = vadd.f32 %v8039, %v8423
    %v8425 = vpop.f32.mrf.mxu0
    %8426 = vmatprep.mubr.f32.mxu0 0.0
    %8427 = vmatmul.mubr.f32.gmra.mxu0 %v7389
    %v8428 = vpop.f32.mrf.mxu0
    %v8429 = vadd.f32 %v8044, %v8428
    %v8430 = vpop.f32.mrf.mxu0
    %8431 = vmatprep.mubr.f32.mxu0 0.0
    %8432 = vmatmul.mubr.f32.gmra.mxu0 %v7392
    %v8433 = vpop.f32.mrf.mxu0
    %v8434 = vadd.f32 %v8049, %v8433
    %v8435 = vpop.f32.mrf.mxu0
    %8436 = vmatprep.mubr.f32.mxu0 0.0
    %8437 = vmatmul.mubr.f32.gmra.mxu0 %v7395
    %v8438 = vpop.f32.mrf.mxu0
    %v8439 = vadd.f32 %v8054, %v8438
    %v8440 = vpop.f32.mrf.mxu0
    %8441 = vmatprep.mubr.f32.mxu0 0.0
    %8442 = vmatmul.mubr.f32.gmra.mxu0 %v7398
    %v8443 = vpop.f32.mrf.mxu0
    %v8444 = vadd.f32 %v8059, %v8443
    %v8445 = vpop.f32.mrf.mxu0
    %8446 = vmatprep.mubr.f32.mxu0 0.0
    %8447 = vmatmul.mubr.f32.gmra.mxu0 %v7401
    %v8448 = vpop.f32.mrf.mxu0
    %v8449 = vadd.f32 %v8064, %v8448
    %v8450 = vpop.f32.mrf.mxu0
    %8451 = vmatprep.mubr.f32.mxu0 0.0
    %8452 = vmatmul.mubr.f32.gmra.mxu0 %v7404
    %v8453 = vpop.f32.mrf.mxu0
    %v8454 = vadd.f32 %v8069, %v8453
    %v8455 = vpop.f32.mrf.mxu0
    %8456 = vmatprep.mubr.f32.mxu0 0.0
    %8457 = vmatmul.mubr.f32.gmra.mxu0 %v7407
    %v8458 = vpop.f32.mrf.mxu0
    %v8459 = vadd.f32 %v8074, %v8458
    %v8460 = vpop.f32.mrf.mxu0
    %8461 = vmatprep.mubr.f32.mxu0 0.0
    %8462 = vmatmul.mubr.f32.gmra.mxu0 %v7410
    %v8463 = vpop.f32.mrf.mxu0
    %v8464 = vadd.f32 %v8079, %v8463
    %v8465 = vpop.f32.mrf.mxu0
    %8466 = vmatprep.mubr.f32.mxu0 0.0
    %8467 = vmatmul.mubr.f32.gmra.mxu0 %v7413
    %v8468 = vpop.f32.mrf.mxu0
    %v8469 = vadd.f32 %v8084, %v8468
    %v8470 = vpop.f32.mrf.mxu0
    %8471 = vmatprep.mubr.f32.mxu0 0.0
    %8472 = vmatmul.mubr.f32.gmra.mxu0 %v7416
    %v8473 = vpop.f32.mrf.mxu0
    %v8474 = vadd.f32 %v8089, %v8473
    %v8475 = vpop.f32.mrf.mxu0
    %8476 = vmatprep.mubr.f32.mxu0 0.0
    %8477 = vmatmul.mubr.f32.gmra.mxu0 %v7419
    %v8478 = vpop.f32.mrf.mxu0
    %v8479 = vadd.f32 %v8094, %v8478
    %v8480 = vpop.f32.mrf.mxu0
    %8481 = vmatprep.mubr.f32.mxu0 0.0
    %8482 = vmatmul.mubr.f32.gmra.mxu0 %v7422
    %v8483 = vpop.f32.mrf.mxu0
    %v8484 = vadd.f32 %v8099, %v8483
    %v8485 = vpop.f32.mrf.mxu0
    %8486 = vmatprep.mubr.f32.mxu0 0.0
    %8487 = vmatmul.mubr.f32.gmra.mxu0 %v7425
    %v8488 = vpop.f32.mrf.mxu0
    %v8489 = vadd.f32 %v8104, %v8488
    %v8490 = vpop.f32.mrf.mxu0
    %8491 = vmatprep.mubr.f32.mxu0 0.0
    %8492 = vmatmul.mubr.f32.gmra.mxu0 %v7428
    %v8493 = vpop.f32.mrf.mxu0
    %v8494 = vadd.f32 %v8109, %v8493
    %v8495 = vpop.f32.mrf.mxu0
    %8496 = vmatprep.mubr.f32.mxu0 0.0
    %8497 = vmatmul.mubr.f32.gmra.mxu0 %v7431
    %v8498 = vpop.f32.mrf.mxu0
    %v8499 = vadd.f32 %v8114, %v8498
    %v8500 = vpop.f32.mrf.mxu0
    %8501 = vmatprep.mubr.f32.mxu0 0.0
    %8502 = vmatmul.mubr.f32.gmra.mxu0 %v7434
    %v8503 = vpop.f32.mrf.mxu0
    %v8504 = vadd.f32 %v8119, %v8503
    %v8505 = vpop.f32.mrf.mxu0
    %8506 = vmatprep.mubr.f32.mxu0 0.0
    %8507 = vmatmul.mubr.f32.gmra.mxu0 %v7437
    %v8508 = vpop.f32.mrf.mxu0
    %v8509 = vadd.f32 %v8124, %v8508
    %v8510 = vpop.f32.mrf.mxu0
    %8511 = vmatprep.mubr.f32.mxu0 0.0
    %8512 = vmatmul.mubr.f32.gmra.mxu0 %v7440
    %v8513 = vpop.f32.mrf.mxu0
    %v8514 = vadd.f32 %v8129, %v8513
    %v8515 = vpop.f32.mrf.mxu0
    %8516 = vmatprep.mubr.f32.mxu0 0.0
    %8517 = vmatmul.mubr.f32.gmra.mxu0 %v7443
    %v8518 = vpop.f32.mrf.mxu0
    %v8519 = vadd.f32 %v8134, %v8518
    %v8520 = vpop.f32.mrf.mxu0
    %8521 = vmatprep.mubr.f32.mxu0 0.0
    %8522 = vmatmul.mubr.f32.gmra.mxu0 %v7446
    %v8523 = vpop.f32.mrf.mxu0
    %v8524 = vadd.f32 %v8139, %v8523
    %v8525 = vpop.f32.mrf.mxu0
    %8526 = vmatprep.mubr.f32.mxu0 0.0
    %8527 = vmatmul.mubr.f32.gmra.mxu0 %v7449
    %v8528 = vpop.f32.mrf.mxu0
    %v8529 = vadd.f32 %v8144, %v8528
    %v8530 = vpop.f32.mrf.mxu0
    %8531 = vmatprep.mubr.f32.mxu0 0.0
    %8532 = vmatmul.mubr.f32.gmra.mxu0 %v7452
    %v8533 = vpop.f32.mrf.mxu0
    %v8534 = vadd.f32 %v8149, %v8533
    %v8535 = vpop.f32.mrf.mxu0
    %8536 = vmatprep.mubr.f32.mxu0 0.0
    %8537 = vmatmul.mubr.f32.gmra.mxu0 %v7455
    %v8538 = vpop.f32.mrf.mxu0
    %v8539 = vadd.f32 %v8154, %v8538
    %v8540 = vpop.f32.mrf.mxu0
    %8541 = vmatprep.mubr.f32.mxu0 0.0
    %8542 = vmatmul.mubr.f32.gmra.mxu0 %v7458
    %v8543 = vpop.f32.mrf.mxu0
    %v8544 = vadd.f32 %v8159, %v8543
    %v8545 = vpop.f32.mrf.mxu0
    %8546 = vmatprep.mubr.f32.mxu0 0.0
    %8547 = vmatmul.mubr.f32.gmra.mxu0 %v7461
    %v8548 = vpop.f32.mrf.mxu0
    %v8549 = vadd.f32 %v8164, %v8548
    %v8550 = vpop.f32.mrf.mxu0
    %8551 = vmatprep.mubr.f32.mxu0 0.0
    %8552 = vmatmul.mubr.f32.gmra.mxu0 %v7464
    %v8553 = vpop.f32.mrf.mxu0
    %v8554 = vadd.f32 %v8169, %v8553
    %v8555 = vpop.f32.mrf.mxu0
    %8556 = vmatprep.mubr.f32.mxu0 0.0
    %8557 = vmatmul.mubr.f32.gmra.mxu0 %v7467
    %v8558 = vpop.f32.mrf.mxu0
    %v8559 = vadd.f32 %v8174, %v8558
    %v8560 = vpop.f32.mrf.mxu0
    %8561 = vmatprep.mubr.f32.mxu0 0.0
    %8562 = vmatmul.mubr.f32.gmra.mxu0 %v7470
    %v8563 = vpop.f32.mrf.mxu0
    %v8564 = vadd.f32 %v8179, %v8563
    %v8565 = vpop.f32.mrf.mxu0
    %8566 = vmatprep.mubr.f32.mxu0 0.0
    %8567 = vmatmul.mubr.f32.gmra.mxu0 %v7473
    %v8568 = vpop.f32.mrf.mxu0
    %v8569 = vadd.f32 %v8184, %v8568
    %v8570 = vpop.f32.mrf.mxu0
    %8571 = vmatprep.mubr.f32.mxu0 0.0
    %8572 = vmatmul.mubr.f32.gmra.mxu0 %v7476
    %v8573 = vpop.f32.mrf.mxu0
    %v8574 = vadd.f32 %v8189, %v8573
    %v8575 = vpop.f32.mrf.mxu0
    %8576 = vmatprep.mubr.f32.mxu0 0.0
    %8577 = vmatmul.mubr.f32.gmra.mxu0 %v7479
    %v8578 = vpop.f32.mrf.mxu0
    %v8579 = vadd.f32 %v8194, %v8578
    %v8580 = vpop.f32.mrf.mxu0
    %8581 = vmatprep.mubr.f32.mxu0 0.0
    %8582 = vmatmul.mubr.f32.gmra.mxu0 %v7482
    %v8583 = vpop.f32.mrf.mxu0
    %v8584 = vadd.f32 %v8199, %v8583
    %v8585 = vpop.f32.mrf.mxu0
    %8586 = vmatprep.mubr.f32.mxu0 0.0
    %8587 = vmatmul.mubr.f32.gmra.mxu0 %v7485
    %v8588 = vpop.f32.mrf.mxu0
    %v8589 = vadd.f32 %v8204, %v8588
    %v8590 = vpop.f32.mrf.mxu0
    %8591 = vmatprep.mubr.f32.mxu0 0.0
    %8592 = vmatmul.mubr.f32.gmra.mxu0 %v7488
    %v8593 = vpop.f32.mrf.mxu0
    %v8594 = vadd.f32 %v8209, %v8593
    %v8595 = vpop.f32.mrf.mxu0
    %8596 = vmatprep.mubr.f32.mxu0 0.0
    %8597 = vmatmul.mubr.f32.gmra.mxu0 %v7491
    %v8598 = vpop.f32.mrf.mxu0
    %v8599 = vadd.f32 %v8214, %v8598
    %v8600 = vpop.f32.mrf.mxu0
    %8601 = vmatprep.mubr.f32.mxu0 0.0
    %8602 = vmatmul.mubr.f32.gmra.mxu0 %v7494
    %v8603 = vpop.f32.mrf.mxu0
    %v8604 = vadd.f32 %v8219, %v8603
    %v8605 = vpop.f32.mrf.mxu0
    %8606 = vmatprep.mubr.f32.mxu0 0.0
    %8607 = vmatmul.mubr.f32.gmra.mxu0 %v7497
    %v8608 = vpop.f32.mrf.mxu0
    %v8609 = vadd.f32 %v8224, %v8608
    %v8610 = vpop.f32.mrf.mxu0
    %8611 = vmatprep.mubr.f32.mxu0 0.0
    %8612 = vmatmul.mubr.f32.gmra.mxu0 %v7500
    %v8613 = vpop.f32.mrf.mxu0
    %v8614 = vadd.f32 %v8229, %v8613
    %v8615 = vpop.f32.mrf.mxu0
    %8616 = vmatprep.mubr.f32.mxu0 0.0
    %8617 = vmatmul.mubr.f32.gmra.mxu0 %v7503
    %v8618 = vpop.f32.mrf.mxu0
    %v8619 = vadd.f32 %v8234, %v8618
    %v8620 = vpop.f32.mrf.mxu0
    %8621 = vmatprep.mubr.f32.mxu0 0.0
    %8622 = vmatmul.mubr.f32.gmra.mxu0 %v7506
    %v8623 = vpop.f32.mrf.mxu0
    %v8624 = vadd.f32 %v8239, %v8623
    %v8625 = vpop.f32.mrf.mxu0
    %8626 = vmatprep.mubr.f32.mxu0 0.0
    %8627 = vmatmul.mubr.f32.gmra.mxu0 %v7509
    %v8628 = vpop.f32.mrf.mxu0
    %v8629 = vadd.f32 %v8244, %v8628
    %v8630 = vpop.f32.mrf.mxu0
    %8631 = vmatprep.mubr.f32.mxu0 0.0
    %8632 = vmatmul.mubr.f32.gmra.mxu0 %v7512
    %v8633 = vpop.f32.mrf.mxu0
    %v8634 = vadd.f32 %v8249, %v8633
    %v8635 = vpop.f32.mrf.mxu0
    %8636 = vmatprep.mubr.f32.mxu0 0.0
    %8637 = vmatmul.mubr.f32.gmra.mxu0 %v7515
    %v8638 = vpop.f32.mrf.mxu0
    %v8639 = vadd.f32 %v8254, %v8638
    %v8640 = vpop.f32.mrf.mxu0
    %8641 = vmatprep.mubr.f32.mxu0 0.0
    %8642 = vmatmul.mubr.f32.gmra.mxu0 %v7518
    %v8643 = vpop.f32.mrf.mxu0
    %v8644 = vadd.f32 %v8259, %v8643
    %v8645 = vpop.f32.mrf.mxu0
    %8646 = vmatprep.mubr.f32.mxu0 0.0
    %8647 = vmatmul.mubr.f32.gmra.mxu0 %v7521
    %v8648 = vpop.f32.mrf.mxu0
    %v8649 = vadd.f32 %v8264, %v8648
    %v8650 = vpop.f32.mrf.mxu0
    %8651 = vmatprep.mubr.f32.mxu0 0.0
    %8652 = vmatmul.mubr.f32.gmra.mxu0 %v7524
    %v8653 = vpop.f32.mrf.mxu0
    %v8654 = vadd.f32 %v8269, %v8653
    %v8655 = vpop.f32.mrf.mxu0
    %8656 = vmatprep.mubr.f32.mxu0 0.0
    %8657 = vmatmul.mubr.f32.gmra.mxu0 %v7527
    %v8658 = vpop.f32.mrf.mxu0
    %v8659 = vadd.f32 %v8274, %v8658
    %v8660 = vpop.f32.mrf.mxu0
    %8661 = vmatprep.mubr.f32.mxu0 0.0
    %8662 = vmatmul.mubr.f32.gmra.mxu0 %v7530
    %v8663 = vpop.f32.mrf.mxu0
    %v8664 = vadd.f32 %v8279, %v8663
    %v8665 = vpop.f32.mrf.mxu0
    %8666 = vmatprep.mubr.f32.mxu0 0.0
    %8667 = vmatmul.mubr.f32.gmra.mxu0 %v7533
    %v8668 = vpop.f32.mrf.mxu0
    %v8669 = vadd.f32 %v8284, %v8668
    %v8670 = vpop.f32.mrf.mxu0
    %8671 = vmatprep.mubr.f32.mxu0 0.0
    %8672 = vmatmul.mubr.f32.gmra.mxu0 %v7536
    %v8673 = vpop.f32.mrf.mxu0
    %v8674 = vadd.f32 %v8289, %v8673
    %v8675 = vpop.f32.mrf.mxu0
    %8676 = vmatprep.mubr.f32.mxu0 0.0
    %8677 = vmatmul.mubr.f32.gmra.mxu0 %v7539
    %v8678 = vpop.f32.mrf.mxu0
    %v8679 = vadd.f32 %v8294, %v8678
    %v8680 = vpop.f32.mrf.mxu0
    %8681 = vmatprep.mubr.f32.mxu0 0.0
    %8682 = vmatmul.mubr.f32.gmra.mxu0 %v7542
    %v8683 = vpop.f32.mrf.mxu0
    %v8684 = vadd.f32 %v8299, %v8683
    %v8685 = vpop.f32.mrf.mxu0
    %8686 = vmatprep.mubr.f32.mxu0 0.0
    %8687 = vmatmul.mubr.f32.gmra.mxu0 %v7545
    %v8688 = vpop.f32.mrf.mxu0
    %v8689 = vadd.f32 %v8304, %v8688
    %v8690 = vpop.f32.mrf.mxu0
    %8691 = vmatprep.mubr.f32.mxu0 0.0
    %8692 = vmatmul.mubr.f32.gmra.mxu0 %v7548
    %v8693 = vpop.f32.mrf.mxu0
    %v8694 = vadd.f32 %v8309, %v8693
    %v8695 = vpop.f32.mrf.mxu0
    %8696 = vmatprep.mubr.f32.mxu0 0.0
    %8697 = vmatmul.mubr.f32.gmra.mxu0 %v7551
    %v8698 = vpop.f32.mrf.mxu0
    %v8699 = vadd.f32 %v8314, %v8698
    %v8700 = vpop.f32.mrf.mxu0
    %8701 = vmatprep.mubr.f32.mxu0 0.0
    %8702 = vmatmul.mubr.f32.gmra.mxu0 %v7554
    %v8703 = vpop.f32.mrf.mxu0
    %v8704 = vadd.f32 %v8319, %v8703
    %v8705 = vpop.f32.mrf.mxu0
    %8706 = vmatprep.mubr.f32.mxu0 0.0
    %8707 = vmatmul.mubr.f32.gmra.mxu0 %v7557
    %v8708 = vpop.f32.mrf.mxu0
    %v8709 = vadd.f32 %v8324, %v8708
    %v8710 = vpop.f32.mrf.mxu0
    %8711 = vmatprep.mubr.f32.mxu0 0.0
    %8712 = vmatmul.mubr.f32.gmra.mxu0 %v7560
    %v8713 = vpop.f32.mrf.mxu0
    %v8714 = vadd.f32 %v8329, %v8713
    %v8715 = vpop.f32.mrf.mxu0
    %8716 = vdwg.mxu0
    %v8717 = vxor.u32 %v8399, 2147483648
    %v8718 = vxor.u32 %v8404, 2147483648
    %v8719 = vxor.u32 %v8409, 2147483648
    %v8720 = vxor.u32 %v8414, 2147483648
    %v8721 = vxor.u32 %v8419, 2147483648
    %v8722 = vxor.u32 %v8424, 2147483648
    %v8723 = vxor.u32 %v8429, 2147483648
    %v8724 = vxor.u32 %v8434, 2147483648
    %v8725 = vxor.u32 %v8439, 2147483648
    %v8726 = vxor.u32 %v8444, 2147483648
    %v8727 = vxor.u32 %v8449, 2147483648
    %v8728 = vxor.u32 %v8454, 2147483648
    %v8729 = vxor.u32 %v8459, 2147483648
    %v8730 = vxor.u32 %v8464, 2147483648
    %v8731 = vxor.u32 %v8469, 2147483648
    %v8732 = vxor.u32 %v8474, 2147483648
    %v8733 = vxor.u32 %v8479, 2147483648
    %v8734 = vxor.u32 %v8484, 2147483648
    %v8735 = vxor.u32 %v8489, 2147483648
    %v8736 = vxor.u32 %v8494, 2147483648
    %v8737 = vxor.u32 %v8499, 2147483648
    %v8738 = vxor.u32 %v8504, 2147483648
    %v8739 = vxor.u32 %v8509, 2147483648
    %v8740 = vxor.u32 %v8514, 2147483648
    %v8741 = vxor.u32 %v8519, 2147483648
    %v8742 = vxor.u32 %v8524, 2147483648
    %v8743 = vxor.u32 %v8529, 2147483648
    %v8744 = vxor.u32 %v8534, 2147483648
    %v8745 = vxor.u32 %v8539, 2147483648
    %v8746 = vxor.u32 %v8544, 2147483648
    %v8747 = vxor.u32 %v8549, 2147483648
    %v8748 = vxor.u32 %v8554, 2147483648
    %v8749 = vxor.u32 %v8559, 2147483648
    %v8750 = vxor.u32 %v8564, 2147483648
    %v8751 = vxor.u32 %v8569, 2147483648
    %v8752 = vxor.u32 %v8574, 2147483648
    %v8753 = vxor.u32 %v8579, 2147483648
    %v8754 = vxor.u32 %v8584, 2147483648
    %v8755 = vxor.u32 %v8589, 2147483648
    %v8756 = vxor.u32 %v8594, 2147483648
    %v8757 = vxor.u32 %v8599, 2147483648
    %v8758 = vxor.u32 %v8604, 2147483648
    %v8759 = vxor.u32 %v8609, 2147483648
    %v8760 = vxor.u32 %v8614, 2147483648
    %v8761 = vxor.u32 %v8619, 2147483648
    %v8762 = vxor.u32 %v8624, 2147483648
    %v8763 = vxor.u32 %v8629, 2147483648
    %v8764 = vxor.u32 %v8634, 2147483648
    %v8765 = vxor.u32 %v8639, 2147483648
    %v8766 = vxor.u32 %v8644, 2147483648
    %v8767 = vxor.u32 %v8649, 2147483648
    %v8768 = vxor.u32 %v8654, 2147483648
    %v8769 = vxor.u32 %v8659, 2147483648
    %v8770 = vxor.u32 %v8664, 2147483648
    %v8771 = vxor.u32 %v8669, 2147483648
    %v8772 = vxor.u32 %v8674, 2147483648
    %v8773 = vxor.u32 %v8679, 2147483648
    %v8774 = vxor.u32 %v8684, 2147483648
    %v8775 = vxor.u32 %v8689, 2147483648
    %v8776 = vxor.u32 %v8694, 2147483648
    %v8777 = vxor.u32 %v8699, 2147483648
    %v8778 = vxor.u32 %v8704, 2147483648
    %v8779 = vxor.u32 %v8709, 2147483648
    %v8780 = vxor.u32 %v8714, 2147483648
    %v8781 = vmul.f32 %v8717, 1.442695
    %v8782 = vpow.pop %v8781
    %v8783 = vmul.f32 %v8718, 1.442695
    %v8784 = vpow.pop %v8783
    %v8785 = vmul.f32 %v8719, 1.442695
    %v8786 = vpow.pop %v8785
    %v8787 = vmul.f32 %v8720, 1.442695
    %v8788 = vpow.pop %v8787
    %v8789 = vmul.f32 %v8721, 1.442695
    %v8790 = vpow.pop %v8789
    %v8791 = vmul.f32 %v8722, 1.442695
    %v8792 = vpow.pop %v8791
    %v8793 = vmul.f32 %v8723, 1.442695
    %v8794 = vpow.pop %v8793
    %v8795 = vmul.f32 %v8724, 1.442695
    %v8796 = vpow.pop %v8795
    %v8797 = vmul.f32 %v8725, 1.442695
    %v8798 = vpow.pop %v8797
    %v8799 = vmul.f32 %v8726, 1.442695
    %v8800 = vpow.pop %v8799
    %v8801 = vmul.f32 %v8727, 1.442695
    %v8802 = vpow.pop %v8801
    %v8803 = vmul.f32 %v8728, 1.442695
    %v8804 = vpow.pop %v8803
    %v8805 = vmul.f32 %v8729, 1.442695
    %v8806 = vpow.pop %v8805
    %v8807 = vmul.f32 %v8730, 1.442695
    %v8808 = vpow.pop %v8807
    %v8809 = vmul.f32 %v8731, 1.442695
    %v8810 = vpow.pop %v8809
    %v8811 = vmul.f32 %v8732, 1.442695
    %v8812 = vpow.pop %v8811
    %v8813 = vmul.f32 %v8733, 1.442695
    %v8814 = vpow.pop %v8813
    %v8815 = vmul.f32 %v8734, 1.442695
    %v8816 = vpow.pop %v8815
    %v8817 = vmul.f32 %v8735, 1.442695
    %v8818 = vpow.pop %v8817
    %v8819 = vmul.f32 %v8736, 1.442695
    %v8820 = vpow.pop %v8819
    %v8821 = vmul.f32 %v8737, 1.442695
    %v8822 = vpow.pop %v8821
    %v8823 = vmul.f32 %v8738, 1.442695
    %v8824 = vpow.pop %v8823
    %v8825 = vmul.f32 %v8739, 1.442695
    %v8826 = vpow.pop %v8825
    %v8827 = vmul.f32 %v8740, 1.442695
    %v8828 = vpow.pop %v8827
    %v8829 = vmul.f32 %v8741, 1.442695
    %v8830 = vpow.pop %v8829
    %v8831 = vmul.f32 %v8742, 1.442695
    %v8832 = vpow.pop %v8831
    %v8833 = vmul.f32 %v8743, 1.442695
    %v8834 = vpow.pop %v8833
    %v8835 = vmul.f32 %v8744, 1.442695
    %v8836 = vpow.pop %v8835
    %v8837 = vmul.f32 %v8745, 1.442695
    %v8838 = vpow.pop %v8837
    %v8839 = vmul.f32 %v8746, 1.442695
    %v8840 = vpow.pop %v8839
    %v8841 = vmul.f32 %v8747, 1.442695
    %v8842 = vpow.pop %v8841
    %v8843 = vmul.f32 %v8748, 1.442695
    %v8844 = vpow.pop %v8843
    %v8845 = vmul.f32 %v8749, 1.442695
    %v8846 = vpow.pop %v8845
    %v8847 = vmul.f32 %v8750, 1.442695
    %v8848 = vpow.pop %v8847
    %v8849 = vmul.f32 %v8751, 1.442695
    %v8850 = vpow.pop %v8849
    %v8851 = vmul.f32 %v8752, 1.442695
    %v8852 = vpow.pop %v8851
    %v8853 = vmul.f32 %v8753, 1.442695
    %v8854 = vpow.pop %v8853
    %v8855 = vmul.f32 %v8754, 1.442695
    %v8856 = vpow.pop %v8855
    %v8857 = vmul.f32 %v8755, 1.442695
    %v8858 = vpow.pop %v8857
    %v8859 = vmul.f32 %v8756, 1.442695
    %v8860 = vpow.pop %v8859
    %v8861 = vmul.f32 %v8757, 1.442695
    %v8862 = vpow.pop %v8861
    %v8863 = vmul.f32 %v8758, 1.442695
    %v8864 = vpow.pop %v8863
    %v8865 = vmul.f32 %v8759, 1.442695
    %v8866 = vpow.pop %v8865
    %v8867 = vmul.f32 %v8760, 1.442695
    %v8868 = vpow.pop %v8867
    %v8869 = vmul.f32 %v8761, 1.442695
    %v8870 = vpow.pop %v8869
    %v8871 = vmul.f32 %v8762, 1.442695
    %v8872 = vpow.pop %v8871
    %v8873 = vmul.f32 %v8763, 1.442695
    %v8874 = vpow.pop %v8873
    %v8875 = vmul.f32 %v8764, 1.442695
    %v8876 = vpow.pop %v8875
    %v8877 = vmul.f32 %v8765, 1.442695
    %v8878 = vpow.pop %v8877
    %v8879 = vmul.f32 %v8766, 1.442695
    %v8880 = vpow.pop %v8879
    %v8881 = vmul.f32 %v8767, 1.442695
    %v8882 = vpow.pop %v8881
    %v8883 = vmul.f32 %v8768, 1.442695
    %v8884 = vpow.pop %v8883
    %v8885 = vmul.f32 %v8769, 1.442695
    %v8886 = vpow.pop %v8885
    %v8887 = vmul.f32 %v8770, 1.442695
    %v8888 = vpow.pop %v8887
    %v8889 = vmul.f32 %v8771, 1.442695
    %v8890 = vpow.pop %v8889
    %v8891 = vmul.f32 %v8772, 1.442695
    %v8892 = vpow.pop %v8891
    %v8893 = vmul.f32 %v8773, 1.442695
    %v8894 = vpow.pop %v8893
    %v8895 = vmul.f32 %v8774, 1.442695
    %v8896 = vpow.pop %v8895
    %v8897 = vmul.f32 %v8775, 1.442695
    %v8898 = vpow.pop %v8897
    %v8899 = vmul.f32 %v8776, 1.442695
    %v8900 = vpow.pop %v8899
    %v8901 = vmul.f32 %v8777, 1.442695
    %v8902 = vpow.pop %v8901
    %v8903 = vmul.f32 %v8778, 1.442695
    %v8904 = vpow.pop %v8903
    %v8905 = vmul.f32 %v8779, 1.442695
    %v8906 = vpow.pop %v8905
    %v8907 = vmul.f32 %v8780, 1.442695
    %v8908 = vpow.pop %v8907
    %v8909 = vadd.f32 %v8782, 1.0
    %v8910 = vadd.f32 %v8784, 1.0
    %v8911 = vadd.f32 %v8786, 1.0
    %v8912 = vadd.f32 %v8788, 1.0
    %v8913 = vadd.f32 %v8790, 1.0
    %v8914 = vadd.f32 %v8792, 1.0
    %v8915 = vadd.f32 %v8794, 1.0
    %v8916 = vadd.f32 %v8796, 1.0
    %v8917 = vadd.f32 %v8798, 1.0
    %v8918 = vadd.f32 %v8800, 1.0
    %v8919 = vadd.f32 %v8802, 1.0
    %v8920 = vadd.f32 %v8804, 1.0
    %v8921 = vadd.f32 %v8806, 1.0
    %v8922 = vadd.f32 %v8808, 1.0
    %v8923 = vadd.f32 %v8810, 1.0
    %v8924 = vadd.f32 %v8812, 1.0
    %v8925 = vadd.f32 %v8814, 1.0
    %v8926 = vadd.f32 %v8816, 1.0
    %v8927 = vadd.f32 %v8818, 1.0
    %v8928 = vadd.f32 %v8820, 1.0
    %v8929 = vadd.f32 %v8822, 1.0
    %v8930 = vadd.f32 %v8824, 1.0
    %v8931 = vadd.f32 %v8826, 1.0
    %v8932 = vadd.f32 %v8828, 1.0
    %v8933 = vadd.f32 %v8830, 1.0
    %v8934 = vadd.f32 %v8832, 1.0
    %v8935 = vadd.f32 %v8834, 1.0
    %v8936 = vadd.f32 %v8836, 1.0
    %v8937 = vadd.f32 %v8838, 1.0
    %v8938 = vadd.f32 %v8840, 1.0
    %v8939 = vadd.f32 %v8842, 1.0
    %v8940 = vadd.f32 %v8844, 1.0
    %v8941 = vadd.f32 %v8846, 1.0
    %v8942 = vadd.f32 %v8848, 1.0
    %v8943 = vadd.f32 %v8850, 1.0
    %v8944 = vadd.f32 %v8852, 1.0
    %v8945 = vadd.f32 %v8854, 1.0
    %v8946 = vadd.f32 %v8856, 1.0
    %v8947 = vadd.f32 %v8858, 1.0
    %v8948 = vadd.f32 %v8860, 1.0
    %v8949 = vadd.f32 %v8862, 1.0
    %v8950 = vadd.f32 %v8864, 1.0
    %v8951 = vadd.f32 %v8866, 1.0
    %v8952 = vadd.f32 %v8868, 1.0
    %v8953 = vadd.f32 %v8870, 1.0
    %v8954 = vadd.f32 %v8872, 1.0
    %v8955 = vadd.f32 %v8874, 1.0
    %v8956 = vadd.f32 %v8876, 1.0
    %v8957 = vadd.f32 %v8878, 1.0
    %v8958 = vadd.f32 %v8880, 1.0
    %v8959 = vadd.f32 %v8882, 1.0
    %v8960 = vadd.f32 %v8884, 1.0
    %v8961 = vadd.f32 %v8886, 1.0
    %v8962 = vadd.f32 %v8888, 1.0
    %v8963 = vadd.f32 %v8890, 1.0
    %v8964 = vadd.f32 %v8892, 1.0
    %v8965 = vadd.f32 %v8894, 1.0
    %v8966 = vadd.f32 %v8896, 1.0
    %v8967 = vadd.f32 %v8898, 1.0
    %v8968 = vadd.f32 %v8900, 1.0
    %v8969 = vadd.f32 %v8902, 1.0
    %v8970 = vadd.f32 %v8904, 1.0
    %v8971 = vadd.f32 %v8906, 1.0
    %v8972 = vadd.f32 %v8908, 1.0
    %v8973 = vrcp.pop %v8909
    %v8974 = vmul.f32 1.0, %v8973
    %v8975 = vrcp.pop %v8910
    %v8976 = vmul.f32 1.0, %v8975
    %v8977 = vrcp.pop %v8911
    %v8978 = vmul.f32 1.0, %v8977
    %v8979 = vrcp.pop %v8912
    %v8980 = vmul.f32 1.0, %v8979
    %v8981 = vrcp.pop %v8913
    %v8982 = vmul.f32 1.0, %v8981
    %v8983 = vrcp.pop %v8914
    %v8984 = vmul.f32 1.0, %v8983
    %v8985 = vrcp.pop %v8915
    %v8986 = vmul.f32 1.0, %v8985
    %v8987 = vrcp.pop %v8916
    %v8988 = vmul.f32 1.0, %v8987
    %v8989 = vrcp.pop %v8917
    %v8990 = vmul.f32 1.0, %v8989
    %v8991 = vrcp.pop %v8918
    %v8992 = vmul.f32 1.0, %v8991
    %v8993 = vrcp.pop %v8919
    %v8994 = vmul.f32 1.0, %v8993
    %v8995 = vrcp.pop %v8920
    %v8996 = vmul.f32 1.0, %v8995
    %v8997 = vrcp.pop %v8921
    %v8998 = vmul.f32 1.0, %v8997
    %v8999 = vrcp.pop %v8922
    %v9000 = vmul.f32 1.0, %v8999
    %v9001 = vrcp.pop %v8923
    %v9002 = vmul.f32 1.0, %v9001
    %v9003 = vrcp.pop %v8924
    %v9004 = vmul.f32 1.0, %v9003
    %v9005 = vrcp.pop %v8925
    %v9006 = vmul.f32 1.0, %v9005
    %v9007 = vrcp.pop %v8926
    %v9008 = vmul.f32 1.0, %v9007
    %v9009 = vrcp.pop %v8927
    %v9010 = vmul.f32 1.0, %v9009
    %v9011 = vrcp.pop %v8928
    %v9012 = vmul.f32 1.0, %v9011
    %v9013 = vrcp.pop %v8929
    %v9014 = vmul.f32 1.0, %v9013
    %v9015 = vrcp.pop %v8930
    %v9016 = vmul.f32 1.0, %v9015
    %v9017 = vrcp.pop %v8931
    %v9018 = vmul.f32 1.0, %v9017
    %v9019 = vrcp.pop %v8932
    %v9020 = vmul.f32 1.0, %v9019
    %v9021 = vrcp.pop %v8933
    %v9022 = vmul.f32 1.0, %v9021
    %v9023 = vrcp.pop %v8934
    %v9024 = vmul.f32 1.0, %v9023
    %v9025 = vrcp.pop %v8935
    %v9026 = vmul.f32 1.0, %v9025
    %v9027 = vrcp.pop %v8936
    %v9028 = vmul.f32 1.0, %v9027
    %v9029 = vrcp.pop %v8937
    %v9030 = vmul.f32 1.0, %v9029
    %v9031 = vrcp.pop %v8938
    %v9032 = vmul.f32 1.0, %v9031
    %v9033 = vrcp.pop %v8939
    %v9034 = vmul.f32 1.0, %v9033
    %v9035 = vrcp.pop %v8940
    %v9036 = vmul.f32 1.0, %v9035
    %v9037 = vrcp.pop %v8941
    %v9038 = vmul.f32 1.0, %v9037
    %v9039 = vrcp.pop %v8942
    %v9040 = vmul.f32 1.0, %v9039
    %v9041 = vrcp.pop %v8943
    %v9042 = vmul.f32 1.0, %v9041
    %v9043 = vrcp.pop %v8944
    %v9044 = vmul.f32 1.0, %v9043
    %v9045 = vrcp.pop %v8945
    %v9046 = vmul.f32 1.0, %v9045
    %v9047 = vrcp.pop %v8946
    %v9048 = vmul.f32 1.0, %v9047
    %v9049 = vrcp.pop %v8947
    %v9050 = vmul.f32 1.0, %v9049
    %v9051 = vrcp.pop %v8948
    %v9052 = vmul.f32 1.0, %v9051
    %v9053 = vrcp.pop %v8949
    %v9054 = vmul.f32 1.0, %v9053
    %v9055 = vrcp.pop %v8950
    %v9056 = vmul.f32 1.0, %v9055
    %v9057 = vrcp.pop %v8951
    %v9058 = vmul.f32 1.0, %v9057
    %v9059 = vrcp.pop %v8952
    %v9060 = vmul.f32 1.0, %v9059
    %v9061 = vrcp.pop %v8953
    %v9062 = vmul.f32 1.0, %v9061
    %v9063 = vrcp.pop %v8954
    %v9064 = vmul.f32 1.0, %v9063
    %v9065 = vrcp.pop %v8955
    %v9066 = vmul.f32 1.0, %v9065
    %v9067 = vrcp.pop %v8956
    %v9068 = vmul.f32 1.0, %v9067
    %v9069 = vrcp.pop %v8957
    %v9070 = vmul.f32 1.0, %v9069
    %v9071 = vrcp.pop %v8958
    %v9072 = vmul.f32 1.0, %v9071
    %v9073 = vrcp.pop %v8959
    %v9074 = vmul.f32 1.0, %v9073
    %v9075 = vrcp.pop %v8960
    %v9076 = vmul.f32 1.0, %v9075
    %v9077 = vrcp.pop %v8961
    %v9078 = vmul.f32 1.0, %v9077
    %v9079 = vrcp.pop %v8962
    %v9080 = vmul.f32 1.0, %v9079
    %v9081 = vrcp.pop %v8963
    %v9082 = vmul.f32 1.0, %v9081
    %v9083 = vrcp.pop %v8964
    %v9084 = vmul.f32 1.0, %v9083
    %v9085 = vrcp.pop %v8965
    %v9086 = vmul.f32 1.0, %v9085
    %v9087 = vrcp.pop %v8966
    %v9088 = vmul.f32 1.0, %v9087
    %v9089 = vrcp.pop %v8967
    %v9090 = vmul.f32 1.0, %v9089
    %v9091 = vrcp.pop %v8968
    %v9092 = vmul.f32 1.0, %v9091
    %v9093 = vrcp.pop %v8969
    %v9094 = vmul.f32 1.0, %v9093
    %v9095 = vrcp.pop %v8970
    %v9096 = vmul.f32 1.0, %v9095
    %v9097 = vrcp.pop %v8971
    %v9098 = vmul.f32 1.0, %v9097
    %v9099 = vrcp.pop %v8972
    %v9100 = vmul.f32 1.0, %v9099
    %v9101 = vmul.f32 %v8399, %v8974
    %v9102 = vmul.f32 %v8404, %v8976
    %v9103 = vmul.f32 %v8409, %v8978
    %v9104 = vmul.f32 %v8414, %v8980
    %v9105 = vmul.f32 %v8419, %v8982
    %v9106 = vmul.f32 %v8424, %v8984
    %v9107 = vmul.f32 %v8429, %v8986
    %v9108 = vmul.f32 %v8434, %v8988
    %v9109 = vmul.f32 %v8439, %v8990
    %v9110 = vmul.f32 %v8444, %v8992
    %v9111 = vmul.f32 %v8449, %v8994
    %v9112 = vmul.f32 %v8454, %v8996
    %v9113 = vmul.f32 %v8459, %v8998
    %v9114 = vmul.f32 %v8464, %v9000
    %v9115 = vmul.f32 %v8469, %v9002
    %v9116 = vmul.f32 %v8474, %v9004
    %v9117 = vmul.f32 %v8479, %v9006
    %v9118 = vmul.f32 %v8484, %v9008
    %v9119 = vmul.f32 %v8489, %v9010
    %v9120 = vmul.f32 %v8494, %v9012
    %v9121 = vmul.f32 %v8499, %v9014
    %v9122 = vmul.f32 %v8504, %v9016
    %v9123 = vmul.f32 %v8509, %v9018
    %v9124 = vmul.f32 %v8514, %v9020
    %v9125 = vmul.f32 %v8519, %v9022
    %v9126 = vmul.f32 %v8524, %v9024
    %v9127 = vmul.f32 %v8529, %v9026
    %v9128 = vmul.f32 %v8534, %v9028
    %v9129 = vmul.f32 %v8539, %v9030
    %v9130 = vmul.f32 %v8544, %v9032
    %v9131 = vmul.f32 %v8549, %v9034
    %v9132 = vmul.f32 %v8554, %v9036
    %v9133 = vmul.f32 %v8559, %v9038
    %v9134 = vmul.f32 %v8564, %v9040
    %v9135 = vmul.f32 %v8569, %v9042
    %v9136 = vmul.f32 %v8574, %v9044
    %v9137 = vmul.f32 %v8579, %v9046
    %v9138 = vmul.f32 %v8584, %v9048
    %v9139 = vmul.f32 %v8589, %v9050
    %v9140 = vmul.f32 %v8594, %v9052
    %v9141 = vmul.f32 %v8599, %v9054
    %v9142 = vmul.f32 %v8604, %v9056
    %v9143 = vmul.f32 %v8609, %v9058
    %v9144 = vmul.f32 %v8614, %v9060
    %v9145 = vmul.f32 %v8619, %v9062
    %v9146 = vmul.f32 %v8624, %v9064
    %v9147 = vmul.f32 %v8629, %v9066
    %v9148 = vmul.f32 %v8634, %v9068
    %v9149 = vmul.f32 %v8639, %v9070
    %v9150 = vmul.f32 %v8644, %v9072
    %v9151 = vmul.f32 %v8649, %v9074
    %v9152 = vmul.f32 %v8654, %v9076
    %v9153 = vmul.f32 %v8659, %v9078
    %v9154 = vmul.f32 %v8664, %v9080
    %v9155 = vmul.f32 %v8669, %v9082
    %v9156 = vmul.f32 %v8674, %v9084
    %v9157 = vmul.f32 %v8679, %v9086
    %v9158 = vmul.f32 %v8684, %v9088
    %v9159 = vmul.f32 %v8689, %v9090
    %v9160 = vmul.f32 %v8694, %v9092
    %v9161 = vmul.f32 %v8699, %v9094
    %v9162 = vmul.f32 %v8704, %v9096
    %v9163 = vmul.f32 %v8709, %v9098
    %v9164 = vmul.f32 %v8714, %v9100
    %v9165 = vld [vmem:[%s7] sm:$0xff]
    %v9166 = vld [vmem:[%s7 + $0x8] sm:$0xff]
    %v9167 = vld [vmem:[%s7 + $0x10] sm:$0xff]
    %v9168 = vld [vmem:[%s7 + $0x18] sm:$0xff]
    %v9169 = vld [vmem:[%s7 + $0x20] sm:$0xff]
    %v9170 = vld [vmem:[%s7 + $0x28] sm:$0xff]
    %v9171 = vld [vmem:[%s7 + $0x30] sm:$0xff]
    %v9172 = vld [vmem:[%s7 + $0x38] sm:$0xff]
    %v9173 = vld [vmem:[%s8] sm:$0x1]
    %v9175 = vlaneseq
    %v9176 = vshrl.u32 %v9175, 7
    %v9177 = vsub.s32 0, %v9176
    %v9178 = vrot.slane %v9173, %v9177
    %v9181 = vsel %vm143, %v9101, 0
    %v9184 = vsel %vm143, %v9102, 0
    %v9187 = vsel %vm143, %v9103, 0
    %v9190 = vsel %vm143, %v9104, 0
    %v9193 = vsel %vm143, %v9105, 0
    %v9196 = vsel %vm143, %v9106, 0
    %v9199 = vsel %vm143, %v9107, 0
    %v9202 = vsel %vm143, %v9108, 0
    %v9205 = vsel %vm143, %v9109, 0
    %v9208 = vsel %vm143, %v9110, 0
    %v9211 = vsel %vm143, %v9111, 0
    %v9214 = vsel %vm143, %v9112, 0
    %v9217 = vsel %vm143, %v9113, 0
    %v9220 = vsel %vm143, %v9114, 0
    %v9223 = vsel %vm143, %v9115, 0
    %v9226 = vsel %vm143, %v9116, 0
    %v9229 = vsel %vm143, %v9117, 0
    %v9232 = vsel %vm143, %v9118, 0
    %v9235 = vsel %vm143, %v9119, 0
    %v9238 = vsel %vm143, %v9120, 0
    %v9241 = vsel %vm143, %v9121, 0
    %v9244 = vsel %vm143, %v9122, 0
    %v9247 = vsel %vm143, %v9123, 0
    %v9250 = vsel %vm143, %v9124, 0
    %v9253 = vsel %vm143, %v9125, 0
    %v9256 = vsel %vm143, %v9126, 0
    %v9259 = vsel %vm143, %v9127, 0
    %v9262 = vsel %vm143, %v9128, 0
    %v9265 = vsel %vm143, %v9129, 0
    %v9268 = vsel %vm143, %v9130, 0
    %v9271 = vsel %vm143, %v9131, 0
    %v9274 = vsel %vm143, %v9132, 0
    %v9277 = vsel %vm143, %v9133, 0
    %v9280 = vsel %vm143, %v9134, 0
    %v9283 = vsel %vm143, %v9135, 0
    %v9286 = vsel %vm143, %v9136, 0
    %v9289 = vsel %vm143, %v9137, 0
    %v9292 = vsel %vm143, %v9138, 0
    %v9295 = vsel %vm143, %v9139, 0
    %v9298 = vsel %vm143, %v9140, 0
    %v9301 = vsel %vm143, %v9141, 0
    %v9304 = vsel %vm143, %v9142, 0
    %v9307 = vsel %vm143, %v9143, 0
    %v9310 = vsel %vm143, %v9144, 0
    %v9313 = vsel %vm143, %v9145, 0
    %v9316 = vsel %vm143, %v9146, 0
    %v9319 = vsel %vm143, %v9147, 0
    %v9322 = vsel %vm143, %v9148, 0
    %v9325 = vsel %vm143, %v9149, 0
    %v9328 = vsel %vm143, %v9150, 0
    %v9331 = vsel %vm143, %v9151, 0
    %v9334 = vsel %vm143, %v9152, 0
    %v9337 = vsel %vm143, %v9153, 0
    %v9340 = vsel %vm143, %v9154, 0
    %v9343 = vsel %vm143, %v9155, 0
    %v9346 = vsel %vm143, %v9156, 0
    %v9349 = vsel %vm143, %v9157, 0
    %v9352 = vsel %vm143, %v9158, 0
    %v9355 = vsel %vm143, %v9159, 0
    %v9358 = vsel %vm143, %v9160, 0
    %v9361 = vsel %vm143, %v9161, 0
    %v9364 = vsel %vm143, %v9162, 0
    %v9367 = vsel %vm143, %v9163, 0
    %v9370 = vsel %vm143, %v9164, 0
    %9372 = vmatprep.subr.mxu0 0.0
    %9373 = vmatpush1.msra.mxu0 0.0
    %9374 = vmatprep.subr.mxu0 0.0
    %9375 = vmatpush1.msra.mxu0 0.0
    %9376 = vmatprep.subr.mxu0 0.0
    %9377 = vmatpush1.msra.mxu0 0.0
    %9378 = vmatprep.subr.mxu0 0.0
    %9379 = vmatpush1.msra.mxu0 0.0
    %9380 = vmatprep.subr.mxu0 0.0
    %9381 = vmatpush1.msra.mxu0 0.0
    %9382 = vmatprep.subr.mxu0 0.0
    %9383 = vmatpush1.msra.mxu0 0.0
    %9384 = vmatprep.subr.mxu0 0.0
    %9385 = vmatpush1.msra.mxu0 0.0
    %9386 = vmatprep.subr.mxu0 0.0
    %9387 = vmatpush1.msra.mxu0 0.0
    %9388 = vmatprep.subr.mxu0 0.0
    %9389 = vmatpush1.msra.mxu0 %v9172
    %9390 = vmatprep.subr.mxu0 0.0
    %9391 = vmatpush1.msra.mxu0 %v9171
    %9392 = vmatprep.subr.mxu0 0.0
    %9393 = vmatpush1.msra.mxu0 %v9170
    %9394 = vmatprep.subr.mxu0 0.0
    %9395 = vmatpush1.msra.mxu0 %v9169
    %9396 = vmatprep.subr.mxu0 0.0
    %9397 = vmatpush1.msra.mxu0 %v9168
    %9398 = vmatprep.subr.mxu0 0.0
    %9399 = vmatpush1.msra.mxu0 %v9167
    %9400 = vmatprep.subr.mxu0 0.0
    %9401 = vmatpush1.msra.mxu0 %v9166
    %9402 = vmatprep.subr.mxu0 0.0
    %9403 = vmatpush1.msra.mxu0 %v9165
    %9404 = vmatprep.subr.mxu0 0.0
    %9405 = vmatpush2.msra.mxu0 0.0
    %9406 = vmatprep.subr.mxu0 0.0
    %9407 = vmatpush2.msra.mxu0 0.0
    %9408 = vmatprep.subr.mxu0 0.0
    %9409 = vmatpush2.msra.mxu0 0.0
    %9410 = vmatprep.subr.mxu0 0.0
    %9411 = vmatpush2.msra.mxu0 0.0
    %9412 = vmatprep.subr.mxu0 0.0
    %9413 = vmatpush2.msra.mxu0 0.0
    %9414 = vmatprep.subr.mxu0 0.0
    %9415 = vmatpush2.msra.mxu0 0.0
    %9416 = vmatprep.subr.mxu0 0.0
    %9417 = vmatpush2.msra.mxu0 0.0
    %9418 = vmatprep.subr.mxu0 0.0
    %9419 = vmatpush2.msra.mxu0 0.0
    %9420 = vmatprep.subr.mxu0 0.0
    %9421 = vmatpush2.msra.mxu0 0.0
    %9422 = vmatprep.subr.mxu0 0.0
    %9423 = vmatpush2.msra.mxu0 0.0
    %9424 = vmatprep.subr.mxu0 0.0
    %9425 = vmatpush2.msra.mxu0 0.0
    %9426 = vmatprep.subr.mxu0 0.0
    %9427 = vmatpush2.msra.mxu0 0.0
    %9428 = vmatprep.subr.mxu0 0.0
    %9429 = vmatpush2.msra.mxu0 0.0
    %9430 = vmatprep.subr.mxu0 0.0
    %9431 = vmatpush2.msra.mxu0 0.0
    %9432 = vmatprep.subr.mxu0 0.0
    %9433 = vmatpush2.msra.mxu0 0.0
    %9434 = vmatprep.subr.mxu0 0.0
    %9435 = vmatpush2.msra.mxu0 0.0
    %9436 = vmatprep.mubr.f32.mxu0 0.0
    %9437 = vmatmul.mubr.f32.gmra.mxu0 %v9181
    %v9438 = vpop.f32.mrf.mxu0
    %v9439 = vadd.f32 %v9178, %v9438
    %v9440 = vpop.f32.mrf.mxu0
    %9441 = vmatprep.mubr.f32.mxu0 0.0
    %9442 = vmatmul.mubr.f32.gmra.mxu0 %v9184
    %v9443 = vpop.f32.mrf.mxu0
    %v9444 = vadd.f32 %v9178, %v9443
    %v9445 = vpop.f32.mrf.mxu0
    %9446 = vmatprep.mubr.f32.mxu0 0.0
    %9447 = vmatmul.mubr.f32.gmra.mxu0 %v9187
    %v9448 = vpop.f32.mrf.mxu0
    %v9449 = vadd.f32 %v9178, %v9448
    %v9450 = vpop.f32.mrf.mxu0
    %9451 = vmatprep.mubr.f32.mxu0 0.0
    %9452 = vmatmul.mubr.f32.gmra.mxu0 %v9190
    %v9453 = vpop.f32.mrf.mxu0
    %v9454 = vadd.f32 %v9178, %v9453
    %v9455 = vpop.f32.mrf.mxu0
    %9456 = vmatprep.mubr.f32.mxu0 0.0
    %9457 = vmatmul.mubr.f32.gmra.mxu0 %v9193
    %v9458 = vpop.f32.mrf.mxu0
    %v9459 = vadd.f32 %v9178, %v9458
    %v9460 = vpop.f32.mrf.mxu0
    %9461 = vmatprep.mubr.f32.mxu0 0.0
    %9462 = vmatmul.mubr.f32.gmra.mxu0 %v9196
    %v9463 = vpop.f32.mrf.mxu0
    %v9464 = vadd.f32 %v9178, %v9463
    %v9465 = vpop.f32.mrf.mxu0
    %9466 = vmatprep.mubr.f32.mxu0 0.0
    %9467 = vmatmul.mubr.f32.gmra.mxu0 %v9199
    %v9468 = vpop.f32.mrf.mxu0
    %v9469 = vadd.f32 %v9178, %v9468
    %v9470 = vpop.f32.mrf.mxu0
    %9471 = vmatprep.mubr.f32.mxu0 0.0
    %9472 = vmatmul.mubr.f32.gmra.mxu0 %v9202
    %v9473 = vpop.f32.mrf.mxu0
    %v9474 = vadd.f32 %v9178, %v9473
    %v9475 = vpop.f32.mrf.mxu0
    %9476 = vmatprep.mubr.f32.mxu0 0.0
    %9477 = vmatmul.mubr.f32.gmra.mxu0 %v9205
    %v9478 = vpop.f32.mrf.mxu0
    %v9479 = vadd.f32 %v9178, %v9478
    %v9480 = vpop.f32.mrf.mxu0
    %9481 = vmatprep.mubr.f32.mxu0 0.0
    %9482 = vmatmul.mubr.f32.gmra.mxu0 %v9208
    %v9483 = vpop.f32.mrf.mxu0
    %v9484 = vadd.f32 %v9178, %v9483
    %v9485 = vpop.f32.mrf.mxu0
    %9486 = vmatprep.mubr.f32.mxu0 0.0
    %9487 = vmatmul.mubr.f32.gmra.mxu0 %v9211
    %v9488 = vpop.f32.mrf.mxu0
    %v9489 = vadd.f32 %v9178, %v9488
    %v9490 = vpop.f32.mrf.mxu0
    %9491 = vmatprep.mubr.f32.mxu0 0.0
    %9492 = vmatmul.mubr.f32.gmra.mxu0 %v9214
    %v9493 = vpop.f32.mrf.mxu0
    %v9494 = vadd.f32 %v9178, %v9493
    %v9495 = vpop.f32.mrf.mxu0
    %9496 = vmatprep.mubr.f32.mxu0 0.0
    %9497 = vmatmul.mubr.f32.gmra.mxu0 %v9217
    %v9498 = vpop.f32.mrf.mxu0
    %v9499 = vadd.f32 %v9178, %v9498
    %v9500 = vpop.f32.mrf.mxu0
    %9501 = vmatprep.mubr.f32.mxu0 0.0
    %9502 = vmatmul.mubr.f32.gmra.mxu0 %v9220
    %v9503 = vpop.f32.mrf.mxu0
    %v9504 = vadd.f32 %v9178, %v9503
    %v9505 = vpop.f32.mrf.mxu0
    %9506 = vmatprep.mubr.f32.mxu0 0.0
    %9507 = vmatmul.mubr.f32.gmra.mxu0 %v9223
    %v9508 = vpop.f32.mrf.mxu0
    %v9509 = vadd.f32 %v9178, %v9508
    %v9510 = vpop.f32.mrf.mxu0
    %9511 = vmatprep.mubr.f32.mxu0 0.0
    %9512 = vmatmul.mubr.f32.gmra.mxu0 %v9226
    %v9513 = vpop.f32.mrf.mxu0
    %v9514 = vadd.f32 %v9178, %v9513
    %v9515 = vpop.f32.mrf.mxu0
    %9516 = vmatprep.mubr.f32.mxu0 0.0
    %9517 = vmatmul.mubr.f32.gmra.mxu0 %v9229
    %v9518 = vpop.f32.mrf.mxu0
    %v9519 = vadd.f32 %v9178, %v9518
    %v9520 = vpop.f32.mrf.mxu0
    %9521 = vmatprep.mubr.f32.mxu0 0.0
    %9522 = vmatmul.mubr.f32.gmra.mxu0 %v9232
    %v9523 = vpop.f32.mrf.mxu0
    %v9524 = vadd.f32 %v9178, %v9523
    %v9525 = vpop.f32.mrf.mxu0
    %9526 = vmatprep.mubr.f32.mxu0 0.0
    %9527 = vmatmul.mubr.f32.gmra.mxu0 %v9235
    %v9528 = vpop.f32.mrf.mxu0
    %v9529 = vadd.f32 %v9178, %v9528
    %v9530 = vpop.f32.mrf.mxu0
    %9531 = vmatprep.mubr.f32.mxu0 0.0
    %9532 = vmatmul.mubr.f32.gmra.mxu0 %v9238
    %v9533 = vpop.f32.mrf.mxu0
    %v9534 = vadd.f32 %v9178, %v9533
    %v9535 = vpop.f32.mrf.mxu0
    %9536 = vmatprep.mubr.f32.mxu0 0.0
    %9537 = vmatmul.mubr.f32.gmra.mxu0 %v9241
    %v9538 = vpop.f32.mrf.mxu0
    %v9539 = vadd.f32 %v9178, %v9538
    %v9540 = vpop.f32.mrf.mxu0
    %9541 = vmatprep.mubr.f32.mxu0 0.0
    %9542 = vmatmul.mubr.f32.gmra.mxu0 %v9244
    %v9543 = vpop.f32.mrf.mxu0
    %v9544 = vadd.f32 %v9178, %v9543
    %v9545 = vpop.f32.mrf.mxu0
    %9546 = vmatprep.mubr.f32.mxu0 0.0
    %9547 = vmatmul.mubr.f32.gmra.mxu0 %v9247
    %v9548 = vpop.f32.mrf.mxu0
    %v9549 = vadd.f32 %v9178, %v9548
    %v9550 = vpop.f32.mrf.mxu0
    %9551 = vmatprep.mubr.f32.mxu0 0.0
    %9552 = vmatmul.mubr.f32.gmra.mxu0 %v9250
    %v9553 = vpop.f32.mrf.mxu0
    %v9554 = vadd.f32 %v9178, %v9553
    %v9555 = vpop.f32.mrf.mxu0
    %9556 = vmatprep.mubr.f32.mxu0 0.0
    %9557 = vmatmul.mubr.f32.gmra.mxu0 %v9253
    %v9558 = vpop.f32.mrf.mxu0
    %v9559 = vadd.f32 %v9178, %v9558
    %v9560 = vpop.f32.mrf.mxu0
    %9561 = vmatprep.mubr.f32.mxu0 0.0
    %9562 = vmatmul.mubr.f32.gmra.mxu0 %v9256
    %v9563 = vpop.f32.mrf.mxu0
    %v9564 = vadd.f32 %v9178, %v9563
    %v9565 = vpop.f32.mrf.mxu0
    %9566 = vmatprep.mubr.f32.mxu0 0.0
    %9567 = vmatmul.mubr.f32.gmra.mxu0 %v9259
    %v9568 = vpop.f32.mrf.mxu0
    %v9569 = vadd.f32 %v9178, %v9568
    %v9570 = vpop.f32.mrf.mxu0
    %9571 = vmatprep.mubr.f32.mxu0 0.0
    %9572 = vmatmul.mubr.f32.gmra.mxu0 %v9262
    %v9573 = vpop.f32.mrf.mxu0
    %v9574 = vadd.f32 %v9178, %v9573
    %v9575 = vpop.f32.mrf.mxu0
    %9576 = vmatprep.mubr.f32.mxu0 0.0
    %9577 = vmatmul.mubr.f32.gmra.mxu0 %v9265
    %v9578 = vpop.f32.mrf.mxu0
    %v9579 = vadd.f32 %v9178, %v9578
    %v9580 = vpop.f32.mrf.mxu0
    %9581 = vmatprep.mubr.f32.mxu0 0.0
    %9582 = vmatmul.mubr.f32.gmra.mxu0 %v9268
    %v9583 = vpop.f32.mrf.mxu0
    %v9584 = vadd.f32 %v9178, %v9583
    %v9585 = vpop.f32.mrf.mxu0
    %9586 = vmatprep.mubr.f32.mxu0 0.0
    %9587 = vmatmul.mubr.f32.gmra.mxu0 %v9271
    %v9588 = vpop.f32.mrf.mxu0
    %v9589 = vadd.f32 %v9178, %v9588
    %v9590 = vpop.f32.mrf.mxu0
    %9591 = vmatprep.mubr.f32.mxu0 0.0
    %9592 = vmatmul.mubr.f32.gmra.mxu0 %v9274
    %v9593 = vpop.f32.mrf.mxu0
    %v9594 = vadd.f32 %v9178, %v9593
    %v9595 = vpop.f32.mrf.mxu0
    %9596 = vmatprep.mubr.f32.mxu0 0.0
    %9597 = vmatmul.mubr.f32.gmra.mxu0 %v9277
    %v9598 = vpop.f32.mrf.mxu0
    %v9599 = vadd.f32 %v9178, %v9598
    %v9600 = vpop.f32.mrf.mxu0
    %9601 = vmatprep.mubr.f32.mxu0 0.0
    %9602 = vmatmul.mubr.f32.gmra.mxu0 %v9280
    %v9603 = vpop.f32.mrf.mxu0
    %v9604 = vadd.f32 %v9178, %v9603
    %v9605 = vpop.f32.mrf.mxu0
    %9606 = vmatprep.mubr.f32.mxu0 0.0
    %9607 = vmatmul.mubr.f32.gmra.mxu0 %v9283
    %v9608 = vpop.f32.mrf.mxu0
    %v9609 = vadd.f32 %v9178, %v9608
    %v9610 = vpop.f32.mrf.mxu0
    %9611 = vmatprep.mubr.f32.mxu0 0.0
    %9612 = vmatmul.mubr.f32.gmra.mxu0 %v9286
    %v9613 = vpop.f32.mrf.mxu0
    %v9614 = vadd.f32 %v9178, %v9613
    %v9615 = vpop.f32.mrf.mxu0
    %9616 = vmatprep.mubr.f32.mxu0 0.0
    %9617 = vmatmul.mubr.f32.gmra.mxu0 %v9289
    %v9618 = vpop.f32.mrf.mxu0
    %v9619 = vadd.f32 %v9178, %v9618
    %v9620 = vpop.f32.mrf.mxu0
    %9621 = vmatprep.mubr.f32.mxu0 0.0
    %9622 = vmatmul.mubr.f32.gmra.mxu0 %v9292
    %v9623 = vpop.f32.mrf.mxu0
    %v9624 = vadd.f32 %v9178, %v9623
    %v9625 = vpop.f32.mrf.mxu0
    %9626 = vmatprep.mubr.f32.mxu0 0.0
    %9627 = vmatmul.mubr.f32.gmra.mxu0 %v9295
    %v9628 = vpop.f32.mrf.mxu0
    %v9629 = vadd.f32 %v9178, %v9628
    %v9630 = vpop.f32.mrf.mxu0
    %9631 = vmatprep.mubr.f32.mxu0 0.0
    %9632 = vmatmul.mubr.f32.gmra.mxu0 %v9298
    %v9633 = vpop.f32.mrf.mxu0
    %v9634 = vadd.f32 %v9178, %v9633
    %v9635 = vpop.f32.mrf.mxu0
    %9636 = vmatprep.mubr.f32.mxu0 0.0
    %9637 = vmatmul.mubr.f32.gmra.mxu0 %v9301
    %v9638 = vpop.f32.mrf.mxu0
    %v9639 = vadd.f32 %v9178, %v9638
    %v9640 = vpop.f32.mrf.mxu0
    %9641 = vmatprep.mubr.f32.mxu0 0.0
    %9642 = vmatmul.mubr.f32.gmra.mxu0 %v9304
    %v9643 = vpop.f32.mrf.mxu0
    %v9644 = vadd.f32 %v9178, %v9643
    %v9645 = vpop.f32.mrf.mxu0
    %9646 = vmatprep.mubr.f32.mxu0 0.0
    %9647 = vmatmul.mubr.f32.gmra.mxu0 %v9307
    %v9648 = vpop.f32.mrf.mxu0
    %v9649 = vadd.f32 %v9178, %v9648
    %v9650 = vpop.f32.mrf.mxu0
    %9651 = vmatprep.mubr.f32.mxu0 0.0
    %9652 = vmatmul.mubr.f32.gmra.mxu0 %v9310
    %v9653 = vpop.f32.mrf.mxu0
    %v9654 = vadd.f32 %v9178, %v9653
    %v9655 = vpop.f32.mrf.mxu0
    %9656 = vmatprep.mubr.f32.mxu0 0.0
    %9657 = vmatmul.mubr.f32.gmra.mxu0 %v9313
    %v9658 = vpop.f32.mrf.mxu0
    %v9659 = vadd.f32 %v9178, %v9658
    %v9660 = vpop.f32.mrf.mxu0
    %9661 = vmatprep.mubr.f32.mxu0 0.0
    %9662 = vmatmul.mubr.f32.gmra.mxu0 %v9316
    %v9663 = vpop.f32.mrf.mxu0
    %v9664 = vadd.f32 %v9178, %v9663
    %v9665 = vpop.f32.mrf.mxu0
    %9666 = vmatprep.mubr.f32.mxu0 0.0
    %9667 = vmatmul.mubr.f32.gmra.mxu0 %v9319
    %v9668 = vpop.f32.mrf.mxu0
    %v9669 = vadd.f32 %v9178, %v9668
    %v9670 = vpop.f32.mrf.mxu0
    %9671 = vmatprep.mubr.f32.mxu0 0.0
    %9672 = vmatmul.mubr.f32.gmra.mxu0 %v9322
    %v9673 = vpop.f32.mrf.mxu0
    %v9674 = vadd.f32 %v9178, %v9673
    %v9675 = vpop.f32.mrf.mxu0
    %9676 = vmatprep.mubr.f32.mxu0 0.0
    %9677 = vmatmul.mubr.f32.gmra.mxu0 %v9325
    %v9678 = vpop.f32.mrf.mxu0
    %v9679 = vadd.f32 %v9178, %v9678
    %v9680 = vpop.f32.mrf.mxu0
    %9681 = vmatprep.mubr.f32.mxu0 0.0
    %9682 = vmatmul.mubr.f32.gmra.mxu0 %v9328
    %v9683 = vpop.f32.mrf.mxu0
    %v9684 = vadd.f32 %v9178, %v9683
    %v9685 = vpop.f32.mrf.mxu0
    %9686 = vmatprep.mubr.f32.mxu0 0.0
    %9687 = vmatmul.mubr.f32.gmra.mxu0 %v9331
    %v9688 = vpop.f32.mrf.mxu0
    %v9689 = vadd.f32 %v9178, %v9688
    %v9690 = vpop.f32.mrf.mxu0
    %9691 = vmatprep.mubr.f32.mxu0 0.0
    %9692 = vmatmul.mubr.f32.gmra.mxu0 %v9334
    %v9693 = vpop.f32.mrf.mxu0
    %v9694 = vadd.f32 %v9178, %v9693
    %v9695 = vpop.f32.mrf.mxu0
    %9696 = vmatprep.mubr.f32.mxu0 0.0
    %9697 = vmatmul.mubr.f32.gmra.mxu0 %v9337
    %v9698 = vpop.f32.mrf.mxu0
    %v9699 = vadd.f32 %v9178, %v9698
    %v9700 = vpop.f32.mrf.mxu0
    %9701 = vmatprep.mubr.f32.mxu0 0.0
    %9702 = vmatmul.mubr.f32.gmra.mxu0 %v9340
    %v9703 = vpop.f32.mrf.mxu0
    %v9704 = vadd.f32 %v9178, %v9703
    %v9705 = vpop.f32.mrf.mxu0
    %9706 = vmatprep.mubr.f32.mxu0 0.0
    %9707 = vmatmul.mubr.f32.gmra.mxu0 %v9343
    %v9708 = vpop.f32.mrf.mxu0
    %v9709 = vadd.f32 %v9178, %v9708
    %v9710 = vpop.f32.mrf.mxu0
    %9711 = vmatprep.mubr.f32.mxu0 0.0
    %9712 = vmatmul.mubr.f32.gmra.mxu0 %v9346
    %v9713 = vpop.f32.mrf.mxu0
    %v9714 = vadd.f32 %v9178, %v9713
    %v9715 = vpop.f32.mrf.mxu0
    %9716 = vmatprep.mubr.f32.mxu0 0.0
    %9717 = vmatmul.mubr.f32.gmra.mxu0 %v9349
    %v9718 = vpop.f32.mrf.mxu0
    %v9719 = vadd.f32 %v9178, %v9718
    %v9720 = vpop.f32.mrf.mxu0
    %9721 = vmatprep.mubr.f32.mxu0 0.0
    %9722 = vmatmul.mubr.f32.gmra.mxu0 %v9352
    %v9723 = vpop.f32.mrf.mxu0
    %v9724 = vadd.f32 %v9178, %v9723
    %v9725 = vpop.f32.mrf.mxu0
    %9726 = vmatprep.mubr.f32.mxu0 0.0
    %9727 = vmatmul.mubr.f32.gmra.mxu0 %v9355
    %v9728 = vpop.f32.mrf.mxu0
    %v9729 = vadd.f32 %v9178, %v9728
    %v9730 = vpop.f32.mrf.mxu0
    %9731 = vmatprep.mubr.f32.mxu0 0.0
    %9732 = vmatmul.mubr.f32.gmra.mxu0 %v9358
    %v9733 = vpop.f32.mrf.mxu0
    %v9734 = vadd.f32 %v9178, %v9733
    %v9735 = vpop.f32.mrf.mxu0
    %9736 = vmatprep.mubr.f32.mxu0 0.0
    %9737 = vmatmul.mubr.f32.gmra.mxu0 %v9361
    %v9738 = vpop.f32.mrf.mxu0
    %v9739 = vadd.f32 %v9178, %v9738
    %v9740 = vpop.f32.mrf.mxu0
    %9741 = vmatprep.mubr.f32.mxu0 0.0
    %9742 = vmatmul.mubr.f32.gmra.mxu0 %v9364
    %v9743 = vpop.f32.mrf.mxu0
    %v9744 = vadd.f32 %v9178, %v9743
    %v9745 = vpop.f32.mrf.mxu0
    %9746 = vmatprep.mubr.f32.mxu0 0.0
    %9747 = vmatmul.mubr.f32.gmra.mxu0 %v9367
    %v9748 = vpop.f32.mrf.mxu0
    %v9749 = vadd.f32 %v9178, %v9748
    %v9750 = vpop.f32.mrf.mxu0
    %9751 = vmatprep.mubr.f32.mxu0 0.0
    %9752 = vmatmul.mubr.f32.gmra.mxu0 %v9370
    %v9753 = vpop.f32.mrf.mxu0
    %v9754 = vadd.f32 %v9178, %v9753
    %v9755 = vpop.f32.mrf.mxu0
    %9756 = vdwg.mxu0
    %9757 = vxpose.xlu0.b32.start [1/16] %v9439, 128
    %9758 = vxpose.xlu0.b32.cont [2/16] %v9444, 128
    %9759 = vxpose.xlu0.b32.cont [3/16] %v9449, 128
    %9760 = vxpose.xlu0.b32.cont [4/16] %v9454, 128
    %9761 = vxpose.xlu0.b32.cont [5/16] %v9459, 128
    %9762 = vxpose.xlu0.b32.cont [6/16] %v9464, 128
    %9763 = vxpose.xlu0.b32.cont [7/16] %v9469, 128
    %9764 = vxpose.xlu0.b32.cont [8/16] %v9474, 128
    %9765 = vxpose.xlu0.b32.cont [9/16] %v9479, 128
    %9766 = vxpose.xlu0.b32.cont [10/16] %v9484, 128
    %9767 = vxpose.xlu0.b32.cont [11/16] %v9489, 128
    %9768 = vxpose.xlu0.b32.cont [12/16] %v9494, 128
    %9769 = vxpose.xlu0.b32.cont [13/16] %v9499, 128
    %9770 = vxpose.xlu0.b32.cont [14/16] %v9504, 128
    %9771 = vxpose.xlu0.b32.cont [15/16] %v9509, 128
    %9772 = vxpose.xlu0.b32.end [16/16] %v9514, 128
    %v9773 = vpop.trf.xlu0
    %v9774 = vpop.trf.xlu0
    %v9775 = vpop.trf.xlu0
    %v9776 = vpop.trf.xlu0
    %v9777 = vpop.trf.xlu0
    %v9778 = vpop.trf.xlu0
    %v9779 = vpop.trf.xlu0
    %v9780 = vpop.trf.xlu0
    %v9781 = vpop.trf.xlu0
    %v9782 = vpop.trf.xlu0
    %v9783 = vpop.trf.xlu0
    %v9784 = vpop.trf.xlu0
    %v9785 = vpop.trf.xlu0
    %v9786 = vpop.trf.xlu0
    %v9787 = vpop.trf.xlu0
    %v9788 = vpop.trf.xlu0
    %9789 = vxpose.xlu0.b32.start [1/16] %v9519, 128
    %9790 = vxpose.xlu0.b32.cont [2/16] %v9524, 128
    %9791 = vxpose.xlu0.b32.cont [3/16] %v9529, 128
    %9792 = vxpose.xlu0.b32.cont [4/16] %v9534, 128
    %9793 = vxpose.xlu0.b32.cont [5/16] %v9539, 128
    %9794 = vxpose.xlu0.b32.cont [6/16] %v9544, 128
    %9795 = vxpose.xlu0.b32.cont [7/16] %v9549, 128
    %9796 = vxpose.xlu0.b32.cont [8/16] %v9554, 128
    %9797 = vxpose.xlu0.b32.cont [9/16] %v9559, 128
    %9798 = vxpose.xlu0.b32.cont [10/16] %v9564, 128
    %9799 = vxpose.xlu0.b32.cont [11/16] %v9569, 128
    %9800 = vxpose.xlu0.b32.cont [12/16] %v9574, 128
    %9801 = vxpose.xlu0.b32.cont [13/16] %v9579, 128
    %9802 = vxpose.xlu0.b32.cont [14/16] %v9584, 128
    %9803 = vxpose.xlu0.b32.cont [15/16] %v9589, 128
    %9804 = vxpose.xlu0.b32.end [16/16] %v9594, 128
    %v9805 = vpop.trf.xlu0
    %v9806 = vpop.trf.xlu0
    %v9807 = vpop.trf.xlu0
    %v9808 = vpop.trf.xlu0
    %v9809 = vpop.trf.xlu0
    %v9810 = vpop.trf.xlu0
    %v9811 = vpop.trf.xlu0
    %v9812 = vpop.trf.xlu0
    %v9813 = vpop.trf.xlu0
    %v9814 = vpop.trf.xlu0
    %v9815 = vpop.trf.xlu0
    %v9816 = vpop.trf.xlu0
    %v9817 = vpop.trf.xlu0
    %v9818 = vpop.trf.xlu0
    %v9819 = vpop.trf.xlu0
    %v9820 = vpop.trf.xlu0
    %9821 = vst [vmem:[#allocation4] sm:$0xff] %v9773
    %9822 = vst [vmem:[#allocation4 + $0x8] sm:$0xff] %v9805
    %9823 = vxpose.xlu0.b32.start [1/16] %v9599, 128
    %9824 = vxpose.xlu0.b32.cont [2/16] %v9604, 128
    %9825 = vxpose.xlu0.b32.cont [3/16] %v9609, 128
    %9826 = vxpose.xlu0.b32.cont [4/16] %v9614, 128
    %9827 = vxpose.xlu0.b32.cont [5/16] %v9619, 128
    %9828 = vxpose.xlu0.b32.cont [6/16] %v9624, 128
    %9829 = vxpose.xlu0.b32.cont [7/16] %v9629, 128
    %9830 = vxpose.xlu0.b32.cont [8/16] %v9634, 128
    %9831 = vxpose.xlu0.b32.cont [9/16] %v9639, 128
    %9832 = vxpose.xlu0.b32.cont [10/16] %v9644, 128
    %9833 = vxpose.xlu0.b32.cont [11/16] %v9649, 128
    %9834 = vxpose.xlu0.b32.cont [12/16] %v9654, 128
    %9835 = vxpose.xlu0.b32.cont [13/16] %v9659, 128
    %9836 = vxpose.xlu0.b32.cont [14/16] %v9664, 128
    %9837 = vxpose.xlu0.b32.cont [15/16] %v9669, 128
    %9838 = vxpose.xlu0.b32.end [16/16] %v9674, 128
    %v9839 = vpop.trf.xlu0
    %v9840 = vpop.trf.xlu0
    %v9841 = vpop.trf.xlu0
    %v9842 = vpop.trf.xlu0
    %v9843 = vpop.trf.xlu0
    %v9844 = vpop.trf.xlu0
    %v9845 = vpop.trf.xlu0
    %v9846 = vpop.trf.xlu0
    %v9847 = vpop.trf.xlu0
    %v9848 = vpop.trf.xlu0
    %v9849 = vpop.trf.xlu0
    %v9850 = vpop.trf.xlu0
    %v9851 = vpop.trf.xlu0
    %v9852 = vpop.trf.xlu0
    %v9853 = vpop.trf.xlu0
    %v9854 = vpop.trf.xlu0
    %9855 = vxpose.xlu0.b32.start [1/16] %v9679, 128
    %9856 = vxpose.xlu0.b32.cont [2/16] %v9684, 128
    %9857 = vxpose.xlu0.b32.cont [3/16] %v9689, 128
    %9858 = vxpose.xlu0.b32.cont [4/16] %v9694, 128
    %9859 = vxpose.xlu0.b32.cont [5/16] %v9699, 128
    %9860 = vxpose.xlu0.b32.cont [6/16] %v9704, 128
    %9861 = vxpose.xlu0.b32.cont [7/16] %v9709, 128
    %9862 = vxpose.xlu0.b32.cont [8/16] %v9714, 128
    %9863 = vxpose.xlu0.b32.cont [9/16] %v9719, 128
    %9864 = vxpose.xlu0.b32.cont [10/16] %v9724, 128
    %9865 = vxpose.xlu0.b32.cont [11/16] %v9729, 128
    %9866 = vxpose.xlu0.b32.cont [12/16] %v9734, 128
    %9867 = vxpose.xlu0.b32.cont [13/16] %v9739, 128
    %9868 = vxpose.xlu0.b32.cont [14/16] %v9744, 128
    %9869 = vxpose.xlu0.b32.cont [15/16] %v9749, 128
    %9870 = vxpose.xlu0.b32.end [16/16] %v9754, 128
    %v9871 = vpop.trf.xlu0
    %v9872 = vpop.trf.xlu0
    %v9873 = vpop.trf.xlu0
    %v9874 = vpop.trf.xlu0
    %v9875 = vpop.trf.xlu0
    %v9876 = vpop.trf.xlu0
    %v9877 = vpop.trf.xlu0
    %v9878 = vpop.trf.xlu0
    %v9879 = vpop.trf.xlu0
    %v9880 = vpop.trf.xlu0
    %v9881 = vpop.trf.xlu0
    %v9882 = vpop.trf.xlu0
    %v9883 = vpop.trf.xlu0
    %v9884 = vpop.trf.xlu0
    %v9885 = vpop.trf.xlu0
    %v9886 = vpop.trf.xlu0
    %s9887 = scalar_lea.vmem [#allocation4], 16
    %9888 = vst [vmem:[%s9887] sm:$0xff] %v9839
    %9889 = vst [vmem:[%s9887 + $0x8] sm:$0xff] %v9871
    // Predicated region
    $region38: #{tpu_custom_call.1} parent=1 // pred_check
      _
    $region39: #{tpu_custom_call.1} parent=1 // pred_check_branch
      %9891 = sbr.rel (0) target = $region41
    $region40: #{tpu_custom_call.1} parent=1 // pred_region
      %s9893 = ssub.s32 512, 512
      %9894 = vsyncadd [#allocation5], %s9893
      %s9895 = sshll.u32 [#allocation4], 4
      %s9896 = int_to_ptr.vmem [resolvable:$true] %s9895
      %9901 = dma.vmem_to_hbm [thread:$0]  %s9896, 512, %s9, [#allocation5], 256, 256, 16
    $region41: #{tpu_custom_call.1} parent=1 // pred_fallthru
      _
    // Predicated region
    $region42: #{tpu_custom_call.1} parent=1 // pred_check
      _
    $region43: #{tpu_custom_call.1} parent=1 // pred_check_branch
      %9903 = sbr.rel (0) target = $region45
    $region44: #{tpu_custom_call.1} parent=1 // pred_region
      %9904 = dma.done [#allocation5], 512
    $region45: #{tpu_custom_call.1} parent=1 // pred_fallthru
      _
    %9905 = vsyncpa [#allocation5], 1

</llo_original>
